<compile_context>
chip_gen: v6e
topology: v6e:2x2x1
jax: 0.10.0
libtpu: 0.0.40
codegen_flags: <defaults>
</compile_context>

<pallas_src>
import math

import jax
import jax.numpy as jnp
from jax import lax
from jax.experimental import pallas as pl
from jax.experimental.pallas import tpu as pltpu

E = 300                         # GloVe embedding dim used by WordEmbedding
EP = ((E + 127) // 128) * 128   # padded to 384 = 3 * 128 lanes


def _two_way_kernel(
    w_emb_ref, v_ref, d_iou_ref, thr_ref,
    gru_wih_ref, gru_whh_ref, gru_bih_ref, gru_bhh_ref,
    vproj_w_ref, vproj_b_ref, qproj_w_ref, qproj_b_ref,
    attlin_w_ref, attlin_b_ref,
    bi_w1_ref, bi_b1_ref, bi_w2_ref, bi_b2_ref,
    final_w_ref, final_b_ref,
    pred_ref,
    xp_ref,
):
    T, Bt, Ep = w_emb_ref.shape          # time-major question embeddings (bf16)
    _, K, D = v_ref.shape
    H = gru_whh_ref.shape[0]
    f32 = jnp.float32
    bf16 = jnp.bfloat16

    # ---- QuestionEmbedding: 1-layer unidirectional GRU over T steps, last hidden ----
    # All input projections in one [T*Bt, Ep] @ [Ep, 3H] bf16 matmul (gate order r,z,n),
    # staged into a VMEM scratch so the recurrence keeps only one [Bt, 3H] slab live.
    x = w_emb_ref[...]                                                    # bf16 [T, Bt, Ep]
    xp = jnp.dot(x.reshape(T * Bt, Ep), gru_wih_ref[...],
                 preferred_element_type=f32) + gru_bih_ref[...]           # f32 [T*Bt, 3H]
    xp_ref[...] = xp.reshape(T, Bt, 3 * H)

    whh = gru_whh_ref[...]                                                # bf16 [H, 3H]
    bhh = gru_bhh_ref[...]                                                # f32  [1, 3H]

    def gru_step(t, h):
        gx = xp_ref[t]                                                    # f32 [Bt, 3H]
        gh = jnp.dot(h.astype(bf16), whh, preferred_element_type=f32) + bhh
        r = jax.nn.sigmoid(gx[:, 0:H] + gh[:, 0:H])
        z = jax.nn.sigmoid(gx[:, H:2 * H] + gh[:, H:2 * H])
        n = jnp.tanh(gx[:, 2 * H:3 * H] + r * gh[:, 2 * H:3 * H])
        return (1.0 - z) * n + z * h

    q_emb = lax.fori_loop(0, T, gru_step, jnp.zeros((Bt, H), f32), unroll=True)

    # ---- NewAttention(v, q_emb): softmax over the K regions ----
    v_bf = v_ref[...]                                                     # bf16 [Bt, K, D]
    v_f32 = v_bf.astype(f32)
    v_proj = jax.nn.relu(
        jnp.dot(v_bf.reshape(Bt * K, D), vproj_w_ref[...],
                preferred_element_type=f32) + vproj_b_ref[...])           # [Bt*K, H]
    q_proj = jax.nn.relu(
        jnp.dot(q_emb.astype(bf16), qproj_w_ref[...],
                preferred_element_type=f32) + qproj_b_ref[...])           # [Bt, H]
    joint = v_proj.reshape(Bt, K, H) * q_proj[:, None, :]                 # [Bt, K, H]
    # num_hid -> 1 linear as a VPU broadcast-mul + lane reduction (no N=1 MXU output).
    aw = attlin_w_ref[...].reshape(1, 1, H)
    logits = jnp.sum(joint * aw, axis=-1) + attlin_b_ref[...]             # [Bt, K]
    m = jnp.max(logits, axis=-1, keepdims=True)
    e = jnp.exp(logits - m)
    att = e * pl.reciprocal(jnp.sum(e, axis=-1, keepdims=True), approx=True)

    # att = att * v  (.squeeze() is a no-op for B,K,D > 1)
    att_v = att[:, :, None] * v_f32                                       # f32 [Bt, K, D]

    # ---- TwoWayAttention + (* d_iou) + final Linear(feat_size, 1), fused ----
    att_bf = att_v.astype(bf16).reshape(Bt * K, D)
    v1 = jax.nn.relu(
        jnp.dot(att_bf, bi_w1_ref[...],
                preferred_element_type=f32) + bi_b1_ref[...])             # f32 [Bt*K, D]
    v2 = jax.nn.relu(
        jnp.dot(att_bf, bi_w2_ref[...],
                preferred_element_type=f32) + bi_b2_ref[...])             # f32 [Bt*K, D]
    # bi[b,k,j] = (v1[b,k,:].v2[b,j,:]) / sqrt(D);  a_tilde = sum_j bi*d_iou*final_w + b
    # Fused form (avoids the [Bt,K,K] intermediate; D-wide lane-dense MXU output):
    #   M[b,k,:]     = sum_j (d_iou[b,k,j] * final_w[j]) * v2[b,j,:]
    #   a_tilde[b,k] = (1/sqrt(D)) * sum_d v1[b,k,d] * M[b,k,d] + final_b
    w_rel = (d_iou_ref[...] * final_w_ref[...].reshape(1, 1, K)).astype(bf16)   # [Bt,K,K]
    m_rel = jnp.einsum('bkj,bjd->bkd', w_rel,
                       v2.reshape(Bt, K, D).astype(bf16),
                       preferred_element_type=f32)                        # [Bt, K, D]
    a_tilde = (jnp.sum(v1.reshape(Bt, K, D) * m_rel, axis=-1)
               * (1.0 / math.sqrt(D)) + final_b_ref[...])                 # [Bt, K]

    # sigmoid, threshold mask, sum over K (lane reduce), lane-dense [1,1,Bt] store
    a_sig = jax.nn.sigmoid(a_tilde)
    masked = jnp.where(a_sig > thr_ref[0], a_sig, 0.0)
    row = jnp.sum(masked, axis=-1, keepdims=True)                         # [Bt, 1]
    pred_ref[...] = row.T[None]                                           # [1, 1, Bt]


def _round_up(x, m):
    return ((x + m - 1) // m) * m


def _vmem_capacity_bytes():
    try:
        return int(pltpu.get_tpu_info().vmem_capacity_bytes)
    except Exception:
        return 64 * 1024 * 1024          # conservative default (v7x per-TC)


def _pick_block_b(B, K, D, T, H, vmem_budget):
    """Batch tile: multiple of 8, up to 256 rows, bounded by the per-generation VMEM budget."""
    b8 = max(8, _round_up(B, 8))
    weight_bytes = 2 * (EP * 3 * H + H * 3 * H + D * H + H * H + 2 * D * D) \
        + 4 * (9 * H + 2 * D + K + 3)

    def est(bt):
        stream = 2 * (2 * bt * T * EP + 2 * bt * K * D + 4 * bt * K * K) + 2 * 4 * bt
        scratch = 4 * T * bt * 3 * H
        act = 4 * bt * (T * 3 * H + K * (4 * D + 2 * H) + 8 * K)
        return weight_bytes + stream + scratch + act

    bt = 8
    cand = 16
    while cand <= min(256, b8):
        if est(cand) <= vmem_budget:
            bt = cand
        cand += 8
    if bt >= b8:
        bt = b8
        if b8 >= 128:
            # >= 2 grid steps so the "parallel" axis can shard across v7x's 2 TensorCores.
            bt = _round_up(b8 // 2, 8)
    return bt


def two_way_forward(params, v, b, q_tokens, a, d_iou, threshold, *, block_b=None):
    """Mirrors TwoWayModel.forward(v, b, q, a, d_iou, threshold).  b, a are unused."""
    del b, a
    B, K, D = v.shape
    T = q_tokens.shape[1]
    H = params["qproj_w"].shape[0]
    f32, bf16 = jnp.float32, jnp.bfloat16

    vmem_cap = _vmem_capacity_bytes()
    if block_b is None:
        block_b = _pick_block_b(B, K, D, T, H, int(0.6 * vmem_cap))
    num_blocks = -(-B // block_b)
    B_pad = num_blocks * block_b

    # ---- host-side glue / prep (once per call, fused by XLA) ----
    # WordEmbedding lookup (gather) + zero-pad E=300 -> 384 lanes, streamed as bf16.
    emb_p = jnp.pad(params["emb"].astype(f32), ((0, 0), (0, EP - E))).astype(bf16)
    w_emb = emb_p[q_tokens]                                              # bf16 [B, T, EP]

    # Pre-transpose weights; MXU operands cast to bf16, biases / VPU rows stay f32.
    gru_wih_t = jnp.pad(params["gru_wih"].T.astype(f32),
                        ((0, EP - E), (0, 0))).astype(bf16)              # [EP, 3H]
    gru_whh_t = params["gru_whh"].T.astype(bf16)                         # [H, 3H]
    vproj_w_t = params["vproj_w"].T.astype(bf16)                         # [D, H]
    qproj_w_t = params["qproj_w"].T.astype(bf16)                         # [H, H]
    bi_w1_t = params["bi_w1"].T.astype(bf16)                             # [D, D]
    bi_w2_t = params["bi_w2"].T.astype(bf16)                             # [D, D]

    v_in = v.astype(bf16)
    d_iou_in = d_iou.astype(f32)
    if B_pad != B:
        pad3 = ((0, B_pad - B), (0, 0), (0, 0))
        w_emb = jnp.pad(w_emb, pad3)
        v_in = jnp.pad(v_in, pad3)
        d_iou_in = jnp.pad(d_iou_in, pad3)
    # Time-major layout per batch tile so the GRU slices the leading scratch dim.
    w_emb = w_emb.reshape(num_blocks, block_b, T, EP).transpose(0, 2, 1, 3)

    thr = jnp.full((1,), threshold, f32)

    weight_args = (
        gru_wih_t, gru_whh_t, params["gru_bih"], params["gru_bhh"],
        vproj_w_t, params["vproj_b"], qproj_w_t, params["qproj_b"],
        params["attlin_w"], params["attlin_b"],
        bi_w1_t, params["bi_b1"], bi_w2_t, params["bi_b2"],
        params["final_w"], params["final_b"],
    )

    # Explicit scoped-VMEM budget: resident weights + double-buffered streamed tiles
    # + staged GRU projections + activation headroom.
    weight_bytes = sum(int(x.size) * x.dtype.itemsize for x in weight_args)
    stream_bytes = 2 * (block_b * T * EP * 2 + block_b * K * D * 2
                        + block_b * K * K * 4) + 2 * 4 * block_b
    scratch_bytes = 4 * T * block_b * 3 * H
    act_bytes = 4 * block_b * (T * 3 * H + K * (4 * D + 2 * H) + 8 * K)
    need = 2 * weight_bytes + stream_bytes + scratch_bytes + act_bytes
    vmem_limit = int(min(int(0.9 * vmem_cap), max(32 * 1024 * 1024, 2 * need)))

    def _call(single_buffer_weights):
        def batched(shape):
            n = len(shape)
            return pl.BlockSpec(shape, lambda i, n=n: (i,) + (0,) * (n - 1))

        def replicated(shape):
            n = len(shape)
            idx = lambda i, n=n: (0,) * n
            if single_buffer_weights:
                # Grid-invariant weights: constant index_map -> no next-block prefetch
                # is ever needed, so single-buffer them (halves weight VMEM residency).
                return pl.BlockSpec(shape, idx, pipeline_mode=pl.Buffered(1))
            return pl.BlockSpec(shape, idx)

        in_specs = [
            pl.BlockSpec((None, T, block_b, EP), lambda i: (i, 0, 0, 0)),  # w_emb tile
            batched((block_b, K, D)),                                      # v
            batched((block_b, K, K)),                                      # d_iou
            pl.BlockSpec(memory_space=pltpu.MemorySpace.SMEM),             # threshold
            replicated((EP, 3 * H)),                                       # gru_wih^T (padded)
            replicated((H, 3 * H)),                                        # gru_whh^T
            replicated((1, 3 * H)),                                        # gru_bih
            replicated((1, 3 * H)),                                        # gru_bhh
            replicated((D, H)),                                            # vproj_w^T
            replicated((1, H)),                                            # vproj_b
            replicated((H, H)),                                            # qproj_w^T
            replicated((1, H)),                                            # qproj_b
            replicated((1, H)),                                            # attlin_w (row)
            replicated((1, 1)),                                            # attlin_b
            replicated((D, D)),                                            # bi_w1^T
            replicated((1, D)),                                            # bi_b1
            replicated((D, D)),                                            # bi_w2^T
            replicated((1, D)),                                            # bi_b2
            replicated((1, K)),                                            # final_w (row)
            replicated((1, 1)),                                            # final_b
        ]
        return pl.pallas_call(
            _two_way_kernel,
            out_shape=jax.ShapeDtypeStruct((num_blocks, 1, block_b), f32),
            grid=(num_blocks,),
            in_specs=in_specs,
            out_specs=pl.BlockSpec((1, 1, block_b), lambda i: (i, 0, 0)),
            scratch_shapes=[pltpu.VMEM((T, block_b, 3 * H), f32)],
            compiler_params=pltpu.CompilerParams(
                dimension_semantics=("parallel",),
                vmem_limit_bytes=vmem_limit),
        )(w_emb, v_in, d_iou_in, thr, *weight_args)

    try:
        out = jax.block_until_ready(_call(True))
    except Exception:
        # Fallback for jax versions without BlockSpec pipeline_mode / Buffered(1).
        out = jax.block_until_ready(_call(False))
    return out.reshape(-1)[:B]  # predictions: [B]


def init_params(key, *, num_hid, v_dim, feat_size, ntokens):
    H, D, K = num_hid, v_dim, feat_size
    ks = jax.random.split(key, 16)
    scale = 0.1

    def rnd(k, shape):
        return (scale * jax.random.normal(k, shape)).astype(jnp.float32)

    params = {
        "emb": rnd(ks[0], (ntokens + 1, E)),       # WordEmbedding (padding row included)
        "gru_wih": rnd(ks[1], (3 * H, E)),         # QuestionEmbedding GRU
        "gru_whh": rnd(ks[2], (3 * H, H)),
        "gru_bih": rnd(ks[3], (1, 3 * H)),
        "gru_bhh": rnd(ks[4], (1, 3 * H)),
        "vproj_w": rnd(ks[5], (H, D)),             # NewAttention.v_proj (FCNet linear+ReLU)
        "vproj_b": rnd(ks[6], (1, H)),
        "qproj_w": rnd(ks[7], (H, H)),             # NewAttention.q_proj
        "qproj_b": rnd(ks[8], (1, H)),
        "attlin_w": rnd(ks[9], (1, H)),            # NewAttention.linear (num_hid -> 1)
        "attlin_b": rnd(ks[10], (1, 1)),
        "bi_w1": rnd(ks[11], (D, D)),              # TwoWayAttention (assumed two projections)
        "bi_b1": rnd(ks[12], (1, D)),
        "bi_w2": rnd(ks[13], (D, D)),
        "bi_b2": rnd(ks[14], (1, D)),
        "final_w": rnd(ks[15], (1, K)),            # nn.Linear(feat_size, 1)
        "final_b": jnp.zeros((1, 1), jnp.float32),
    }
    return params


if __name__ == "__main__":
    # Small shapes consistent with the module:
    B, K, V_DIM, NUM_HID, T = 2, 8, 32, 32, 8
    NTOKENS, NUM_ANS = 20, 10
    FEAT_SIZE = K  # nn.Linear(feat_size, 1) is applied over the K-wide relation axis

    root = jax.random.PRNGKey(0)
    k_param, k_v, k_b, k_q, k_a, k_iou = jax.random.split(root, 6)

    params = init_params(k_param, num_hid=NUM_HID, v_dim=V_DIM,
                         feat_size=FEAT_SIZE, ntokens=NTOKENS)

    v = jax.random.normal(k_v, (B, K, V_DIM), jnp.float32)
    b = jax.random.uniform(k_b, (B, K, 4), jnp.float32)                   # unused by forward
    q = jax.random.randint(k_q, (B, T), 0, NTOKENS, jnp.int32)
    a = jax.random.uniform(k_a, (B, NUM_ANS), jnp.float32)                # unused by forward
    d_iou = jax.random.uniform(k_iou, (B, K, K), jnp.float32)
    threshold = 0.5

    predictions = two_way_forward(params, v, b, q, a, d_iou, threshold)
    predictions = jax.block_until_ready(predictions)

    assert predictions.shape == (B,)
    assert bool(jnp.all(jnp.isfinite(predictions)))
    print("KERNEL_OK")
</pallas_src>

<mosaic_0001>
module attributes {stable_mosaic.version = 11 : i64} {
  func.func @_two_way_kernel(%arg0: i32, %arg1: memref<1x8x8x384xbf16, #tpu.memory_space<vmem>>, %arg2: memref<8x8x32xbf16, #tpu.memory_space<vmem>>, %arg3: memref<8x8x8xf32, #tpu.memory_space<vmem>>, %arg4: memref<1xf32, #tpu.memory_space<smem>>, %arg5: memref<384x96xbf16, #tpu.memory_space<vmem>>, %arg6: memref<32x96xbf16, #tpu.memory_space<vmem>>, %arg7: memref<1x96xf32, #tpu.memory_space<vmem>>, %arg8: memref<1x96xf32, #tpu.memory_space<vmem>>, %arg9: memref<32x32xbf16, #tpu.memory_space<vmem>>, %arg10: memref<1x32xf32, #tpu.memory_space<vmem>>, %arg11: memref<32x32xbf16, #tpu.memory_space<vmem>>, %arg12: memref<1x32xf32, #tpu.memory_space<vmem>>, %arg13: memref<1x32xf32, #tpu.memory_space<vmem>>, %arg14: memref<1x1xf32, #tpu.memory_space<vmem>>, %arg15: memref<32x32xbf16, #tpu.memory_space<vmem>>, %arg16: memref<1x32xf32, #tpu.memory_space<vmem>>, %arg17: memref<32x32xbf16, #tpu.memory_space<vmem>>, %arg18: memref<1x32xf32, #tpu.memory_space<vmem>>, %arg19: memref<1x8xf32, #tpu.memory_space<vmem>>, %arg20: memref<1x1xf32, #tpu.memory_space<vmem>>, %arg21: memref<1x1x8xf32, #tpu.memory_space<vmem>>, %arg22: memref<8x8x96xf32, #tpu.memory_space<vmem>>) attributes {dimension_semantics = [#tpu.dimension_semantics<parallel>], iteration_bounds = array<i64: 1>, scalar_prefetch = 0 : i64, scratch_operands = 1 : i64, tpu.core_type = #tpu.core_type<tc>, window_params = [{transform_indices = @transform_0, window_bounds = array<i64: 1, 8, 8, 384>}, {transform_indices = @transform_1, window_bounds = array<i64: 8, 8, 32>}, {transform_indices = @transform_2, window_bounds = array<i64: 8, 8, 8>}, {transform_indices = @transform_3, window_bounds = array<i64: 1>}, {pipeline_mode = #tpu.pipeline_mode<synchronous>, transform_indices = @transform_4, window_bounds = array<i64: 384, 96>}, {pipeline_mode = #tpu.pipeline_mode<synchronous>, transform_indices = @transform_5, window_bounds = array<i64: 32, 96>}, {pipeline_mode = #tpu.pipeline_mode<synchronous>, transform_indices = @transform_6, window_bounds = array<i64: 1, 96>}, {pipeline_mode = #tpu.pipeline_mode<synchronous>, transform_indices = @transform_7, window_bounds = array<i64: 1, 96>}, {pipeline_mode = #tpu.pipeline_mode<synchronous>, transform_indices = @transform_8, window_bounds = array<i64: 32, 32>}, {pipeline_mode = #tpu.pipeline_mode<synchronous>, transform_indices = @transform_9, window_bounds = array<i64: 1, 32>}, {pipeline_mode = #tpu.pipeline_mode<synchronous>, transform_indices = @transform_10, window_bounds = array<i64: 32, 32>}, {pipeline_mode = #tpu.pipeline_mode<synchronous>, transform_indices = @transform_11, window_bounds = array<i64: 1, 32>}, {pipeline_mode = #tpu.pipeline_mode<synchronous>, transform_indices = @transform_12, window_bounds = array<i64: 1, 32>}, {pipeline_mode = #tpu.pipeline_mode<synchronous>, transform_indices = @transform_13, window_bounds = array<i64: 1, 1>}, {pipeline_mode = #tpu.pipeline_mode<synchronous>, transform_indices = @transform_14, window_bounds = array<i64: 32, 32>}, {pipeline_mode = #tpu.pipeline_mode<synchronous>, transform_indices = @transform_15, window_bounds = array<i64: 1, 32>}, {pipeline_mode = #tpu.pipeline_mode<synchronous>, transform_indices = @transform_16, window_bounds = array<i64: 32, 32>}, {pipeline_mode = #tpu.pipeline_mode<synchronous>, transform_indices = @transform_17, window_bounds = array<i64: 1, 32>}, {pipeline_mode = #tpu.pipeline_mode<synchronous>, transform_indices = @transform_18, window_bounds = array<i64: 1, 8>}, {pipeline_mode = #tpu.pipeline_mode<synchronous>, transform_indices = @transform_19, window_bounds = array<i64: 1, 1>}, {transform_indices = @transform_20, window_bounds = array<i64: 1, 1, 8>}]} {
    %c0 = arith.constant 0 : index
    %c0_0 = arith.constant 0 : index
    %c0_1 = arith.constant 0 : index
    %c0_2 = arith.constant 0 : index
    %0 = vector.load %arg1[%c0, %c0_0, %c0_1, %c0_2] : memref<1x8x8x384xbf16, #tpu.memory_space<vmem>>, vector<1x8x8x384xbf16>
    %1 = vector.shape_cast %0 : vector<1x8x8x384xbf16> to vector<8x8x384xbf16>
    %2 = vector.shape_cast %1 : vector<8x8x384xbf16> to vector<64x384xbf16>
    %c0_3 = arith.constant 0 : index
    %c0_4 = arith.constant 0 : index
    %3 = vector.load %arg5[%c0_3, %c0_4] : memref<384x96xbf16, #tpu.memory_space<vmem>>, vector<384x96xbf16>
    %cst = arith.constant dense<0.000000e+00> : vector<64x96xf32>
    %4 = tpu.matmul %2, %3, %cst {dimension_numbers = #tpu.dot_dimension_numbers<[1], [0], [0], [1], [0, 0, 1, 1], [], []>} : vector<64x384xbf16>, vector<384x96xbf16>, vector<64x96xf32> -> vector<64x96xf32>
    %c0_5 = arith.constant 0 : index
    %c0_6 = arith.constant 0 : index
    %5 = vector.load %arg7[%c0_5, %c0_6] : memref<1x96xf32, #tpu.memory_space<vmem>>, vector<1x96xf32>
    %6 = vector.broadcast %5 : vector<1x96xf32> to vector<64x96xf32>
    %7 = arith.addf %4, %6 : vector<64x96xf32>
    %8 = vector.shape_cast %7 : vector<64x96xf32> to vector<8x8x96xf32>
    %c0_7 = arith.constant 0 : index
    %c0_8 = arith.constant 0 : index
    %c0_9 = arith.constant 0 : index
    %9 = vector.load %arg22[%c0_7, %c0_8, %c0_9] : memref<8x8x96xf32, #tpu.memory_space<vmem>>, vector<8x8x96xf32>
    tpu.vector_store %arg22[%c0_7, %c0_8, %c0_9], %8 {strides = array<i32>} : memref<8x8x96xf32, #tpu.memory_space<vmem>>, vector<8x8x96xf32>,
    %c0_10 = arith.constant 0 : index
    %c0_11 = arith.constant 0 : index
    %10 = vector.load %arg6[%c0_10, %c0_11] : memref<32x96xbf16, #tpu.memory_space<vmem>>, vector<32x96xbf16>
    %c0_12 = arith.constant 0 : index
    %c0_13 = arith.constant 0 : index
    %11 = vector.load %arg8[%c0_12, %c0_13] : memref<1x96xf32, #tpu.memory_space<vmem>>, vector<1x96xf32>
    %cst_14 = arith.constant 0.000000e+00 : f32
    %12 = vector.broadcast %cst_14 : f32 to vector<8x32xf32>
    %c0_i32 = arith.constant 0 : i32
    %13 = arith.index_cast %c0_i32 : i32 to index
    %c0_15 = arith.constant 0 : index
    %c0_16 = arith.constant 0 : index
    %14 = vector.load %arg22[%13, %c0_15, %c0_16] : memref<8x8x96xf32, #tpu.memory_space<vmem>>, vector<1x8x96xf32>
    %15 = vector.shape_cast %14 : vector<1x8x96xf32> to vector<8x96xf32>
    %16 = arith.truncf %12 : vector<8x32xf32> to vector<8x32xbf16>
    %cst_17 = arith.constant dense<0.000000e+00> : vector<8x96xf32>
    %17 = tpu.matmul %16, %10, %cst_17 {dimension_numbers = #tpu.dot_dimension_numbers<[1], [0], [0], [1], [0, 0, 1, 1], [], []>} : vector<8x32xbf16>, vector<32x96xbf16>, vector<8x96xf32> -> vector<8x96xf32>
    %18 = vector.broadcast %11 : vector<1x96xf32> to vector<8x96xf32>
    %19 = arith.addf %17, %18 : vector<8x96xf32>
    %20 = vector.extract_strided_slice %15 {offsets = [0, 0], sizes = [8, 32], strides = [1, 1]} : vector<8x96xf32> to vector<8x32xf32>
    %21 = vector.extract_strided_slice %19 {offsets = [0, 0], sizes = [8, 32], strides = [1, 1]} : vector<8x96xf32> to vector<8x32xf32>
    %22 = arith.addf %20, %21 : vector<8x32xf32>
    %23 = arith.negf %22 : vector<8x32xf32>
    %24 = math.exp %23 : vector<8x32xf32>
    %cst_18 = arith.constant 1.000000e+00 : f32
    %25 = vector.broadcast %cst_18 : f32 to vector<8x32xf32>
    %26 = arith.addf %25, %24 : vector<8x32xf32>
    %27 = arith.divf %25, %26 : vector<8x32xf32>
    %28 = vector.extract_strided_slice %15 {offsets = [0, 32], sizes = [8, 32], strides = [1, 1]} : vector<8x96xf32> to vector<8x32xf32>
    %29 = vector.extract_strided_slice %19 {offsets = [0, 32], sizes = [8, 32], strides = [1, 1]} : vector<8x96xf32> to vector<8x32xf32>
    %30 = arith.addf %28, %29 : vector<8x32xf32>
    %31 = arith.negf %30 : vector<8x32xf32>
    %32 = math.exp %31 : vector<8x32xf32>
    %cst_19 = arith.constant 1.000000e+00 : f32
    %33 = vector.broadcast %cst_19 : f32 to vector<8x32xf32>
    %34 = arith.addf %33, %32 : vector<8x32xf32>
    %35 = arith.divf %33, %34 : vector<8x32xf32>
    %36 = vector.extract_strided_slice %15 {offsets = [0, 64], sizes = [8, 32], strides = [1, 1]} : vector<8x96xf32> to vector<8x32xf32>
    %37 = vector.extract_strided_slice %19 {offsets = [0, 64], sizes = [8, 32], strides = [1, 1]} : vector<8x96xf32> to vector<8x32xf32>
    %38 = arith.mulf %27, %37 : vector<8x32xf32>
    %39 = arith.addf %36, %38 : vector<8x32xf32>
    %40 = math.tanh %39 : vector<8x32xf32>
    %cst_20 = arith.constant 1.000000e+00 : f32
    %41 = vector.broadcast %cst_20 : f32 to vector<8x32xf32>
    %42 = arith.subf %41, %35 : vector<8x32xf32>
    %43 = arith.mulf %42, %40 : vector<8x32xf32>
    %44 = arith.mulf %35, %12 : vector<8x32xf32>
    %45 = arith.addf %43, %44 : vector<8x32xf32>
    %c1_i32 = arith.constant 1 : i32
    %46 = arith.index_cast %c1_i32 : i32 to index
    %c0_21 = arith.constant 0 : index
    %c0_22 = arith.constant 0 : index
    %47 = vector.load %arg22[%46, %c0_21, %c0_22] : memref<8x8x96xf32, #tpu.memory_space<vmem>>, vector<1x8x96xf32>
    %48 = vector.shape_cast %47 : vector<1x8x96xf32> to vector<8x96xf32>
    %49 = arith.truncf %45 : vector<8x32xf32> to vector<8x32xbf16>
    %cst_23 = arith.constant dense<0.000000e+00> : vector<8x96xf32>
    %50 = tpu.matmul %49, %10, %cst_23 {dimension_numbers = #tpu.dot_dimension_numbers<[1], [0], [0], [1], [0, 0, 1, 1], [], []>} : vector<8x32xbf16>, vector<32x96xbf16>, vector<8x96xf32> -> vector<8x96xf32>
    %51 = vector.broadcast %11 : vector<1x96xf32> to vector<8x96xf32>
    %52 = arith.addf %50, %51 : vector<8x96xf32>
    %53 = vector.extract_strided_slice %48 {offsets = [0, 0], sizes = [8, 32], strides = [1, 1]} : vector<8x96xf32> to vector<8x32xf32>
    %54 = vector.extract_strided_slice %52 {offsets = [0, 0], sizes = [8, 32], strides = [1, 1]} : vector<8x96xf32> to vector<8x32xf32>
    %55 = arith.addf %53, %54 : vector<8x32xf32>
    %56 = arith.negf %55 : vector<8x32xf32>
    %57 = math.exp %56 : vector<8x32xf32>
    %cst_24 = arith.constant 1.000000e+00 : f32
    %58 = vector.broadcast %cst_24 : f32 to vector<8x32xf32>
    %59 = arith.addf %58, %57 : vector<8x32xf32>
    %60 = arith.divf %58, %59 : vector<8x32xf32>
    %61 = vector.extract_strided_slice %48 {offsets = [0, 32], sizes = [8, 32], strides = [1, 1]} : vector<8x96xf32> to vector<8x32xf32>
    %62 = vector.extract_strided_slice %52 {offsets = [0, 32], sizes = [8, 32], strides = [1, 1]} : vector<8x96xf32> to vector<8x32xf32>
    %63 = arith.addf %61, %62 : vector<8x32xf32>
    %64 = arith.negf %63 : vector<8x32xf32>
    %65 = math.exp %64 : vector<8x32xf32>
    %cst_25 = arith.constant 1.000000e+00 : f32
    %66 = vector.broadcast %cst_25 : f32 to vector<8x32xf32>
    %67 = arith.addf %66, %65 : vector<8x32xf32>
    %68 = arith.divf %66, %67 : vector<8x32xf32>
    %69 = vector.extract_strided_slice %48 {offsets = [0, 64], sizes = [8, 32], strides = [1, 1]} : vector<8x96xf32> to vector<8x32xf32>
    %70 = vector.extract_strided_slice %52 {offsets = [0, 64], sizes = [8, 32], strides = [1, 1]} : vector<8x96xf32> to vector<8x32xf32>
    %71 = arith.mulf %60, %70 : vector<8x32xf32>
    %72 = arith.addf %69, %71 : vector<8x32xf32>
    %73 = math.tanh %72 : vector<8x32xf32>
    %cst_26 = arith.constant 1.000000e+00 : f32
    %74 = vector.broadcast %cst_26 : f32 to vector<8x32xf32>
    %75 = arith.subf %74, %68 : vector<8x32xf32>
    %76 = arith.mulf %75, %73 : vector<8x32xf32>
    %77 = arith.mulf %68, %45 : vector<8x32xf32>
    %78 = arith.addf %76, %77 : vector<8x32xf32>
    %c2_i32 = arith.constant 2 : i32
    %79 = arith.index_cast %c2_i32 : i32 to index
    %c0_27 = arith.constant 0 : index
    %c0_28 = arith.constant 0 : index
    %80 = vector.load %arg22[%79, %c0_27, %c0_28] : memref<8x8x96xf32, #tpu.memory_space<vmem>>, vector<1x8x96xf32>
    %81 = vector.shape_cast %80 : vector<1x8x96xf32> to vector<8x96xf32>
    %82 = arith.truncf %78 : vector<8x32xf32> to vector<8x32xbf16>
    %cst_29 = arith.constant dense<0.000000e+00> : vector<8x96xf32>
    %83 = tpu.matmul %82, %10, %cst_29 {dimension_numbers = #tpu.dot_dimension_numbers<[1], [0], [0], [1], [0, 0, 1, 1], [], []>} : vector<8x32xbf16>, vector<32x96xbf16>, vector<8x96xf32> -> vector<8x96xf32>
    %84 = vector.broadcast %11 : vector<1x96xf32> to vector<8x96xf32>
    %85 = arith.addf %83, %84 : vector<8x96xf32>
    %86 = vector.extract_strided_slice %81 {offsets = [0, 0], sizes = [8, 32], strides = [1, 1]} : vector<8x96xf32> to vector<8x32xf32>
    %87 = vector.extract_strided_slice %85 {offsets = [0, 0], sizes = [8, 32], strides = [1, 1]} : vector<8x96xf32> to vector<8x32xf32>
    %88 = arith.addf %86, %87 : vector<8x32xf32>
    %89 = arith.negf %88 : vector<8x32xf32>
    %90 = math.exp %89 : vector<8x32xf32>
    %cst_30 = arith.constant 1.000000e+00 : f32
    %91 = vector.broadcast %cst_30 : f32 to vector<8x32xf32>
    %92 = arith.addf %91, %90 : vector<8x32xf32>
    %93 = arith.divf %91, %92 : vector<8x32xf32>
    %94 = vector.extract_strided_slice %81 {offsets = [0, 32], sizes = [8, 32], strides = [1, 1]} : vector<8x96xf32> to vector<8x32xf32>
    %95 = vector.extract_strided_slice %85 {offsets = [0, 32], sizes = [8, 32], strides = [1, 1]} : vector<8x96xf32> to vector<8x32xf32>
    %96 = arith.addf %94, %95 : vector<8x32xf32>
    %97 = arith.negf %96 : vector<8x32xf32>
    %98 = math.exp %97 : vector<8x32xf32>
    %cst_31 = arith.constant 1.000000e+00 : f32
    %99 = vector.broadcast %cst_31 : f32 to vector<8x32xf32>
    %100 = arith.addf %99, %98 : vector<8x32xf32>
    %101 = arith.divf %99, %100 : vector<8x32xf32>
    %102 = vector.extract_strided_slice %81 {offsets = [0, 64], sizes = [8, 32], strides = [1, 1]} : vector<8x96xf32> to vector<8x32xf32>
    %103 = vector.extract_strided_slice %85 {offsets = [0, 64], sizes = [8, 32], strides = [1, 1]} : vector<8x96xf32> to vector<8x32xf32>
    %104 = arith.mulf %93, %103 : vector<8x32xf32>
    %105 = arith.addf %102, %104 : vector<8x32xf32>
    %106 = math.tanh %105 : vector<8x32xf32>
    %cst_32 = arith.constant 1.000000e+00 : f32
    %107 = vector.broadcast %cst_32 : f32 to vector<8x32xf32>
    %108 = arith.subf %107, %101 : vector<8x32xf32>
    %109 = arith.mulf %108, %106 : vector<8x32xf32>
    %110 = arith.mulf %101, %78 : vector<8x32xf32>
    %111 = arith.addf %109, %110 : vector<8x32xf32>
    %c3_i32 = arith.constant 3 : i32
    %112 = arith.index_cast %c3_i32 : i32 to index
    %c0_33 = arith.constant 0 : index
    %c0_34 = arith.constant 0 : index
    %113 = vector.load %arg22[%112, %c0_33, %c0_34] : memref<8x8x96xf32, #tpu.memory_space<vmem>>, vector<1x8x96xf32>
    %114 = vector.shape_cast %113 : vector<1x8x96xf32> to vector<8x96xf32>
    %115 = arith.truncf %111 : vector<8x32xf32> to vector<8x32xbf16>
    %cst_35 = arith.constant dense<0.000000e+00> : vector<8x96xf32>
    %116 = tpu.matmul %115, %10, %cst_35 {dimension_numbers = #tpu.dot_dimension_numbers<[1], [0], [0], [1], [0, 0, 1, 1], [], []>} : vector<8x32xbf16>, vector<32x96xbf16>, vector<8x96xf32> -> vector<8x96xf32>
    %117 = vector.broadcast %11 : vector<1x96xf32> to vector<8x96xf32>
    %118 = arith.addf %116, %117 : vector<8x96xf32>
    %119 = vector.extract_strided_slice %114 {offsets = [0, 0], sizes = [8, 32], strides = [1, 1]} : vector<8x96xf32> to vector<8x32xf32>
    %120 = vector.extract_strided_slice %118 {offsets = [0, 0], sizes = [8, 32], strides = [1, 1]} : vector<8x96xf32> to vector<8x32xf32>
    %121 = arith.addf %119, %120 : vector<8x32xf32>
    %122 = arith.negf %121 : vector<8x32xf32>
    %123 = math.exp %122 : vector<8x32xf32>
    %cst_36 = arith.constant 1.000000e+00 : f32
    %124 = vector.broadcast %cst_36 : f32 to vector<8x32xf32>
    %125 = arith.addf %124, %123 : vector<8x32xf32>
    %126 = arith.divf %124, %125 : vector<8x32xf32>
    %127 = vector.extract_strided_slice %114 {offsets = [0, 32], sizes = [8, 32], strides = [1, 1]} : vector<8x96xf32> to vector<8x32xf32>
    %128 = vector.extract_strided_slice %118 {offsets = [0, 32], sizes = [8, 32], strides = [1, 1]} : vector<8x96xf32> to vector<8x32xf32>
    %129 = arith.addf %127, %128 : vector<8x32xf32>
    %130 = arith.negf %129 : vector<8x32xf32>
    %131 = math.exp %130 : vector<8x32xf32>
    %cst_37 = arith.constant 1.000000e+00 : f32
    %132 = vector.broadcast %cst_37 : f32 to vector<8x32xf32>
    %133 = arith.addf %132, %131 : vector<8x32xf32>
    %134 = arith.divf %132, %133 : vector<8x32xf32>
    %135 = vector.extract_strided_slice %114 {offsets = [0, 64], sizes = [8, 32], strides = [1, 1]} : vector<8x96xf32> to vector<8x32xf32>
    %136 = vector.extract_strided_slice %118 {offsets = [0, 64], sizes = [8, 32], strides = [1, 1]} : vector<8x96xf32> to vector<8x32xf32>
    %137 = arith.mulf %126, %136 : vector<8x32xf32>
    %138 = arith.addf %135, %137 : vector<8x32xf32>
    %139 = math.tanh %138 : vector<8x32xf32>
    %cst_38 = arith.constant 1.000000e+00 : f32
    %140 = vector.broadcast %cst_38 : f32 to vector<8x32xf32>
    %141 = arith.subf %140, %134 : vector<8x32xf32>
    %142 = arith.mulf %141, %139 : vector<8x32xf32>
    %143 = arith.mulf %134, %111 : vector<8x32xf32>
    %144 = arith.addf %142, %143 : vector<8x32xf32>
    %c4_i32 = arith.constant 4 : i32
    %145 = arith.index_cast %c4_i32 : i32 to index
    %c0_39 = arith.constant 0 : index
    %c0_40 = arith.constant 0 : index
    %146 = vector.load %arg22[%145, %c0_39, %c0_40] : memref<8x8x96xf32, #tpu.memory_space<vmem>>, vector<1x8x96xf32>
    %147 = vector.shape_cast %146 : vector<1x8x96xf32> to vector<8x96xf32>
    %148 = arith.truncf %144 : vector<8x32xf32> to vector<8x32xbf16>
    %cst_41 = arith.constant dense<0.000000e+00> : vector<8x96xf32>
    %149 = tpu.matmul %148, %10, %cst_41 {dimension_numbers = #tpu.dot_dimension_numbers<[1], [0], [0], [1], [0, 0, 1, 1], [], []>} : vector<8x32xbf16>, vector<32x96xbf16>, vector<8x96xf32> -> vector<8x96xf32>
    %150 = vector.broadcast %11 : vector<1x96xf32> to vector<8x96xf32>
    %151 = arith.addf %149, %150 : vector<8x96xf32>
    %152 = vector.extract_strided_slice %147 {offsets = [0, 0], sizes = [8, 32], strides = [1, 1]} : vector<8x96xf32> to vector<8x32xf32>
    %153 = vector.extract_strided_slice %151 {offsets = [0, 0], sizes = [8, 32], strides = [1, 1]} : vector<8x96xf32> to vector<8x32xf32>
    %154 = arith.addf %152, %153 : vector<8x32xf32>
    %155 = arith.negf %154 : vector<8x32xf32>
    %156 = math.exp %155 : vector<8x32xf32>
    %cst_42 = arith.constant 1.000000e+00 : f32
    %157 = vector.broadcast %cst_42 : f32 to vector<8x32xf32>
    %158 = arith.addf %157, %156 : vector<8x32xf32>
    %159 = arith.divf %157, %158 : vector<8x32xf32>
    %160 = vector.extract_strided_slice %147 {offsets = [0, 32], sizes = [8, 32], strides = [1, 1]} : vector<8x96xf32> to vector<8x32xf32>
    %161 = vector.extract_strided_slice %151 {offsets = [0, 32], sizes = [8, 32], strides = [1, 1]} : vector<8x96xf32> to vector<8x32xf32>
    %162 = arith.addf %160, %161 : vector<8x32xf32>
    %163 = arith.negf %162 : vector<8x32xf32>
    %164 = math.exp %163 : vector<8x32xf32>
    %cst_43 = arith.constant 1.000000e+00 : f32
    %165 = vector.broadcast %cst_43 : f32 to vector<8x32xf32>
    %166 = arith.addf %165, %164 : vector<8x32xf32>
    %167 = arith.divf %165, %166 : vector<8x32xf32>
    %168 = vector.extract_strided_slice %147 {offsets = [0, 64], sizes = [8, 32], strides = [1, 1]} : vector<8x96xf32> to vector<8x32xf32>
    %169 = vector.extract_strided_slice %151 {offsets = [0, 64], sizes = [8, 32], strides = [1, 1]} : vector<8x96xf32> to vector<8x32xf32>
    %170 = arith.mulf %159, %169 : vector<8x32xf32>
    %171 = arith.addf %168, %170 : vector<8x32xf32>
    %172 = math.tanh %171 : vector<8x32xf32>
    %cst_44 = arith.constant 1.000000e+00 : f32
    %173 = vector.broadcast %cst_44 : f32 to vector<8x32xf32>
    %174 = arith.subf %173, %167 : vector<8x32xf32>
    %175 = arith.mulf %174, %172 : vector<8x32xf32>
    %176 = arith.mulf %167, %144 : vector<8x32xf32>
    %177 = arith.addf %175, %176 : vector<8x32xf32>
    %c5_i32 = arith.constant 5 : i32
    %178 = arith.index_cast %c5_i32 : i32 to index
    %c0_45 = arith.constant 0 : index
    %c0_46 = arith.constant 0 : index
    %179 = vector.load %arg22[%178, %c0_45, %c0_46] : memref<8x8x96xf32, #tpu.memory_space<vmem>>, vector<1x8x96xf32>
    %180 = vector.shape_cast %179 : vector<1x8x96xf32> to vector<8x96xf32>
    %181 = arith.truncf %177 : vector<8x32xf32> to vector<8x32xbf16>
    %cst_47 = arith.constant dense<0.000000e+00> : vector<8x96xf32>
    %182 = tpu.matmul %181, %10, %cst_47 {dimension_numbers = #tpu.dot_dimension_numbers<[1], [0], [0], [1], [0, 0, 1, 1], [], []>} : vector<8x32xbf16>, vector<32x96xbf16>, vector<8x96xf32> -> vector<8x96xf32>
    %183 = vector.broadcast %11 : vector<1x96xf32> to vector<8x96xf32>
    %184 = arith.addf %182, %183 : vector<8x96xf32>
    %185 = vector.extract_strided_slice %180 {offsets = [0, 0], sizes = [8, 32], strides = [1, 1]} : vector<8x96xf32> to vector<8x32xf32>
    %186 = vector.extract_strided_slice %184 {offsets = [0, 0], sizes = [8, 32], strides = [1, 1]} : vector<8x96xf32> to vector<8x32xf32>
    %187 = arith.addf %185, %186 : vector<8x32xf32>
    %188 = arith.negf %187 : vector<8x32xf32>
    %189 = math.exp %188 : vector<8x32xf32>
    %cst_48 = arith.constant 1.000000e+00 : f32
    %190 = vector.broadcast %cst_48 : f32 to vector<8x32xf32>
    %191 = arith.addf %190, %189 : vector<8x32xf32>
    %192 = arith.divf %190, %191 : vector<8x32xf32>
    %193 = vector.extract_strided_slice %180 {offsets = [0, 32], sizes = [8, 32], strides = [1, 1]} : vector<8x96xf32> to vector<8x32xf32>
    %194 = vector.extract_strided_slice %184 {offsets = [0, 32], sizes = [8, 32], strides = [1, 1]} : vector<8x96xf32> to vector<8x32xf32>
    %195 = arith.addf %193, %194 : vector<8x32xf32>
    %196 = arith.negf %195 : vector<8x32xf32>
    %197 = math.exp %196 : vector<8x32xf32>
    %cst_49 = arith.constant 1.000000e+00 : f32
    %198 = vector.broadcast %cst_49 : f32 to vector<8x32xf32>
    %199 = arith.addf %198, %197 : vector<8x32xf32>
    %200 = arith.divf %198, %199 : vector<8x32xf32>
    %201 = vector.extract_strided_slice %180 {offsets = [0, 64], sizes = [8, 32], strides = [1, 1]} : vector<8x96xf32> to vector<8x32xf32>
    %202 = vector.extract_strided_slice %184 {offsets = [0, 64], sizes = [8, 32], strides = [1, 1]} : vector<8x96xf32> to vector<8x32xf32>
    %203 = arith.mulf %192, %202 : vector<8x32xf32>
    %204 = arith.addf %201, %203 : vector<8x32xf32>
    %205 = math.tanh %204 : vector<8x32xf32>
    %cst_50 = arith.constant 1.000000e+00 : f32
    %206 = vector.broadcast %cst_50 : f32 to vector<8x32xf32>
    %207 = arith.subf %206, %200 : vector<8x32xf32>
    %208 = arith.mulf %207, %205 : vector<8x32xf32>
    %209 = arith.mulf %200, %177 : vector<8x32xf32>
    %210 = arith.addf %208, %209 : vector<8x32xf32>
    %c6_i32 = arith.constant 6 : i32
    %211 = arith.index_cast %c6_i32 : i32 to index
    %c0_51 = arith.constant 0 : index
    %c0_52 = arith.constant 0 : index
    %212 = vector.load %arg22[%211, %c0_51, %c0_52] : memref<8x8x96xf32, #tpu.memory_space<vmem>>, vector<1x8x96xf32>
    %213 = vector.shape_cast %212 : vector<1x8x96xf32> to vector<8x96xf32>
    %214 = arith.truncf %210 : vector<8x32xf32> to vector<8x32xbf16>
    %cst_53 = arith.constant dense<0.000000e+00> : vector<8x96xf32>
    %215 = tpu.matmul %214, %10, %cst_53 {dimension_numbers = #tpu.dot_dimension_numbers<[1], [0], [0], [1], [0, 0, 1, 1], [], []>} : vector<8x32xbf16>, vector<32x96xbf16>, vector<8x96xf32> -> vector<8x96xf32>
    %216 = vector.broadcast %11 : vector<1x96xf32> to vector<8x96xf32>
    %217 = arith.addf %215, %216 : vector<8x96xf32>
    %218 = vector.extract_strided_slice %213 {offsets = [0, 0], sizes = [8, 32], strides = [1, 1]} : vector<8x96xf32> to vector<8x32xf32>
    %219 = vector.extract_strided_slice %217 {offsets = [0, 0], sizes = [8, 32], strides = [1, 1]} : vector<8x96xf32> to vector<8x32xf32>
    %220 = arith.addf %218, %219 : vector<8x32xf32>
    %221 = arith.negf %220 : vector<8x32xf32>
    %222 = math.exp %221 : vector<8x32xf32>
    %cst_54 = arith.constant 1.000000e+00 : f32
    %223 = vector.broadcast %cst_54 : f32 to vector<8x32xf32>
    %224 = arith.addf %223, %222 : vector<8x32xf32>
    %225 = arith.divf %223, %224 : vector<8x32xf32>
    %226 = vector.extract_strided_slice %213 {offsets = [0, 32], sizes = [8, 32], strides = [1, 1]} : vector<8x96xf32> to vector<8x32xf32>
    %227 = vector.extract_strided_slice %217 {offsets = [0, 32], sizes = [8, 32], strides = [1, 1]} : vector<8x96xf32> to vector<8x32xf32>
    %228 = arith.addf %226, %227 : vector<8x32xf32>
    %229 = arith.negf %228 : vector<8x32xf32>
    %230 = math.exp %229 : vector<8x32xf32>
    %cst_55 = arith.constant 1.000000e+00 : f32
    %231 = vector.broadcast %cst_55 : f32 to vector<8x32xf32>
    %232 = arith.addf %231, %230 : vector<8x32xf32>
    %233 = arith.divf %231, %232 : vector<8x32xf32>
    %234 = vector.extract_strided_slice %213 {offsets = [0, 64], sizes = [8, 32], strides = [1, 1]} : vector<8x96xf32> to vector<8x32xf32>
    %235 = vector.extract_strided_slice %217 {offsets = [0, 64], sizes = [8, 32], strides = [1, 1]} : vector<8x96xf32> to vector<8x32xf32>
    %236 = arith.mulf %225, %235 : vector<8x32xf32>
    %237 = arith.addf %234, %236 : vector<8x32xf32>
    %238 = math.tanh %237 : vector<8x32xf32>
    %cst_56 = arith.constant 1.000000e+00 : f32
    %239 = vector.broadcast %cst_56 : f32 to vector<8x32xf32>
    %240 = arith.subf %239, %233 : vector<8x32xf32>
    %241 = arith.mulf %240, %238 : vector<8x32xf32>
    %242 = arith.mulf %233, %210 : vector<8x32xf32>
    %243 = arith.addf %241, %242 : vector<8x32xf32>
    %c7_i32 = arith.constant 7 : i32
    %244 = arith.index_cast %c7_i32 : i32 to index
    %c0_57 = arith.constant 0 : index
    %c0_58 = arith.constant 0 : index
    %245 = vector.load %arg22[%244, %c0_57, %c0_58] : memref<8x8x96xf32, #tpu.memory_space<vmem>>, vector<1x8x96xf32>
    %246 = vector.shape_cast %245 : vector<1x8x96xf32> to vector<8x96xf32>
    %247 = arith.truncf %243 : vector<8x32xf32> to vector<8x32xbf16>
    %cst_59 = arith.constant dense<0.000000e+00> : vector<8x96xf32>
    %248 = tpu.matmul %247, %10, %cst_59 {dimension_numbers = #tpu.dot_dimension_numbers<[1], [0], [0], [1], [0, 0, 1, 1], [], []>} : vector<8x32xbf16>, vector<32x96xbf16>, vector<8x96xf32> -> vector<8x96xf32>
    %249 = vector.broadcast %11 : vector<1x96xf32> to vector<8x96xf32>
    %250 = arith.addf %248, %249 : vector<8x96xf32>
    %251 = vector.extract_strided_slice %246 {offsets = [0, 0], sizes = [8, 32], strides = [1, 1]} : vector<8x96xf32> to vector<8x32xf32>
    %252 = vector.extract_strided_slice %250 {offsets = [0, 0], sizes = [8, 32], strides = [1, 1]} : vector<8x96xf32> to vector<8x32xf32>
    %253 = arith.addf %251, %252 : vector<8x32xf32>
    %254 = arith.negf %253 : vector<8x32xf32>
    %255 = math.exp %254 : vector<8x32xf32>
    %cst_60 = arith.constant 1.000000e+00 : f32
    %256 = vector.broadcast %cst_60 : f32 to vector<8x32xf32>
    %257 = arith.addf %256, %255 : vector<8x32xf32>
    %258 = arith.divf %256, %257 : vector<8x32xf32>
    %259 = vector.extract_strided_slice %246 {offsets = [0, 32], sizes = [8, 32], strides = [1, 1]} : vector<8x96xf32> to vector<8x32xf32>
    %260 = vector.extract_strided_slice %250 {offsets = [0, 32], sizes = [8, 32], strides = [1, 1]} : vector<8x96xf32> to vector<8x32xf32>
    %261 = arith.addf %259, %260 : vector<8x32xf32>
    %262 = arith.negf %261 : vector<8x32xf32>
    %263 = math.exp %262 : vector<8x32xf32>
    %cst_61 = arith.constant 1.000000e+00 : f32
    %264 = vector.broadcast %cst_61 : f32 to vector<8x32xf32>
    %265 = arith.addf %264, %263 : vector<8x32xf32>
    %266 = arith.divf %264, %265 : vector<8x32xf32>
    %267 = vector.extract_strided_slice %246 {offsets = [0, 64], sizes = [8, 32], strides = [1, 1]} : vector<8x96xf32> to vector<8x32xf32>
    %268 = vector.extract_strided_slice %250 {offsets = [0, 64], sizes = [8, 32], strides = [1, 1]} : vector<8x96xf32> to vector<8x32xf32>
    %269 = arith.mulf %258, %268 : vector<8x32xf32>
    %270 = arith.addf %267, %269 : vector<8x32xf32>
    %271 = math.tanh %270 : vector<8x32xf32>
    %cst_62 = arith.constant 1.000000e+00 : f32
    %272 = vector.broadcast %cst_62 : f32 to vector<8x32xf32>
    %273 = arith.subf %272, %266 : vector<8x32xf32>
    %274 = arith.mulf %273, %271 : vector<8x32xf32>
    %275 = arith.mulf %266, %243 : vector<8x32xf32>
    %276 = arith.addf %274, %275 : vector<8x32xf32>
    %c8_i32 = arith.constant 8 : i32
    %c0_63 = arith.constant 0 : index
    %c0_64 = arith.constant 0 : index
    %c0_65 = arith.constant 0 : index
    %277 = vector.load %arg2[%c0_63, %c0_64, %c0_65] : memref<8x8x32xbf16, #tpu.memory_space<vmem>>, vector<8x8x32xbf16>
    %278 = arith.extf %277 : vector<8x8x32xbf16> to vector<8x8x32xf32>
    %279 = vector.shape_cast %277 : vector<8x8x32xbf16> to vector<64x32xbf16>
    %c0_66 = arith.constant 0 : index
    %c0_67 = arith.constant 0 : index
    %280 = vector.load %arg9[%c0_66, %c0_67] : memref<32x32xbf16, #tpu.memory_space<vmem>>, vector<32x32xbf16>
    %cst_68 = arith.constant dense<0.000000e+00> : vector<64x32xf32>
    %281 = tpu.matmul %279, %280, %cst_68 {dimension_numbers = #tpu.dot_dimension_numbers<[1], [0], [0], [1], [0, 0, 1, 1], [], []>} : vector<64x32xbf16>, vector<32x32xbf16>, vector<64x32xf32> -> vector<64x32xf32>
    %c0_69 = arith.constant 0 : index
    %c0_70 = arith.constant 0 : index
    %282 = vector.load %arg10[%c0_69, %c0_70] : memref<1x32xf32, #tpu.memory_space<vmem>>, vector<1x32xf32>
    %283 = vector.broadcast %282 : vector<1x32xf32> to vector<64x32xf32>
    %284 = arith.addf %281, %283 : vector<64x32xf32>
    %cst_71 = arith.constant 0.000000e+00 : f32
    %285 = vector.broadcast %cst_71 : f32 to vector<64x32xf32>
    %286 = arith.maximumf %284, %285 : vector<64x32xf32>
    %287 = arith.truncf %276 : vector<8x32xf32> to vector<8x32xbf16>
    %c0_72 = arith.constant 0 : index
    %c0_73 = arith.constant 0 : index
    %288 = vector.load %arg11[%c0_72, %c0_73] : memref<32x32xbf16, #tpu.memory_space<vmem>>, vector<32x32xbf16>
    %cst_74 = arith.constant dense<0.000000e+00> : vector<8x32xf32>
    %289 = tpu.matmul %287, %288, %cst_74 {dimension_numbers = #tpu.dot_dimension_numbers<[1], [0], [0], [1], [0, 0, 1, 1], [], []>} : vector<8x32xbf16>, vector<32x32xbf16>, vector<8x32xf32> -> vector<8x32xf32>
    %c0_75 = arith.constant 0 : index
    %c0_76 = arith.constant 0 : index
    %290 = vector.load %arg12[%c0_75, %c0_76] : memref<1x32xf32, #tpu.memory_space<vmem>>, vector<1x32xf32>
    %291 = vector.broadcast %290 : vector<1x32xf32> to vector<8x32xf32>
    %292 = arith.addf %289, %291 : vector<8x32xf32>
    %cst_77 = arith.constant 0.000000e+00 : f32
    %293 = vector.broadcast %cst_77 : f32 to vector<8x32xf32>
    %294 = arith.maximumf %292, %293 : vector<8x32xf32>
    %295 = vector.shape_cast %286 : vector<64x32xf32> to vector<8x8x32xf32>
    %296 = vector.shape_cast %294 : vector<8x32xf32> to vector<8x1x32xf32>
    %297 = vector.broadcast %296 : vector<8x1x32xf32> to vector<8x8x32xf32>
    %298 = arith.mulf %295, %297 : vector<8x8x32xf32>
    %c0_78 = arith.constant 0 : index
    %c0_79 = arith.constant 0 : index
    %299 = vector.load %arg13[%c0_78, %c0_79] : memref<1x32xf32, #tpu.memory_space<vmem>>, vector<1x32xf32>
    %300 = vector.shape_cast %299 : vector<1x32xf32> to vector<1x1x32xf32>
    %301 = vector.broadcast %300 : vector<1x1x32xf32> to vector<8x8x32xf32>
    %302 = arith.mulf %298, %301 : vector<8x8x32xf32>
    %cst_80 = arith.constant dense<0.000000e+00> : vector<8x8xf32>
    %303 = vector.multi_reduction <add>, %302, %cst_80 [2] : vector<8x8x32xf32> to vector<8x8xf32>
    %c0_81 = arith.constant 0 : index
    %c0_82 = arith.constant 0 : index
    %304 = vector.load %arg14[%c0_81, %c0_82] : memref<1x1xf32, #tpu.memory_space<vmem>>, vector<1x1xf32>
    %305 = vector.broadcast %304 : vector<1x1xf32> to vector<8x8xf32>
    %306 = arith.addf %303, %305 : vector<8x8xf32>
    %cst_83 = arith.constant dense<0xFF800000> : vector<8xf32>
    %307 = vector.multi_reduction <maximumf>, %306, %cst_83 [1] : vector<8x8xf32> to vector<8xf32>
    %308 = vector.shape_cast %307 : vector<8xf32> to vector<8x1xf32>
    %309 = vector.broadcast %308 : vector<8x1xf32> to vector<8x8xf32>
    %310 = arith.subf %306, %309 : vector<8x8xf32>
    %311 = math.exp %310 : vector<8x8xf32>
    %cst_84 = arith.constant dense<0.000000e+00> : vector<8xf32>
    %312 = vector.multi_reduction <add>, %311, %cst_84 [1] : vector<8x8xf32> to vector<8xf32>
    %313 = vector.shape_cast %312 : vector<8xf32> to vector<8x1xf32>
    %314 = tpu.reciprocal %313 {approx = true} : vector<8x1xf32> -> vector<8x1xf32>
    %315 = vector.broadcast %314 : vector<8x1xf32> to vector<8x8xf32>
    %316 = arith.mulf %311, %315 : vector<8x8xf32>
    %317 = vector.shape_cast %316 : vector<8x8xf32> to vector<8x8x1xf32>
    %318 = vector.broadcast %317 : vector<8x8x1xf32> to vector<8x8x32xf32>
    %319 = arith.mulf %318, %278 : vector<8x8x32xf32>
    %320 = arith.truncf %319 : vector<8x8x32xf32> to vector<8x8x32xbf16>
    %321 = vector.shape_cast %320 : vector<8x8x32xbf16> to vector<64x32xbf16>
    %c0_85 = arith.constant 0 : index
    %c0_86 = arith.constant 0 : index
    %322 = vector.load %arg15[%c0_85, %c0_86] : memref<32x32xbf16, #tpu.memory_space<vmem>>, vector<32x32xbf16>
    %cst_87 = arith.constant dense<0.000000e+00> : vector<64x32xf32>
    %323 = tpu.matmul %321, %322, %cst_87 {dimension_numbers = #tpu.dot_dimension_numbers<[1], [0], [0], [1], [0, 0, 1, 1], [], []>} : vector<64x32xbf16>, vector<32x32xbf16>, vector<64x32xf32> -> vector<64x32xf32>
    %c0_88 = arith.constant 0 : index
    %c0_89 = arith.constant 0 : index
    %324 = vector.load %arg16[%c0_88, %c0_89] : memref<1x32xf32, #tpu.memory_space<vmem>>, vector<1x32xf32>
    %325 = vector.broadcast %324 : vector<1x32xf32> to vector<64x32xf32>
    %326 = arith.addf %323, %325 : vector<64x32xf32>
    %cst_90 = arith.constant 0.000000e+00 : f32
    %327 = vector.broadcast %cst_90 : f32 to vector<64x32xf32>
    %328 = arith.maximumf %326, %327 : vector<64x32xf32>
    %c0_91 = arith.constant 0 : index
    %c0_92 = arith.constant 0 : index
    %329 = vector.load %arg17[%c0_91, %c0_92] : memref<32x32xbf16, #tpu.memory_space<vmem>>, vector<32x32xbf16>
    %cst_93 = arith.constant dense<0.000000e+00> : vector<64x32xf32>
    %330 = tpu.matmul %321, %329, %cst_93 {dimension_numbers = #tpu.dot_dimension_numbers<[1], [0], [0], [1], [0, 0, 1, 1], [], []>} : vector<64x32xbf16>, vector<32x32xbf16>, vector<64x32xf32> -> vector<64x32xf32>
    %c0_94 = arith.constant 0 : index
    %c0_95 = arith.constant 0 : index
    %331 = vector.load %arg18[%c0_94, %c0_95] : memref<1x32xf32, #tpu.memory_space<vmem>>, vector<1x32xf32>
    %332 = vector.broadcast %331 : vector<1x32xf32> to vector<64x32xf32>
    %333 = arith.addf %330, %332 : vector<64x32xf32>
    %cst_96 = arith.constant 0.000000e+00 : f32
    %334 = vector.broadcast %cst_96 : f32 to vector<64x32xf32>
    %335 = arith.maximumf %333, %334 : vector<64x32xf32>
    %c0_97 = arith.constant 0 : index
    %c0_98 = arith.constant 0 : index
    %c0_99 = arith.constant 0 : index
    %336 = vector.load %arg3[%c0_97, %c0_98, %c0_99] : memref<8x8x8xf32, #tpu.memory_space<vmem>>, vector<8x8x8xf32>
    %c0_100 = arith.constant 0 : index
    %c0_101 = arith.constant 0 : index
    %337 = vector.load %arg19[%c0_100, %c0_101] : memref<1x8xf32, #tpu.memory_space<vmem>>, vector<1x8xf32>
    %338 = vector.shape_cast %337 : vector<1x8xf32> to vector<1x1x8xf32>
    %339 = vector.broadcast %338 : vector<1x1x8xf32> to vector<8x8x8xf32>
    %340 = arith.mulf %336, %339 : vector<8x8x8xf32>
    %341 = arith.truncf %340 : vector<8x8x8xf32> to vector<8x8x8xbf16>
    %342 = vector.shape_cast %335 : vector<64x32xf32> to vector<8x8x32xf32>
    %343 = arith.truncf %342 : vector<8x8x32xf32> to vector<8x8x32xbf16>
    "tpu.trace_start"() <{level = 10 : i32, message = "bkj,bjd->bkd"}> : () -> ()
    %cst_102 = arith.constant dense<0.000000e+00> : vector<8x8x32xf32>
    %344 = tpu.matmul %341, %343, %cst_102 {dimension_numbers = #tpu.dot_dimension_numbers<[2], [1], [1], [2], [0, 0, 0, 1, 1, 2], [0], [0]>} : vector<8x8x8xbf16>, vector<8x8x32xbf16>, vector<8x8x32xf32> -> vector<8x8x32xf32>
    "tpu.trace_stop"() : () -> ()
    %345 = vector.shape_cast %328 : vector<64x32xf32> to vector<8x8x32xf32>
    %346 = arith.mulf %345, %344 : vector<8x8x32xf32>
    %cst_103 = arith.constant dense<0.000000e+00> : vector<8x8xf32>
    %347 = vector.multi_reduction <add>, %346, %cst_103 [2] : vector<8x8x32xf32> to vector<8x8xf32>
    %cst_104 = arith.constant 0.176776692 : f32
    %348 = vector.broadcast %cst_104 : f32 to vector<8x8xf32>
    %349 = arith.mulf %347, %348 : vector<8x8xf32>
    %c0_105 = arith.constant 0 : index
    %c0_106 = arith.constant 0 : index
    %350 = vector.load %arg20[%c0_105, %c0_106] : memref<1x1xf32, #tpu.memory_space<vmem>>, vector<1x1xf32>
    %351 = vector.broadcast %350 : vector<1x1xf32> to vector<8x8xf32>
    %352 = arith.addf %349, %351 : vector<8x8xf32>
    %353 = arith.negf %352 : vector<8x8xf32>
    %354 = math.exp %353 : vector<8x8xf32>
    %cst_107 = arith.constant 1.000000e+00 : f32
    %355 = vector.broadcast %cst_107 : f32 to vector<8x8xf32>
    %356 = arith.addf %355, %354 : vector<8x8xf32>
    %357 = arith.divf %355, %356 : vector<8x8xf32>
    %c0_108 = arith.constant 0 : index
    %358 = memref.load %arg4[%c0_108] : memref<1xf32, #tpu.memory_space<smem>>
    %359 = vector.broadcast %358 : f32 to vector<8x8xf32>
    %360 = arith.cmpf ogt, %357, %359 : vector<8x8xf32>
    %cst_109 = arith.constant 0.000000e+00 : f32
    %361 = vector.broadcast %cst_109 : f32 to vector<8x8xf32>
    %362 = arith.select %360, %357, %361 : vector<8x8xi1>, vector<8x8xf32>
    %cst_110 = arith.constant dense<0.000000e+00> : vector<8xf32>
    %363 = vector.multi_reduction <add>, %362, %cst_110 [1] : vector<8x8xf32> to vector<8xf32>
    %364 = vector.shape_cast %363 : vector<8xf32> to vector<8x1xf32>
    %365 = tpu.transpose %364, [1, 0] : vector<8x1xf32> -> vector<1x8xf32>
    %366 = vector.shape_cast %365 : vector<1x8xf32> to vector<1x1x8xf32>
    %c0_111 = arith.constant 0 : index
    %c0_112 = arith.constant 0 : index
    %c0_113 = arith.constant 0 : index
    %367 = vector.load %arg21[%c0_111, %c0_112, %c0_113] : memref<1x1x8xf32, #tpu.memory_space<vmem>>, vector<1x1x8xf32>
    tpu.vector_store %arg21[%c0_111, %c0_112, %c0_113], %366 {strides = array<i32>} : memref<1x1x8xf32, #tpu.memory_space<vmem>>, vector<1x1x8xf32>,
    return
  }
  func.func @transform_0(%arg0: i32) -> (i32, i32, i32, i32) {
    %c0_i32 = arith.constant 0 : i32
    %c0_i32_0 = arith.constant 0 : i32
    %c0_i32_1 = arith.constant 0 : i32
    %c0_i32_2 = arith.constant 0 : i32
    return %arg0, %c0_i32, %c0_i32_0, %c0_i32_1 : i32, i32, i32, i32
  }
  func.func @transform_1(%arg0: i32) -> (i32, i32, i32) {
    %c0_i32 = arith.constant 0 : i32
    %c0_i32_0 = arith.constant 0 : i32
    %c0_i32_1 = arith.constant 0 : i32
    return %arg0, %c0_i32, %c0_i32_0 : i32, i32, i32
  }
  func.func @transform_2(%arg0: i32) -> (i32, i32, i32) {
    %c0_i32 = arith.constant 0 : i32
    %c0_i32_0 = arith.constant 0 : i32
    %c0_i32_1 = arith.constant 0 : i32
    return %arg0, %c0_i32, %c0_i32_0 : i32, i32, i32
  }
  func.func @transform_3(%arg0: i32) -> i32 {
    %c0_i32 = arith.constant 0 : i32
    %c0_i32_0 = arith.constant 0 : i32
    return %c0_i32 : i32
  }
  func.func @transform_4(%arg0: i32) -> (i32, i32) {
    %c0_i32 = arith.constant 0 : i32
    %c0_i32_0 = arith.constant 0 : i32
    %c0_i32_1 = arith.constant 0 : i32
    return %c0_i32, %c0_i32_0 : i32, i32
  }
  func.func @transform_5(%arg0: i32) -> (i32, i32) {
    %c0_i32 = arith.constant 0 : i32
    %c0_i32_0 = arith.constant 0 : i32
    %c0_i32_1 = arith.constant 0 : i32
    return %c0_i32, %c0_i32_0 : i32, i32
  }
  func.func @transform_6(%arg0: i32) -> (i32, i32) {
    %c0_i32 = arith.constant 0 : i32
    %c0_i32_0 = arith.constant 0 : i32
    %c0_i32_1 = arith.constant 0 : i32
    return %c0_i32, %c0_i32_0 : i32, i32
  }
  func.func @transform_7(%arg0: i32) -> (i32, i32) {
    %c0_i32 = arith.constant 0 : i32
    %c0_i32_0 = arith.constant 0 : i32
    %c0_i32_1 = arith.constant 0 : i32
    return %c0_i32, %c0_i32_0 : i32, i32
  }
  func.func @transform_8(%arg0: i32) -> (i32, i32) {
    %c0_i32 = arith.constant 0 : i32
    %c0_i32_0 = arith.constant 0 : i32
    %c0_i32_1 = arith.constant 0 : i32
    return %c0_i32, %c0_i32_0 : i32, i32
  }
  func.func @transform_9(%arg0: i32) -> (i32, i32) {
    %c0_i32 = arith.constant 0 : i32
    %c0_i32_0 = arith.constant 0 : i32
    %c0_i32_1 = arith.constant 0 : i32
    return %c0_i32, %c0_i32_0 : i32, i32
  }
  func.func @transform_10(%arg0: i32) -> (i32, i32) {
    %c0_i32 = arith.constant 0 : i32
    %c0_i32_0 = arith.constant 0 : i32
    %c0_i32_1 = arith.constant 0 : i32
    return %c0_i32, %c0_i32_0 : i32, i32
  }
  func.func @transform_11(%arg0: i32) -> (i32, i32) {
    %c0_i32 = arith.constant 0 : i32
    %c0_i32_0 = arith.constant 0 : i32
    %c0_i32_1 = arith.constant 0 : i32
    return %c0_i32, %c0_i32_0 : i32, i32
  }
  func.func @transform_12(%arg0: i32) -> (i32, i32) {
    %c0_i32 = arith.constant 0 : i32
    %c0_i32_0 = arith.constant 0 : i32
    %c0_i32_1 = arith.constant 0 : i32
    return %c0_i32, %c0_i32_0 : i32, i32
  }
  func.func @transform_13(%arg0: i32) -> (i32, i32) {
    %c0_i32 = arith.constant 0 : i32
    %c0_i32_0 = arith.constant 0 : i32
    %c0_i32_1 = arith.constant 0 : i32
    return %c0_i32, %c0_i32_0 : i32, i32
  }
  func.func @transform_14(%arg0: i32) -> (i32, i32) {
    %c0_i32 = arith.constant 0 : i32
    %c0_i32_0 = arith.constant 0 : i32
    %c0_i32_1 = arith.constant 0 : i32
    return %c0_i32, %c0_i32_0 : i32, i32
  }
  func.func @transform_15(%arg0: i32) -> (i32, i32) {
    %c0_i32 = arith.constant 0 : i32
    %c0_i32_0 = arith.constant 0 : i32
    %c0_i32_1 = arith.constant 0 : i32
    return %c0_i32, %c0_i32_0 : i32, i32
  }
  func.func @transform_16(%arg0: i32) -> (i32, i32) {
    %c0_i32 = arith.constant 0 : i32
    %c0_i32_0 = arith.constant 0 : i32
    %c0_i32_1 = arith.constant 0 : i32
    return %c0_i32, %c0_i32_0 : i32, i32
  }
  func.func @transform_17(%arg0: i32) -> (i32, i32) {
    %c0_i32 = arith.constant 0 : i32
    %c0_i32_0 = arith.constant 0 : i32
    %c0_i32_1 = arith.constant 0 : i32
    return %c0_i32, %c0_i32_0 : i32, i32
  }
  func.func @transform_18(%arg0: i32) -> (i32, i32) {
    %c0_i32 = arith.constant 0 : i32
    %c0_i32_0 = arith.constant 0 : i32
    %c0_i32_1 = arith.constant 0 : i32
    return %c0_i32, %c0_i32_0 : i32, i32
  }
  func.func @transform_19(%arg0: i32) -> (i32, i32) {
    %c0_i32 = arith.constant 0 : i32
    %c0_i32_0 = arith.constant 0 : i32
    %c0_i32_1 = arith.constant 0 : i32
    return %c0_i32, %c0_i32_0 : i32, i32
  }
  func.func @transform_20(%arg0: i32) -> (i32, i32, i32) {
    %c0_i32 = arith.constant 0 : i32
    %c0_i32_0 = arith.constant 0 : i32
    %c0_i32_1 = arith.constant 0 : i32
    return %arg0, %c0_i32, %c0_i32_0 : i32, i32, i32
  }
}

module attributes {stable_mosaic.version = 11 : i64} {
  func.func @_two_way_kernel(%arg0: i32, %arg1: memref<1x8x8x384xbf16, #tpu.memory_space<vmem>>, %arg2: memref<8x8x32xbf16, #tpu.memory_space<vmem>>, %arg3: memref<8x8x8xf32, #tpu.memory_space<vmem>>, %arg4: memref<1xf32, #tpu.memory_space<smem>>, %arg5: memref<384x96xbf16, #tpu.memory_space<vmem>>, %arg6: memref<32x96xbf16, #tpu.memory_space<vmem>>, %arg7: memref<1x96xf32, #tpu.memory_space<vmem>>, %arg8: memref<1x96xf32, #tpu.memory_space<vmem>>, %arg9: memref<32x32xbf16, #tpu.memory_space<vmem>>, %arg10: memref<1x32xf32, #tpu.memory_space<vmem>>, %arg11: memref<32x32xbf16, #tpu.memory_space<vmem>>, %arg12: memref<1x32xf32, #tpu.memory_space<vmem>>, %arg13: memref<1x32xf32, #tpu.memory_space<vmem>>, %arg14: memref<1x1xf32, #tpu.memory_space<vmem>>, %arg15: memref<32x32xbf16, #tpu.memory_space<vmem>>, %arg16: memref<1x32xf32, #tpu.memory_space<vmem>>, %arg17: memref<32x32xbf16, #tpu.memory_space<vmem>>, %arg18: memref<1x32xf32, #tpu.memory_space<vmem>>, %arg19: memref<1x8xf32, #tpu.memory_space<vmem>>, %arg20: memref<1x1xf32, #tpu.memory_space<vmem>>, %arg21: memref<1x1x8xf32, #tpu.memory_space<vmem>>, %arg22: memref<8x8x96xf32, #tpu.memory_space<vmem>>) attributes {dimension_semantics = [#tpu.dimension_semantics<parallel>], iteration_bounds = array<i64: 1>, scalar_prefetch = 0 : i64, scratch_operands = 1 : i64, tpu.core_type = #tpu.core_type<tc>, window_params = [{transform_indices = @transform_0, window_bounds = array<i64: 1, 8, 8, 384>}, {transform_indices = @transform_1, window_bounds = array<i64: 8, 8, 32>}, {transform_indices = @transform_2, window_bounds = array<i64: 8, 8, 8>}, {transform_indices = @transform_3, window_bounds = array<i64: 1>}, {pipeline_mode = #tpu.pipeline_mode<synchronous>, transform_indices = @transform_4, window_bounds = array<i64: 384, 96>}, {pipeline_mode = #tpu.pipeline_mode<synchronous>, transform_indices = @transform_5, window_bounds = array<i64: 32, 96>}, {pipeline_mode = #tpu.pipeline_mode<synchronous>, transform_indices = @transform_6, window_bounds = array<i64: 1, 96>}, {pipeline_mode = #tpu.pipeline_mode<synchronous>, transform_indices = @transform_7, window_bounds = array<i64: 1, 96>}, {pipeline_mode = #tpu.pipeline_mode<synchronous>, transform_indices = @transform_8, window_bounds = array<i64: 32, 32>}, {pipeline_mode = #tpu.pipeline_mode<synchronous>, transform_indices = @transform_9, window_bounds = array<i64: 1, 32>}, {pipeline_mode = #tpu.pipeline_mode<synchronous>, transform_indices = @transform_10, window_bounds = array<i64: 32, 32>}, {pipeline_mode = #tpu.pipeline_mode<synchronous>, transform_indices = @transform_11, window_bounds = array<i64: 1, 32>}, {pipeline_mode = #tpu.pipeline_mode<synchronous>, transform_indices = @transform_12, window_bounds = array<i64: 1, 32>}, {pipeline_mode = #tpu.pipeline_mode<synchronous>, transform_indices = @transform_13, window_bounds = array<i64: 1, 1>}, {pipeline_mode = #tpu.pipeline_mode<synchronous>, transform_indices = @transform_14, window_bounds = array<i64: 32, 32>}, {pipeline_mode = #tpu.pipeline_mode<synchronous>, transform_indices = @transform_15, window_bounds = array<i64: 1, 32>}, {pipeline_mode = #tpu.pipeline_mode<synchronous>, transform_indices = @transform_16, window_bounds = array<i64: 32, 32>}, {pipeline_mode = #tpu.pipeline_mode<synchronous>, transform_indices = @transform_17, window_bounds = array<i64: 1, 32>}, {pipeline_mode = #tpu.pipeline_mode<synchronous>, transform_indices = @transform_18, window_bounds = array<i64: 1, 8>}, {pipeline_mode = #tpu.pipeline_mode<synchronous>, transform_indices = @transform_19, window_bounds = array<i64: 1, 1>}, {transform_indices = @transform_20, window_bounds = array<i64: 1, 1, 8>}]} {
    %c0 = arith.constant 0 : index
    %c0_0 = arith.constant 0 : index
    %c0_1 = arith.constant 0 : index
    %c0_2 = arith.constant 0 : index
    %0 = vector.load %arg1[%c0, %c0_0, %c0_1, %c0_2] : memref<1x8x8x384xbf16, #tpu.memory_space<vmem>>, vector<1x8x8x384xbf16>
    %1 = vector.shape_cast %0 : vector<1x8x8x384xbf16> to vector<8x8x384xbf16>
    %2 = vector.shape_cast %1 : vector<8x8x384xbf16> to vector<64x384xbf16>
    %c0_3 = arith.constant 0 : index
    %c0_4 = arith.constant 0 : index
    %3 = vector.load %arg5[%c0_3, %c0_4] : memref<384x96xbf16, #tpu.memory_space<vmem>>, vector<384x96xbf16>
    %cst = arith.constant dense<0.000000e+00> : vector<64x96xf32>
    %4 = tpu.matmul %2, %3, %cst {dimension_numbers = #tpu.dot_dimension_numbers<[1], [0], [0], [1], [0, 0, 1, 1], [], []>} : vector<64x384xbf16>, vector<384x96xbf16>, vector<64x96xf32> -> vector<64x96xf32>
    %c0_5 = arith.constant 0 : index
    %c0_6 = arith.constant 0 : index
    %5 = vector.load %arg7[%c0_5, %c0_6] : memref<1x96xf32, #tpu.memory_space<vmem>>, vector<1x96xf32>
    %6 = vector.broadcast %5 : vector<1x96xf32> to vector<64x96xf32>
    %7 = arith.addf %4, %6 : vector<64x96xf32>
    %8 = vector.shape_cast %7 : vector<64x96xf32> to vector<8x8x96xf32>
    %c0_7 = arith.constant 0 : index
    %c0_8 = arith.constant 0 : index
    %c0_9 = arith.constant 0 : index
    %9 = vector.load %arg22[%c0_7, %c0_8, %c0_9] : memref<8x8x96xf32, #tpu.memory_space<vmem>>, vector<8x8x96xf32>
    tpu.vector_store %arg22[%c0_7, %c0_8, %c0_9], %8 {strides = array<i32>} : memref<8x8x96xf32, #tpu.memory_space<vmem>>, vector<8x8x96xf32>,
    %c0_10 = arith.constant 0 : index
    %c0_11 = arith.constant 0 : index
    %10 = vector.load %arg6[%c0_10, %c0_11] : memref<32x96xbf16, #tpu.memory_space<vmem>>, vector<32x96xbf16>
    %c0_12 = arith.constant 0 : index
    %c0_13 = arith.constant 0 : index
    %11 = vector.load %arg8[%c0_12, %c0_13] : memref<1x96xf32, #tpu.memory_space<vmem>>, vector<1x96xf32>
    %cst_14 = arith.constant 0.000000e+00 : f32
    %12 = vector.broadcast %cst_14 : f32 to vector<8x32xf32>
    %c0_i32 = arith.constant 0 : i32
    %13 = arith.index_cast %c0_i32 : i32 to index
    %c0_15 = arith.constant 0 : index
    %c0_16 = arith.constant 0 : index
    %14 = vector.load %arg22[%13, %c0_15, %c0_16] : memref<8x8x96xf32, #tpu.memory_space<vmem>>, vector<1x8x96xf32>
    %15 = vector.shape_cast %14 : vector<1x8x96xf32> to vector<8x96xf32>
    %16 = arith.truncf %12 : vector<8x32xf32> to vector<8x32xbf16>
    %cst_17 = arith.constant dense<0.000000e+00> : vector<8x96xf32>
    %17 = tpu.matmul %16, %10, %cst_17 {dimension_numbers = #tpu.dot_dimension_numbers<[1], [0], [0], [1], [0, 0, 1, 1], [], []>} : vector<8x32xbf16>, vector<32x96xbf16>, vector<8x96xf32> -> vector<8x96xf32>
    %18 = vector.broadcast %11 : vector<1x96xf32> to vector<8x96xf32>
    %19 = arith.addf %17, %18 : vector<8x96xf32>
    %20 = vector.extract_strided_slice %15 {offsets = [0, 0], sizes = [8, 32], strides = [1, 1]} : vector<8x96xf32> to vector<8x32xf32>
    %21 = vector.extract_strided_slice %19 {offsets = [0, 0], sizes = [8, 32], strides = [1, 1]} : vector<8x96xf32> to vector<8x32xf32>
    %22 = arith.addf %20, %21 : vector<8x32xf32>
    %23 = arith.negf %22 : vector<8x32xf32>
    %24 = math.exp %23 : vector<8x32xf32>
    %cst_18 = arith.constant 1.000000e+00 : f32
    %25 = vector.broadcast %cst_18 : f32 to vector<8x32xf32>
    %26 = arith.addf %25, %24 : vector<8x32xf32>
    %27 = arith.divf %25, %26 : vector<8x32xf32>
    %28 = vector.extract_strided_slice %15 {offsets = [0, 32], sizes = [8, 32], strides = [1, 1]} : vector<8x96xf32> to vector<8x32xf32>
    %29 = vector.extract_strided_slice %19 {offsets = [0, 32], sizes = [8, 32], strides = [1, 1]} : vector<8x96xf32> to vector<8x32xf32>
    %30 = arith.addf %28, %29 : vector<8x32xf32>
    %31 = arith.negf %30 : vector<8x32xf32>
    %32 = math.exp %31 : vector<8x32xf32>
    %cst_19 = arith.constant 1.000000e+00 : f32
    %33 = vector.broadcast %cst_19 : f32 to vector<8x32xf32>
    %34 = arith.addf %33, %32 : vector<8x32xf32>
    %35 = arith.divf %33, %34 : vector<8x32xf32>
    %36 = vector.extract_strided_slice %15 {offsets = [0, 64], sizes = [8, 32], strides = [1, 1]} : vector<8x96xf32> to vector<8x32xf32>
    %37 = vector.extract_strided_slice %19 {offsets = [0, 64], sizes = [8, 32], strides = [1, 1]} : vector<8x96xf32> to vector<8x32xf32>
    %38 = arith.mulf %27, %37 : vector<8x32xf32>
    %39 = arith.addf %36, %38 : vector<8x32xf32>
    %40 = math.tanh %39 : vector<8x32xf32>
    %cst_20 = arith.constant 1.000000e+00 : f32
    %41 = vector.broadcast %cst_20 : f32 to vector<8x32xf32>
    %42 = arith.subf %41, %35 : vector<8x32xf32>
    %43 = arith.mulf %42, %40 : vector<8x32xf32>
    %44 = arith.mulf %35, %12 : vector<8x32xf32>
    %45 = arith.addf %43, %44 : vector<8x32xf32>
    %c1_i32 = arith.constant 1 : i32
    %46 = arith.index_cast %c1_i32 : i32 to index
    %c0_21 = arith.constant 0 : index
    %c0_22 = arith.constant 0 : index
    %47 = vector.load %arg22[%46, %c0_21, %c0_22] : memref<8x8x96xf32, #tpu.memory_space<vmem>>, vector<1x8x96xf32>
    %48 = vector.shape_cast %47 : vector<1x8x96xf32> to vector<8x96xf32>
    %49 = arith.truncf %45 : vector<8x32xf32> to vector<8x32xbf16>
    %cst_23 = arith.constant dense<0.000000e+00> : vector<8x96xf32>
    %50 = tpu.matmul %49, %10, %cst_23 {dimension_numbers = #tpu.dot_dimension_numbers<[1], [0], [0], [1], [0, 0, 1, 1], [], []>} : vector<8x32xbf16>, vector<32x96xbf16>, vector<8x96xf32> -> vector<8x96xf32>
    %51 = vector.broadcast %11 : vector<1x96xf32> to vector<8x96xf32>
    %52 = arith.addf %50, %51 : vector<8x96xf32>
    %53 = vector.extract_strided_slice %48 {offsets = [0, 0], sizes = [8, 32], strides = [1, 1]} : vector<8x96xf32> to vector<8x32xf32>
    %54 = vector.extract_strided_slice %52 {offsets = [0, 0], sizes = [8, 32], strides = [1, 1]} : vector<8x96xf32> to vector<8x32xf32>
    %55 = arith.addf %53, %54 : vector<8x32xf32>
    %56 = arith.negf %55 : vector<8x32xf32>
    %57 = math.exp %56 : vector<8x32xf32>
    %cst_24 = arith.constant 1.000000e+00 : f32
    %58 = vector.broadcast %cst_24 : f32 to vector<8x32xf32>
    %59 = arith.addf %58, %57 : vector<8x32xf32>
    %60 = arith.divf %58, %59 : vector<8x32xf32>
    %61 = vector.extract_strided_slice %48 {offsets = [0, 32], sizes = [8, 32], strides = [1, 1]} : vector<8x96xf32> to vector<8x32xf32>
    %62 = vector.extract_strided_slice %52 {offsets = [0, 32], sizes = [8, 32], strides = [1, 1]} : vector<8x96xf32> to vector<8x32xf32>
    %63 = arith.addf %61, %62 : vector<8x32xf32>
    %64 = arith.negf %63 : vector<8x32xf32>
    %65 = math.exp %64 : vector<8x32xf32>
    %cst_25 = arith.constant 1.000000e+00 : f32
    %66 = vector.broadcast %cst_25 : f32 to vector<8x32xf32>
    %67 = arith.addf %66, %65 : vector<8x32xf32>
    %68 = arith.divf %66, %67 : vector<8x32xf32>
    %69 = vector.extract_strided_slice %48 {offsets = [0, 64], sizes = [8, 32], strides = [1, 1]} : vector<8x96xf32> to vector<8x32xf32>
    %70 = vector.extract_strided_slice %52 {offsets = [0, 64], sizes = [8, 32], strides = [1, 1]} : vector<8x96xf32> to vector<8x32xf32>
    %71 = arith.mulf %60, %70 : vector<8x32xf32>
    %72 = arith.addf %69, %71 : vector<8x32xf32>
    %73 = math.tanh %72 : vector<8x32xf32>
    %cst_26 = arith.constant 1.000000e+00 : f32
    %74 = vector.broadcast %cst_26 : f32 to vector<8x32xf32>
    %75 = arith.subf %74, %68 : vector<8x32xf32>
    %76 = arith.mulf %75, %73 : vector<8x32xf32>
    %77 = arith.mulf %68, %45 : vector<8x32xf32>
    %78 = arith.addf %76, %77 : vector<8x32xf32>
    %c2_i32 = arith.constant 2 : i32
    %79 = arith.index_cast %c2_i32 : i32 to index
    %c0_27 = arith.constant 0 : index
    %c0_28 = arith.constant 0 : index
    %80 = vector.load %arg22[%79, %c0_27, %c0_28] : memref<8x8x96xf32, #tpu.memory_space<vmem>>, vector<1x8x96xf32>
    %81 = vector.shape_cast %80 : vector<1x8x96xf32> to vector<8x96xf32>
    %82 = arith.truncf %78 : vector<8x32xf32> to vector<8x32xbf16>
    %cst_29 = arith.constant dense<0.000000e+00> : vector<8x96xf32>
    %83 = tpu.matmul %82, %10, %cst_29 {dimension_numbers = #tpu.dot_dimension_numbers<[1], [0], [0], [1], [0, 0, 1, 1], [], []>} : vector<8x32xbf16>, vector<32x96xbf16>, vector<8x96xf32> -> vector<8x96xf32>
    %84 = vector.broadcast %11 : vector<1x96xf32> to vector<8x96xf32>
    %85 = arith.addf %83, %84 : vector<8x96xf32>
    %86 = vector.extract_strided_slice %81 {offsets = [0, 0], sizes = [8, 32], strides = [1, 1]} : vector<8x96xf32> to vector<8x32xf32>
    %87 = vector.extract_strided_slice %85 {offsets = [0, 0], sizes = [8, 32], strides = [1, 1]} : vector<8x96xf32> to vector<8x32xf32>
    %88 = arith.addf %86, %87 : vector<8x32xf32>
    %89 = arith.negf %88 : vector<8x32xf32>
    %90 = math.exp %89 : vector<8x32xf32>
    %cst_30 = arith.constant 1.000000e+00 : f32
    %91 = vector.broadcast %cst_30 : f32 to vector<8x32xf32>
    %92 = arith.addf %91, %90 : vector<8x32xf32>
    %93 = arith.divf %91, %92 : vector<8x32xf32>
    %94 = vector.extract_strided_slice %81 {offsets = [0, 32], sizes = [8, 32], strides = [1, 1]} : vector<8x96xf32> to vector<8x32xf32>
    %95 = vector.extract_strided_slice %85 {offsets = [0, 32], sizes = [8, 32], strides = [1, 1]} : vector<8x96xf32> to vector<8x32xf32>
    %96 = arith.addf %94, %95 : vector<8x32xf32>
    %97 = arith.negf %96 : vector<8x32xf32>
    %98 = math.exp %97 : vector<8x32xf32>
    %cst_31 = arith.constant 1.000000e+00 : f32
    %99 = vector.broadcast %cst_31 : f32 to vector<8x32xf32>
    %100 = arith.addf %99, %98 : vector<8x32xf32>
    %101 = arith.divf %99, %100 : vector<8x32xf32>
    %102 = vector.extract_strided_slice %81 {offsets = [0, 64], sizes = [8, 32], strides = [1, 1]} : vector<8x96xf32> to vector<8x32xf32>
    %103 = vector.extract_strided_slice %85 {offsets = [0, 64], sizes = [8, 32], strides = [1, 1]} : vector<8x96xf32> to vector<8x32xf32>
    %104 = arith.mulf %93, %103 : vector<8x32xf32>
    %105 = arith.addf %102, %104 : vector<8x32xf32>
    %106 = math.tanh %105 : vector<8x32xf32>
    %cst_32 = arith.constant 1.000000e+00 : f32
    %107 = vector.broadcast %cst_32 : f32 to vector<8x32xf32>
    %108 = arith.subf %107, %101 : vector<8x32xf32>
    %109 = arith.mulf %108, %106 : vector<8x32xf32>
    %110 = arith.mulf %101, %78 : vector<8x32xf32>
    %111 = arith.addf %109, %110 : vector<8x32xf32>
    %c3_i32 = arith.constant 3 : i32
    %112 = arith.index_cast %c3_i32 : i32 to index
    %c0_33 = arith.constant 0 : index
    %c0_34 = arith.constant 0 : index
    %113 = vector.load %arg22[%112, %c0_33, %c0_34] : memref<8x8x96xf32, #tpu.memory_space<vmem>>, vector<1x8x96xf32>
    %114 = vector.shape_cast %113 : vector<1x8x96xf32> to vector<8x96xf32>
    %115 = arith.truncf %111 : vector<8x32xf32> to vector<8x32xbf16>
    %cst_35 = arith.constant dense<0.000000e+00> : vector<8x96xf32>
    %116 = tpu.matmul %115, %10, %cst_35 {dimension_numbers = #tpu.dot_dimension_numbers<[1], [0], [0], [1], [0, 0, 1, 1], [], []>} : vector<8x32xbf16>, vector<32x96xbf16>, vector<8x96xf32> -> vector<8x96xf32>
    %117 = vector.broadcast %11 : vector<1x96xf32> to vector<8x96xf32>
    %118 = arith.addf %116, %117 : vector<8x96xf32>
    %119 = vector.extract_strided_slice %114 {offsets = [0, 0], sizes = [8, 32], strides = [1, 1]} : vector<8x96xf32> to vector<8x32xf32>
    %120 = vector.extract_strided_slice %118 {offsets = [0, 0], sizes = [8, 32], strides = [1, 1]} : vector<8x96xf32> to vector<8x32xf32>
    %121 = arith.addf %119, %120 : vector<8x32xf32>
    %122 = arith.negf %121 : vector<8x32xf32>
    %123 = math.exp %122 : vector<8x32xf32>
    %cst_36 = arith.constant 1.000000e+00 : f32
    %124 = vector.broadcast %cst_36 : f32 to vector<8x32xf32>
    %125 = arith.addf %124, %123 : vector<8x32xf32>
    %126 = arith.divf %124, %125 : vector<8x32xf32>
    %127 = vector.extract_strided_slice %114 {offsets = [0, 32], sizes = [8, 32], strides = [1, 1]} : vector<8x96xf32> to vector<8x32xf32>
    %128 = vector.extract_strided_slice %118 {offsets = [0, 32], sizes = [8, 32], strides = [1, 1]} : vector<8x96xf32> to vector<8x32xf32>
    %129 = arith.addf %127, %128 : vector<8x32xf32>
    %130 = arith.negf %129 : vector<8x32xf32>
    %131 = math.exp %130 : vector<8x32xf32>
    %cst_37 = arith.constant 1.000000e+00 : f32
    %132 = vector.broadcast %cst_37 : f32 to vector<8x32xf32>
    %133 = arith.addf %132, %131 : vector<8x32xf32>
    %134 = arith.divf %132, %133 : vector<8x32xf32>
    %135 = vector.extract_strided_slice %114 {offsets = [0, 64], sizes = [8, 32], strides = [1, 1]} : vector<8x96xf32> to vector<8x32xf32>
    %136 = vector.extract_strided_slice %118 {offsets = [0, 64], sizes = [8, 32], strides = [1, 1]} : vector<8x96xf32> to vector<8x32xf32>
    %137 = arith.mulf %126, %136 : vector<8x32xf32>
    %138 = arith.addf %135, %137 : vector<8x32xf32>
    %139 = math.tanh %138 : vector<8x32xf32>
    %cst_38 = arith.constant 1.000000e+00 : f32
    %140 = vector.broadcast %cst_38 : f32 to vector<8x32xf32>
    %141 = arith.subf %140, %134 : vector<8x32xf32>
    %142 = arith.mulf %141, %139 : vector<8x32xf32>
    %143 = arith.mulf %134, %111 : vector<8x32xf32>
    %144 = arith.addf %142, %143 : vector<8x32xf32>
    %c4_i32 = arith.constant 4 : i32
    %145 = arith.index_cast %c4_i32 : i32 to index
    %c0_39 = arith.constant 0 : index
    %c0_40 = arith.constant 0 : index
    %146 = vector.load %arg22[%145, %c0_39, %c0_40] : memref<8x8x96xf32, #tpu.memory_space<vmem>>, vector<1x8x96xf32>
    %147 = vector.shape_cast %146 : vector<1x8x96xf32> to vector<8x96xf32>
    %148 = arith.truncf %144 : vector<8x32xf32> to vector<8x32xbf16>
    %cst_41 = arith.constant dense<0.000000e+00> : vector<8x96xf32>
    %149 = tpu.matmul %148, %10, %cst_41 {dimension_numbers = #tpu.dot_dimension_numbers<[1], [0], [0], [1], [0, 0, 1, 1], [], []>} : vector<8x32xbf16>, vector<32x96xbf16>, vector<8x96xf32> -> vector<8x96xf32>
    %150 = vector.broadcast %11 : vector<1x96xf32> to vector<8x96xf32>
    %151 = arith.addf %149, %150 : vector<8x96xf32>
    %152 = vector.extract_strided_slice %147 {offsets = [0, 0], sizes = [8, 32], strides = [1, 1]} : vector<8x96xf32> to vector<8x32xf32>
    %153 = vector.extract_strided_slice %151 {offsets = [0, 0], sizes = [8, 32], strides = [1, 1]} : vector<8x96xf32> to vector<8x32xf32>
    %154 = arith.addf %152, %153 : vector<8x32xf32>
    %155 = arith.negf %154 : vector<8x32xf32>
    %156 = math.exp %155 : vector<8x32xf32>
    %cst_42 = arith.constant 1.000000e+00 : f32
    %157 = vector.broadcast %cst_42 : f32 to vector<8x32xf32>
    %158 = arith.addf %157, %156 : vector<8x32xf32>
    %159 = arith.divf %157, %158 : vector<8x32xf32>
    %160 = vector.extract_strided_slice %147 {offsets = [0, 32], sizes = [8, 32], strides = [1, 1]} : vector<8x96xf32> to vector<8x32xf32>
    %161 = vector.extract_strided_slice %151 {offsets = [0, 32], sizes = [8, 32], strides = [1, 1]} : vector<8x96xf32> to vector<8x32xf32>
    %162 = arith.addf %160, %161 : vector<8x32xf32>
    %163 = arith.negf %162 : vector<8x32xf32>
    %164 = math.exp %163 : vector<8x32xf32>
    %cst_43 = arith.constant 1.000000e+00 : f32
    %165 = vector.broadcast %cst_43 : f32 to vector<8x32xf32>
    %166 = arith.addf %165, %164 : vector<8x32xf32>
    %167 = arith.divf %165, %166 : vector<8x32xf32>
    %168 = vector.extract_strided_slice %147 {offsets = [0, 64], sizes = [8, 32], strides = [1, 1]} : vector<8x96xf32> to vector<8x32xf32>
    %169 = vector.extract_strided_slice %151 {offsets = [0, 64], sizes = [8, 32], strides = [1, 1]} : vector<8x96xf32> to vector<8x32xf32>
    %170 = arith.mulf %159, %169 : vector<8x32xf32>
    %171 = arith.addf %168, %170 : vector<8x32xf32>
    %172 = math.tanh %171 : vector<8x32xf32>
    %cst_44 = arith.constant 1.000000e+00 : f32
    %173 = vector.broadcast %cst_44 : f32 to vector<8x32xf32>
    %174 = arith.subf %173, %167 : vector<8x32xf32>
    %175 = arith.mulf %174, %172 : vector<8x32xf32>
    %176 = arith.mulf %167, %144 : vector<8x32xf32>
    %177 = arith.addf %175, %176 : vector<8x32xf32>
    %c5_i32 = arith.constant 5 : i32
    %178 = arith.index_cast %c5_i32 : i32 to index
    %c0_45 = arith.constant 0 : index
    %c0_46 = arith.constant 0 : index
    %179 = vector.load %arg22[%178, %c0_45, %c0_46] : memref<8x8x96xf32, #tpu.memory_space<vmem>>, vector<1x8x96xf32>
    %180 = vector.shape_cast %179 : vector<1x8x96xf32> to vector<8x96xf32>
    %181 = arith.truncf %177 : vector<8x32xf32> to vector<8x32xbf16>
    %cst_47 = arith.constant dense<0.000000e+00> : vector<8x96xf32>
    %182 = tpu.matmul %181, %10, %cst_47 {dimension_numbers = #tpu.dot_dimension_numbers<[1], [0], [0], [1], [0, 0, 1, 1], [], []>} : vector<8x32xbf16>, vector<32x96xbf16>, vector<8x96xf32> -> vector<8x96xf32>
    %183 = vector.broadcast %11 : vector<1x96xf32> to vector<8x96xf32>
    %184 = arith.addf %182, %183 : vector<8x96xf32>
    %185 = vector.extract_strided_slice %180 {offsets = [0, 0], sizes = [8, 32], strides = [1, 1]} : vector<8x96xf32> to vector<8x32xf32>
    %186 = vector.extract_strided_slice %184 {offsets = [0, 0], sizes = [8, 32], strides = [1, 1]} : vector<8x96xf32> to vector<8x32xf32>
    %187 = arith.addf %185, %186 : vector<8x32xf32>
    %188 = arith.negf %187 : vector<8x32xf32>
    %189 = math.exp %188 : vector<8x32xf32>
    %cst_48 = arith.constant 1.000000e+00 : f32
    %190 = vector.broadcast %cst_48 : f32 to vector<8x32xf32>
    %191 = arith.addf %190, %189 : vector<8x32xf32>
    %192 = arith.divf %190, %191 : vector<8x32xf32>
    %193 = vector.extract_strided_slice %180 {offsets = [0, 32], sizes = [8, 32], strides = [1, 1]} : vector<8x96xf32> to vector<8x32xf32>
    %194 = vector.extract_strided_slice %184 {offsets = [0, 32], sizes = [8, 32], strides = [1, 1]} : vector<8x96xf32> to vector<8x32xf32>
    %195 = arith.addf %193, %194 : vector<8x32xf32>
    %196 = arith.negf %195 : vector<8x32xf32>
    %197 = math.exp %196 : vector<8x32xf32>
    %cst_49 = arith.constant 1.000000e+00 : f32
    %198 = vector.broadcast %cst_49 : f32 to vector<8x32xf32>
    %199 = arith.addf %198, %197 : vector<8x32xf32>
    %200 = arith.divf %198, %199 : vector<8x32xf32>
    %201 = vector.extract_strided_slice %180 {offsets = [0, 64], sizes = [8, 32], strides = [1, 1]} : vector<8x96xf32> to vector<8x32xf32>
    %202 = vector.extract_strided_slice %184 {offsets = [0, 64], sizes = [8, 32], strides = [1, 1]} : vector<8x96xf32> to vector<8x32xf32>
    %203 = arith.mulf %192, %202 : vector<8x32xf32>
    %204 = arith.addf %201, %203 : vector<8x32xf32>
    %205 = math.tanh %204 : vector<8x32xf32>
    %cst_50 = arith.constant 1.000000e+00 : f32
    %206 = vector.broadcast %cst_50 : f32 to vector<8x32xf32>
    %207 = arith.subf %206, %200 : vector<8x32xf32>
    %208 = arith.mulf %207, %205 : vector<8x32xf32>
    %209 = arith.mulf %200, %177 : vector<8x32xf32>
    %210 = arith.addf %208, %209 : vector<8x32xf32>
    %c6_i32 = arith.constant 6 : i32
    %211 = arith.index_cast %c6_i32 : i32 to index
    %c0_51 = arith.constant 0 : index
    %c0_52 = arith.constant 0 : index
    %212 = vector.load %arg22[%211, %c0_51, %c0_52] : memref<8x8x96xf32, #tpu.memory_space<vmem>>, vector<1x8x96xf32>
    %213 = vector.shape_cast %212 : vector<1x8x96xf32> to vector<8x96xf32>
    %214 = arith.truncf %210 : vector<8x32xf32> to vector<8x32xbf16>
    %cst_53 = arith.constant dense<0.000000e+00> : vector<8x96xf32>
    %215 = tpu.matmul %214, %10, %cst_53 {dimension_numbers = #tpu.dot_dimension_numbers<[1], [0], [0], [1], [0, 0, 1, 1], [], []>} : vector<8x32xbf16>, vector<32x96xbf16>, vector<8x96xf32> -> vector<8x96xf32>
    %216 = vector.broadcast %11 : vector<1x96xf32> to vector<8x96xf32>
    %217 = arith.addf %215, %216 : vector<8x96xf32>
    %218 = vector.extract_strided_slice %213 {offsets = [0, 0], sizes = [8, 32], strides = [1, 1]} : vector<8x96xf32> to vector<8x32xf32>
    %219 = vector.extract_strided_slice %217 {offsets = [0, 0], sizes = [8, 32], strides = [1, 1]} : vector<8x96xf32> to vector<8x32xf32>
    %220 = arith.addf %218, %219 : vector<8x32xf32>
    %221 = arith.negf %220 : vector<8x32xf32>
    %222 = math.exp %221 : vector<8x32xf32>
    %cst_54 = arith.constant 1.000000e+00 : f32
    %223 = vector.broadcast %cst_54 : f32 to vector<8x32xf32>
    %224 = arith.addf %223, %222 : vector<8x32xf32>
    %225 = arith.divf %223, %224 : vector<8x32xf32>
    %226 = vector.extract_strided_slice %213 {offsets = [0, 32], sizes = [8, 32], strides = [1, 1]} : vector<8x96xf32> to vector<8x32xf32>
    %227 = vector.extract_strided_slice %217 {offsets = [0, 32], sizes = [8, 32], strides = [1, 1]} : vector<8x96xf32> to vector<8x32xf32>
    %228 = arith.addf %226, %227 : vector<8x32xf32>
    %229 = arith.negf %228 : vector<8x32xf32>
    %230 = math.exp %229 : vector<8x32xf32>
    %cst_55 = arith.constant 1.000000e+00 : f32
    %231 = vector.broadcast %cst_55 : f32 to vector<8x32xf32>
    %232 = arith.addf %231, %230 : vector<8x32xf32>
    %233 = arith.divf %231, %232 : vector<8x32xf32>
    %234 = vector.extract_strided_slice %213 {offsets = [0, 64], sizes = [8, 32], strides = [1, 1]} : vector<8x96xf32> to vector<8x32xf32>
    %235 = vector.extract_strided_slice %217 {offsets = [0, 64], sizes = [8, 32], strides = [1, 1]} : vector<8x96xf32> to vector<8x32xf32>
    %236 = arith.mulf %225, %235 : vector<8x32xf32>
    %237 = arith.addf %234, %236 : vector<8x32xf32>
    %238 = math.tanh %237 : vector<8x32xf32>
    %cst_56 = arith.constant 1.000000e+00 : f32
    %239 = vector.broadcast %cst_56 : f32 to vector<8x32xf32>
    %240 = arith.subf %239, %233 : vector<8x32xf32>
    %241 = arith.mulf %240, %238 : vector<8x32xf32>
    %242 = arith.mulf %233, %210 : vector<8x32xf32>
    %243 = arith.addf %241, %242 : vector<8x32xf32>
    %c7_i32 = arith.constant 7 : i32
    %244 = arith.index_cast %c7_i32 : i32 to index
    %c0_57 = arith.constant 0 : index
    %c0_58 = arith.constant 0 : index
    %245 = vector.load %arg22[%244, %c0_57, %c0_58] : memref<8x8x96xf32, #tpu.memory_space<vmem>>, vector<1x8x96xf32>
    %246 = vector.shape_cast %245 : vector<1x8x96xf32> to vector<8x96xf32>
    %247 = arith.truncf %243 : vector<8x32xf32> to vector<8x32xbf16>
    %cst_59 = arith.constant dense<0.000000e+00> : vector<8x96xf32>
    %248 = tpu.matmul %247, %10, %cst_59 {dimension_numbers = #tpu.dot_dimension_numbers<[1], [0], [0], [1], [0, 0, 1, 1], [], []>} : vector<8x32xbf16>, vector<32x96xbf16>, vector<8x96xf32> -> vector<8x96xf32>
    %249 = vector.broadcast %11 : vector<1x96xf32> to vector<8x96xf32>
    %250 = arith.addf %248, %249 : vector<8x96xf32>
    %251 = vector.extract_strided_slice %246 {offsets = [0, 0], sizes = [8, 32], strides = [1, 1]} : vector<8x96xf32> to vector<8x32xf32>
    %252 = vector.extract_strided_slice %250 {offsets = [0, 0], sizes = [8, 32], strides = [1, 1]} : vector<8x96xf32> to vector<8x32xf32>
    %253 = arith.addf %251, %252 : vector<8x32xf32>
    %254 = arith.negf %253 : vector<8x32xf32>
    %255 = math.exp %254 : vector<8x32xf32>
    %cst_60 = arith.constant 1.000000e+00 : f32
    %256 = vector.broadcast %cst_60 : f32 to vector<8x32xf32>
    %257 = arith.addf %256, %255 : vector<8x32xf32>
    %258 = arith.divf %256, %257 : vector<8x32xf32>
    %259 = vector.extract_strided_slice %246 {offsets = [0, 32], sizes = [8, 32], strides = [1, 1]} : vector<8x96xf32> to vector<8x32xf32>
    %260 = vector.extract_strided_slice %250 {offsets = [0, 32], sizes = [8, 32], strides = [1, 1]} : vector<8x96xf32> to vector<8x32xf32>
    %261 = arith.addf %259, %260 : vector<8x32xf32>
    %262 = arith.negf %261 : vector<8x32xf32>
    %263 = math.exp %262 : vector<8x32xf32>
    %cst_61 = arith.constant 1.000000e+00 : f32
    %264 = vector.broadcast %cst_61 : f32 to vector<8x32xf32>
    %265 = arith.addf %264, %263 : vector<8x32xf32>
    %266 = arith.divf %264, %265 : vector<8x32xf32>
    %267 = vector.extract_strided_slice %246 {offsets = [0, 64], sizes = [8, 32], strides = [1, 1]} : vector<8x96xf32> to vector<8x32xf32>
    %268 = vector.extract_strided_slice %250 {offsets = [0, 64], sizes = [8, 32], strides = [1, 1]} : vector<8x96xf32> to vector<8x32xf32>
    %269 = arith.mulf %258, %268 : vector<8x32xf32>
    %270 = arith.addf %267, %269 : vector<8x32xf32>
    %271 = math.tanh %270 : vector<8x32xf32>
    %cst_62 = arith.constant 1.000000e+00 : f32
    %272 = vector.broadcast %cst_62 : f32 to vector<8x32xf32>
    %273 = arith.subf %272, %266 : vector<8x32xf32>
    %274 = arith.mulf %273, %271 : vector<8x32xf32>
    %275 = arith.mulf %266, %243 : vector<8x32xf32>
    %276 = arith.addf %274, %275 : vector<8x32xf32>
    %c8_i32 = arith.constant 8 : i32
    %c0_63 = arith.constant 0 : index
    %c0_64 = arith.constant 0 : index
    %c0_65 = arith.constant 0 : index
    %277 = vector.load %arg2[%c0_63, %c0_64, %c0_65] : memref<8x8x32xbf16, #tpu.memory_space<vmem>>, vector<8x8x32xbf16>
    %278 = arith.extf %277 : vector<8x8x32xbf16> to vector<8x8x32xf32>
    %279 = vector.shape_cast %277 : vector<8x8x32xbf16> to vector<64x32xbf16>
    %c0_66 = arith.constant 0 : index
    %c0_67 = arith.constant 0 : index
    %280 = vector.load %arg9[%c0_66, %c0_67] : memref<32x32xbf16, #tpu.memory_space<vmem>>, vector<32x32xbf16>
    %cst_68 = arith.constant dense<0.000000e+00> : vector<64x32xf32>
    %281 = tpu.matmul %279, %280, %cst_68 {dimension_numbers = #tpu.dot_dimension_numbers<[1], [0], [0], [1], [0, 0, 1, 1], [], []>} : vector<64x32xbf16>, vector<32x32xbf16>, vector<64x32xf32> -> vector<64x32xf32>
    %c0_69 = arith.constant 0 : index
    %c0_70 = arith.constant 0 : index
    %282 = vector.load %arg10[%c0_69, %c0_70] : memref<1x32xf32, #tpu.memory_space<vmem>>, vector<1x32xf32>
    %283 = vector.broadcast %282 : vector<1x32xf32> to vector<64x32xf32>
    %284 = arith.addf %281, %283 : vector<64x32xf32>
    %cst_71 = arith.constant 0.000000e+00 : f32
    %285 = vector.broadcast %cst_71 : f32 to vector<64x32xf32>
    %286 = arith.maximumf %284, %285 : vector<64x32xf32>
    %287 = arith.truncf %276 : vector<8x32xf32> to vector<8x32xbf16>
    %c0_72 = arith.constant 0 : index
    %c0_73 = arith.constant 0 : index
    %288 = vector.load %arg11[%c0_72, %c0_73] : memref<32x32xbf16, #tpu.memory_space<vmem>>, vector<32x32xbf16>
    %cst_74 = arith.constant dense<0.000000e+00> : vector<8x32xf32>
    %289 = tpu.matmul %287, %288, %cst_74 {dimension_numbers = #tpu.dot_dimension_numbers<[1], [0], [0], [1], [0, 0, 1, 1], [], []>} : vector<8x32xbf16>, vector<32x32xbf16>, vector<8x32xf32> -> vector<8x32xf32>
    %c0_75 = arith.constant 0 : index
    %c0_76 = arith.constant 0 : index
    %290 = vector.load %arg12[%c0_75, %c0_76] : memref<1x32xf32, #tpu.memory_space<vmem>>, vector<1x32xf32>
    %291 = vector.broadcast %290 : vector<1x32xf32> to vector<8x32xf32>
    %292 = arith.addf %289, %291 : vector<8x32xf32>
    %cst_77 = arith.constant 0.000000e+00 : f32
    %293 = vector.broadcast %cst_77 : f32 to vector<8x32xf32>
    %294 = arith.maximumf %292, %293 : vector<8x32xf32>
    %295 = vector.shape_cast %286 : vector<64x32xf32> to vector<8x8x32xf32>
    %296 = vector.shape_cast %294 : vector<8x32xf32> to vector<8x1x32xf32>
    %297 = vector.broadcast %296 : vector<8x1x32xf32> to vector<8x8x32xf32>
    %298 = arith.mulf %295, %297 : vector<8x8x32xf32>
    %c0_78 = arith.constant 0 : index
    %c0_79 = arith.constant 0 : index
    %299 = vector.load %arg13[%c0_78, %c0_79] : memref<1x32xf32, #tpu.memory_space<vmem>>, vector<1x32xf32>
    %300 = vector.shape_cast %299 : vector<1x32xf32> to vector<1x1x32xf32>
    %301 = vector.broadcast %300 : vector<1x1x32xf32> to vector<8x8x32xf32>
    %302 = arith.mulf %298, %301 : vector<8x8x32xf32>
    %cst_80 = arith.constant dense<0.000000e+00> : vector<8x8xf32>
    %303 = vector.multi_reduction <add>, %302, %cst_80 [2] : vector<8x8x32xf32> to vector<8x8xf32>
    %c0_81 = arith.constant 0 : index
    %c0_82 = arith.constant 0 : index
    %304 = vector.load %arg14[%c0_81, %c0_82] : memref<1x1xf32, #tpu.memory_space<vmem>>, vector<1x1xf32>
    %305 = vector.broadcast %304 : vector<1x1xf32> to vector<8x8xf32>
    %306 = arith.addf %303, %305 : vector<8x8xf32>
    %cst_83 = arith.constant dense<0xFF800000> : vector<8xf32>
    %307 = vector.multi_reduction <maximumf>, %306, %cst_83 [1] : vector<8x8xf32> to vector<8xf32>
    %308 = vector.shape_cast %307 : vector<8xf32> to vector<8x1xf32>
    %309 = vector.broadcast %308 : vector<8x1xf32> to vector<8x8xf32>
    %310 = arith.subf %306, %309 : vector<8x8xf32>
    %311 = math.exp %310 : vector<8x8xf32>
    %cst_84 = arith.constant dense<0.000000e+00> : vector<8xf32>
    %312 = vector.multi_reduction <add>, %311, %cst_84 [1] : vector<8x8xf32> to vector<8xf32>
    %313 = vector.shape_cast %312 : vector<8xf32> to vector<8x1xf32>
    %314 = tpu.reciprocal %313 {approx = true} : vector<8x1xf32> -> vector<8x1xf32>
    %315 = vector.broadcast %314 : vector<8x1xf32> to vector<8x8xf32>
    %316 = arith.mulf %311, %315 : vector<8x8xf32>
    %317 = vector.shape_cast %316 : vector<8x8xf32> to vector<8x8x1xf32>
    %318 = vector.broadcast %317 : vector<8x8x1xf32> to vector<8x8x32xf32>
    %319 = arith.mulf %318, %278 : vector<8x8x32xf32>
    %320 = arith.truncf %319 : vector<8x8x32xf32> to vector<8x8x32xbf16>
    %321 = vector.shape_cast %320 : vector<8x8x32xbf16> to vector<64x32xbf16>
    %c0_85 = arith.constant 0 : index
    %c0_86 = arith.constant 0 : index
    %322 = vector.load %arg15[%c0_85, %c0_86] : memref<32x32xbf16, #tpu.memory_space<vmem>>, vector<32x32xbf16>
    %cst_87 = arith.constant dense<0.000000e+00> : vector<64x32xf32>
    %323 = tpu.matmul %321, %322, %cst_87 {dimension_numbers = #tpu.dot_dimension_numbers<[1], [0], [0], [1], [0, 0, 1, 1], [], []>} : vector<64x32xbf16>, vector<32x32xbf16>, vector<64x32xf32> -> vector<64x32xf32>
    %c0_88 = arith.constant 0 : index
    %c0_89 = arith.constant 0 : index
    %324 = vector.load %arg16[%c0_88, %c0_89] : memref<1x32xf32, #tpu.memory_space<vmem>>, vector<1x32xf32>
    %325 = vector.broadcast %324 : vector<1x32xf32> to vector<64x32xf32>
    %326 = arith.addf %323, %325 : vector<64x32xf32>
    %cst_90 = arith.constant 0.000000e+00 : f32
    %327 = vector.broadcast %cst_90 : f32 to vector<64x32xf32>
    %328 = arith.maximumf %326, %327 : vector<64x32xf32>
    %c0_91 = arith.constant 0 : index
    %c0_92 = arith.constant 0 : index
    %329 = vector.load %arg17[%c0_91, %c0_92] : memref<32x32xbf16, #tpu.memory_space<vmem>>, vector<32x32xbf16>
    %cst_93 = arith.constant dense<0.000000e+00> : vector<64x32xf32>
    %330 = tpu.matmul %321, %329, %cst_93 {dimension_numbers = #tpu.dot_dimension_numbers<[1], [0], [0], [1], [0, 0, 1, 1], [], []>} : vector<64x32xbf16>, vector<32x32xbf16>, vector<64x32xf32> -> vector<64x32xf32>
    %c0_94 = arith.constant 0 : index
    %c0_95 = arith.constant 0 : index
    %331 = vector.load %arg18[%c0_94, %c0_95] : memref<1x32xf32, #tpu.memory_space<vmem>>, vector<1x32xf32>
    %332 = vector.broadcast %331 : vector<1x32xf32> to vector<64x32xf32>
    %333 = arith.addf %330, %332 : vector<64x32xf32>
    %cst_96 = arith.constant 0.000000e+00 : f32
    %334 = vector.broadcast %cst_96 : f32 to vector<64x32xf32>
    %335 = arith.maximumf %333, %334 : vector<64x32xf32>
    %c0_97 = arith.constant 0 : index
    %c0_98 = arith.constant 0 : index
    %c0_99 = arith.constant 0 : index
    %336 = vector.load %arg3[%c0_97, %c0_98, %c0_99] : memref<8x8x8xf32, #tpu.memory_space<vmem>>, vector<8x8x8xf32>
    %c0_100 = arith.constant 0 : index
    %c0_101 = arith.constant 0 : index
    %337 = vector.load %arg19[%c0_100, %c0_101] : memref<1x8xf32, #tpu.memory_space<vmem>>, vector<1x8xf32>
    %338 = vector.shape_cast %337 : vector<1x8xf32> to vector<1x1x8xf32>
    %339 = vector.broadcast %338 : vector<1x1x8xf32> to vector<8x8x8xf32>
    %340 = arith.mulf %336, %339 : vector<8x8x8xf32>
    %341 = arith.truncf %340 : vector<8x8x8xf32> to vector<8x8x8xbf16>
    %342 = vector.shape_cast %335 : vector<64x32xf32> to vector<8x8x32xf32>
    %343 = arith.truncf %342 : vector<8x8x32xf32> to vector<8x8x32xbf16>
    "tpu.trace_start"() <{level = 10 : i32, message = "bkj,bjd->bkd"}> : () -> ()
    %cst_102 = arith.constant dense<0.000000e+00> : vector<8x8x32xf32>
    %344 = tpu.matmul %341, %343, %cst_102 {dimension_numbers = #tpu.dot_dimension_numbers<[2], [1], [1], [2], [0, 0, 0, 1, 1, 2], [0], [0]>} : vector<8x8x8xbf16>, vector<8x8x32xbf16>, vector<8x8x32xf32> -> vector<8x8x32xf32>
    "tpu.trace_stop"() : () -> ()
    %345 = vector.shape_cast %328 : vector<64x32xf32> to vector<8x8x32xf32>
    %346 = arith.mulf %345, %344 : vector<8x8x32xf32>
    %cst_103 = arith.constant dense<0.000000e+00> : vector<8x8xf32>
    %347 = vector.multi_reduction <add>, %346, %cst_103 [2] : vector<8x8x32xf32> to vector<8x8xf32>
    %cst_104 = arith.constant 0.176776692 : f32
    %348 = vector.broadcast %cst_104 : f32 to vector<8x8xf32>
    %349 = arith.mulf %347, %348 : vector<8x8xf32>
    %c0_105 = arith.constant 0 : index
    %c0_106 = arith.constant 0 : index
    %350 = vector.load %arg20[%c0_105, %c0_106] : memref<1x1xf32, #tpu.memory_space<vmem>>, vector<1x1xf32>
    %351 = vector.broadcast %350 : vector<1x1xf32> to vector<8x8xf32>
    %352 = arith.addf %349, %351 : vector<8x8xf32>
    %353 = arith.negf %352 : vector<8x8xf32>
    %354 = math.exp %353 : vector<8x8xf32>
    %cst_107 = arith.constant 1.000000e+00 : f32
    %355 = vector.broadcast %cst_107 : f32 to vector<8x8xf32>
    %356 = arith.addf %355, %354 : vector<8x8xf32>
    %357 = arith.divf %355, %356 : vector<8x8xf32>
    %c0_108 = arith.constant 0 : index
    %358 = memref.load %arg4[%c0_108] : memref<1xf32, #tpu.memory_space<smem>>
    %359 = vector.broadcast %358 : f32 to vector<8x8xf32>
    %360 = arith.cmpf ogt, %357, %359 : vector<8x8xf32>
    %cst_109 = arith.constant 0.000000e+00 : f32
    %361 = vector.broadcast %cst_109 : f32 to vector<8x8xf32>
    %362 = arith.select %360, %357, %361 : vector<8x8xi1>, vector<8x8xf32>
    %cst_110 = arith.constant dense<0.000000e+00> : vector<8xf32>
    %363 = vector.multi_reduction <add>, %362, %cst_110 [1] : vector<8x8xf32> to vector<8xf32>
    %364 = vector.shape_cast %363 : vector<8xf32> to vector<8x1xf32>
    %365 = tpu.transpose %364, [1, 0] : vector<8x1xf32> -> vector<1x8xf32>
    %366 = vector.shape_cast %365 : vector<1x8xf32> to vector<1x1x8xf32>
    %c0_111 = arith.constant 0 : index
    %c0_112 = arith.constant 0 : index
    %c0_113 = arith.constant 0 : index
    %367 = vector.load %arg21[%c0_111, %c0_112, %c0_113] : memref<1x1x8xf32, #tpu.memory_space<vmem>>, vector<1x1x8xf32>
    tpu.vector_store %arg21[%c0_111, %c0_112, %c0_113], %366 {strides = array<i32>} : memref<1x1x8xf32, #tpu.memory_space<vmem>>, vector<1x1x8xf32>,
    return
  }
  func.func @transform_0(%arg0: i32) -> (i32, i32, i32, i32) {
    %c0_i32 = arith.constant 0 : i32
    %c0_i32_0 = arith.constant 0 : i32
    %c0_i32_1 = arith.constant 0 : i32
    %c0_i32_2 = arith.constant 0 : i32
    return %arg0, %c0_i32, %c0_i32_0, %c0_i32_1 : i32, i32, i32, i32
  }
  func.func @transform_1(%arg0: i32) -> (i32, i32, i32) {
    %c0_i32 = arith.constant 0 : i32
    %c0_i32_0 = arith.constant 0 : i32
    %c0_i32_1 = arith.constant 0 : i32
    return %arg0, %c0_i32, %c0_i32_0 : i32, i32, i32
  }
  func.func @transform_2(%arg0: i32) -> (i32, i32, i32) {
    %c0_i32 = arith.constant 0 : i32
    %c0_i32_0 = arith.constant 0 : i32
    %c0_i32_1 = arith.constant 0 : i32
    return %arg0, %c0_i32, %c0_i32_0 : i32, i32, i32
  }
  func.func @transform_3(%arg0: i32) -> i32 {
    %c0_i32 = arith.constant 0 : i32
    %c0_i32_0 = arith.constant 0 : i32
    return %c0_i32 : i32
  }
  func.func @transform_4(%arg0: i32) -> (i32, i32) {
    %c0_i32 = arith.constant 0 : i32
    %c0_i32_0 = arith.constant 0 : i32
    %c0_i32_1 = arith.constant 0 : i32
    return %c0_i32, %c0_i32_0 : i32, i32
  }
  func.func @transform_5(%arg0: i32) -> (i32, i32) {
    %c0_i32 = arith.constant 0 : i32
    %c0_i32_0 = arith.constant 0 : i32
    %c0_i32_1 = arith.constant 0 : i32
    return %c0_i32, %c0_i32_0 : i32, i32
  }
  func.func @transform_6(%arg0: i32) -> (i32, i32) {
    %c0_i32 = arith.constant 0 : i32
    %c0_i32_0 = arith.constant 0 : i32
    %c0_i32_1 = arith.constant 0 : i32
    return %c0_i32, %c0_i32_0 : i32, i32
  }
  func.func @transform_7(%arg0: i32) -> (i32, i32) {
    %c0_i32 = arith.constant 0 : i32
    %c0_i32_0 = arith.constant 0 : i32
    %c0_i32_1 = arith.constant 0 : i32
    return %c0_i32, %c0_i32_0 : i32, i32
  }
  func.func @transform_8(%arg0: i32) -> (i32, i32) {
    %c0_i32 = arith.constant 0 : i32
    %c0_i32_0 = arith.constant 0 : i32
    %c0_i32_1 = arith.constant 0 : i32
    return %c0_i32, %c0_i32_0 : i32, i32
  }
  func.func @transform_9(%arg0: i32) -> (i32, i32) {
    %c0_i32 = arith.constant 0 : i32
    %c0_i32_0 = arith.constant 0 : i32
    %c0_i32_1 = arith.constant 0 : i32
    return %c0_i32, %c0_i32_0 : i32, i32
  }
  func.func @transform_10(%arg0: i32) -> (i32, i32) {
    %c0_i32 = arith.constant 0 : i32
    %c0_i32_0 = arith.constant 0 : i32
    %c0_i32_1 = arith.constant 0 : i32
    return %c0_i32, %c0_i32_0 : i32, i32
  }
  func.func @transform_11(%arg0: i32) -> (i32, i32) {
    %c0_i32 = arith.constant 0 : i32
    %c0_i32_0 = arith.constant 0 : i32
    %c0_i32_1 = arith.constant 0 : i32
    return %c0_i32, %c0_i32_0 : i32, i32
  }
  func.func @transform_12(%arg0: i32) -> (i32, i32) {
    %c0_i32 = arith.constant 0 : i32
    %c0_i32_0 = arith.constant 0 : i32
    %c0_i32_1 = arith.constant 0 : i32
    return %c0_i32, %c0_i32_0 : i32, i32
  }
  func.func @transform_13(%arg0: i32) -> (i32, i32) {
    %c0_i32 = arith.constant 0 : i32
    %c0_i32_0 = arith.constant 0 : i32
    %c0_i32_1 = arith.constant 0 : i32
    return %c0_i32, %c0_i32_0 : i32, i32
  }
  func.func @transform_14(%arg0: i32) -> (i32, i32) {
    %c0_i32 = arith.constant 0 : i32
    %c0_i32_0 = arith.constant 0 : i32
    %c0_i32_1 = arith.constant 0 : i32
    return %c0_i32, %c0_i32_0 : i32, i32
  }
  func.func @transform_15(%arg0: i32) -> (i32, i32) {
    %c0_i32 = arith.constant 0 : i32
    %c0_i32_0 = arith.constant 0 : i32
    %c0_i32_1 = arith.constant 0 : i32
    return %c0_i32, %c0_i32_0 : i32, i32
  }
  func.func @transform_16(%arg0: i32) -> (i32, i32) {
    %c0_i32 = arith.constant 0 : i32
    %c0_i32_0 = arith.constant 0 : i32
    %c0_i32_1 = arith.constant 0 : i32
    return %c0_i32, %c0_i32_0 : i32, i32
  }
  func.func @transform_17(%arg0: i32) -> (i32, i32) {
    %c0_i32 = arith.constant 0 : i32
    %c0_i32_0 = arith.constant 0 : i32
    %c0_i32_1 = arith.constant 0 : i32
    return %c0_i32, %c0_i32_0 : i32, i32
  }
  func.func @transform_18(%arg0: i32) -> (i32, i32) {
    %c0_i32 = arith.constant 0 : i32
    %c0_i32_0 = arith.constant 0 : i32
    %c0_i32_1 = arith.constant 0 : i32
    return %c0_i32, %c0_i32_0 : i32, i32
  }
  func.func @transform_19(%arg0: i32) -> (i32, i32) {
    %c0_i32 = arith.constant 0 : i32
    %c0_i32_0 = arith.constant 0 : i32
    %c0_i32_1 = arith.constant 0 : i32
    return %c0_i32, %c0_i32_0 : i32, i32
  }
  func.func @transform_20(%arg0: i32) -> (i32, i32, i32) {
    %c0_i32 = arith.constant 0 : i32
    %c0_i32_0 = arith.constant 0 : i32
    %c0_i32_1 = arith.constant 0 : i32
    return %arg0, %c0_i32, %c0_i32_0 : i32, i32, i32
  }
}

</mosaic_0001>

<llo_original>
// kernel: tpu_custom_call.1
$region0: #{tpu_custom_call.1}
  #allocation0 [shape = 'u32[]', space=smem, size = 0x4, offset = 0x4, fixed_abs, tag = 'smem constant byte address 0x4 - core index']
  #allocation1 [shape = 'u32[144,128]{1,0:T(1,128)}', space=vmem, size = 0x12000, scoped, tag = 'internal scratch']
  #allocation2 [shape = 'f32[8,8,96]{2,1,0:T(8,128)}', space=vmem, size = 0x8000, scoped, tag = 'scratch operand']
  #allocation3 [shape = 'f32[1]{0:T(128)S(6)}', space=smem, size = 0x200, scoped, tag = 'scoped memory for tpu_custom_call.1']
  #allocation4 [shape = 'f32[1,1]{1,0:T(1,128)S(1)}', space=vmem, size = 0x200, scoped, tag = 'scoped memory for tpu_custom_call.1']
  #allocation5 [shape = 'f32[1,1]{1,0:T(1,128)S(1)}', space=vmem, size = 0x200, scoped, tag = 'scoped memory for tpu_custom_call.1']
  %s0 = inlined_call_operand.vmem [shape: bf16[1,8,8,384], index: 0, kind: input, shape index: {}]
  %s1 = inlined_call_operand.vmem [shape: bf16[8,8,32], index: 1, kind: input, shape index: {}]
  %s2 = inlined_call_operand.vmem [shape: f32[8,8,8], index: 2, kind: input, shape index: {}]
  %s3 = inlined_call_operand.<no memory space> [shape: f32[1], index: 3, kind: input, shape index: {}]
  %s4 = inlined_call_operand.vmem [shape: bf16[384,96], index: 4, kind: input, shape index: {}]
  %s5 = inlined_call_operand.vmem [shape: bf16[32,96], index: 5, kind: input, shape index: {}]
  %s6 = inlined_call_operand.vmem [shape: f32[1,96], index: 6, kind: input, shape index: {}]
  %s7 = inlined_call_operand.vmem [shape: f32[1,96], index: 7, kind: input, shape index: {}]
  %s8 = inlined_call_operand.vmem [shape: bf16[32,32], index: 8, kind: input, shape index: {}]
  %s9 = inlined_call_operand.vmem [shape: f32[1,32], index: 9, kind: input, shape index: {}]
  %s10 = inlined_call_operand.vmem [shape: bf16[32,32], index: 10, kind: input, shape index: {}]
  %s11 = inlined_call_operand.vmem [shape: f32[1,32], index: 11, kind: input, shape index: {}]
  %s12 = inlined_call_operand.vmem [shape: f32[1,32], index: 12, kind: input, shape index: {}]
  %s13 = inlined_call_operand.<no memory space> [shape: f32[1,1], index: 13, kind: input, shape index: {}]
  %s14 = inlined_call_operand.vmem [shape: bf16[32,32], index: 14, kind: input, shape index: {}]
  %s15 = inlined_call_operand.vmem [shape: f32[1,32], index: 15, kind: input, shape index: {}]
  %s16 = inlined_call_operand.vmem [shape: bf16[32,32], index: 16, kind: input, shape index: {}]
  %s17 = inlined_call_operand.vmem [shape: f32[1,32], index: 17, kind: input, shape index: {}]
  %s18 = inlined_call_operand.vmem [shape: f32[1,8], index: 18, kind: input, shape index: {}]
  %s19 = inlined_call_operand.<no memory space> [shape: f32[1,1], index: 19, kind: input, shape index: {}]
  %s20 = inlined_call_operand.hbm [shape: f32[1,1,8], index: 20, kind: output, shape index: {}]
  %s21 = sld [smem:[#allocation0]]
  $region90: #{tpu_custom_call.1} parent=0
    _
  %s23 = ssub.s32 1, %s21
  %s24 = scalar_select 0, %s23, %s21
  %25 = sst [smem:[#allocation3]] %s3
  %v26 = vstv %s13
  %27 = vst [vmem:[#allocation4] sm:$0x1] %v26
  %v28 = vstv %s19
  %29 = vst [vmem:[#allocation5] sm:$0x1] %v28
  $region1: #{tpu_custom_call.1} parent=0
    #allocation6 [shape = 'u8[512]{0}', space=vmem, size = 0x400, scoped, tag = 'output window, operand 0, single buffered']
    #allocation7 [shape = 's32[1]{0}', space=sflag, size = 0x4, scoped, tag = 'scoped memory for tpu_custom_call.1']
    %30 = vsyncpa [#allocation7], 0
    // Predicated region
    $region2: #{tpu_custom_call.1} parent=1 // pred_check
      _
    $region3: #{tpu_custom_call.1} parent=1 // pred_check_branch
      %32 = sbr.rel (0) target = $region5
    $region4: #{tpu_custom_call.1} parent=1 // pred_region
      _
    $region5: #{tpu_custom_call.1} parent=1 // pred_fallthru
      _
    // Predicated region
    $region6: #{tpu_custom_call.1} parent=1 // pred_check
      _
    $region7: #{tpu_custom_call.1} parent=1 // pred_check_branch
      %34 = sbr.rel (0) target = $region9
    $region8: #{tpu_custom_call.1} parent=1 // pred_region
      _
    $region9: #{tpu_custom_call.1} parent=1 // pred_fallthru
      _
    // Predicated region
    $region10: #{tpu_custom_call.1} parent=1 // pred_check
      _
    $region11: #{tpu_custom_call.1} parent=1 // pred_check_branch
      %36 = sbr.rel (0) target = $region13
    $region12: #{tpu_custom_call.1} parent=1 // pred_region
      _
    $region13: #{tpu_custom_call.1} parent=1 // pred_fallthru
      _
    // Predicated region
    $region14: #{tpu_custom_call.1} parent=1 // pred_check
      _
    $region15: #{tpu_custom_call.1} parent=1 // pred_check_branch
      %38 = sbr.rel (0) target = $region17
    $region16: #{tpu_custom_call.1} parent=1 // pred_region
      _
    $region17: #{tpu_custom_call.1} parent=1 // pred_fallthru
      _
    // Predicated region
    $region18: #{tpu_custom_call.1} parent=1 // pred_check
      _
    $region19: #{tpu_custom_call.1} parent=1 // pred_check_branch
      %40 = sbr.rel (0) target = $region21
    $region20: #{tpu_custom_call.1} parent=1 // pred_region
      _
    $region21: #{tpu_custom_call.1} parent=1 // pred_fallthru
      _
    // Predicated region
    $region22: #{tpu_custom_call.1} parent=1 // pred_check
      _
    $region23: #{tpu_custom_call.1} parent=1 // pred_check_branch
      %42 = sbr.rel (0) target = $region25
    $region24: #{tpu_custom_call.1} parent=1 // pred_region
      _
    $region25: #{tpu_custom_call.1} parent=1 // pred_fallthru
      _
    // Predicated region
    $region26: #{tpu_custom_call.1} parent=1 // pred_check
      _
    $region27: #{tpu_custom_call.1} parent=1 // pred_check_branch
      %44 = sbr.rel (0) target = $region29
    $region28: #{tpu_custom_call.1} parent=1 // pred_region
      _
    $region29: #{tpu_custom_call.1} parent=1 // pred_fallthru
      _
    // Predicated region
    $region30: #{tpu_custom_call.1} parent=1 // pred_check
      _
    $region31: #{tpu_custom_call.1} parent=1 // pred_check_branch
      %46 = sbr.rel (0) target = $region33
    $region32: #{tpu_custom_call.1} parent=1 // pred_region
      _
    $region33: #{tpu_custom_call.1} parent=1 // pred_fallthru
      _
    // Predicated region
    $region34: #{tpu_custom_call.1} parent=1 // pred_check
      _
    $region35: #{tpu_custom_call.1} parent=1 // pred_check_branch
      %48 = sbr.rel (0) target = $region37
    $region36: #{tpu_custom_call.1} parent=1 // pred_region
      _
    $region37: #{tpu_custom_call.1} parent=1 // pred_fallthru
      _
    // Predicated region
    $region38: #{tpu_custom_call.1} parent=1 // pred_check
      _
    $region39: #{tpu_custom_call.1} parent=1 // pred_check_branch
      %50 = sbr.rel (0) target = $region41
    $region40: #{tpu_custom_call.1} parent=1 // pred_region
      _
    $region41: #{tpu_custom_call.1} parent=1 // pred_fallthru
      _
    // Predicated region
    $region42: #{tpu_custom_call.1} parent=1 // pred_check
      _
    $region43: #{tpu_custom_call.1} parent=1 // pred_check_branch
      %52 = sbr.rel (0) target = $region45
    $region44: #{tpu_custom_call.1} parent=1 // pred_region
      _
    $region45: #{tpu_custom_call.1} parent=1 // pred_fallthru
      _
    // Predicated region
    $region46: #{tpu_custom_call.1} parent=1 // pred_check
      _
    $region47: #{tpu_custom_call.1} parent=1 // pred_check_branch
      %54 = sbr.rel (0) target = $region49
    $region48: #{tpu_custom_call.1} parent=1 // pred_region
      _
    $region49: #{tpu_custom_call.1} parent=1 // pred_fallthru
      _
    // Predicated region
    $region50: #{tpu_custom_call.1} parent=1 // pred_check
      _
    $region51: #{tpu_custom_call.1} parent=1 // pred_check_branch
      %56 = sbr.rel (0) target = $region53
    $region52: #{tpu_custom_call.1} parent=1 // pred_region
      _
    $region53: #{tpu_custom_call.1} parent=1 // pred_fallthru
      _
    // Predicated region
    $region54: #{tpu_custom_call.1} parent=1 // pred_check
      _
    $region55: #{tpu_custom_call.1} parent=1 // pred_check_branch
      %58 = sbr.rel (0) target = $region57
    $region56: #{tpu_custom_call.1} parent=1 // pred_region
      _
    $region57: #{tpu_custom_call.1} parent=1 // pred_fallthru
      _
    // Predicated region
    $region58: #{tpu_custom_call.1} parent=1 // pred_check
      _
    $region59: #{tpu_custom_call.1} parent=1 // pred_check_branch
      %60 = sbr.rel (0) target = $region61
    $region60: #{tpu_custom_call.1} parent=1 // pred_region
      _
    $region61: #{tpu_custom_call.1} parent=1 // pred_fallthru
      _
    // Predicated region
    $region62: #{tpu_custom_call.1} parent=1 // pred_check
      _
    $region63: #{tpu_custom_call.1} parent=1 // pred_check_branch
      %62 = sbr.rel (0) target = $region65
    $region64: #{tpu_custom_call.1} parent=1 // pred_region
      _
    $region65: #{tpu_custom_call.1} parent=1 // pred_fallthru
      _
    // Predicated region
    $region66: #{tpu_custom_call.1} parent=1 // pred_check
      _
    $region67: #{tpu_custom_call.1} parent=1 // pred_check_branch
      %64 = sbr.rel (0) target = $region69
    $region68: #{tpu_custom_call.1} parent=1 // pred_region
      _
    $region69: #{tpu_custom_call.1} parent=1 // pred_fallthru
      _
    // Predicated region
    $region70: #{tpu_custom_call.1} parent=1 // pred_check
      _
    $region71: #{tpu_custom_call.1} parent=1 // pred_check_branch
      %66 = sbr.rel (0) target = $region73
    $region72: #{tpu_custom_call.1} parent=1 // pred_region
      _
    $region73: #{tpu_custom_call.1} parent=1 // pred_fallthru
      _
    // Predicated region
    $region74: #{tpu_custom_call.1} parent=1 // pred_check
      _
    $region75: #{tpu_custom_call.1} parent=1 // pred_check_branch
      %68 = sbr.rel (0) target = $region77
    $region76: #{tpu_custom_call.1} parent=1 // pred_region
      _
    $region77: #{tpu_custom_call.1} parent=1 // pred_fallthru
      _
    // Predicated region
    $region78: #{tpu_custom_call.1} parent=1 // pred_check
      _
    $region79: #{tpu_custom_call.1} parent=1 // pred_check_branch
      %70 = sbr.rel (0) target = $region81
    $region80: #{tpu_custom_call.1} parent=1 // pred_region
      _
    $region81: #{tpu_custom_call.1} parent=1 // pred_fallthru
      _
    %v72 = vld [vmem:[%s0] sm:$0xff]
    %v73 = vld [vmem:[%s0 + $0x8] sm:$0xf]
    %v74 = vld [vmem:[%s0 + $0xc] sm:$0xff]
    %v75 = vld [vmem:[%s0 + $0x14] sm:$0xf]
    %v76 = vld [vmem:[%s0 + $0x18] sm:$0xff]
    %v77 = vld [vmem:[%s0 + $0x20] sm:$0xf]
    %v78 = vld [vmem:[%s0 + $0x24] sm:$0xff]
    %v79 = vld [vmem:[%s0 + $0x2c] sm:$0xf]
    %v80 = vld [vmem:[%s0 + $0x30] sm:$0xff]
    %v81 = vld [vmem:[%s0 + $0x38] sm:$0xf]
    %v82 = vld [vmem:[%s0 + $0x3c] sm:$0xff]
    %v83 = vld [vmem:[%s0 + $0x44] sm:$0xf]
    %v84 = vld [vmem:[%s0 + $0x48] sm:$0xff]
    %v85 = vld [vmem:[%s0 + $0x50] sm:$0xf]
    %v86 = vld [vmem:[%s0 + $0x54] sm:$0xff]
    %v87 = vld [vmem:[%s0 + $0x5c] sm:$0xf]
    %v88 = vld [vmem:[%s4] sm:$0xf]
    %v89 = vld [vmem:[%s4 + $0x4] sm:$0xf]
    %v90 = vld [vmem:[%s4 + $0x8] sm:$0xf]
    %v91 = vld [vmem:[%s4 + $0xc] sm:$0xf]
    %v92 = vld [vmem:[%s4 + $0x10] sm:$0xf]
    %v93 = vld [vmem:[%s4 + $0x14] sm:$0xf]
    %v94 = vld [vmem:[%s4 + $0x18] sm:$0xf]
    %v95 = vld [vmem:[%s4 + $0x1c] sm:$0xf]
    %v96 = vld [vmem:[%s4 + $0x20] sm:$0xf]
    %v97 = vld [vmem:[%s4 + $0x24] sm:$0xf]
    %v98 = vld [vmem:[%s4 + $0x28] sm:$0xf]
    %v99 = vld [vmem:[%s4 + $0x2c] sm:$0xf]
    %v100 = vld [vmem:[%s4 + $0x30] sm:$0xf]
    %v101 = vld [vmem:[%s4 + $0x34] sm:$0xf]
    %v102 = vld [vmem:[%s4 + $0x38] sm:$0xf]
    %v103 = vld [vmem:[%s4 + $0x3c] sm:$0xf]
    %v104 = vld [vmem:[%s4 + $0x40] sm:$0xf]
    %v105 = vld [vmem:[%s4 + $0x44] sm:$0xf]
    %v106 = vld [vmem:[%s4 + $0x48] sm:$0xf]
    %v107 = vld [vmem:[%s4 + $0x4c] sm:$0xf]
    %v108 = vld [vmem:[%s4 + $0x50] sm:$0xf]
    %v109 = vld [vmem:[%s4 + $0x54] sm:$0xf]
    %v110 = vld [vmem:[%s4 + $0x58] sm:$0xf]
    %v111 = vld [vmem:[%s4 + $0x5c] sm:$0xf]
    %v112 = vld [vmem:[%s4 + $0x60] sm:$0xf]
    %v113 = vld [vmem:[%s4 + $0x64] sm:$0xf]
    %v114 = vld [vmem:[%s4 + $0x68] sm:$0xf]
    %v115 = vld [vmem:[%s4 + $0x6c] sm:$0xf]
    %v116 = vld [vmem:[%s4 + $0x70] sm:$0xf]
    %v117 = vld [vmem:[%s4 + $0x74] sm:$0xf]
    %v118 = vld [vmem:[%s4 + $0x78] sm:$0xf]
    %v119 = vld [vmem:[%s4 + $0x7c] sm:$0xf]
    %v120 = vld [vmem:[%s4 + $0x80] sm:$0xf]
    %v121 = vld [vmem:[%s4 + $0x84] sm:$0xf]
    %v122 = vld [vmem:[%s4 + $0x88] sm:$0xf]
    %v123 = vld [vmem:[%s4 + $0x8c] sm:$0xf]
    %v124 = vld [vmem:[%s4 + $0x90] sm:$0xf]
    %v125 = vld [vmem:[%s4 + $0x94] sm:$0xf]
    %v126 = vld [vmem:[%s4 + $0x98] sm:$0xf]
    %v127 = vld [vmem:[%s4 + $0x9c] sm:$0xf]
    %v128 = vld [vmem:[%s4 + $0xa0] sm:$0xf]
    %v129 = vld [vmem:[%s4 + $0xa4] sm:$0xf]
    %v130 = vld [vmem:[%s4 + $0xa8] sm:$0xf]
    %v131 = vld [vmem:[%s4 + $0xac] sm:$0xf]
    %v132 = vld [vmem:[%s4 + $0xb0] sm:$0xf]
    %v133 = vld [vmem:[%s4 + $0xb4] sm:$0xf]
    %v134 = vld [vmem:[%s4 + $0xb8] sm:$0xf]
    %v135 = vld [vmem:[%s4 + $0xbc] sm:$0xf]
    %v136 = vld [vmem:[%s6] sm:$0x1]
    %v138 = vlaneseq
    %v139 = vshrl.u32 %v138, 7
    %v140 = vsub.s32 0, %v139
    %v141 = vrot.slane %v136, %v140
    %v159 = vunpack.c.l.b16 %v72
    %v160 = vunpack.c.h.b16 %v72
    %v161 = vunpack.c.l.b16 %v73
    %v162 = vunpack.c.l.b16 %v74
    %v163 = vunpack.c.h.b16 %v74
    %v164 = vunpack.c.l.b16 %v75
    %v165 = vunpack.c.l.b16 %v76
    %v166 = vunpack.c.h.b16 %v76
    %v167 = vunpack.c.l.b16 %v77
    %v168 = vunpack.c.l.b16 %v78
    %v169 = vunpack.c.h.b16 %v78
    %v170 = vunpack.c.l.b16 %v79
    %v171 = vunpack.c.l.b16 %v80
    %v172 = vunpack.c.h.b16 %v80
    %v173 = vunpack.c.l.b16 %v81
    %v174 = vunpack.c.l.b16 %v82
    %v175 = vunpack.c.h.b16 %v82
    %v176 = vunpack.c.l.b16 %v83
    %v177 = vunpack.c.l.b16 %v84
    %v178 = vunpack.c.h.b16 %v84
    %v179 = vunpack.c.l.b16 %v85
    %v180 = vunpack.c.l.b16 %v86
    %v181 = vunpack.c.h.b16 %v86
    %v182 = vunpack.c.l.b16 %v87
    %v183 = vpack.c.b16 %v162, %v159
    %v184 = vpack.c.b16 %v163, %v160
    %v185 = vpack.c.b16 %v164, %v161
    %v186 = vpack.c.b16 %v168, %v165
    %v187 = vpack.c.b16 %v169, %v166
    %v188 = vpack.c.b16 %v170, %v167
    %v189 = vpack.c.b16 %v174, %v171
    %v190 = vpack.c.b16 %v175, %v172
    %v191 = vpack.c.b16 %v176, %v173
    %v192 = vpack.c.b16 %v180, %v177
    %v193 = vpack.c.b16 %v181, %v178
    %v194 = vpack.c.b16 %v182, %v179
    %v255 = vunpack.c.l.b16 %v88
    %v256 = vunpack.c.l.b16 %v89
    %v257 = vunpack.c.l.b16 %v90
    %v258 = vunpack.c.l.b16 %v91
    %v259 = vunpack.c.l.b16 %v92
    %v260 = vunpack.c.l.b16 %v93
    %v261 = vunpack.c.l.b16 %v94
    %v262 = vunpack.c.l.b16 %v95
    %v263 = vunpack.c.l.b16 %v96
    %v264 = vunpack.c.l.b16 %v97
    %v265 = vunpack.c.l.b16 %v98
    %v266 = vunpack.c.l.b16 %v99
    %v267 = vunpack.c.l.b16 %v100
    %v268 = vunpack.c.l.b16 %v101
    %v269 = vunpack.c.l.b16 %v102
    %v270 = vunpack.c.l.b16 %v103
    %v271 = vunpack.c.l.b16 %v104
    %v272 = vunpack.c.l.b16 %v105
    %v273 = vunpack.c.l.b16 %v106
    %v274 = vunpack.c.l.b16 %v107
    %v275 = vunpack.c.l.b16 %v108
    %v276 = vunpack.c.l.b16 %v109
    %v277 = vunpack.c.l.b16 %v110
    %v278 = vunpack.c.l.b16 %v111
    %v279 = vunpack.c.l.b16 %v112
    %v280 = vunpack.c.l.b16 %v113
    %v281 = vunpack.c.l.b16 %v114
    %v282 = vunpack.c.l.b16 %v115
    %v283 = vunpack.c.l.b16 %v116
    %v284 = vunpack.c.l.b16 %v117
    %v285 = vunpack.c.l.b16 %v118
    %v286 = vunpack.c.l.b16 %v119
    %v287 = vunpack.c.l.b16 %v120
    %v288 = vunpack.c.l.b16 %v121
    %v289 = vunpack.c.l.b16 %v122
    %v290 = vunpack.c.l.b16 %v123
    %v291 = vunpack.c.l.b16 %v124
    %v292 = vunpack.c.l.b16 %v125
    %v293 = vunpack.c.l.b16 %v126
    %v294 = vunpack.c.l.b16 %v127
    %v295 = vunpack.c.l.b16 %v128
    %v296 = vunpack.c.l.b16 %v129
    %v297 = vunpack.c.l.b16 %v130
    %v298 = vunpack.c.l.b16 %v131
    %v299 = vunpack.c.l.b16 %v132
    %v300 = vunpack.c.l.b16 %v133
    %v301 = vunpack.c.l.b16 %v134
    %v302 = vunpack.c.l.b16 %v135
    %v303 = vpack.c.b16 %v256, %v255
    %v304 = vpack.c.b16 %v258, %v257
    %v305 = vpack.c.b16 %v260, %v259
    %v306 = vpack.c.b16 %v262, %v261
    %v307 = vpack.c.b16 %v264, %v263
    %v308 = vpack.c.b16 %v266, %v265
    %v309 = vpack.c.b16 %v268, %v267
    %v310 = vpack.c.b16 %v270, %v269
    %v311 = vpack.c.b16 %v272, %v271
    %v312 = vpack.c.b16 %v274, %v273
    %v313 = vpack.c.b16 %v276, %v275
    %v314 = vpack.c.b16 %v278, %v277
    %v315 = vpack.c.b16 %v280, %v279
    %v316 = vpack.c.b16 %v282, %v281
    %v317 = vpack.c.b16 %v284, %v283
    %v318 = vpack.c.b16 %v286, %v285
    %v319 = vpack.c.b16 %v288, %v287
    %v320 = vpack.c.b16 %v290, %v289
    %v321 = vpack.c.b16 %v292, %v291
    %v322 = vpack.c.b16 %v294, %v293
    %v323 = vpack.c.b16 %v296, %v295
    %v324 = vpack.c.b16 %v298, %v297
    %v325 = vpack.c.b16 %v300, %v299
    %v326 = vpack.c.b16 %v302, %v301
    %351 = vmatprep.subr.bf16.mxu0 0
    %352 = vmatpush1.bf16.msra.mxu0 %v310
    %353 = vmatprep.subr.bf16.mxu0 0
    %354 = vmatpush1.bf16.msra.mxu0 %v309
    %355 = vmatprep.subr.bf16.mxu0 0
    %356 = vmatpush1.bf16.msra.mxu0 %v308
    %357 = vmatprep.subr.bf16.mxu0 0
    %358 = vmatpush1.bf16.msra.mxu0 %v307
    %359 = vmatprep.subr.bf16.mxu0 0
    %360 = vmatpush1.bf16.msra.mxu0 %v306
    %361 = vmatprep.subr.bf16.mxu0 0
    %362 = vmatpush1.bf16.msra.mxu0 %v305
    %363 = vmatprep.subr.bf16.mxu0 0
    %364 = vmatpush1.bf16.msra.mxu0 %v304
    %365 = vmatprep.subr.bf16.mxu0 0
    %366 = vmatpush1.bf16.msra.mxu0 %v303
    %367 = vmatprep.subr.bf16.mxu0 0
    %368 = vmatpush2.bf16.msra.mxu0 %v318
    %369 = vmatprep.subr.bf16.mxu0 0
    %370 = vmatpush2.bf16.msra.mxu0 %v317
    %371 = vmatprep.subr.bf16.mxu0 0
    %372 = vmatpush2.bf16.msra.mxu0 %v316
    %373 = vmatprep.subr.bf16.mxu0 0
    %374 = vmatpush2.bf16.msra.mxu0 %v315
    %375 = vmatprep.subr.bf16.mxu0 0
    %376 = vmatpush2.bf16.msra.mxu0 %v314
    %377 = vmatprep.subr.bf16.mxu0 0
    %378 = vmatpush2.bf16.msra.mxu0 %v313
    %379 = vmatprep.subr.bf16.mxu0 0
    %380 = vmatpush2.bf16.msra.mxu0 %v312
    %381 = vmatprep.subr.bf16.mxu0 0
    %382 = vmatpush2.bf16.msra.mxu0 %v311
    %383 = vmatprep.mubr.bf16.mxu0 %v184
    %384 = vmatmul.mubr.bf16.gmra.mxu0 %v183
    %v385 = vpop.f32.mrf.mxu0
    %v386 = vadd.f32 %v141, %v385
    %v387 = vpop.f32.mrf.mxu0
    %v388 = vpop.f32.mrf.mxu0
    %v389 = vadd.f32 %v141, %v388
    %v390 = vpop.f32.mrf.mxu0
    %391 = vmatprep.mubr.bf16.mxu0 %v187
    %392 = vmatmul.mubr.bf16.gmra.mxu0 %v186
    %v393 = vpop.f32.mrf.mxu0
    %v394 = vadd.f32 %v141, %v393
    %v395 = vpop.f32.mrf.mxu0
    %v396 = vpop.f32.mrf.mxu0
    %v397 = vadd.f32 %v141, %v396
    %v398 = vpop.f32.mrf.mxu0
    %399 = vmatprep.mubr.bf16.mxu0 %v190
    %400 = vmatmul.mubr.bf16.gmra.mxu0 %v189
    %v401 = vpop.f32.mrf.mxu0
    %v402 = vadd.f32 %v141, %v401
    %v403 = vpop.f32.mrf.mxu0
    %v404 = vpop.f32.mrf.mxu0
    %v405 = vadd.f32 %v141, %v404
    %v406 = vpop.f32.mrf.mxu0
    %407 = vmatprep.mubr.bf16.mxu0 %v193
    %408 = vmatmul.mubr.bf16.gmra.mxu0 %v192
    %v409 = vpop.f32.mrf.mxu0
    %v410 = vadd.f32 %v141, %v409
    %v411 = vpop.f32.mrf.mxu0
    %v412 = vpop.f32.mrf.mxu0
    %v413 = vadd.f32 %v141, %v412
    %v414 = vpop.f32.mrf.mxu0
    %415 = vdwg.mxu0
    %416 = vmatprep.subr.bf16.mxu0 0
    %417 = vmatpush1.bf16.msra.mxu0 %v326
    %418 = vmatprep.subr.bf16.mxu0 0
    %419 = vmatpush1.bf16.msra.mxu0 %v325
    %420 = vmatprep.subr.bf16.mxu0 0
    %421 = vmatpush1.bf16.msra.mxu0 %v324
    %422 = vmatprep.subr.bf16.mxu0 0
    %423 = vmatpush1.bf16.msra.mxu0 %v323
    %424 = vmatprep.subr.bf16.mxu0 0
    %425 = vmatpush1.bf16.msra.mxu0 %v322
    %426 = vmatprep.subr.bf16.mxu0 0
    %427 = vmatpush1.bf16.msra.mxu0 %v321
    %428 = vmatprep.subr.bf16.mxu0 0
    %429 = vmatpush1.bf16.msra.mxu0 %v320
    %430 = vmatprep.subr.bf16.mxu0 0
    %431 = vmatpush1.bf16.msra.mxu0 %v319
    %432 = vmatprep.subr.bf16.mxu0 0
    %433 = vmatpush2.bf16.msra.mxu0 0
    %434 = vmatprep.subr.bf16.mxu0 0
    %435 = vmatpush2.bf16.msra.mxu0 0
    %436 = vmatprep.subr.bf16.mxu0 0
    %437 = vmatpush2.bf16.msra.mxu0 0
    %438 = vmatprep.subr.bf16.mxu0 0
    %439 = vmatpush2.bf16.msra.mxu0 0
    %440 = vmatprep.subr.bf16.mxu0 0
    %441 = vmatpush2.bf16.msra.mxu0 0
    %442 = vmatprep.subr.bf16.mxu0 0
    %443 = vmatpush2.bf16.msra.mxu0 0
    %444 = vmatprep.subr.bf16.mxu0 0
    %445 = vmatpush2.bf16.msra.mxu0 0
    %446 = vmatprep.subr.bf16.mxu0 0
    %447 = vmatpush2.bf16.msra.mxu0 0
    %448 = vmatprep.mubr.bf16.mxu0 0
    %449 = vmatmul.mubr.bf16.gmra.mxu0 %v185
    %v450 = vpop.f32.mrf.mxu0
    %v451 = vadd.f32 %v386, %v450
    %v452 = vpop.f32.mrf.mxu0
    %v453 = vpop.f32.mrf.mxu0
    %v454 = vadd.f32 %v389, %v453
    %v455 = vpop.f32.mrf.mxu0
    %456 = vmatprep.mubr.bf16.mxu0 0
    %457 = vmatmul.mubr.bf16.gmra.mxu0 %v188
    %v458 = vpop.f32.mrf.mxu0
    %v459 = vadd.f32 %v394, %v458
    %v460 = vpop.f32.mrf.mxu0
    %v461 = vpop.f32.mrf.mxu0
    %v462 = vadd.f32 %v397, %v461
    %v463 = vpop.f32.mrf.mxu0
    %464 = vmatprep.mubr.bf16.mxu0 0
    %465 = vmatmul.mubr.bf16.gmra.mxu0 %v191
    %v466 = vpop.f32.mrf.mxu0
    %v467 = vadd.f32 %v402, %v466
    %v468 = vpop.f32.mrf.mxu0
    %v469 = vpop.f32.mrf.mxu0
    %v470 = vadd.f32 %v405, %v469
    %v471 = vpop.f32.mrf.mxu0
    %472 = vmatprep.mubr.bf16.mxu0 0
    %473 = vmatmul.mubr.bf16.gmra.mxu0 %v194
    %v474 = vpop.f32.mrf.mxu0
    %v475 = vadd.f32 %v410, %v474
    %v476 = vpop.f32.mrf.mxu0
    %v477 = vpop.f32.mrf.mxu0
    %v478 = vadd.f32 %v413, %v477
    %v479 = vpop.f32.mrf.mxu0
    %480 = vdwg.mxu0
    %vm481 = vcmask 785408
    %482 = vst.msk [vmem:[#allocation2] sm:$0xff] %vm481, %v451
    %483 = vst.msk [vmem:[#allocation2 + $0x8] sm:$0xff] %vm481, %v454
    %484 = vst.msk [vmem:[#allocation2 + $0x10] sm:$0xff] %vm481, %v459
    %485 = vst.msk [vmem:[#allocation2 + $0x18] sm:$0xff] %vm481, %v462
    %486 = vst.msk [vmem:[#allocation2 + $0x20] sm:$0xff] %vm481, %v467
    %487 = vst.msk [vmem:[#allocation2 + $0x28] sm:$0xff] %vm481, %v470
    %488 = vst.msk [vmem:[#allocation2 + $0x30] sm:$0xff] %vm481, %v475
    %489 = vst.msk [vmem:[#allocation2 + $0x38] sm:$0xff] %vm481, %v478
    %v490 = vld [vmem:[%s5] sm:$0xf]
    %v491 = vld [vmem:[%s5 + $0x4] sm:$0xf]
    %v492 = vld [vmem:[%s5 + $0x8] sm:$0xf]
    %v493 = vld [vmem:[%s5 + $0xc] sm:$0xf]
    %v494 = vld [vmem:[%s7] sm:$0x1]
    %v495 = vld [vmem:[#allocation2] sm:$0xff]
    %v497 = vlaneseq
    %v498 = vshrl.u32 %v497, 7
    %v499 = vsub.s32 0, %v498
    %v500 = vrot.slane %v494, %v499
    %v506 = vunpack.c.l.b16 %v490
    %v507 = vunpack.c.l.b16 %v491
    %v508 = vunpack.c.l.b16 %v492
    %v509 = vunpack.c.l.b16 %v493
    %v510 = vpack.c.b16 %v507, %v506
    %v511 = vpack.c.b16 %v509, %v508
    %vm514 = vcmask 261120
    %v516 = vsel %vm514, 0, 0
    %518 = vmatprep.subr.bf16.mxu0 0
    %519 = vmatpush1.bf16.msra.mxu0 0
    %520 = vmatprep.subr.bf16.mxu0 0
    %521 = vmatpush1.bf16.msra.mxu0 0
    %522 = vmatprep.subr.bf16.mxu0 0
    %523 = vmatpush1.bf16.msra.mxu0 0
    %524 = vmatprep.subr.bf16.mxu0 0
    %525 = vmatpush1.bf16.msra.mxu0 0
    %526 = vmatprep.subr.bf16.mxu0 0
    %527 = vmatpush1.bf16.msra.mxu0 0
    %528 = vmatprep.subr.bf16.mxu0 0
    %529 = vmatpush1.bf16.msra.mxu0 0
    %530 = vmatprep.subr.bf16.mxu0 0
    %531 = vmatpush1.bf16.msra.mxu0 %v511
    %532 = vmatprep.subr.bf16.mxu0 0
    %533 = vmatpush1.bf16.msra.mxu0 %v510
    %534 = vmatprep.subr.bf16.mxu0 0
    %535 = vmatpush2.bf16.msra.mxu0 0
    %536 = vmatprep.subr.bf16.mxu0 0
    %537 = vmatpush2.bf16.msra.mxu0 0
    %538 = vmatprep.subr.bf16.mxu0 0
    %539 = vmatpush2.bf16.msra.mxu0 0
    %540 = vmatprep.subr.bf16.mxu0 0
    %541 = vmatpush2.bf16.msra.mxu0 0
    %542 = vmatprep.subr.bf16.mxu0 0
    %543 = vmatpush2.bf16.msra.mxu0 0
    %544 = vmatprep.subr.bf16.mxu0 0
    %545 = vmatpush2.bf16.msra.mxu0 0
    %546 = vmatprep.subr.bf16.mxu0 0
    %547 = vmatpush2.bf16.msra.mxu0 0
    %548 = vmatprep.subr.bf16.mxu0 0
    %549 = vmatpush2.bf16.msra.mxu0 0
    %550 = vmatprep.mubr.bf16.mxu0 0
    %551 = vmatmul.mubr.bf16.gmra.mxu0 %v516
    %v552 = vpop.f32.mrf.mxu0
    %v553 = vadd.f32 %v500, %v552
    %v554 = vpop.f32.mrf.mxu0
    %v555 = vpop.f32.mrf.mxu0
    %v556 = vpop.f32.mrf.mxu0
    %557 = vdwg.mxu0
    %v558 = vadd.f32 %v495, %v553
    %v559 = vxor.u32 %v558, 2147483648
    %v560 = vmul.f32 %v559, 1.442695
    %v561 = vpow.pop %v560
    %v562 = vadd.f32 %v561, 1.0
    %v563 = vrcp.pop %v562
    %v564 = vmul.f32 1.0, %v563
    %566 = vrot.lane.b32.xlu0 %v553, 64
    %v567 = vpop.permute.xlu0 %566
    %v569 = vmul.f32 %v564, %v567
    %571 = vrot.lane.b32.xlu0 %v569, 64
    %v572 = vpop.permute.xlu0 %571
    %v574 = vadd.f32 %v495, %v572
    %v575 = vtanh.pop %v574
    %v576 = vsub.f32 1.0, %v564
    %578 = vrot.lane.b32.xlu0 %v575, 96
    %v579 = vpop.permute.xlu0 %578
    %v581 = vmul.f32 %v576, %v579
    %v582 = vmul.f32 %v564, 0.0
    %v583 = vadd.f32 %v581, %v582
    %s584 = scalar_lea.vmem [#allocation2], 8
    %v585 = vld [vmem:[%s584] sm:$0xff]
    %v586 = vpack.c.bf16 %v583, %v583
    %588 = vrot.lane.b32.xlu0 %v586, 96
    %v589 = vpop.permute.xlu0 %588
    %v591 = vsel %vm514, %v589, 0
    %593 = vmatprep.subr.bf16.mxu0 0
    %594 = vmatpush1.bf16.msra.mxu0 0
    %595 = vmatprep.subr.bf16.mxu0 0
    %596 = vmatpush1.bf16.msra.mxu0 0
    %597 = vmatprep.subr.bf16.mxu0 0
    %598 = vmatpush1.bf16.msra.mxu0 0
    %599 = vmatprep.subr.bf16.mxu0 0
    %600 = vmatpush1.bf16.msra.mxu0 0
    %601 = vmatprep.subr.bf16.mxu0 0
    %602 = vmatpush1.bf16.msra.mxu0 0
    %603 = vmatprep.subr.bf16.mxu0 0
    %604 = vmatpush1.bf16.msra.mxu0 0
    %605 = vmatprep.subr.bf16.mxu0 0
    %606 = vmatpush1.bf16.msra.mxu0 %v511
    %607 = vmatprep.subr.bf16.mxu0 0
    %608 = vmatpush1.bf16.msra.mxu0 %v510
    %609 = vmatprep.subr.bf16.mxu0 0
    %610 = vmatpush2.bf16.msra.mxu0 0
    %611 = vmatprep.subr.bf16.mxu0 0
    %612 = vmatpush2.bf16.msra.mxu0 0
    %613 = vmatprep.subr.bf16.mxu0 0
    %614 = vmatpush2.bf16.msra.mxu0 0
    %615 = vmatprep.subr.bf16.mxu0 0
    %616 = vmatpush2.bf16.msra.mxu0 0
    %617 = vmatprep.subr.bf16.mxu0 0
    %618 = vmatpush2.bf16.msra.mxu0 0
    %619 = vmatprep.subr.bf16.mxu0 0
    %620 = vmatpush2.bf16.msra.mxu0 0
    %621 = vmatprep.subr.bf16.mxu0 0
    %622 = vmatpush2.bf16.msra.mxu0 0
    %623 = vmatprep.subr.bf16.mxu0 0
    %624 = vmatpush2.bf16.msra.mxu0 0
    %625 = vmatprep.mubr.bf16.mxu0 0
    %626 = vmatmul.mubr.bf16.gmra.mxu0 %v591
    %v627 = vpop.f32.mrf.mxu0
    %v628 = vadd.f32 %v500, %v627
    %v629 = vpop.f32.mrf.mxu0
    %v630 = vpop.f32.mrf.mxu0
    %v631 = vpop.f32.mrf.mxu0
    %632 = vdwg.mxu0
    %v633 = vadd.f32 %v585, %v628
    %v634 = vxor.u32 %v633, 2147483648
    %v635 = vmul.f32 %v634, 1.442695
    %v636 = vpow.pop %v635
    %v637 = vadd.f32 %v636, 1.0
    %v638 = vrcp.pop %v637
    %v639 = vmul.f32 1.0, %v638
    %641 = vrot.lane.b32.xlu0 %v628, 64
    %v642 = vpop.permute.xlu0 %641
    %v644 = vmul.f32 %v639, %v642
    %646 = vrot.lane.b32.xlu0 %v644, 64
    %v647 = vpop.permute.xlu0 %646
    %v649 = vadd.f32 %v585, %v647
    %v650 = vtanh.pop %v649
    %v651 = vsub.f32 1.0, %v639
    %653 = vrot.lane.b32.xlu0 %v650, 96
    %v654 = vpop.permute.xlu0 %653
    %v656 = vmul.f32 %v651, %v654
    %v657 = vmul.f32 %v639, %v583
    %v658 = vadd.f32 %v656, %v657
    %s659 = scalar_lea.vmem [#allocation2], 16
    %v660 = vld [vmem:[%s659] sm:$0xff]
    %v661 = vpack.c.bf16 %v658, %v658
    %663 = vrot.lane.b32.xlu0 %v661, 96
    %v664 = vpop.permute.xlu0 %663
    %v666 = vsel %vm514, %v664, 0
    %668 = vmatprep.subr.bf16.mxu0 0
    %669 = vmatpush1.bf16.msra.mxu0 0
    %670 = vmatprep.subr.bf16.mxu0 0
    %671 = vmatpush1.bf16.msra.mxu0 0
    %672 = vmatprep.subr.bf16.mxu0 0
    %673 = vmatpush1.bf16.msra.mxu0 0
    %674 = vmatprep.subr.bf16.mxu0 0
    %675 = vmatpush1.bf16.msra.mxu0 0
    %676 = vmatprep.subr.bf16.mxu0 0
    %677 = vmatpush1.bf16.msra.mxu0 0
    %678 = vmatprep.subr.bf16.mxu0 0
    %679 = vmatpush1.bf16.msra.mxu0 0
    %680 = vmatprep.subr.bf16.mxu0 0
    %681 = vmatpush1.bf16.msra.mxu0 %v511
    %682 = vmatprep.subr.bf16.mxu0 0
    %683 = vmatpush1.bf16.msra.mxu0 %v510
    %684 = vmatprep.subr.bf16.mxu0 0
    %685 = vmatpush2.bf16.msra.mxu0 0
    %686 = vmatprep.subr.bf16.mxu0 0
    %687 = vmatpush2.bf16.msra.mxu0 0
    %688 = vmatprep.subr.bf16.mxu0 0
    %689 = vmatpush2.bf16.msra.mxu0 0
    %690 = vmatprep.subr.bf16.mxu0 0
    %691 = vmatpush2.bf16.msra.mxu0 0
    %692 = vmatprep.subr.bf16.mxu0 0
    %693 = vmatpush2.bf16.msra.mxu0 0
    %694 = vmatprep.subr.bf16.mxu0 0
    %695 = vmatpush2.bf16.msra.mxu0 0
    %696 = vmatprep.subr.bf16.mxu0 0
    %697 = vmatpush2.bf16.msra.mxu0 0
    %698 = vmatprep.subr.bf16.mxu0 0
    %699 = vmatpush2.bf16.msra.mxu0 0
    %700 = vmatprep.mubr.bf16.mxu0 0
    %701 = vmatmul.mubr.bf16.gmra.mxu0 %v666
    %v702 = vpop.f32.mrf.mxu0
    %v703 = vadd.f32 %v500, %v702
    %v704 = vpop.f32.mrf.mxu0
    %v705 = vpop.f32.mrf.mxu0
    %v706 = vpop.f32.mrf.mxu0
    %707 = vdwg.mxu0
    %v708 = vadd.f32 %v660, %v703
    %v709 = vxor.u32 %v708, 2147483648
    %v710 = vmul.f32 %v709, 1.442695
    %v711 = vpow.pop %v710
    %v712 = vadd.f32 %v711, 1.0
    %v713 = vrcp.pop %v712
    %v714 = vmul.f32 1.0, %v713
    %716 = vrot.lane.b32.xlu0 %v703, 64
    %v717 = vpop.permute.xlu0 %716
    %v719 = vmul.f32 %v714, %v717
    %721 = vrot.lane.b32.xlu0 %v719, 64
    %v722 = vpop.permute.xlu0 %721
    %v724 = vadd.f32 %v660, %v722
    %v725 = vtanh.pop %v724
    %v726 = vsub.f32 1.0, %v714
    %728 = vrot.lane.b32.xlu0 %v725, 96
    %v729 = vpop.permute.xlu0 %728
    %v731 = vmul.f32 %v726, %v729
    %v732 = vmul.f32 %v714, %v658
    %v733 = vadd.f32 %v731, %v732
    %s734 = scalar_lea.vmem [#allocation2], 24
    %v735 = vld [vmem:[%s734] sm:$0xff]
    %v736 = vpack.c.bf16 %v733, %v733
    %738 = vrot.lane.b32.xlu0 %v736, 96
    %v739 = vpop.permute.xlu0 %738
    %v741 = vsel %vm514, %v739, 0
    %743 = vmatprep.subr.bf16.mxu0 0
    %744 = vmatpush1.bf16.msra.mxu0 0
    %745 = vmatprep.subr.bf16.mxu0 0
    %746 = vmatpush1.bf16.msra.mxu0 0
    %747 = vmatprep.subr.bf16.mxu0 0
    %748 = vmatpush1.bf16.msra.mxu0 0
    %749 = vmatprep.subr.bf16.mxu0 0
    %750 = vmatpush1.bf16.msra.mxu0 0
    %751 = vmatprep.subr.bf16.mxu0 0
    %752 = vmatpush1.bf16.msra.mxu0 0
    %753 = vmatprep.subr.bf16.mxu0 0
    %754 = vmatpush1.bf16.msra.mxu0 0
    %755 = vmatprep.subr.bf16.mxu0 0
    %756 = vmatpush1.bf16.msra.mxu0 %v511
    %757 = vmatprep.subr.bf16.mxu0 0
    %758 = vmatpush1.bf16.msra.mxu0 %v510
    %759 = vmatprep.subr.bf16.mxu0 0
    %760 = vmatpush2.bf16.msra.mxu0 0
    %761 = vmatprep.subr.bf16.mxu0 0
    %762 = vmatpush2.bf16.msra.mxu0 0
    %763 = vmatprep.subr.bf16.mxu0 0
    %764 = vmatpush2.bf16.msra.mxu0 0
    %765 = vmatprep.subr.bf16.mxu0 0
    %766 = vmatpush2.bf16.msra.mxu0 0
    %767 = vmatprep.subr.bf16.mxu0 0
    %768 = vmatpush2.bf16.msra.mxu0 0
    %769 = vmatprep.subr.bf16.mxu0 0
    %770 = vmatpush2.bf16.msra.mxu0 0
    %771 = vmatprep.subr.bf16.mxu0 0
    %772 = vmatpush2.bf16.msra.mxu0 0
    %773 = vmatprep.subr.bf16.mxu0 0
    %774 = vmatpush2.bf16.msra.mxu0 0
    %775 = vmatprep.mubr.bf16.mxu0 0
    %776 = vmatmul.mubr.bf16.gmra.mxu0 %v741
    %v777 = vpop.f32.mrf.mxu0
    %v778 = vadd.f32 %v500, %v777
    %v779 = vpop.f32.mrf.mxu0
    %v780 = vpop.f32.mrf.mxu0
    %v781 = vpop.f32.mrf.mxu0
    %782 = vdwg.mxu0
    %v783 = vadd.f32 %v735, %v778
    %v784 = vxor.u32 %v783, 2147483648
    %v785 = vmul.f32 %v784, 1.442695
    %v786 = vpow.pop %v785
    %v787 = vadd.f32 %v786, 1.0
    %v788 = vrcp.pop %v787
    %v789 = vmul.f32 1.0, %v788
    %791 = vrot.lane.b32.xlu0 %v778, 64
    %v792 = vpop.permute.xlu0 %791
    %v794 = vmul.f32 %v789, %v792
    %796 = vrot.lane.b32.xlu0 %v794, 64
    %v797 = vpop.permute.xlu0 %796
    %v799 = vadd.f32 %v735, %v797
    %v800 = vtanh.pop %v799
    %v801 = vsub.f32 1.0, %v789
    %803 = vrot.lane.b32.xlu0 %v800, 96
    %v804 = vpop.permute.xlu0 %803
    %v806 = vmul.f32 %v801, %v804
    %v807 = vmul.f32 %v789, %v733
    %v808 = vadd.f32 %v806, %v807
    %s809 = scalar_lea.vmem [#allocation2], 32
    %v810 = vld [vmem:[%s809] sm:$0xff]
    %v811 = vpack.c.bf16 %v808, %v808
    %813 = vrot.lane.b32.xlu0 %v811, 96
    %v814 = vpop.permute.xlu0 %813
    %v816 = vsel %vm514, %v814, 0
    %818 = vmatprep.subr.bf16.mxu0 0
    %819 = vmatpush1.bf16.msra.mxu0 0
    %820 = vmatprep.subr.bf16.mxu0 0
    %821 = vmatpush1.bf16.msra.mxu0 0
    %822 = vmatprep.subr.bf16.mxu0 0
    %823 = vmatpush1.bf16.msra.mxu0 0
    %824 = vmatprep.subr.bf16.mxu0 0
    %825 = vmatpush1.bf16.msra.mxu0 0
    %826 = vmatprep.subr.bf16.mxu0 0
    %827 = vmatpush1.bf16.msra.mxu0 0
    %828 = vmatprep.subr.bf16.mxu0 0
    %829 = vmatpush1.bf16.msra.mxu0 0
    %830 = vmatprep.subr.bf16.mxu0 0
    %831 = vmatpush1.bf16.msra.mxu0 %v511
    %832 = vmatprep.subr.bf16.mxu0 0
    %833 = vmatpush1.bf16.msra.mxu0 %v510
    %834 = vmatprep.subr.bf16.mxu0 0
    %835 = vmatpush2.bf16.msra.mxu0 0
    %836 = vmatprep.subr.bf16.mxu0 0
    %837 = vmatpush2.bf16.msra.mxu0 0
    %838 = vmatprep.subr.bf16.mxu0 0
    %839 = vmatpush2.bf16.msra.mxu0 0
    %840 = vmatprep.subr.bf16.mxu0 0
    %841 = vmatpush2.bf16.msra.mxu0 0
    %842 = vmatprep.subr.bf16.mxu0 0
    %843 = vmatpush2.bf16.msra.mxu0 0
    %844 = vmatprep.subr.bf16.mxu0 0
    %845 = vmatpush2.bf16.msra.mxu0 0
    %846 = vmatprep.subr.bf16.mxu0 0
    %847 = vmatpush2.bf16.msra.mxu0 0
    %848 = vmatprep.subr.bf16.mxu0 0
    %849 = vmatpush2.bf16.msra.mxu0 0
    %850 = vmatprep.mubr.bf16.mxu0 0
    %851 = vmatmul.mubr.bf16.gmra.mxu0 %v816
    %v852 = vpop.f32.mrf.mxu0
    %v853 = vadd.f32 %v500, %v852
    %v854 = vpop.f32.mrf.mxu0
    %v855 = vpop.f32.mrf.mxu0
    %v856 = vpop.f32.mrf.mxu0
    %857 = vdwg.mxu0
    %v858 = vadd.f32 %v810, %v853
    %v859 = vxor.u32 %v858, 2147483648
    %v860 = vmul.f32 %v859, 1.442695
    %v861 = vpow.pop %v860
    %v862 = vadd.f32 %v861, 1.0
    %v863 = vrcp.pop %v862
    %v864 = vmul.f32 1.0, %v863
    %866 = vrot.lane.b32.xlu0 %v853, 64
    %v867 = vpop.permute.xlu0 %866
    %v869 = vmul.f32 %v864, %v867
    %871 = vrot.lane.b32.xlu0 %v869, 64
    %v872 = vpop.permute.xlu0 %871
    %v874 = vadd.f32 %v810, %v872
    %v875 = vtanh.pop %v874
    %v876 = vsub.f32 1.0, %v864
    %878 = vrot.lane.b32.xlu0 %v875, 96
    %v879 = vpop.permute.xlu0 %878
    %v881 = vmul.f32 %v876, %v879
    %v882 = vmul.f32 %v864, %v808
    %v883 = vadd.f32 %v881, %v882
    %s884 = scalar_lea.vmem [#allocation2], 40
    %v885 = vld [vmem:[%s884] sm:$0xff]
    %v886 = vpack.c.bf16 %v883, %v883
    %888 = vrot.lane.b32.xlu0 %v886, 96
    %v889 = vpop.permute.xlu0 %888
    %v891 = vsel %vm514, %v889, 0
    %893 = vmatprep.subr.bf16.mxu0 0
    %894 = vmatpush1.bf16.msra.mxu0 0
    %895 = vmatprep.subr.bf16.mxu0 0
    %896 = vmatpush1.bf16.msra.mxu0 0
    %897 = vmatprep.subr.bf16.mxu0 0
    %898 = vmatpush1.bf16.msra.mxu0 0
    %899 = vmatprep.subr.bf16.mxu0 0
    %900 = vmatpush1.bf16.msra.mxu0 0
    %901 = vmatprep.subr.bf16.mxu0 0
    %902 = vmatpush1.bf16.msra.mxu0 0
    %903 = vmatprep.subr.bf16.mxu0 0
    %904 = vmatpush1.bf16.msra.mxu0 0
    %905 = vmatprep.subr.bf16.mxu0 0
    %906 = vmatpush1.bf16.msra.mxu0 %v511
    %907 = vmatprep.subr.bf16.mxu0 0
    %908 = vmatpush1.bf16.msra.mxu0 %v510
    %909 = vmatprep.subr.bf16.mxu0 0
    %910 = vmatpush2.bf16.msra.mxu0 0
    %911 = vmatprep.subr.bf16.mxu0 0
    %912 = vmatpush2.bf16.msra.mxu0 0
    %913 = vmatprep.subr.bf16.mxu0 0
    %914 = vmatpush2.bf16.msra.mxu0 0
    %915 = vmatprep.subr.bf16.mxu0 0
    %916 = vmatpush2.bf16.msra.mxu0 0
    %917 = vmatprep.subr.bf16.mxu0 0
    %918 = vmatpush2.bf16.msra.mxu0 0
    %919 = vmatprep.subr.bf16.mxu0 0
    %920 = vmatpush2.bf16.msra.mxu0 0
    %921 = vmatprep.subr.bf16.mxu0 0
    %922 = vmatpush2.bf16.msra.mxu0 0
    %923 = vmatprep.subr.bf16.mxu0 0
    %924 = vmatpush2.bf16.msra.mxu0 0
    %925 = vmatprep.mubr.bf16.mxu0 0
    %926 = vmatmul.mubr.bf16.gmra.mxu0 %v891
    %v927 = vpop.f32.mrf.mxu0
    %v928 = vadd.f32 %v500, %v927
    %v929 = vpop.f32.mrf.mxu0
    %v930 = vpop.f32.mrf.mxu0
    %v931 = vpop.f32.mrf.mxu0
    %932 = vdwg.mxu0
    %v933 = vadd.f32 %v885, %v928
    %v934 = vxor.u32 %v933, 2147483648
    %v935 = vmul.f32 %v934, 1.442695
    %v936 = vpow.pop %v935
    %v937 = vadd.f32 %v936, 1.0
    %v938 = vrcp.pop %v937
    %v939 = vmul.f32 1.0, %v938
    %941 = vrot.lane.b32.xlu0 %v928, 64
    %v942 = vpop.permute.xlu0 %941
    %v944 = vmul.f32 %v939, %v942
    %946 = vrot.lane.b32.xlu0 %v944, 64
    %v947 = vpop.permute.xlu0 %946
    %v949 = vadd.f32 %v885, %v947
    %v950 = vtanh.pop %v949
    %v951 = vsub.f32 1.0, %v939
    %953 = vrot.lane.b32.xlu0 %v950, 96
    %v954 = vpop.permute.xlu0 %953
    %v956 = vmul.f32 %v951, %v954
    %v957 = vmul.f32 %v939, %v883
    %v958 = vadd.f32 %v956, %v957
    %s959 = scalar_lea.vmem [#allocation2], 48
    %v960 = vld [vmem:[%s959] sm:$0xff]
    %v961 = vpack.c.bf16 %v958, %v958
    %963 = vrot.lane.b32.xlu0 %v961, 96
    %v964 = vpop.permute.xlu0 %963
    %v966 = vsel %vm514, %v964, 0
    %968 = vmatprep.subr.bf16.mxu0 0
    %969 = vmatpush1.bf16.msra.mxu0 0
    %970 = vmatprep.subr.bf16.mxu0 0
    %971 = vmatpush1.bf16.msra.mxu0 0
    %972 = vmatprep.subr.bf16.mxu0 0
    %973 = vmatpush1.bf16.msra.mxu0 0
    %974 = vmatprep.subr.bf16.mxu0 0
    %975 = vmatpush1.bf16.msra.mxu0 0
    %976 = vmatprep.subr.bf16.mxu0 0
    %977 = vmatpush1.bf16.msra.mxu0 0
    %978 = vmatprep.subr.bf16.mxu0 0
    %979 = vmatpush1.bf16.msra.mxu0 0
    %980 = vmatprep.subr.bf16.mxu0 0
    %981 = vmatpush1.bf16.msra.mxu0 %v511
    %982 = vmatprep.subr.bf16.mxu0 0
    %983 = vmatpush1.bf16.msra.mxu0 %v510
    %984 = vmatprep.subr.bf16.mxu0 0
    %985 = vmatpush2.bf16.msra.mxu0 0
    %986 = vmatprep.subr.bf16.mxu0 0
    %987 = vmatpush2.bf16.msra.mxu0 0
    %988 = vmatprep.subr.bf16.mxu0 0
    %989 = vmatpush2.bf16.msra.mxu0 0
    %990 = vmatprep.subr.bf16.mxu0 0
    %991 = vmatpush2.bf16.msra.mxu0 0
    %992 = vmatprep.subr.bf16.mxu0 0
    %993 = vmatpush2.bf16.msra.mxu0 0
    %994 = vmatprep.subr.bf16.mxu0 0
    %995 = vmatpush2.bf16.msra.mxu0 0
    %996 = vmatprep.subr.bf16.mxu0 0
    %997 = vmatpush2.bf16.msra.mxu0 0
    %998 = vmatprep.subr.bf16.mxu0 0
    %999 = vmatpush2.bf16.msra.mxu0 0
    %1000 = vmatprep.mubr.bf16.mxu0 0
    %1001 = vmatmul.mubr.bf16.gmra.mxu0 %v966
    %v1002 = vpop.f32.mrf.mxu0
    %v1003 = vadd.f32 %v500, %v1002
    %v1004 = vpop.f32.mrf.mxu0
    %v1005 = vpop.f32.mrf.mxu0
    %v1006 = vpop.f32.mrf.mxu0
    %1007 = vdwg.mxu0
    %v1008 = vadd.f32 %v960, %v1003
    %v1009 = vxor.u32 %v1008, 2147483648
    %v1010 = vmul.f32 %v1009, 1.442695
    %v1011 = vpow.pop %v1010
    %v1012 = vadd.f32 %v1011, 1.0
    %v1013 = vrcp.pop %v1012
    %v1014 = vmul.f32 1.0, %v1013
    %1016 = vrot.lane.b32.xlu0 %v1003, 64
    %v1017 = vpop.permute.xlu0 %1016
    %v1019 = vmul.f32 %v1014, %v1017
    %1021 = vrot.lane.b32.xlu0 %v1019, 64
    %v1022 = vpop.permute.xlu0 %1021
    %v1024 = vadd.f32 %v960, %v1022
    %v1025 = vtanh.pop %v1024
    %v1026 = vsub.f32 1.0, %v1014
    %1028 = vrot.lane.b32.xlu0 %v1025, 96
    %v1029 = vpop.permute.xlu0 %1028
    %v1031 = vmul.f32 %v1026, %v1029
    %v1032 = vmul.f32 %v1014, %v958
    %v1033 = vadd.f32 %v1031, %v1032
    %s1034 = scalar_lea.vmem [#allocation2], 56
    %v1035 = vld [vmem:[%s1034] sm:$0xff]
    %v1036 = vpack.c.bf16 %v1033, %v1033
    %1038 = vrot.lane.b32.xlu0 %v1036, 96
    %v1039 = vpop.permute.xlu0 %1038
    %v1041 = vsel %vm514, %v1039, 0
    %1043 = vmatprep.subr.bf16.mxu0 0
    %1044 = vmatpush1.bf16.msra.mxu0 0
    %1045 = vmatprep.subr.bf16.mxu0 0
    %1046 = vmatpush1.bf16.msra.mxu0 0
    %1047 = vmatprep.subr.bf16.mxu0 0
    %1048 = vmatpush1.bf16.msra.mxu0 0
    %1049 = vmatprep.subr.bf16.mxu0 0
    %1050 = vmatpush1.bf16.msra.mxu0 0
    %1051 = vmatprep.subr.bf16.mxu0 0
    %1052 = vmatpush1.bf16.msra.mxu0 0
    %1053 = vmatprep.subr.bf16.mxu0 0
    %1054 = vmatpush1.bf16.msra.mxu0 0
    %1055 = vmatprep.subr.bf16.mxu0 0
    %1056 = vmatpush1.bf16.msra.mxu0 %v511
    %1057 = vmatprep.subr.bf16.mxu0 0
    %1058 = vmatpush1.bf16.msra.mxu0 %v510
    %1059 = vmatprep.subr.bf16.mxu0 0
    %1060 = vmatpush2.bf16.msra.mxu0 0
    %1061 = vmatprep.subr.bf16.mxu0 0
    %1062 = vmatpush2.bf16.msra.mxu0 0
    %1063 = vmatprep.subr.bf16.mxu0 0
    %1064 = vmatpush2.bf16.msra.mxu0 0
    %1065 = vmatprep.subr.bf16.mxu0 0
    %1066 = vmatpush2.bf16.msra.mxu0 0
    %1067 = vmatprep.subr.bf16.mxu0 0
    %1068 = vmatpush2.bf16.msra.mxu0 0
    %1069 = vmatprep.subr.bf16.mxu0 0
    %1070 = vmatpush2.bf16.msra.mxu0 0
    %1071 = vmatprep.subr.bf16.mxu0 0
    %1072 = vmatpush2.bf16.msra.mxu0 0
    %1073 = vmatprep.subr.bf16.mxu0 0
    %1074 = vmatpush2.bf16.msra.mxu0 0
    %1075 = vmatprep.mubr.bf16.mxu0 0
    %1076 = vmatmul.mubr.bf16.gmra.mxu0 %v1041
    %v1077 = vpop.f32.mrf.mxu0
    %v1078 = vadd.f32 %v500, %v1077
    %v1079 = vpop.f32.mrf.mxu0
    %v1080 = vpop.f32.mrf.mxu0
    %v1081 = vpop.f32.mrf.mxu0
    %1082 = vdwg.mxu0
    %v1083 = vadd.f32 %v1035, %v1078
    %v1084 = vxor.u32 %v1083, 2147483648
    %v1085 = vmul.f32 %v1084, 1.442695
    %v1086 = vpow.pop %v1085
    %v1087 = vadd.f32 %v1086, 1.0
    %v1088 = vrcp.pop %v1087
    %v1089 = vmul.f32 1.0, %v1088
    %1091 = vrot.lane.b32.xlu0 %v1078, 64
    %v1092 = vpop.permute.xlu0 %1091
    %v1094 = vmul.f32 %v1089, %v1092
    %1096 = vrot.lane.b32.xlu0 %v1094, 64
    %v1097 = vpop.permute.xlu0 %1096
    %v1099 = vadd.f32 %v1035, %v1097
    %v1100 = vtanh.pop %v1099
    %v1101 = vsub.f32 1.0, %v1089
    %1103 = vrot.lane.b32.xlu0 %v1100, 96
    %v1104 = vpop.permute.xlu0 %1103
    %v1106 = vmul.f32 %v1101, %v1104
    %v1107 = vmul.f32 %v1089, %v1033
    %v1108 = vadd.f32 %v1106, %v1107
    %v1109 = vld [vmem:[%s1] sm:$0xf]
    %v1110 = vld [vmem:[%s1 + $0x4] sm:$0xf]
    %v1111 = vld [vmem:[%s1 + $0x8] sm:$0xf]
    %v1112 = vld [vmem:[%s1 + $0xc] sm:$0xf]
    %v1113 = vld [vmem:[%s1 + $0x10] sm:$0xf]
    %v1114 = vld [vmem:[%s1 + $0x14] sm:$0xf]
    %v1115 = vld [vmem:[%s1 + $0x18] sm:$0xf]
    %v1116 = vld [vmem:[%s1 + $0x1c] sm:$0xf]
    %v1117 = vunpack.c.l.bf16 %v1109
    %v1118 = vunpack.c.l.bf16 %v1110
    %v1119 = vunpack.c.l.bf16 %v1111
    %v1120 = vunpack.c.l.bf16 %v1112
    %v1121 = vunpack.c.l.bf16 %v1113
    %v1122 = vunpack.c.l.bf16 %v1114
    %v1123 = vunpack.c.l.bf16 %v1115
    %v1124 = vunpack.c.l.bf16 %v1116
    %v1125 = vld [vmem:[%s8] sm:$0xf]
    %v1126 = vld [vmem:[%s8 + $0x4] sm:$0xf]
    %v1127 = vld [vmem:[%s8 + $0x8] sm:$0xf]
    %v1128 = vld [vmem:[%s8 + $0xc] sm:$0xf]
    %v1129 = vld [vmem:[%s9] sm:$0x1]
    %v1131 = vlaneseq
    %v1132 = vshrl.u32 %v1131, 7
    %v1133 = vsub.s32 0, %v1132
    %v1134 = vrot.slane %v1129, %v1133
    %v1144 = vunpack.c.l.b16 %v1109
    %v1145 = vunpack.c.l.b16 %v1110
    %v1146 = vunpack.c.l.b16 %v1111
    %v1147 = vunpack.c.l.b16 %v1112
    %v1148 = vunpack.c.l.b16 %v1113
    %v1149 = vunpack.c.l.b16 %v1114
    %v1150 = vunpack.c.l.b16 %v1115
    %v1151 = vunpack.c.l.b16 %v1116
    %v1152 = vpack.c.b16 %v1145, %v1144
    %v1153 = vpack.c.b16 %v1147, %v1146
    %v1154 = vpack.c.b16 %v1149, %v1148
    %v1155 = vpack.c.b16 %v1151, %v1150
    %v1160 = vunpack.c.l.b16 %v1125
    %v1161 = vunpack.c.l.b16 %v1126
    %v1162 = vunpack.c.l.b16 %v1127
    %v1163 = vunpack.c.l.b16 %v1128
    %v1164 = vpack.c.b16 %v1161, %v1160
    %v1165 = vpack.c.b16 %v1163, %v1162
    %v1169 = vsel %vm514, %v1152, 0
    %v1172 = vsel %vm514, %v1153, 0
    %v1175 = vsel %vm514, %v1154, 0
    %v1178 = vsel %vm514, %v1155, 0
    %1180 = vmatprep.subr.bf16.mxu0 0
    %1181 = vmatpush1.bf16.msra.mxu0 0
    %1182 = vmatprep.subr.bf16.mxu0 0
    %1183 = vmatpush1.bf16.msra.mxu0 0
    %1184 = vmatprep.subr.bf16.mxu0 0
    %1185 = vmatpush1.bf16.msra.mxu0 0
    %1186 = vmatprep.subr.bf16.mxu0 0
    %1187 = vmatpush1.bf16.msra.mxu0 0
    %1188 = vmatprep.subr.bf16.mxu0 0
    %1189 = vmatpush1.bf16.msra.mxu0 0
    %1190 = vmatprep.subr.bf16.mxu0 0
    %1191 = vmatpush1.bf16.msra.mxu0 0
    %1192 = vmatprep.subr.bf16.mxu0 0
    %1193 = vmatpush1.bf16.msra.mxu0 %v1165
    %1194 = vmatprep.subr.bf16.mxu0 0
    %1195 = vmatpush1.bf16.msra.mxu0 %v1164
    %1196 = vmatprep.subr.bf16.mxu0 0
    %1197 = vmatpush2.bf16.msra.mxu0 0
    %1198 = vmatprep.subr.bf16.mxu0 0
    %1199 = vmatpush2.bf16.msra.mxu0 0
    %1200 = vmatprep.subr.bf16.mxu0 0
    %1201 = vmatpush2.bf16.msra.mxu0 0
    %1202 = vmatprep.subr.bf16.mxu0 0
    %1203 = vmatpush2.bf16.msra.mxu0 0
    %1204 = vmatprep.subr.bf16.mxu0 0
    %1205 = vmatpush2.bf16.msra.mxu0 0
    %1206 = vmatprep.subr.bf16.mxu0 0
    %1207 = vmatpush2.bf16.msra.mxu0 0
    %1208 = vmatprep.subr.bf16.mxu0 0
    %1209 = vmatpush2.bf16.msra.mxu0 0
    %1210 = vmatprep.subr.bf16.mxu0 0
    %1211 = vmatpush2.bf16.msra.mxu0 0
    %1212 = vmatprep.mubr.bf16.mxu0 0
    %1213 = vmatmul.mubr.bf16.gmra.mxu0 %v1169
    %v1214 = vpop.f32.mrf.mxu0
    %v1215 = vadd.f32 %v1134, %v1214
    %v1216 = vpop.f32.mrf.mxu0
    %v1217 = vpop.f32.mrf.mxu0
    %v1218 = vadd.f32 %v1134, %v1217
    %v1219 = vpop.f32.mrf.mxu0
    %1220 = vmatprep.mubr.bf16.mxu0 0
    %1221 = vmatmul.mubr.bf16.gmra.mxu0 %v1172
    %v1222 = vpop.f32.mrf.mxu0
    %v1223 = vadd.f32 %v1134, %v1222
    %v1224 = vpop.f32.mrf.mxu0
    %v1225 = vpop.f32.mrf.mxu0
    %v1226 = vadd.f32 %v1134, %v1225
    %v1227 = vpop.f32.mrf.mxu0
    %1228 = vmatprep.mubr.bf16.mxu0 0
    %1229 = vmatmul.mubr.bf16.gmra.mxu0 %v1175
    %v1230 = vpop.f32.mrf.mxu0
    %v1231 = vadd.f32 %v1134, %v1230
    %v1232 = vpop.f32.mrf.mxu0
    %v1233 = vpop.f32.mrf.mxu0
    %v1234 = vadd.f32 %v1134, %v1233
    %v1235 = vpop.f32.mrf.mxu0
    %1236 = vmatprep.mubr.bf16.mxu0 0
    %1237 = vmatmul.mubr.bf16.gmra.mxu0 %v1178
    %v1238 = vpop.f32.mrf.mxu0
    %v1239 = vadd.f32 %v1134, %v1238
    %v1240 = vpop.f32.mrf.mxu0
    %v1241 = vpop.f32.mrf.mxu0
    %v1242 = vadd.f32 %v1134, %v1241
    %v1243 = vpop.f32.mrf.mxu0
    %1244 = vdwg.mxu0
    %v1245 = vmax.f32 %v1215, 0.0
    %v1246 = vmax.f32 %v1218, 0.0
    %v1247 = vmax.f32 %v1223, 0.0
    %v1248 = vmax.f32 %v1226, 0.0
    %v1249 = vmax.f32 %v1231, 0.0
    %v1250 = vmax.f32 %v1234, 0.0
    %v1251 = vmax.f32 %v1239, 0.0
    %v1252 = vmax.f32 %v1242, 0.0
    %v1253 = vpack.c.bf16 %v1108, %v1108
    %v1254 = vld [vmem:[%s10] sm:$0xf]
    %v1255 = vld [vmem:[%s10 + $0x4] sm:$0xf]
    %v1256 = vld [vmem:[%s10 + $0x8] sm:$0xf]
    %v1257 = vld [vmem:[%s10 + $0xc] sm:$0xf]
    %v1258 = vld [vmem:[%s11] sm:$0x1]
    %v1260 = vlaneseq
    %v1261 = vshrl.u32 %v1260, 7
    %v1262 = vsub.s32 0, %v1261
    %v1263 = vrot.slane %v1258, %v1262
    %1266 = vrot.lane.b32.xlu0 %v1253, 96
    %v1267 = vpop.permute.xlu0 %1266
    %v1272 = vunpack.c.l.b16 %v1254
    %v1273 = vunpack.c.l.b16 %v1255
    %v1274 = vunpack.c.l.b16 %v1256
    %v1275 = vunpack.c.l.b16 %v1257
    %v1276 = vpack.c.b16 %v1273, %v1272
    %v1277 = vpack.c.b16 %v1275, %v1274
    %v1281 = vsel %vm514, %v1267, 0
    %1283 = vmatprep.subr.bf16.mxu0 0
    %1284 = vmatpush1.bf16.msra.mxu0 0
    %1285 = vmatprep.subr.bf16.mxu0 0
    %1286 = vmatpush1.bf16.msra.mxu0 0
    %1287 = vmatprep.subr.bf16.mxu0 0
    %1288 = vmatpush1.bf16.msra.mxu0 0
    %1289 = vmatprep.subr.bf16.mxu0 0
    %1290 = vmatpush1.bf16.msra.mxu0 0
    %1291 = vmatprep.subr.bf16.mxu0 0
    %1292 = vmatpush1.bf16.msra.mxu0 0
    %1293 = vmatprep.subr.bf16.mxu0 0
    %1294 = vmatpush1.bf16.msra.mxu0 0
    %1295 = vmatprep.subr.bf16.mxu0 0
    %1296 = vmatpush1.bf16.msra.mxu0 %v1277
    %1297 = vmatprep.subr.bf16.mxu0 0
    %1298 = vmatpush1.bf16.msra.mxu0 %v1276
    %1299 = vmatprep.subr.bf16.mxu0 0
    %1300 = vmatpush2.bf16.msra.mxu0 0
    %1301 = vmatprep.subr.bf16.mxu0 0
    %1302 = vmatpush2.bf16.msra.mxu0 0
    %1303 = vmatprep.subr.bf16.mxu0 0
    %1304 = vmatpush2.bf16.msra.mxu0 0
    %1305 = vmatprep.subr.bf16.mxu0 0
    %1306 = vmatpush2.bf16.msra.mxu0 0
    %1307 = vmatprep.subr.bf16.mxu0 0
    %1308 = vmatpush2.bf16.msra.mxu0 0
    %1309 = vmatprep.subr.bf16.mxu0 0
    %1310 = vmatpush2.bf16.msra.mxu0 0
    %1311 = vmatprep.subr.bf16.mxu0 0
    %1312 = vmatpush2.bf16.msra.mxu0 0
    %1313 = vmatprep.subr.bf16.mxu0 0
    %1314 = vmatpush2.bf16.msra.mxu0 0
    %1315 = vmatprep.mubr.bf16.mxu0 0
    %1316 = vmatmul.mubr.bf16.gmra.mxu0 %v1281
    %v1317 = vpop.f32.mrf.mxu0
    %v1318 = vadd.f32 %v1263, %v1317
    %v1319 = vpop.f32.mrf.mxu0
    %v1320 = vpop.f32.mrf.mxu0
    %v1321 = vpop.f32.mrf.mxu0
    %1322 = vdwg.mxu0
    %v1323 = vmax.f32 %v1318, 0.0
    %v1325 = vcombine.high %v1323, %v1323
    %v1327 = vunpack.c.l.s4 1966171168
    %v1328 = vunpack.c.0.s8 %v1327
    %v1329 = vlaneseq
    %v1330 = vshrl.u32 %v1329, 7
    %v1331 = vsub.s32 %v1328, %v1330
    %v1332 = vrot.slane %v1323, %v1331
    %v1334 = vunpack.c.l.s4 1966171168
    %v1335 = vunpack.c.0.s8 %v1334
    %v1336 = vlaneseq
    %v1337 = vshrl.u32 %v1336, 7
    %v1338 = vsub.s32 %v1335, %v1337
    %v1339 = vrot.slane %v1325, %v1338
    %v1340 = vcombine.high %v1332, %v1332
    %v1341 = vcombine.high %v1339, %v1339
    %v1343 = vunpack.c.l.s4 1966171168
    %v1344 = vunpack.c.0.s8 %v1343
    %v1345 = vlaneseq
    %v1346 = vshrl.u32 %v1345, 7
    %v1347 = vsub.s32 %v1344, %v1346
    %v1348 = vrot.slane %v1332, %v1347
    %v1350 = vunpack.c.l.s4 1966171168
    %v1351 = vunpack.c.0.s8 %v1350
    %v1352 = vlaneseq
    %v1353 = vshrl.u32 %v1352, 7
    %v1354 = vsub.s32 %v1351, %v1353
    %v1355 = vrot.slane %v1339, %v1354
    %v1357 = vunpack.c.l.s4 1966171168
    %v1358 = vunpack.c.0.s8 %v1357
    %v1359 = vlaneseq
    %v1360 = vshrl.u32 %v1359, 7
    %v1361 = vsub.s32 %v1358, %v1360
    %v1362 = vrot.slane %v1340, %v1361
    %v1364 = vunpack.c.l.s4 1966171168
    %v1365 = vunpack.c.0.s8 %v1364
    %v1366 = vlaneseq
    %v1367 = vshrl.u32 %v1366, 7
    %v1368 = vsub.s32 %v1365, %v1367
    %v1369 = vrot.slane %v1341, %v1368
    %v1370 = vcombine.high %v1348, %v1348
    %v1371 = vcombine.high %v1355, %v1355
    %v1372 = vcombine.high %v1362, %v1362
    %v1373 = vcombine.high %v1369, %v1369
    %v1374 = vlaneseq
    %v1375 = vshrl.u32 %v1374, 7
    %v1376 = vsub.s32 0, %v1375
    %v1377 = vrot.slane %v1348, %v1376
    %v1378 = vlaneseq
    %v1379 = vshrl.u32 %v1378, 7
    %v1380 = vsub.s32 0, %v1379
    %v1381 = vrot.slane %v1362, %v1380
    %v1382 = vlaneseq
    %v1383 = vshrl.u32 %v1382, 7
    %v1384 = vsub.s32 0, %v1383
    %v1385 = vrot.slane %v1370, %v1384
    %v1386 = vlaneseq
    %v1387 = vshrl.u32 %v1386, 7
    %v1388 = vsub.s32 0, %v1387
    %v1389 = vrot.slane %v1372, %v1388
    %v1390 = vlaneseq
    %v1391 = vshrl.u32 %v1390, 7
    %v1392 = vsub.s32 0, %v1391
    %v1393 = vrot.slane %v1355, %v1392
    %v1394 = vlaneseq
    %v1395 = vshrl.u32 %v1394, 7
    %v1396 = vsub.s32 0, %v1395
    %v1397 = vrot.slane %v1369, %v1396
    %v1398 = vlaneseq
    %v1399 = vshrl.u32 %v1398, 7
    %v1400 = vsub.s32 0, %v1399
    %v1401 = vrot.slane %v1371, %v1400
    %v1402 = vlaneseq
    %v1403 = vshrl.u32 %v1402, 7
    %v1404 = vsub.s32 0, %v1403
    %v1405 = vrot.slane %v1373, %v1404
    %v1414 = vmul.f32 %v1245, %v1377
    %v1415 = vmul.f32 %v1246, %v1381
    %v1416 = vmul.f32 %v1247, %v1385
    %v1417 = vmul.f32 %v1248, %v1389
    %v1418 = vmul.f32 %v1249, %v1393
    %v1419 = vmul.f32 %v1250, %v1397
    %v1420 = vmul.f32 %v1251, %v1401
    %v1421 = vmul.f32 %v1252, %v1405
    %v1422 = vld [vmem:[%s12] sm:$0x1]
    %v1424 = vlaneseq
    %v1425 = vshrl.u32 %v1424, 7
    %v1426 = vsub.s32 0, %v1425
    %v1427 = vrot.slane %v1422, %v1426
    %v1429 = vmul.f32 %v1414, %v1427
    %v1430 = vmul.f32 %v1415, %v1427
    %v1431 = vmul.f32 %v1416, %v1427
    %v1432 = vmul.f32 %v1417, %v1427
    %v1433 = vmul.f32 %v1418, %v1427
    %v1434 = vmul.f32 %v1419, %v1427
    %v1435 = vmul.f32 %v1420, %v1427
    %v1436 = vmul.f32 %v1421, %v1427
    %v1437 = vsel %vm514, %v1429, 0.0
    %1438 = vadd.xlane.f32.xlu0 %v1437
    %v1439 = vpop.xlane.xlu0 %1438
    %v1440 = vsel %vm514, %v1430, 0.0
    %1441 = vadd.xlane.f32.xlu0 %v1440
    %v1442 = vpop.xlane.xlu0 %1441
    %v1443 = vsel %vm514, %v1431, 0.0
    %1444 = vadd.xlane.f32.xlu0 %v1443
    %v1445 = vpop.xlane.xlu0 %1444
    %v1446 = vsel %vm514, %v1432, 0.0
    %1447 = vadd.xlane.f32.xlu0 %v1446
    %v1448 = vpop.xlane.xlu0 %1447
    %v1449 = vsel %vm514, %v1433, 0.0
    %1450 = vadd.xlane.f32.xlu0 %v1449
    %v1451 = vpop.xlane.xlu0 %1450
    %v1452 = vsel %vm514, %v1434, 0.0
    %1453 = vadd.xlane.f32.xlu0 %v1452
    %v1454 = vpop.xlane.xlu0 %1453
    %v1455 = vsel %vm514, %v1435, 0.0
    %1456 = vadd.xlane.f32.xlu0 %v1455
    %v1457 = vpop.xlane.xlu0 %1456
    %v1458 = vsel %vm514, %v1436, 0.0
    %1459 = vadd.xlane.f32.xlu0 %v1458
    %v1460 = vpop.xlane.xlu0 %1459
    %v1461 = vld [vmem:[#allocation4] sm:$0x1]
    %v1463 = vlaneseq
    %v1464 = vshrl.u32 %v1463, 7
    %v1465 = vsub.s32 0, %v1464
    %v1466 = vrot.slane %v1461, %v1465
    %1467 = vset.pattern.permute.xlu0 0
    %1468 = vperm.xlu0 %1467, %v1466
    %v1469 = vpop.permute.xlu0 %1468
    %v1471 = vadd.f32 %v1439, %v1469
    %v1472 = vadd.f32 %v1442, %v1469
    %v1473 = vadd.f32 %v1445, %v1469
    %v1474 = vadd.f32 %v1448, %v1469
    %v1475 = vadd.f32 %v1451, %v1469
    %v1476 = vadd.f32 %v1454, %v1469
    %v1477 = vadd.f32 %v1457, %v1469
    %v1478 = vadd.f32 %v1460, %v1469
    %v1487 = vlaneseq
    %v1488 = vand.u32 %v1487, 127
    %v1489 = vlaneseq
    %v1490 = vshrl.u32 %v1489, 7
    %v1491 = vsub.s32 %v1488, %v1490
    %v1492 = vrot.slane %v1471, %v1491
    %v1493 = vlaneseq
    %v1494 = vshrl.u32 %v1493, 7
    %v1495 = vsub.s32 %v1488, %v1494
    %v1496 = vrot.slane %v1472, %v1495
    %v1497 = vlaneseq
    %v1498 = vshrl.u32 %v1497, 7
    %v1499 = vsub.s32 %v1488, %v1498
    %v1500 = vrot.slane %v1473, %v1499
    %v1501 = vlaneseq
    %v1502 = vshrl.u32 %v1501, 7
    %v1503 = vsub.s32 %v1488, %v1502
    %v1504 = vrot.slane %v1474, %v1503
    %v1505 = vlaneseq
    %v1506 = vshrl.u32 %v1505, 7
    %v1507 = vsub.s32 %v1488, %v1506
    %v1508 = vrot.slane %v1475, %v1507
    %v1509 = vlaneseq
    %v1510 = vshrl.u32 %v1509, 7
    %v1511 = vsub.s32 %v1488, %v1510
    %v1512 = vrot.slane %v1476, %v1511
    %v1513 = vlaneseq
    %v1514 = vshrl.u32 %v1513, 7
    %v1515 = vsub.s32 %v1488, %v1514
    %v1516 = vrot.slane %v1477, %v1515
    %v1517 = vlaneseq
    %v1518 = vshrl.u32 %v1517, 7
    %v1519 = vsub.s32 %v1488, %v1518
    %v1520 = vrot.slane %v1478, %v1519
    %vm1521 = vcmask 1041409
    %v1522 = vsel %vm1521, %v1496, %v1492
    %vm1523 = vcmask 1042434
    %v1524 = vsel %vm1523, %v1500, %v1522
    %vm1525 = vcmask 1043459
    %v1526 = vsel %vm1525, %v1504, %v1524
    %vm1527 = vcmask 1044484
    %v1528 = vsel %vm1527, %v1508, %v1526
    %vm1529 = vcmask 1045509
    %v1530 = vsel %vm1529, %v1512, %v1528
    %vm1531 = vcmask 1046534
    %v1532 = vsel %vm1531, %v1516, %v1530
    %vm1533 = vcmask 1047559
    %v1534 = vsel %vm1533, %v1520, %v1532
    %vm1536 = vcmask 64512
    %v1537 = vsel %vm1536, %v1534, -inf
    %1538 = vmax.xlane.f32.xlu0 %v1537
    %v1539 = vpop.xlane.xlu0 %1538
    %v1541 = vlaneseq
    %v1542 = vshrl.u32 %v1541, 7
    %v1543 = vsub.s32 0, %v1542
    %v1544 = vrot.slane %v1539, %v1543
    %v1545 = vlaneseq
    %v1546 = vshrl.u32 %v1545, 7
    %v1547 = vsub.s32 1, %v1546
    %v1548 = vrot.slane %v1539, %v1547
    %v1549 = vlaneseq
    %v1550 = vshrl.u32 %v1549, 7
    %v1551 = vsub.s32 2, %v1550
    %v1552 = vrot.slane %v1539, %v1551
    %v1553 = vlaneseq
    %v1554 = vshrl.u32 %v1553, 7
    %v1555 = vsub.s32 3, %v1554
    %v1556 = vrot.slane %v1539, %v1555
    %v1557 = vlaneseq
    %v1558 = vshrl.u32 %v1557, 7
    %v1559 = vsub.s32 4, %v1558
    %v1560 = vrot.slane %v1539, %v1559
    %v1561 = vlaneseq
    %v1562 = vshrl.u32 %v1561, 7
    %v1563 = vsub.s32 5, %v1562
    %v1564 = vrot.slane %v1539, %v1563
    %v1565 = vlaneseq
    %v1566 = vshrl.u32 %v1565, 7
    %v1567 = vsub.s32 6, %v1566
    %v1568 = vrot.slane %v1539, %v1567
    %v1569 = vlaneseq
    %v1570 = vshrl.u32 %v1569, 7
    %v1571 = vsub.s32 7, %v1570
    %v1572 = vrot.slane %v1539, %v1571
    %v1581 = vsub.f32 %v1471, %v1544
    %v1582 = vsub.f32 %v1472, %v1548
    %v1583 = vsub.f32 %v1473, %v1552
    %v1584 = vsub.f32 %v1474, %v1556
    %v1585 = vsub.f32 %v1475, %v1560
    %v1586 = vsub.f32 %v1476, %v1564
    %v1587 = vsub.f32 %v1477, %v1568
    %v1588 = vsub.f32 %v1478, %v1572
    %v1589 = vmul.f32 %v1581, 1.442695
    %v1590 = vpow.pop %v1589
    %v1591 = vmul.f32 %v1582, 1.442695
    %v1592 = vpow.pop %v1591
    %v1593 = vmul.f32 %v1583, 1.442695
    %v1594 = vpow.pop %v1593
    %v1595 = vmul.f32 %v1584, 1.442695
    %v1596 = vpow.pop %v1595
    %v1597 = vmul.f32 %v1585, 1.442695
    %v1598 = vpow.pop %v1597
    %v1599 = vmul.f32 %v1586, 1.442695
    %v1600 = vpow.pop %v1599
    %v1601 = vmul.f32 %v1587, 1.442695
    %v1602 = vpow.pop %v1601
    %v1603 = vmul.f32 %v1588, 1.442695
    %v1604 = vpow.pop %v1603
    %1613 = vset.pattern.permute.xlu0 0
    %1614 = vperm.xlu0 %1613, %v1590
    %v1615 = vpop.permute.xlu0 %1614
    %1616 = vset.pattern.permute.xlu0 0
    %1617 = vperm.xlu0 %1616, %v1592
    %v1618 = vpop.permute.xlu0 %1617
    %1619 = vset.pattern.permute.xlu0 0
    %1620 = vperm.xlu0 %1619, %v1594
    %v1621 = vpop.permute.xlu0 %1620
    %1622 = vset.pattern.permute.xlu0 0
    %1623 = vperm.xlu0 %1622, %v1596
    %v1624 = vpop.permute.xlu0 %1623
    %1625 = vset.pattern.permute.xlu0 0
    %1626 = vperm.xlu0 %1625, %v1598
    %v1627 = vpop.permute.xlu0 %1626
    %1628 = vset.pattern.permute.xlu0 0
    %1629 = vperm.xlu0 %1628, %v1600
    %v1630 = vpop.permute.xlu0 %1629
    %1631 = vset.pattern.permute.xlu0 0
    %1632 = vperm.xlu0 %1631, %v1602
    %v1633 = vpop.permute.xlu0 %1632
    %1634 = vset.pattern.permute.xlu0 0
    %1635 = vperm.xlu0 %1634, %v1604
    %v1636 = vpop.permute.xlu0 %1635
    %v1637 = vlaneseq
    %v1638 = vshrl.u32 %v1637, 7
    %v1639 = vsub.s32 %v1488, %v1638
    %v1640 = vrot.slane %v1615, %v1639
    %v1641 = vlaneseq
    %v1642 = vshrl.u32 %v1641, 7
    %v1643 = vsub.s32 %v1488, %v1642
    %v1644 = vrot.slane %v1618, %v1643
    %v1645 = vlaneseq
    %v1646 = vshrl.u32 %v1645, 7
    %v1647 = vsub.s32 %v1488, %v1646
    %v1648 = vrot.slane %v1621, %v1647
    %v1649 = vlaneseq
    %v1650 = vshrl.u32 %v1649, 7
    %v1651 = vsub.s32 %v1488, %v1650
    %v1652 = vrot.slane %v1624, %v1651
    %v1653 = vlaneseq
    %v1654 = vshrl.u32 %v1653, 7
    %v1655 = vsub.s32 %v1488, %v1654
    %v1656 = vrot.slane %v1627, %v1655
    %v1657 = vlaneseq
    %v1658 = vshrl.u32 %v1657, 7
    %v1659 = vsub.s32 %v1488, %v1658
    %v1660 = vrot.slane %v1630, %v1659
    %v1661 = vlaneseq
    %v1662 = vshrl.u32 %v1661, 7
    %v1663 = vsub.s32 %v1488, %v1662
    %v1664 = vrot.slane %v1633, %v1663
    %v1665 = vlaneseq
    %v1666 = vshrl.u32 %v1665, 7
    %v1667 = vsub.s32 %v1488, %v1666
    %v1668 = vrot.slane %v1636, %v1667
    %v1669 = vsel %vm1521, %v1644, %v1640
    %v1670 = vsel %vm1523, %v1648, %v1669
    %v1671 = vsel %vm1525, %v1652, %v1670
    %v1672 = vsel %vm1527, %v1656, %v1671
    %v1673 = vsel %vm1529, %v1660, %v1672
    %v1674 = vsel %vm1531, %v1664, %v1673
    %v1675 = vsel %vm1533, %v1668, %v1674
    %v1677 = vsel %vm1536, %v1675, 0.0
    %1678 = vadd.xlane.f32.xlu0 %v1677
    %v1679 = vpop.xlane.xlu0 %1678
    %v1680 = vrcp.pop %v1679
    %v1682 = vlaneseq
    %v1683 = vshrl.u32 %v1682, 7
    %v1684 = vsub.s32 0, %v1683
    %v1685 = vrot.slane %v1680, %v1684
    %v1686 = vlaneseq
    %v1687 = vshrl.u32 %v1686, 7
    %v1688 = vsub.s32 1, %v1687
    %v1689 = vrot.slane %v1680, %v1688
    %v1690 = vlaneseq
    %v1691 = vshrl.u32 %v1690, 7
    %v1692 = vsub.s32 2, %v1691
    %v1693 = vrot.slane %v1680, %v1692
    %v1694 = vlaneseq
    %v1695 = vshrl.u32 %v1694, 7
    %v1696 = vsub.s32 3, %v1695
    %v1697 = vrot.slane %v1680, %v1696
    %v1698 = vlaneseq
    %v1699 = vshrl.u32 %v1698, 7
    %v1700 = vsub.s32 4, %v1699
    %v1701 = vrot.slane %v1680, %v1700
    %v1702 = vlaneseq
    %v1703 = vshrl.u32 %v1702, 7
    %v1704 = vsub.s32 5, %v1703
    %v1705 = vrot.slane %v1680, %v1704
    %v1706 = vlaneseq
    %v1707 = vshrl.u32 %v1706, 7
    %v1708 = vsub.s32 6, %v1707
    %v1709 = vrot.slane %v1680, %v1708
    %v1710 = vlaneseq
    %v1711 = vshrl.u32 %v1710, 7
    %v1712 = vsub.s32 7, %v1711
    %v1713 = vrot.slane %v1680, %v1712
    %v1722 = vmul.f32 %v1590, %v1685
    %v1723 = vmul.f32 %v1592, %v1689
    %v1724 = vmul.f32 %v1594, %v1693
    %v1725 = vmul.f32 %v1596, %v1697
    %v1726 = vmul.f32 %v1598, %v1701
    %v1727 = vmul.f32 %v1600, %v1705
    %v1728 = vmul.f32 %v1602, %v1709
    %v1729 = vmul.f32 %v1604, %v1713
    %1731 = vset.pattern.permute.xlu0 0
    %1732 = vperm.xlu0 %1731, %v1722
    %v1733 = vpop.permute.xlu0 %1732
    %1736 = vset.pattern.permute.xlu0 0
    %1737 = vperm.xlu0 %1736, %v1723
    %v1738 = vpop.permute.xlu0 %1737
    %1741 = vset.pattern.permute.xlu0 0
    %1742 = vperm.xlu0 %1741, %v1724
    %v1743 = vpop.permute.xlu0 %1742
    %1746 = vset.pattern.permute.xlu0 0
    %1747 = vperm.xlu0 %1746, %v1725
    %v1748 = vpop.permute.xlu0 %1747
    %1751 = vset.pattern.permute.xlu0 0
    %1752 = vperm.xlu0 %1751, %v1726
    %v1753 = vpop.permute.xlu0 %1752
    %1756 = vset.pattern.permute.xlu0 0
    %1757 = vperm.xlu0 %1756, %v1727
    %v1758 = vpop.permute.xlu0 %1757
    %1761 = vset.pattern.permute.xlu0 0
    %1762 = vperm.xlu0 %1761, %v1728
    %v1763 = vpop.permute.xlu0 %1762
    %1766 = vset.pattern.permute.xlu0 0
    %1767 = vperm.xlu0 %1766, %v1729
    %v1768 = vpop.permute.xlu0 %1767
    %v1770 = vmul.f32 %v1733, %v1117
    %v1771 = vmul.f32 %v1738, %v1118
    %v1772 = vmul.f32 %v1743, %v1119
    %v1773 = vmul.f32 %v1748, %v1120
    %v1774 = vmul.f32 %v1753, %v1121
    %v1775 = vmul.f32 %v1758, %v1122
    %v1776 = vmul.f32 %v1763, %v1123
    %v1777 = vmul.f32 %v1768, %v1124
    %v1778 = vpack.c.bf16 %v1770, %v1770
    %v1779 = vpack.c.bf16 %v1771, %v1771
    %v1780 = vpack.c.bf16 %v1772, %v1772
    %v1781 = vpack.c.bf16 %v1773, %v1773
    %v1782 = vpack.c.bf16 %v1774, %v1774
    %v1783 = vpack.c.bf16 %v1775, %v1775
    %v1784 = vpack.c.bf16 %v1776, %v1776
    %v1785 = vpack.c.bf16 %v1777, %v1777
    %v1786 = vld [vmem:[%s14] sm:$0xf]
    %v1787 = vld [vmem:[%s14 + $0x4] sm:$0xf]
    %v1788 = vld [vmem:[%s14 + $0x8] sm:$0xf]
    %v1789 = vld [vmem:[%s14 + $0xc] sm:$0xf]
    %v1790 = vld [vmem:[%s15] sm:$0x1]
    %v1792 = vlaneseq
    %v1793 = vshrl.u32 %v1792, 7
    %v1794 = vsub.s32 0, %v1793
    %v1795 = vrot.slane %v1790, %v1794
    %v1805 = vunpack.c.l.b16 %v1778
    %v1806 = vunpack.c.l.b16 %v1779
    %v1807 = vunpack.c.l.b16 %v1780
    %v1808 = vunpack.c.l.b16 %v1781
    %v1809 = vunpack.c.l.b16 %v1782
    %v1810 = vunpack.c.l.b16 %v1783
    %v1811 = vunpack.c.l.b16 %v1784
    %v1812 = vunpack.c.l.b16 %v1785
    %v1813 = vpack.c.b16 %v1806, %v1805
    %v1814 = vpack.c.b16 %v1808, %v1807
    %v1815 = vpack.c.b16 %v1810, %v1809
    %v1816 = vpack.c.b16 %v1812, %v1811
    %v1821 = vunpack.c.l.b16 %v1786
    %v1822 = vunpack.c.l.b16 %v1787
    %v1823 = vunpack.c.l.b16 %v1788
    %v1824 = vunpack.c.l.b16 %v1789
    %v1825 = vpack.c.b16 %v1822, %v1821
    %v1826 = vpack.c.b16 %v1824, %v1823
    %v1830 = vsel %vm514, %v1813, 0
    %v1833 = vsel %vm514, %v1814, 0
    %v1836 = vsel %vm514, %v1815, 0
    %v1839 = vsel %vm514, %v1816, 0
    %1841 = vmatprep.subr.bf16.mxu0 0
    %1842 = vmatpush1.bf16.msra.mxu0 0
    %1843 = vmatprep.subr.bf16.mxu0 0
    %1844 = vmatpush1.bf16.msra.mxu0 0
    %1845 = vmatprep.subr.bf16.mxu0 0
    %1846 = vmatpush1.bf16.msra.mxu0 0
    %1847 = vmatprep.subr.bf16.mxu0 0
    %1848 = vmatpush1.bf16.msra.mxu0 0
    %1849 = vmatprep.subr.bf16.mxu0 0
    %1850 = vmatpush1.bf16.msra.mxu0 0
    %1851 = vmatprep.subr.bf16.mxu0 0
    %1852 = vmatpush1.bf16.msra.mxu0 0
    %1853 = vmatprep.subr.bf16.mxu0 0
    %1854 = vmatpush1.bf16.msra.mxu0 %v1826
    %1855 = vmatprep.subr.bf16.mxu0 0
    %1856 = vmatpush1.bf16.msra.mxu0 %v1825
    %1857 = vmatprep.subr.bf16.mxu0 0
    %1858 = vmatpush2.bf16.msra.mxu0 0
    %1859 = vmatprep.subr.bf16.mxu0 0
    %1860 = vmatpush2.bf16.msra.mxu0 0
    %1861 = vmatprep.subr.bf16.mxu0 0
    %1862 = vmatpush2.bf16.msra.mxu0 0
    %1863 = vmatprep.subr.bf16.mxu0 0
    %1864 = vmatpush2.bf16.msra.mxu0 0
    %1865 = vmatprep.subr.bf16.mxu0 0
    %1866 = vmatpush2.bf16.msra.mxu0 0
    %1867 = vmatprep.subr.bf16.mxu0 0
    %1868 = vmatpush2.bf16.msra.mxu0 0
    %1869 = vmatprep.subr.bf16.mxu0 0
    %1870 = vmatpush2.bf16.msra.mxu0 0
    %1871 = vmatprep.subr.bf16.mxu0 0
    %1872 = vmatpush2.bf16.msra.mxu0 0
    %1873 = vmatprep.mubr.bf16.mxu0 0
    %1874 = vmatmul.mubr.bf16.gmra.mxu0 %v1830
    %v1875 = vpop.f32.mrf.mxu0
    %v1876 = vadd.f32 %v1795, %v1875
    %v1877 = vpop.f32.mrf.mxu0
    %v1878 = vpop.f32.mrf.mxu0
    %v1879 = vadd.f32 %v1795, %v1878
    %v1880 = vpop.f32.mrf.mxu0
    %1881 = vmatprep.mubr.bf16.mxu0 0
    %1882 = vmatmul.mubr.bf16.gmra.mxu0 %v1833
    %v1883 = vpop.f32.mrf.mxu0
    %v1884 = vadd.f32 %v1795, %v1883
    %v1885 = vpop.f32.mrf.mxu0
    %v1886 = vpop.f32.mrf.mxu0
    %v1887 = vadd.f32 %v1795, %v1886
    %v1888 = vpop.f32.mrf.mxu0
    %1889 = vmatprep.mubr.bf16.mxu0 0
    %1890 = vmatmul.mubr.bf16.gmra.mxu0 %v1836
    %v1891 = vpop.f32.mrf.mxu0
    %v1892 = vadd.f32 %v1795, %v1891
    %v1893 = vpop.f32.mrf.mxu0
    %v1894 = vpop.f32.mrf.mxu0
    %v1895 = vadd.f32 %v1795, %v1894
    %v1896 = vpop.f32.mrf.mxu0
    %1897 = vmatprep.mubr.bf16.mxu0 0
    %1898 = vmatmul.mubr.bf16.gmra.mxu0 %v1839
    %v1899 = vpop.f32.mrf.mxu0
    %v1900 = vadd.f32 %v1795, %v1899
    %v1901 = vpop.f32.mrf.mxu0
    %v1902 = vpop.f32.mrf.mxu0
    %v1903 = vadd.f32 %v1795, %v1902
    %v1904 = vpop.f32.mrf.mxu0
    %1905 = vdwg.mxu0
    %v1906 = vmax.f32 %v1876, 0.0
    %v1907 = vmax.f32 %v1879, 0.0
    %v1908 = vmax.f32 %v1884, 0.0
    %v1909 = vmax.f32 %v1887, 0.0
    %v1910 = vmax.f32 %v1892, 0.0
    %v1911 = vmax.f32 %v1895, 0.0
    %v1912 = vmax.f32 %v1900, 0.0
    %v1913 = vmax.f32 %v1903, 0.0
    %v1914 = vld [vmem:[%s16] sm:$0xf]
    %v1915 = vld [vmem:[%s16 + $0x4] sm:$0xf]
    %v1916 = vld [vmem:[%s16 + $0x8] sm:$0xf]
    %v1917 = vld [vmem:[%s16 + $0xc] sm:$0xf]
    %v1918 = vld [vmem:[%s17] sm:$0x1]
    %v1920 = vlaneseq
    %v1921 = vshrl.u32 %v1920, 7
    %v1922 = vsub.s32 0, %v1921
    %v1923 = vrot.slane %v1918, %v1922
    %v1929 = vunpack.c.l.b16 %v1914
    %v1930 = vunpack.c.l.b16 %v1915
    %v1931 = vunpack.c.l.b16 %v1916
    %v1932 = vunpack.c.l.b16 %v1917
    %v1933 = vpack.c.b16 %v1930, %v1929
    %v1934 = vpack.c.b16 %v1932, %v1931
    %1937 = vmatprep.subr.bf16.mxu0 0
    %1938 = vmatpush1.bf16.msra.mxu0 0
    %1939 = vmatprep.subr.bf16.mxu0 0
    %1940 = vmatpush1.bf16.msra.mxu0 0
    %1941 = vmatprep.subr.bf16.mxu0 0
    %1942 = vmatpush1.bf16.msra.mxu0 0
    %1943 = vmatprep.subr.bf16.mxu0 0
    %1944 = vmatpush1.bf16.msra.mxu0 0
    %1945 = vmatprep.subr.bf16.mxu0 0
    %1946 = vmatpush1.bf16.msra.mxu0 0
    %1947 = vmatprep.subr.bf16.mxu0 0
    %1948 = vmatpush1.bf16.msra.mxu0 0
    %1949 = vmatprep.subr.bf16.mxu0 0
    %1950 = vmatpush1.bf16.msra.mxu0 %v1934
    %1951 = vmatprep.subr.bf16.mxu0 0
    %1952 = vmatpush1.bf16.msra.mxu0 %v1933
    %1953 = vmatprep.subr.bf16.mxu0 0
    %1954 = vmatpush2.bf16.msra.mxu0 0
    %1955 = vmatprep.subr.bf16.mxu0 0
    %1956 = vmatpush2.bf16.msra.mxu0 0
    %1957 = vmatprep.subr.bf16.mxu0 0
    %1958 = vmatpush2.bf16.msra.mxu0 0
    %1959 = vmatprep.subr.bf16.mxu0 0
    %1960 = vmatpush2.bf16.msra.mxu0 0
    %1961 = vmatprep.subr.bf16.mxu0 0
    %1962 = vmatpush2.bf16.msra.mxu0 0
    %1963 = vmatprep.subr.bf16.mxu0 0
    %1964 = vmatpush2.bf16.msra.mxu0 0
    %1965 = vmatprep.subr.bf16.mxu0 0
    %1966 = vmatpush2.bf16.msra.mxu0 0
    %1967 = vmatprep.subr.bf16.mxu0 0
    %1968 = vmatpush2.bf16.msra.mxu0 0
    %1969 = vmatprep.mubr.bf16.mxu0 0
    %1970 = vmatmul.mubr.bf16.gmra.mxu0 %v1830
    %v1971 = vpop.f32.mrf.mxu0
    %v1972 = vadd.f32 %v1923, %v1971
    %v1973 = vpop.f32.mrf.mxu0
    %v1974 = vpop.f32.mrf.mxu0
    %v1975 = vadd.f32 %v1923, %v1974
    %v1976 = vpop.f32.mrf.mxu0
    %1977 = vmatprep.mubr.bf16.mxu0 0
    %1978 = vmatmul.mubr.bf16.gmra.mxu0 %v1833
    %v1979 = vpop.f32.mrf.mxu0
    %v1980 = vadd.f32 %v1923, %v1979
    %v1981 = vpop.f32.mrf.mxu0
    %v1982 = vpop.f32.mrf.mxu0
    %v1983 = vadd.f32 %v1923, %v1982
    %v1984 = vpop.f32.mrf.mxu0
    %1985 = vmatprep.mubr.bf16.mxu0 0
    %1986 = vmatmul.mubr.bf16.gmra.mxu0 %v1836
    %v1987 = vpop.f32.mrf.mxu0
    %v1988 = vadd.f32 %v1923, %v1987
    %v1989 = vpop.f32.mrf.mxu0
    %v1990 = vpop.f32.mrf.mxu0
    %v1991 = vadd.f32 %v1923, %v1990
    %v1992 = vpop.f32.mrf.mxu0
    %1993 = vmatprep.mubr.bf16.mxu0 0
    %1994 = vmatmul.mubr.bf16.gmra.mxu0 %v1839
    %v1995 = vpop.f32.mrf.mxu0
    %v1996 = vadd.f32 %v1923, %v1995
    %v1997 = vpop.f32.mrf.mxu0
    %v1998 = vpop.f32.mrf.mxu0
    %v1999 = vadd.f32 %v1923, %v1998
    %v2000 = vpop.f32.mrf.mxu0
    %2001 = vdwg.mxu0
    %v2002 = vmax.f32 %v1972, 0.0
    %v2003 = vmax.f32 %v1975, 0.0
    %v2004 = vmax.f32 %v1980, 0.0
    %v2005 = vmax.f32 %v1983, 0.0
    %v2006 = vmax.f32 %v1988, 0.0
    %v2007 = vmax.f32 %v1991, 0.0
    %v2008 = vmax.f32 %v1996, 0.0
    %v2009 = vmax.f32 %v1999, 0.0
    %v2010 = vld [vmem:[%s2] sm:$0xff]
    %v2011 = vld [vmem:[%s2 + $0x8] sm:$0xff]
    %v2012 = vld [vmem:[%s2 + $0x10] sm:$0xff]
    %v2013 = vld [vmem:[%s2 + $0x18] sm:$0xff]
    %v2014 = vld [vmem:[%s2 + $0x20] sm:$0xff]
    %v2015 = vld [vmem:[%s2 + $0x28] sm:$0xff]
    %v2016 = vld [vmem:[%s2 + $0x30] sm:$0xff]
    %v2017 = vld [vmem:[%s2 + $0x38] sm:$0xff]
    %v2018 = vld [vmem:[%s18] sm:$0x1]
    %v2020 = vlaneseq
    %v2021 = vshrl.u32 %v2020, 7
    %v2022 = vsub.s32 0, %v2021
    %v2023 = vrot.slane %v2018, %v2022
    %v2025 = vmul.f32 %v2010, %v2023
    %v2026 = vmul.f32 %v2011, %v2023
    %v2027 = vmul.f32 %v2012, %v2023
    %v2028 = vmul.f32 %v2013, %v2023
    %v2029 = vmul.f32 %v2014, %v2023
    %v2030 = vmul.f32 %v2015, %v2023
    %v2031 = vmul.f32 %v2016, %v2023
    %v2032 = vmul.f32 %v2017, %v2023
    %v2033 = vpack.c.bf16 %v2025, %v2025
    %v2034 = vpack.c.bf16 %v2026, %v2026
    %v2035 = vpack.c.bf16 %v2027, %v2027
    %v2036 = vpack.c.bf16 %v2028, %v2028
    %v2037 = vpack.c.bf16 %v2029, %v2029
    %v2038 = vpack.c.bf16 %v2030, %v2030
    %v2039 = vpack.c.bf16 %v2031, %v2031
    %v2040 = vpack.c.bf16 %v2032, %v2032
    %v2041 = vpack.c.bf16 %v2002, %v2002
    %v2042 = vpack.c.bf16 %v2003, %v2003
    %v2043 = vpack.c.bf16 %v2004, %v2004
    %v2044 = vpack.c.bf16 %v2005, %v2005
    %v2045 = vpack.c.bf16 %v2006, %v2006
    %v2046 = vpack.c.bf16 %v2007, %v2007
    %v2047 = vpack.c.bf16 %v2008, %v2008
    %v2048 = vpack.c.bf16 %v2009, %v2009
    %v2050 = vsel %vm1536, %v2033, 0
    %vm2052 = vcmask 1043456
    %v2054 = vsel %vm2052, %v2041, 0
    %2056 = vmatprep.subr.bf16.mxu0 0
    %2057 = vmatpush1.bf16.msra.mxu0 0
    %2058 = vmatprep.subr.bf16.mxu0 0
    %2059 = vmatpush1.bf16.msra.mxu0 0
    %2060 = vmatprep.subr.bf16.mxu0 0
    %2061 = vmatpush1.bf16.msra.mxu0 0
    %2062 = vmatprep.subr.bf16.mxu0 0
    %2063 = vmatpush1.bf16.msra.mxu0 0
    %2064 = vmatprep.subr.bf16.mxu0 0
    %2065 = vmatpush1.bf16.msra.mxu0 0
    %2066 = vmatprep.subr.bf16.mxu0 0
    %2067 = vmatpush1.bf16.msra.mxu0 0
    %2068 = vmatprep.subr.bf16.mxu0 0
    %2069 = vmatpush1.bf16.msra.mxu0 0
    %2070 = vmatprep.subr.bf16.mxu0 0
    %2071 = vmatpush1.bf16.msra.mxu0 %v2054
    %2072 = vmatprep.subr.bf16.mxu0 0
    %2073 = vmatpush2.bf16.msra.mxu0 0
    %2074 = vmatprep.subr.bf16.mxu0 0
    %2075 = vmatpush2.bf16.msra.mxu0 0
    %2076 = vmatprep.subr.bf16.mxu0 0
    %2077 = vmatpush2.bf16.msra.mxu0 0
    %2078 = vmatprep.subr.bf16.mxu0 0
    %2079 = vmatpush2.bf16.msra.mxu0 0
    %2080 = vmatprep.subr.bf16.mxu0 0
    %2081 = vmatpush2.bf16.msra.mxu0 0
    %2082 = vmatprep.subr.bf16.mxu0 0
    %2083 = vmatpush2.bf16.msra.mxu0 0
    %2084 = vmatprep.subr.bf16.mxu0 0
    %2085 = vmatpush2.bf16.msra.mxu0 0
    %2086 = vmatprep.subr.bf16.mxu0 0
    %2087 = vmatpush2.bf16.msra.mxu0 0
    %2088 = vmatprep.mubr.bf16.mxu0 0
    %2089 = vmatmul.mubr.bf16.gmra.mxu0 %v2050
    %v2090 = vpop.f32.mrf.mxu0
    %v2091 = vadd.f32 0.0, %v2090
    %v2092 = vpop.f32.mrf.mxu0
    %v2093 = vpop.f32.mrf.mxu0
    %v2094 = vpop.f32.mrf.mxu0
    %2095 = vdwg.mxu0
    %v2097 = vsel %vm1536, %v2034, 0
    %v2100 = vsel %vm2052, %v2042, 0
    %2102 = vmatprep.subr.bf16.mxu0 0
    %2103 = vmatpush1.bf16.msra.mxu0 0
    %2104 = vmatprep.subr.bf16.mxu0 0
    %2105 = vmatpush1.bf16.msra.mxu0 0
    %2106 = vmatprep.subr.bf16.mxu0 0
    %2107 = vmatpush1.bf16.msra.mxu0 0
    %2108 = vmatprep.subr.bf16.mxu0 0
    %2109 = vmatpush1.bf16.msra.mxu0 0
    %2110 = vmatprep.subr.bf16.mxu0 0
    %2111 = vmatpush1.bf16.msra.mxu0 0
    %2112 = vmatprep.subr.bf16.mxu0 0
    %2113 = vmatpush1.bf16.msra.mxu0 0
    %2114 = vmatprep.subr.bf16.mxu0 0
    %2115 = vmatpush1.bf16.msra.mxu0 0
    %2116 = vmatprep.subr.bf16.mxu0 0
    %2117 = vmatpush1.bf16.msra.mxu0 %v2100
    %2118 = vmatprep.subr.bf16.mxu0 0
    %2119 = vmatpush2.bf16.msra.mxu0 0
    %2120 = vmatprep.subr.bf16.mxu0 0
    %2121 = vmatpush2.bf16.msra.mxu0 0
    %2122 = vmatprep.subr.bf16.mxu0 0
    %2123 = vmatpush2.bf16.msra.mxu0 0
    %2124 = vmatprep.subr.bf16.mxu0 0
    %2125 = vmatpush2.bf16.msra.mxu0 0
    %2126 = vmatprep.subr.bf16.mxu0 0
    %2127 = vmatpush2.bf16.msra.mxu0 0
    %2128 = vmatprep.subr.bf16.mxu0 0
    %2129 = vmatpush2.bf16.msra.mxu0 0
    %2130 = vmatprep.subr.bf16.mxu0 0
    %2131 = vmatpush2.bf16.msra.mxu0 0
    %2132 = vmatprep.subr.bf16.mxu0 0
    %2133 = vmatpush2.bf16.msra.mxu0 0
    %2134 = vmatprep.mubr.bf16.mxu0 0
    %2135 = vmatmul.mubr.bf16.gmra.mxu0 %v2097
    %v2136 = vpop.f32.mrf.mxu0
    %v2137 = vadd.f32 0.0, %v2136
    %v2138 = vpop.f32.mrf.mxu0
    %v2139 = vpop.f32.mrf.mxu0
    %v2140 = vpop.f32.mrf.mxu0
    %2141 = vdwg.mxu0
    %v2143 = vsel %vm1536, %v2035, 0
    %v2146 = vsel %vm2052, %v2043, 0
    %2148 = vmatprep.subr.bf16.mxu0 0
    %2149 = vmatpush1.bf16.msra.mxu0 0
    %2150 = vmatprep.subr.bf16.mxu0 0
    %2151 = vmatpush1.bf16.msra.mxu0 0
    %2152 = vmatprep.subr.bf16.mxu0 0
    %2153 = vmatpush1.bf16.msra.mxu0 0
    %2154 = vmatprep.subr.bf16.mxu0 0
    %2155 = vmatpush1.bf16.msra.mxu0 0
    %2156 = vmatprep.subr.bf16.mxu0 0
    %2157 = vmatpush1.bf16.msra.mxu0 0
    %2158 = vmatprep.subr.bf16.mxu0 0
    %2159 = vmatpush1.bf16.msra.mxu0 0
    %2160 = vmatprep.subr.bf16.mxu0 0
    %2161 = vmatpush1.bf16.msra.mxu0 0
    %2162 = vmatprep.subr.bf16.mxu0 0
    %2163 = vmatpush1.bf16.msra.mxu0 %v2146
    %2164 = vmatprep.subr.bf16.mxu0 0
    %2165 = vmatpush2.bf16.msra.mxu0 0
    %2166 = vmatprep.subr.bf16.mxu0 0
    %2167 = vmatpush2.bf16.msra.mxu0 0
    %2168 = vmatprep.subr.bf16.mxu0 0
    %2169 = vmatpush2.bf16.msra.mxu0 0
    %2170 = vmatprep.subr.bf16.mxu0 0
    %2171 = vmatpush2.bf16.msra.mxu0 0
    %2172 = vmatprep.subr.bf16.mxu0 0
    %2173 = vmatpush2.bf16.msra.mxu0 0
    %2174 = vmatprep.subr.bf16.mxu0 0
    %2175 = vmatpush2.bf16.msra.mxu0 0
    %2176 = vmatprep.subr.bf16.mxu0 0
    %2177 = vmatpush2.bf16.msra.mxu0 0
    %2178 = vmatprep.subr.bf16.mxu0 0
    %2179 = vmatpush2.bf16.msra.mxu0 0
    %2180 = vmatprep.mubr.bf16.mxu0 0
    %2181 = vmatmul.mubr.bf16.gmra.mxu0 %v2143
    %v2182 = vpop.f32.mrf.mxu0
    %v2183 = vadd.f32 0.0, %v2182
    %v2184 = vpop.f32.mrf.mxu0
    %v2185 = vpop.f32.mrf.mxu0
    %v2186 = vpop.f32.mrf.mxu0
    %2187 = vdwg.mxu0
    %v2189 = vsel %vm1536, %v2036, 0
    %v2192 = vsel %vm2052, %v2044, 0
    %2194 = vmatprep.subr.bf16.mxu0 0
    %2195 = vmatpush1.bf16.msra.mxu0 0
    %2196 = vmatprep.subr.bf16.mxu0 0
    %2197 = vmatpush1.bf16.msra.mxu0 0
    %2198 = vmatprep.subr.bf16.mxu0 0
    %2199 = vmatpush1.bf16.msra.mxu0 0
    %2200 = vmatprep.subr.bf16.mxu0 0
    %2201 = vmatpush1.bf16.msra.mxu0 0
    %2202 = vmatprep.subr.bf16.mxu0 0
    %2203 = vmatpush1.bf16.msra.mxu0 0
    %2204 = vmatprep.subr.bf16.mxu0 0
    %2205 = vmatpush1.bf16.msra.mxu0 0
    %2206 = vmatprep.subr.bf16.mxu0 0
    %2207 = vmatpush1.bf16.msra.mxu0 0
    %2208 = vmatprep.subr.bf16.mxu0 0
    %2209 = vmatpush1.bf16.msra.mxu0 %v2192
    %2210 = vmatprep.subr.bf16.mxu0 0
    %2211 = vmatpush2.bf16.msra.mxu0 0
    %2212 = vmatprep.subr.bf16.mxu0 0
    %2213 = vmatpush2.bf16.msra.mxu0 0
    %2214 = vmatprep.subr.bf16.mxu0 0
    %2215 = vmatpush2.bf16.msra.mxu0 0
    %2216 = vmatprep.subr.bf16.mxu0 0
    %2217 = vmatpush2.bf16.msra.mxu0 0
    %2218 = vmatprep.subr.bf16.mxu0 0
    %2219 = vmatpush2.bf16.msra.mxu0 0
    %2220 = vmatprep.subr.bf16.mxu0 0
    %2221 = vmatpush2.bf16.msra.mxu0 0
    %2222 = vmatprep.subr.bf16.mxu0 0
    %2223 = vmatpush2.bf16.msra.mxu0 0
    %2224 = vmatprep.subr.bf16.mxu0 0
    %2225 = vmatpush2.bf16.msra.mxu0 0
    %2226 = vmatprep.mubr.bf16.mxu0 0
    %2227 = vmatmul.mubr.bf16.gmra.mxu0 %v2189
    %v2228 = vpop.f32.mrf.mxu0
    %v2229 = vadd.f32 0.0, %v2228
    %v2230 = vpop.f32.mrf.mxu0
    %v2231 = vpop.f32.mrf.mxu0
    %v2232 = vpop.f32.mrf.mxu0
    %2233 = vdwg.mxu0
    %v2235 = vsel %vm1536, %v2037, 0
    %v2238 = vsel %vm2052, %v2045, 0
    %2240 = vmatprep.subr.bf16.mxu0 0
    %2241 = vmatpush1.bf16.msra.mxu0 0
    %2242 = vmatprep.subr.bf16.mxu0 0
    %2243 = vmatpush1.bf16.msra.mxu0 0
    %2244 = vmatprep.subr.bf16.mxu0 0
    %2245 = vmatpush1.bf16.msra.mxu0 0
    %2246 = vmatprep.subr.bf16.mxu0 0
    %2247 = vmatpush1.bf16.msra.mxu0 0
    %2248 = vmatprep.subr.bf16.mxu0 0
    %2249 = vmatpush1.bf16.msra.mxu0 0
    %2250 = vmatprep.subr.bf16.mxu0 0
    %2251 = vmatpush1.bf16.msra.mxu0 0
    %2252 = vmatprep.subr.bf16.mxu0 0
    %2253 = vmatpush1.bf16.msra.mxu0 0
    %2254 = vmatprep.subr.bf16.mxu0 0
    %2255 = vmatpush1.bf16.msra.mxu0 %v2238
    %2256 = vmatprep.subr.bf16.mxu0 0
    %2257 = vmatpush2.bf16.msra.mxu0 0
    %2258 = vmatprep.subr.bf16.mxu0 0
    %2259 = vmatpush2.bf16.msra.mxu0 0
    %2260 = vmatprep.subr.bf16.mxu0 0
    %2261 = vmatpush2.bf16.msra.mxu0 0
    %2262 = vmatprep.subr.bf16.mxu0 0
    %2263 = vmatpush2.bf16.msra.mxu0 0
    %2264 = vmatprep.subr.bf16.mxu0 0
    %2265 = vmatpush2.bf16.msra.mxu0 0
    %2266 = vmatprep.subr.bf16.mxu0 0
    %2267 = vmatpush2.bf16.msra.mxu0 0
    %2268 = vmatprep.subr.bf16.mxu0 0
    %2269 = vmatpush2.bf16.msra.mxu0 0
    %2270 = vmatprep.subr.bf16.mxu0 0
    %2271 = vmatpush2.bf16.msra.mxu0 0
    %2272 = vmatprep.mubr.bf16.mxu0 0
    %2273 = vmatmul.mubr.bf16.gmra.mxu0 %v2235
    %v2274 = vpop.f32.mrf.mxu0
    %v2275 = vadd.f32 0.0, %v2274
    %v2276 = vpop.f32.mrf.mxu0
    %v2277 = vpop.f32.mrf.mxu0
    %v2278 = vpop.f32.mrf.mxu0
    %2279 = vdwg.mxu0
    %v2281 = vsel %vm1536, %v2038, 0
    %v2284 = vsel %vm2052, %v2046, 0
    %2286 = vmatprep.subr.bf16.mxu0 0
    %2287 = vmatpush1.bf16.msra.mxu0 0
    %2288 = vmatprep.subr.bf16.mxu0 0
    %2289 = vmatpush1.bf16.msra.mxu0 0
    %2290 = vmatprep.subr.bf16.mxu0 0
    %2291 = vmatpush1.bf16.msra.mxu0 0
    %2292 = vmatprep.subr.bf16.mxu0 0
    %2293 = vmatpush1.bf16.msra.mxu0 0
    %2294 = vmatprep.subr.bf16.mxu0 0
    %2295 = vmatpush1.bf16.msra.mxu0 0
    %2296 = vmatprep.subr.bf16.mxu0 0
    %2297 = vmatpush1.bf16.msra.mxu0 0
    %2298 = vmatprep.subr.bf16.mxu0 0
    %2299 = vmatpush1.bf16.msra.mxu0 0
    %2300 = vmatprep.subr.bf16.mxu0 0
    %2301 = vmatpush1.bf16.msra.mxu0 %v2284
    %2302 = vmatprep.subr.bf16.mxu0 0
    %2303 = vmatpush2.bf16.msra.mxu0 0
    %2304 = vmatprep.subr.bf16.mxu0 0
    %2305 = vmatpush2.bf16.msra.mxu0 0
    %2306 = vmatprep.subr.bf16.mxu0 0
    %2307 = vmatpush2.bf16.msra.mxu0 0
    %2308 = vmatprep.subr.bf16.mxu0 0
    %2309 = vmatpush2.bf16.msra.mxu0 0
    %2310 = vmatprep.subr.bf16.mxu0 0
    %2311 = vmatpush2.bf16.msra.mxu0 0
    %2312 = vmatprep.subr.bf16.mxu0 0
    %2313 = vmatpush2.bf16.msra.mxu0 0
    %2314 = vmatprep.subr.bf16.mxu0 0
    %2315 = vmatpush2.bf16.msra.mxu0 0
    %2316 = vmatprep.subr.bf16.mxu0 0
    %2317 = vmatpush2.bf16.msra.mxu0 0
    %2318 = vmatprep.mubr.bf16.mxu0 0
    %2319 = vmatmul.mubr.bf16.gmra.mxu0 %v2281
    %v2320 = vpop.f32.mrf.mxu0
    %v2321 = vadd.f32 0.0, %v2320
    %v2322 = vpop.f32.mrf.mxu0
    %v2323 = vpop.f32.mrf.mxu0
    %v2324 = vpop.f32.mrf.mxu0
    %2325 = vdwg.mxu0
    %v2327 = vsel %vm1536, %v2039, 0
    %v2330 = vsel %vm2052, %v2047, 0
    %2332 = vmatprep.subr.bf16.mxu0 0
    %2333 = vmatpush1.bf16.msra.mxu0 0
    %2334 = vmatprep.subr.bf16.mxu0 0
    %2335 = vmatpush1.bf16.msra.mxu0 0
    %2336 = vmatprep.subr.bf16.mxu0 0
    %2337 = vmatpush1.bf16.msra.mxu0 0
    %2338 = vmatprep.subr.bf16.mxu0 0
    %2339 = vmatpush1.bf16.msra.mxu0 0
    %2340 = vmatprep.subr.bf16.mxu0 0
    %2341 = vmatpush1.bf16.msra.mxu0 0
    %2342 = vmatprep.subr.bf16.mxu0 0
    %2343 = vmatpush1.bf16.msra.mxu0 0
    %2344 = vmatprep.subr.bf16.mxu0 0
    %2345 = vmatpush1.bf16.msra.mxu0 0
    %2346 = vmatprep.subr.bf16.mxu0 0
    %2347 = vmatpush1.bf16.msra.mxu0 %v2330
    %2348 = vmatprep.subr.bf16.mxu0 0
    %2349 = vmatpush2.bf16.msra.mxu0 0
    %2350 = vmatprep.subr.bf16.mxu0 0
    %2351 = vmatpush2.bf16.msra.mxu0 0
    %2352 = vmatprep.subr.bf16.mxu0 0
    %2353 = vmatpush2.bf16.msra.mxu0 0
    %2354 = vmatprep.subr.bf16.mxu0 0
    %2355 = vmatpush2.bf16.msra.mxu0 0
    %2356 = vmatprep.subr.bf16.mxu0 0
    %2357 = vmatpush2.bf16.msra.mxu0 0
    %2358 = vmatprep.subr.bf16.mxu0 0
    %2359 = vmatpush2.bf16.msra.mxu0 0
    %2360 = vmatprep.subr.bf16.mxu0 0
    %2361 = vmatpush2.bf16.msra.mxu0 0
    %2362 = vmatprep.subr.bf16.mxu0 0
    %2363 = vmatpush2.bf16.msra.mxu0 0
    %2364 = vmatprep.mubr.bf16.mxu0 0
    %2365 = vmatmul.mubr.bf16.gmra.mxu0 %v2327
    %v2366 = vpop.f32.mrf.mxu0
    %v2367 = vadd.f32 0.0, %v2366
    %v2368 = vpop.f32.mrf.mxu0
    %v2369 = vpop.f32.mrf.mxu0
    %v2370 = vpop.f32.mrf.mxu0
    %2371 = vdwg.mxu0
    %v2373 = vsel %vm1536, %v2040, 0
    %v2376 = vsel %vm2052, %v2048, 0
    %2378 = vmatprep.subr.bf16.mxu0 0
    %2379 = vmatpush1.bf16.msra.mxu0 0
    %2380 = vmatprep.subr.bf16.mxu0 0
    %2381 = vmatpush1.bf16.msra.mxu0 0
    %2382 = vmatprep.subr.bf16.mxu0 0
    %2383 = vmatpush1.bf16.msra.mxu0 0
    %2384 = vmatprep.subr.bf16.mxu0 0
    %2385 = vmatpush1.bf16.msra.mxu0 0
    %2386 = vmatprep.subr.bf16.mxu0 0
    %2387 = vmatpush1.bf16.msra.mxu0 0
    %2388 = vmatprep.subr.bf16.mxu0 0
    %2389 = vmatpush1.bf16.msra.mxu0 0
    %2390 = vmatprep.subr.bf16.mxu0 0
    %2391 = vmatpush1.bf16.msra.mxu0 0
    %2392 = vmatprep.subr.bf16.mxu0 0
    %2393 = vmatpush1.bf16.msra.mxu0 %v2376
    %2394 = vmatprep.subr.bf16.mxu0 0
    %2395 = vmatpush2.bf16.msra.mxu0 0
    %2396 = vmatprep.subr.bf16.mxu0 0
    %2397 = vmatpush2.bf16.msra.mxu0 0
    %2398 = vmatprep.subr.bf16.mxu0 0
    %2399 = vmatpush2.bf16.msra.mxu0 0
    %2400 = vmatprep.subr.bf16.mxu0 0
    %2401 = vmatpush2.bf16.msra.mxu0 0
    %2402 = vmatprep.subr.bf16.mxu0 0
    %2403 = vmatpush2.bf16.msra.mxu0 0
    %2404 = vmatprep.subr.bf16.mxu0 0
    %2405 = vmatpush2.bf16.msra.mxu0 0
    %2406 = vmatprep.subr.bf16.mxu0 0
    %2407 = vmatpush2.bf16.msra.mxu0 0
    %2408 = vmatprep.subr.bf16.mxu0 0
    %2409 = vmatpush2.bf16.msra.mxu0 0
    %2410 = vmatprep.mubr.bf16.mxu0 0
    %2411 = vmatmul.mubr.bf16.gmra.mxu0 %v2373
    %v2412 = vpop.f32.mrf.mxu0
    %v2413 = vadd.f32 0.0, %v2412
    %v2414 = vpop.f32.mrf.mxu0
    %v2415 = vpop.f32.mrf.mxu0
    %v2416 = vpop.f32.mrf.mxu0
    %2417 = vdwg.mxu0
    %v2418 = vmul.f32 %v1906, %v2091
    %v2419 = vmul.f32 %v1907, %v2137
    %v2420 = vmul.f32 %v1908, %v2183
    %v2421 = vmul.f32 %v1909, %v2229
    %v2422 = vmul.f32 %v1910, %v2275
    %v2423 = vmul.f32 %v1911, %v2321
    %v2424 = vmul.f32 %v1912, %v2367
    %v2425 = vmul.f32 %v1913, %v2413
    %v2426 = vsel %vm514, %v2418, 0.0
    %2427 = vadd.xlane.f32.xlu0 %v2426
    %v2428 = vpop.xlane.xlu0 %2427
    %v2429 = vsel %vm514, %v2419, 0.0
    %2430 = vadd.xlane.f32.xlu0 %v2429
    %v2431 = vpop.xlane.xlu0 %2430
    %v2432 = vsel %vm514, %v2420, 0.0
    %2433 = vadd.xlane.f32.xlu0 %v2432
    %v2434 = vpop.xlane.xlu0 %2433
    %v2435 = vsel %vm514, %v2421, 0.0
    %2436 = vadd.xlane.f32.xlu0 %v2435
    %v2437 = vpop.xlane.xlu0 %2436
    %v2438 = vsel %vm514, %v2422, 0.0
    %2439 = vadd.xlane.f32.xlu0 %v2438
    %v2440 = vpop.xlane.xlu0 %2439
    %v2441 = vsel %vm514, %v2423, 0.0
    %2442 = vadd.xlane.f32.xlu0 %v2441
    %v2443 = vpop.xlane.xlu0 %2442
    %v2444 = vsel %vm514, %v2424, 0.0
    %2445 = vadd.xlane.f32.xlu0 %v2444
    %v2446 = vpop.xlane.xlu0 %2445
    %v2447 = vsel %vm514, %v2425, 0.0
    %2448 = vadd.xlane.f32.xlu0 %v2447
    %v2449 = vpop.xlane.xlu0 %2448
    %v2450 = vmul.f32 %v2428, 0.17677669
    %v2451 = vmul.f32 %v2431, 0.17677669
    %v2452 = vmul.f32 %v2434, 0.17677669
    %v2453 = vmul.f32 %v2437, 0.17677669
    %v2454 = vmul.f32 %v2440, 0.17677669
    %v2455 = vmul.f32 %v2443, 0.17677669
    %v2456 = vmul.f32 %v2446, 0.17677669
    %v2457 = vmul.f32 %v2449, 0.17677669
    %v2458 = vld [vmem:[#allocation5] sm:$0x1]
    %v2460 = vlaneseq
    %v2461 = vshrl.u32 %v2460, 7
    %v2462 = vsub.s32 0, %v2461
    %v2463 = vrot.slane %v2458, %v2462
    %2464 = vset.pattern.permute.xlu0 0
    %2465 = vperm.xlu0 %2464, %v2463
    %v2466 = vpop.permute.xlu0 %2465
    %v2468 = vadd.f32 %v2450, %v2466
    %v2469 = vadd.f32 %v2451, %v2466
    %v2470 = vadd.f32 %v2452, %v2466
    %v2471 = vadd.f32 %v2453, %v2466
    %v2472 = vadd.f32 %v2454, %v2466
    %v2473 = vadd.f32 %v2455, %v2466
    %v2474 = vadd.f32 %v2456, %v2466
    %v2475 = vadd.f32 %v2457, %v2466
    %v2476 = vxor.u32 %v2468, 2147483648
    %v2477 = vxor.u32 %v2469, 2147483648
    %v2478 = vxor.u32 %v2470, 2147483648
    %v2479 = vxor.u32 %v2471, 2147483648
    %v2480 = vxor.u32 %v2472, 2147483648
    %v2481 = vxor.u32 %v2473, 2147483648
    %v2482 = vxor.u32 %v2474, 2147483648
    %v2483 = vxor.u32 %v2475, 2147483648
    %v2484 = vmul.f32 %v2476, 1.442695
    %v2485 = vpow.pop %v2484
    %v2486 = vmul.f32 %v2477, 1.442695
    %v2487 = vpow.pop %v2486
    %v2488 = vmul.f32 %v2478, 1.442695
    %v2489 = vpow.pop %v2488
    %v2490 = vmul.f32 %v2479, 1.442695
    %v2491 = vpow.pop %v2490
    %v2492 = vmul.f32 %v2480, 1.442695
    %v2493 = vpow.pop %v2492
    %v2494 = vmul.f32 %v2481, 1.442695
    %v2495 = vpow.pop %v2494
    %v2496 = vmul.f32 %v2482, 1.442695
    %v2497 = vpow.pop %v2496
    %v2498 = vmul.f32 %v2483, 1.442695
    %v2499 = vpow.pop %v2498
    %v2500 = vadd.f32 %v2485, 1.0
    %v2501 = vadd.f32 %v2487, 1.0
    %v2502 = vadd.f32 %v2489, 1.0
    %v2503 = vadd.f32 %v2491, 1.0
    %v2504 = vadd.f32 %v2493, 1.0
    %v2505 = vadd.f32 %v2495, 1.0
    %v2506 = vadd.f32 %v2497, 1.0
    %v2507 = vadd.f32 %v2499, 1.0
    %v2508 = vrcp.pop %v2500
    %v2509 = vmul.f32 1.0, %v2508
    %v2510 = vrcp.pop %v2501
    %v2511 = vmul.f32 1.0, %v2510
    %v2512 = vrcp.pop %v2502
    %v2513 = vmul.f32 1.0, %v2512
    %v2514 = vrcp.pop %v2503
    %v2515 = vmul.f32 1.0, %v2514
    %v2516 = vrcp.pop %v2504
    %v2517 = vmul.f32 1.0, %v2516
    %v2518 = vrcp.pop %v2505
    %v2519 = vmul.f32 1.0, %v2518
    %v2520 = vrcp.pop %v2506
    %v2521 = vmul.f32 1.0, %v2520
    %v2522 = vrcp.pop %v2507
    %v2523 = vmul.f32 1.0, %v2522
    %s2524 = sld [smem:[#allocation3]]
    %v2525 = vstv %s2524
    %vm2526 = vcmp.gt.f32.partialorder %v2509, %v2525
    %vm2527 = vcmp.gt.f32.partialorder %v2511, %v2525
    %vm2528 = vcmp.gt.f32.partialorder %v2513, %v2525
    %vm2529 = vcmp.gt.f32.partialorder %v2515, %v2525
    %vm2530 = vcmp.gt.f32.partialorder %v2517, %v2525
    %vm2531 = vcmp.gt.f32.partialorder %v2519, %v2525
    %vm2532 = vcmp.gt.f32.partialorder %v2521, %v2525
    %vm2533 = vcmp.gt.f32.partialorder %v2523, %v2525
    %v2534 = vsel %vm2526, %v2509, 0.0
    %v2535 = vsel %vm2527, %v2511, 0.0
    %v2536 = vsel %vm2528, %v2513, 0.0
    %v2537 = vsel %vm2529, %v2515, 0.0
    %v2538 = vsel %vm2530, %v2517, 0.0
    %v2539 = vsel %vm2531, %v2519, 0.0
    %v2540 = vsel %vm2532, %v2521, 0.0
    %v2541 = vsel %vm2533, %v2523, 0.0
    %v2550 = vlaneseq
    %v2551 = vshrl.u32 %v2550, 7
    %v2552 = vsub.s32 %v1488, %v2551
    %v2553 = vrot.slane %v2534, %v2552
    %v2554 = vlaneseq
    %v2555 = vshrl.u32 %v2554, 7
    %v2556 = vsub.s32 %v1488, %v2555
    %v2557 = vrot.slane %v2535, %v2556
    %v2558 = vlaneseq
    %v2559 = vshrl.u32 %v2558, 7
    %v2560 = vsub.s32 %v1488, %v2559
    %v2561 = vrot.slane %v2536, %v2560
    %v2562 = vlaneseq
    %v2563 = vshrl.u32 %v2562, 7
    %v2564 = vsub.s32 %v1488, %v2563
    %v2565 = vrot.slane %v2537, %v2564
    %v2566 = vlaneseq
    %v2567 = vshrl.u32 %v2566, 7
    %v2568 = vsub.s32 %v1488, %v2567
    %v2569 = vrot.slane %v2538, %v2568
    %v2570 = vlaneseq
    %v2571 = vshrl.u32 %v2570, 7
    %v2572 = vsub.s32 %v1488, %v2571
    %v2573 = vrot.slane %v2539, %v2572
    %v2574 = vlaneseq
    %v2575 = vshrl.u32 %v2574, 7
    %v2576 = vsub.s32 %v1488, %v2575
    %v2577 = vrot.slane %v2540, %v2576
    %v2578 = vlaneseq
    %v2579 = vshrl.u32 %v2578, 7
    %v2580 = vsub.s32 %v1488, %v2579
    %v2581 = vrot.slane %v2541, %v2580
    %v2582 = vsel %vm1521, %v2557, %v2553
    %v2583 = vsel %vm1523, %v2561, %v2582
    %v2584 = vsel %vm1525, %v2565, %v2583
    %v2585 = vsel %vm1527, %v2569, %v2584
    %v2586 = vsel %vm1529, %v2573, %v2585
    %v2587 = vsel %vm1531, %v2577, %v2586
    %v2588 = vsel %vm1533, %v2581, %v2587
    %v2590 = vsel %vm1536, %v2588, 0.0
    %2591 = vadd.xlane.f32.xlu0 %v2590
    %v2592 = vpop.xlane.xlu0 %2591
    %2593 = vxpose.xlu0.b32.start [1/16] %v2592, 128
    %2594 = vxpose.xlu0.b32.cont [2/16] 0.0, 128
    %2595 = vxpose.xlu0.b32.cont [3/16] 0.0, 128
    %2596 = vxpose.xlu0.b32.cont [4/16] 0.0, 128
    %2597 = vxpose.xlu0.b32.cont [5/16] 0.0, 128
    %2598 = vxpose.xlu0.b32.cont [6/16] 0.0, 128
    %2599 = vxpose.xlu0.b32.cont [7/16] 0.0, 128
    %2600 = vxpose.xlu0.b32.cont [8/16] 0.0, 128
    %2601 = vxpose.xlu0.b32.cont [9/16] 0.0, 128
    %2602 = vxpose.xlu0.b32.cont [10/16] 0.0, 128
    %2603 = vxpose.xlu0.b32.cont [11/16] 0.0, 128
    %2604 = vxpose.xlu0.b32.cont [12/16] 0.0, 128
    %2605 = vxpose.xlu0.b32.cont [13/16] 0.0, 128
    %2606 = vxpose.xlu0.b32.cont [14/16] 0.0, 128
    %2607 = vxpose.xlu0.b32.cont [15/16] 0.0, 128
    %2608 = vxpose.xlu0.b32.end [16/16] 0.0, 128
    %v2609 = vpop.trf.xlu0
    %v2610 = vpop.trf.xlu0
    %v2611 = vpop.trf.xlu0
    %v2612 = vpop.trf.xlu0
    %v2613 = vpop.trf.xlu0
    %v2614 = vpop.trf.xlu0
    %v2615 = vpop.trf.xlu0
    %v2616 = vpop.trf.xlu0
    %v2617 = vpop.trf.xlu0
    %v2618 = vpop.trf.xlu0
    %v2619 = vpop.trf.xlu0
    %v2620 = vpop.trf.xlu0
    %v2621 = vpop.trf.xlu0
    %v2622 = vpop.trf.xlu0
    %v2623 = vpop.trf.xlu0
    %v2624 = vpop.trf.xlu0
    %vm2625 = vcmask 57344
    %2626 = vst.msk [vmem:[#allocation6] sm:$0x1] %vm2625, %v2609
    // Predicated region
    $region82: #{tpu_custom_call.1} parent=1 // pred_check
      _
    $region83: #{tpu_custom_call.1} parent=1 // pred_check_branch
      %2628 = sbr.rel (0) target = $region85
    $region84: #{tpu_custom_call.1} parent=1 // pred_region
      %s2630 = ssub.s32 16, 16
      %2631 = vsyncadd [#allocation7], %s2630
      %s2633 = sshll.u32 [#allocation6], 4
      %s2634 = int_to_ptr.vmem [resolvable:$true] %s2633
      %2636 = dma.vmem_to_hbm [thread:$0]  %s2634, 16, %s20, [#allocation7]
    $region85: #{tpu_custom_call.1} parent=1 // pred_fallthru
      _
    // Predicated region
    $region86: #{tpu_custom_call.1} parent=1 // pred_check
      _
    $region87: #{tpu_custom_call.1} parent=1 // pred_check_branch
      %2638 = sbr.rel (0) target = $region89
    $region88: #{tpu_custom_call.1} parent=1 // pred_region
      %2639 = dma.done [#allocation7], 16
    $region89: #{tpu_custom_call.1} parent=1 // pred_fallthru
      _
    %2640 = vsyncpa [#allocation7], 1

// kernel: tpu_custom_call.1
$region0: #{tpu_custom_call.1}
  #allocation0 [shape = 'u32[]', space=smem, size = 0x4, offset = 0x4, fixed_abs, tag = 'smem constant byte address 0x4 - core index']
  #allocation1 [shape = 'u32[144,128]{1,0:T(1,128)}', space=vmem, size = 0x12000, scoped, tag = 'internal scratch']
  #allocation2 [shape = 'f32[8,8,96]{2,1,0:T(8,128)}', space=vmem, size = 0x8000, scoped, tag = 'scratch operand']
  #allocation3 [shape = 'f32[1]{0:T(128)S(6)}', space=smem, size = 0x200, scoped, tag = 'scoped memory for tpu_custom_call.1']
  #allocation4 [shape = 'f32[1,1]{1,0:T(1,128)S(1)}', space=vmem, size = 0x200, scoped, tag = 'scoped memory for tpu_custom_call.1']
  #allocation5 [shape = 'f32[1,1]{1,0:T(1,128)S(1)}', space=vmem, size = 0x200, scoped, tag = 'scoped memory for tpu_custom_call.1']
  %s0 = inlined_call_operand.vmem [shape: bf16[1,8,8,384], index: 0, kind: input, shape index: {}]
  %s1 = inlined_call_operand.vmem [shape: bf16[8,8,32], index: 1, kind: input, shape index: {}]
  %s2 = inlined_call_operand.vmem [shape: f32[8,8,8], index: 2, kind: input, shape index: {}]
  %s3 = inlined_call_operand.<no memory space> [shape: f32[1], index: 3, kind: input, shape index: {}]
  %s4 = inlined_call_operand.vmem [shape: bf16[384,96], index: 4, kind: input, shape index: {}]
  %s5 = inlined_call_operand.vmem [shape: bf16[32,96], index: 5, kind: input, shape index: {}]
  %s6 = inlined_call_operand.vmem [shape: f32[1,96], index: 6, kind: input, shape index: {}]
  %s7 = inlined_call_operand.vmem [shape: f32[1,96], index: 7, kind: input, shape index: {}]
  %s8 = inlined_call_operand.vmem [shape: bf16[32,32], index: 8, kind: input, shape index: {}]
  %s9 = inlined_call_operand.vmem [shape: f32[1,32], index: 9, kind: input, shape index: {}]
  %s10 = inlined_call_operand.vmem [shape: bf16[32,32], index: 10, kind: input, shape index: {}]
  %s11 = inlined_call_operand.vmem [shape: f32[1,32], index: 11, kind: input, shape index: {}]
  %s12 = inlined_call_operand.vmem [shape: f32[1,32], index: 12, kind: input, shape index: {}]
  %s13 = inlined_call_operand.<no memory space> [shape: f32[1,1], index: 13, kind: input, shape index: {}]
  %s14 = inlined_call_operand.vmem [shape: bf16[32,32], index: 14, kind: input, shape index: {}]
  %s15 = inlined_call_operand.vmem [shape: f32[1,32], index: 15, kind: input, shape index: {}]
  %s16 = inlined_call_operand.vmem [shape: bf16[32,32], index: 16, kind: input, shape index: {}]
  %s17 = inlined_call_operand.vmem [shape: f32[1,32], index: 17, kind: input, shape index: {}]
  %s18 = inlined_call_operand.vmem [shape: f32[1,8], index: 18, kind: input, shape index: {}]
  %s19 = inlined_call_operand.<no memory space> [shape: f32[1,1], index: 19, kind: input, shape index: {}]
  %s20 = inlined_call_operand.hbm [shape: f32[1,1,8], index: 20, kind: output, shape index: {}]
  %s21 = sld [smem:[#allocation0]]
  $region90: #{tpu_custom_call.1} parent=0
    _
  %s23 = ssub.s32 1, %s21
  %s24 = scalar_select 0, %s23, %s21
  %25 = sst [smem:[#allocation3]] %s3
  %v26 = vstv %s13
  %27 = vst [vmem:[#allocation4] sm:$0x1] %v26
  %v28 = vstv %s19
  %29 = vst [vmem:[#allocation5] sm:$0x1] %v28
  $region1: #{tpu_custom_call.1} parent=0
    #allocation6 [shape = 'u8[512]{0}', space=vmem, size = 0x400, scoped, tag = 'output window, operand 0, single buffered']
    #allocation7 [shape = 's32[1]{0}', space=sflag, size = 0x4, scoped, tag = 'scoped memory for tpu_custom_call.1']
    %30 = vsyncpa [#allocation7], 0
    // Predicated region
    $region2: #{tpu_custom_call.1} parent=1 // pred_check
      _
    $region3: #{tpu_custom_call.1} parent=1 // pred_check_branch
      %32 = sbr.rel (0) target = $region5
    $region4: #{tpu_custom_call.1} parent=1 // pred_region
      _
    $region5: #{tpu_custom_call.1} parent=1 // pred_fallthru
      _
    // Predicated region
    $region6: #{tpu_custom_call.1} parent=1 // pred_check
      _
    $region7: #{tpu_custom_call.1} parent=1 // pred_check_branch
      %34 = sbr.rel (0) target = $region9
    $region8: #{tpu_custom_call.1} parent=1 // pred_region
      _
    $region9: #{tpu_custom_call.1} parent=1 // pred_fallthru
      _
    // Predicated region
    $region10: #{tpu_custom_call.1} parent=1 // pred_check
      _
    $region11: #{tpu_custom_call.1} parent=1 // pred_check_branch
      %36 = sbr.rel (0) target = $region13
    $region12: #{tpu_custom_call.1} parent=1 // pred_region
      _
    $region13: #{tpu_custom_call.1} parent=1 // pred_fallthru
      _
    // Predicated region
    $region14: #{tpu_custom_call.1} parent=1 // pred_check
      _
    $region15: #{tpu_custom_call.1} parent=1 // pred_check_branch
      %38 = sbr.rel (0) target = $region17
    $region16: #{tpu_custom_call.1} parent=1 // pred_region
      _
    $region17: #{tpu_custom_call.1} parent=1 // pred_fallthru
      _
    // Predicated region
    $region18: #{tpu_custom_call.1} parent=1 // pred_check
      _
    $region19: #{tpu_custom_call.1} parent=1 // pred_check_branch
      %40 = sbr.rel (0) target = $region21
    $region20: #{tpu_custom_call.1} parent=1 // pred_region
      _
    $region21: #{tpu_custom_call.1} parent=1 // pred_fallthru
      _
    // Predicated region
    $region22: #{tpu_custom_call.1} parent=1 // pred_check
      _
    $region23: #{tpu_custom_call.1} parent=1 // pred_check_branch
      %42 = sbr.rel (0) target = $region25
    $region24: #{tpu_custom_call.1} parent=1 // pred_region
      _
    $region25: #{tpu_custom_call.1} parent=1 // pred_fallthru
      _
    // Predicated region
    $region26: #{tpu_custom_call.1} parent=1 // pred_check
      _
    $region27: #{tpu_custom_call.1} parent=1 // pred_check_branch
      %44 = sbr.rel (0) target = $region29
    $region28: #{tpu_custom_call.1} parent=1 // pred_region
      _
    $region29: #{tpu_custom_call.1} parent=1 // pred_fallthru
      _
    // Predicated region
    $region30: #{tpu_custom_call.1} parent=1 // pred_check
      _
    $region31: #{tpu_custom_call.1} parent=1 // pred_check_branch
      %46 = sbr.rel (0) target = $region33
    $region32: #{tpu_custom_call.1} parent=1 // pred_region
      _
    $region33: #{tpu_custom_call.1} parent=1 // pred_fallthru
      _
    // Predicated region
    $region34: #{tpu_custom_call.1} parent=1 // pred_check
      _
    $region35: #{tpu_custom_call.1} parent=1 // pred_check_branch
      %48 = sbr.rel (0) target = $region37
    $region36: #{tpu_custom_call.1} parent=1 // pred_region
      _
    $region37: #{tpu_custom_call.1} parent=1 // pred_fallthru
      _
    // Predicated region
    $region38: #{tpu_custom_call.1} parent=1 // pred_check
      _
    $region39: #{tpu_custom_call.1} parent=1 // pred_check_branch
      %50 = sbr.rel (0) target = $region41
    $region40: #{tpu_custom_call.1} parent=1 // pred_region
      _
    $region41: #{tpu_custom_call.1} parent=1 // pred_fallthru
      _
    // Predicated region
    $region42: #{tpu_custom_call.1} parent=1 // pred_check
      _
    $region43: #{tpu_custom_call.1} parent=1 // pred_check_branch
      %52 = sbr.rel (0) target = $region45
    $region44: #{tpu_custom_call.1} parent=1 // pred_region
      _
    $region45: #{tpu_custom_call.1} parent=1 // pred_fallthru
      _
    // Predicated region
    $region46: #{tpu_custom_call.1} parent=1 // pred_check
      _
    $region47: #{tpu_custom_call.1} parent=1 // pred_check_branch
      %54 = sbr.rel (0) target = $region49
    $region48: #{tpu_custom_call.1} parent=1 // pred_region
      _
    $region49: #{tpu_custom_call.1} parent=1 // pred_fallthru
      _
    // Predicated region
    $region50: #{tpu_custom_call.1} parent=1 // pred_check
      _
    $region51: #{tpu_custom_call.1} parent=1 // pred_check_branch
      %56 = sbr.rel (0) target = $region53
    $region52: #{tpu_custom_call.1} parent=1 // pred_region
      _
    $region53: #{tpu_custom_call.1} parent=1 // pred_fallthru
      _
    // Predicated region
    $region54: #{tpu_custom_call.1} parent=1 // pred_check
      _
    $region55: #{tpu_custom_call.1} parent=1 // pred_check_branch
      %58 = sbr.rel (0) target = $region57
    $region56: #{tpu_custom_call.1} parent=1 // pred_region
      _
    $region57: #{tpu_custom_call.1} parent=1 // pred_fallthru
      _
    // Predicated region
    $region58: #{tpu_custom_call.1} parent=1 // pred_check
      _
    $region59: #{tpu_custom_call.1} parent=1 // pred_check_branch
      %60 = sbr.rel (0) target = $region61
    $region60: #{tpu_custom_call.1} parent=1 // pred_region
      _
    $region61: #{tpu_custom_call.1} parent=1 // pred_fallthru
      _
    // Predicated region
    $region62: #{tpu_custom_call.1} parent=1 // pred_check
      _
    $region63: #{tpu_custom_call.1} parent=1 // pred_check_branch
      %62 = sbr.rel (0) target = $region65
    $region64: #{tpu_custom_call.1} parent=1 // pred_region
      _
    $region65: #{tpu_custom_call.1} parent=1 // pred_fallthru
      _
    // Predicated region
    $region66: #{tpu_custom_call.1} parent=1 // pred_check
      _
    $region67: #{tpu_custom_call.1} parent=1 // pred_check_branch
      %64 = sbr.rel (0) target = $region69
    $region68: #{tpu_custom_call.1} parent=1 // pred_region
      _
    $region69: #{tpu_custom_call.1} parent=1 // pred_fallthru
      _
    // Predicated region
    $region70: #{tpu_custom_call.1} parent=1 // pred_check
      _
    $region71: #{tpu_custom_call.1} parent=1 // pred_check_branch
      %66 = sbr.rel (0) target = $region73
    $region72: #{tpu_custom_call.1} parent=1 // pred_region
      _
    $region73: #{tpu_custom_call.1} parent=1 // pred_fallthru
      _
    // Predicated region
    $region74: #{tpu_custom_call.1} parent=1 // pred_check
      _
    $region75: #{tpu_custom_call.1} parent=1 // pred_check_branch
      %68 = sbr.rel (0) target = $region77
    $region76: #{tpu_custom_call.1} parent=1 // pred_region
      _
    $region77: #{tpu_custom_call.1} parent=1 // pred_fallthru
      _
    // Predicated region
    $region78: #{tpu_custom_call.1} parent=1 // pred_check
      _
    $region79: #{tpu_custom_call.1} parent=1 // pred_check_branch
      %70 = sbr.rel (0) target = $region81
    $region80: #{tpu_custom_call.1} parent=1 // pred_region
      _
    $region81: #{tpu_custom_call.1} parent=1 // pred_fallthru
      _
    %v72 = vld [vmem:[%s0] sm:$0xff]
    %v73 = vld [vmem:[%s0 + $0x8] sm:$0xf]
    %v74 = vld [vmem:[%s0 + $0xc] sm:$0xff]
    %v75 = vld [vmem:[%s0 + $0x14] sm:$0xf]
    %v76 = vld [vmem:[%s0 + $0x18] sm:$0xff]
    %v77 = vld [vmem:[%s0 + $0x20] sm:$0xf]
    %v78 = vld [vmem:[%s0 + $0x24] sm:$0xff]
    %v79 = vld [vmem:[%s0 + $0x2c] sm:$0xf]
    %v80 = vld [vmem:[%s0 + $0x30] sm:$0xff]
    %v81 = vld [vmem:[%s0 + $0x38] sm:$0xf]
    %v82 = vld [vmem:[%s0 + $0x3c] sm:$0xff]
    %v83 = vld [vmem:[%s0 + $0x44] sm:$0xf]
    %v84 = vld [vmem:[%s0 + $0x48] sm:$0xff]
    %v85 = vld [vmem:[%s0 + $0x50] sm:$0xf]
    %v86 = vld [vmem:[%s0 + $0x54] sm:$0xff]
    %v87 = vld [vmem:[%s0 + $0x5c] sm:$0xf]
    %v88 = vld [vmem:[%s4] sm:$0xf]
    %v89 = vld [vmem:[%s4 + $0x4] sm:$0xf]
    %v90 = vld [vmem:[%s4 + $0x8] sm:$0xf]
    %v91 = vld [vmem:[%s4 + $0xc] sm:$0xf]
    %v92 = vld [vmem:[%s4 + $0x10] sm:$0xf]
    %v93 = vld [vmem:[%s4 + $0x14] sm:$0xf]
    %v94 = vld [vmem:[%s4 + $0x18] sm:$0xf]
    %v95 = vld [vmem:[%s4 + $0x1c] sm:$0xf]
    %v96 = vld [vmem:[%s4 + $0x20] sm:$0xf]
    %v97 = vld [vmem:[%s4 + $0x24] sm:$0xf]
    %v98 = vld [vmem:[%s4 + $0x28] sm:$0xf]
    %v99 = vld [vmem:[%s4 + $0x2c] sm:$0xf]
    %v100 = vld [vmem:[%s4 + $0x30] sm:$0xf]
    %v101 = vld [vmem:[%s4 + $0x34] sm:$0xf]
    %v102 = vld [vmem:[%s4 + $0x38] sm:$0xf]
    %v103 = vld [vmem:[%s4 + $0x3c] sm:$0xf]
    %v104 = vld [vmem:[%s4 + $0x40] sm:$0xf]
    %v105 = vld [vmem:[%s4 + $0x44] sm:$0xf]
    %v106 = vld [vmem:[%s4 + $0x48] sm:$0xf]
    %v107 = vld [vmem:[%s4 + $0x4c] sm:$0xf]
    %v108 = vld [vmem:[%s4 + $0x50] sm:$0xf]
    %v109 = vld [vmem:[%s4 + $0x54] sm:$0xf]
    %v110 = vld [vmem:[%s4 + $0x58] sm:$0xf]
    %v111 = vld [vmem:[%s4 + $0x5c] sm:$0xf]
    %v112 = vld [vmem:[%s4 + $0x60] sm:$0xf]
    %v113 = vld [vmem:[%s4 + $0x64] sm:$0xf]
    %v114 = vld [vmem:[%s4 + $0x68] sm:$0xf]
    %v115 = vld [vmem:[%s4 + $0x6c] sm:$0xf]
    %v116 = vld [vmem:[%s4 + $0x70] sm:$0xf]
    %v117 = vld [vmem:[%s4 + $0x74] sm:$0xf]
    %v118 = vld [vmem:[%s4 + $0x78] sm:$0xf]
    %v119 = vld [vmem:[%s4 + $0x7c] sm:$0xf]
    %v120 = vld [vmem:[%s4 + $0x80] sm:$0xf]
    %v121 = vld [vmem:[%s4 + $0x84] sm:$0xf]
    %v122 = vld [vmem:[%s4 + $0x88] sm:$0xf]
    %v123 = vld [vmem:[%s4 + $0x8c] sm:$0xf]
    %v124 = vld [vmem:[%s4 + $0x90] sm:$0xf]
    %v125 = vld [vmem:[%s4 + $0x94] sm:$0xf]
    %v126 = vld [vmem:[%s4 + $0x98] sm:$0xf]
    %v127 = vld [vmem:[%s4 + $0x9c] sm:$0xf]
    %v128 = vld [vmem:[%s4 + $0xa0] sm:$0xf]
    %v129 = vld [vmem:[%s4 + $0xa4] sm:$0xf]
    %v130 = vld [vmem:[%s4 + $0xa8] sm:$0xf]
    %v131 = vld [vmem:[%s4 + $0xac] sm:$0xf]
    %v132 = vld [vmem:[%s4 + $0xb0] sm:$0xf]
    %v133 = vld [vmem:[%s4 + $0xb4] sm:$0xf]
    %v134 = vld [vmem:[%s4 + $0xb8] sm:$0xf]
    %v135 = vld [vmem:[%s4 + $0xbc] sm:$0xf]
    %v136 = vld [vmem:[%s6] sm:$0x1]
    %v138 = vlaneseq
    %v139 = vshrl.u32 %v138, 7
    %v140 = vsub.s32 0, %v139
    %v141 = vrot.slane %v136, %v140
    %v159 = vunpack.c.l.b16 %v72
    %v160 = vunpack.c.h.b16 %v72
    %v161 = vunpack.c.l.b16 %v73
    %v162 = vunpack.c.l.b16 %v74
    %v163 = vunpack.c.h.b16 %v74
    %v164 = vunpack.c.l.b16 %v75
    %v165 = vunpack.c.l.b16 %v76
    %v166 = vunpack.c.h.b16 %v76
    %v167 = vunpack.c.l.b16 %v77
    %v168 = vunpack.c.l.b16 %v78
    %v169 = vunpack.c.h.b16 %v78
    %v170 = vunpack.c.l.b16 %v79
    %v171 = vunpack.c.l.b16 %v80
    %v172 = vunpack.c.h.b16 %v80
    %v173 = vunpack.c.l.b16 %v81
    %v174 = vunpack.c.l.b16 %v82
    %v175 = vunpack.c.h.b16 %v82
    %v176 = vunpack.c.l.b16 %v83
    %v177 = vunpack.c.l.b16 %v84
    %v178 = vunpack.c.h.b16 %v84
    %v179 = vunpack.c.l.b16 %v85
    %v180 = vunpack.c.l.b16 %v86
    %v181 = vunpack.c.h.b16 %v86
    %v182 = vunpack.c.l.b16 %v87
    %v183 = vpack.c.b16 %v162, %v159
    %v184 = vpack.c.b16 %v163, %v160
    %v185 = vpack.c.b16 %v164, %v161
    %v186 = vpack.c.b16 %v168, %v165
    %v187 = vpack.c.b16 %v169, %v166
    %v188 = vpack.c.b16 %v170, %v167
    %v189 = vpack.c.b16 %v174, %v171
    %v190 = vpack.c.b16 %v175, %v172
    %v191 = vpack.c.b16 %v176, %v173
    %v192 = vpack.c.b16 %v180, %v177
    %v193 = vpack.c.b16 %v181, %v178
    %v194 = vpack.c.b16 %v182, %v179
    %v255 = vunpack.c.l.b16 %v88
    %v256 = vunpack.c.l.b16 %v89
    %v257 = vunpack.c.l.b16 %v90
    %v258 = vunpack.c.l.b16 %v91
    %v259 = vunpack.c.l.b16 %v92
    %v260 = vunpack.c.l.b16 %v93
    %v261 = vunpack.c.l.b16 %v94
    %v262 = vunpack.c.l.b16 %v95
    %v263 = vunpack.c.l.b16 %v96
    %v264 = vunpack.c.l.b16 %v97
    %v265 = vunpack.c.l.b16 %v98
    %v266 = vunpack.c.l.b16 %v99
    %v267 = vunpack.c.l.b16 %v100
    %v268 = vunpack.c.l.b16 %v101
    %v269 = vunpack.c.l.b16 %v102
    %v270 = vunpack.c.l.b16 %v103
    %v271 = vunpack.c.l.b16 %v104
    %v272 = vunpack.c.l.b16 %v105
    %v273 = vunpack.c.l.b16 %v106
    %v274 = vunpack.c.l.b16 %v107
    %v275 = vunpack.c.l.b16 %v108
    %v276 = vunpack.c.l.b16 %v109
    %v277 = vunpack.c.l.b16 %v110
    %v278 = vunpack.c.l.b16 %v111
    %v279 = vunpack.c.l.b16 %v112
    %v280 = vunpack.c.l.b16 %v113
    %v281 = vunpack.c.l.b16 %v114
    %v282 = vunpack.c.l.b16 %v115
    %v283 = vunpack.c.l.b16 %v116
    %v284 = vunpack.c.l.b16 %v117
    %v285 = vunpack.c.l.b16 %v118
    %v286 = vunpack.c.l.b16 %v119
    %v287 = vunpack.c.l.b16 %v120
    %v288 = vunpack.c.l.b16 %v121
    %v289 = vunpack.c.l.b16 %v122
    %v290 = vunpack.c.l.b16 %v123
    %v291 = vunpack.c.l.b16 %v124
    %v292 = vunpack.c.l.b16 %v125
    %v293 = vunpack.c.l.b16 %v126
    %v294 = vunpack.c.l.b16 %v127
    %v295 = vunpack.c.l.b16 %v128
    %v296 = vunpack.c.l.b16 %v129
    %v297 = vunpack.c.l.b16 %v130
    %v298 = vunpack.c.l.b16 %v131
    %v299 = vunpack.c.l.b16 %v132
    %v300 = vunpack.c.l.b16 %v133
    %v301 = vunpack.c.l.b16 %v134
    %v302 = vunpack.c.l.b16 %v135
    %v303 = vpack.c.b16 %v256, %v255
    %v304 = vpack.c.b16 %v258, %v257
    %v305 = vpack.c.b16 %v260, %v259
    %v306 = vpack.c.b16 %v262, %v261
    %v307 = vpack.c.b16 %v264, %v263
    %v308 = vpack.c.b16 %v266, %v265
    %v309 = vpack.c.b16 %v268, %v267
    %v310 = vpack.c.b16 %v270, %v269
    %v311 = vpack.c.b16 %v272, %v271
    %v312 = vpack.c.b16 %v274, %v273
    %v313 = vpack.c.b16 %v276, %v275
    %v314 = vpack.c.b16 %v278, %v277
    %v315 = vpack.c.b16 %v280, %v279
    %v316 = vpack.c.b16 %v282, %v281
    %v317 = vpack.c.b16 %v284, %v283
    %v318 = vpack.c.b16 %v286, %v285
    %v319 = vpack.c.b16 %v288, %v287
    %v320 = vpack.c.b16 %v290, %v289
    %v321 = vpack.c.b16 %v292, %v291
    %v322 = vpack.c.b16 %v294, %v293
    %v323 = vpack.c.b16 %v296, %v295
    %v324 = vpack.c.b16 %v298, %v297
    %v325 = vpack.c.b16 %v300, %v299
    %v326 = vpack.c.b16 %v302, %v301
    %351 = vmatprep.subr.bf16.mxu0 0
    %352 = vmatpush1.bf16.msra.mxu0 %v310
    %353 = vmatprep.subr.bf16.mxu0 0
    %354 = vmatpush1.bf16.msra.mxu0 %v309
    %355 = vmatprep.subr.bf16.mxu0 0
    %356 = vmatpush1.bf16.msra.mxu0 %v308
    %357 = vmatprep.subr.bf16.mxu0 0
    %358 = vmatpush1.bf16.msra.mxu0 %v307
    %359 = vmatprep.subr.bf16.mxu0 0
    %360 = vmatpush1.bf16.msra.mxu0 %v306
    %361 = vmatprep.subr.bf16.mxu0 0
    %362 = vmatpush1.bf16.msra.mxu0 %v305
    %363 = vmatprep.subr.bf16.mxu0 0
    %364 = vmatpush1.bf16.msra.mxu0 %v304
    %365 = vmatprep.subr.bf16.mxu0 0
    %366 = vmatpush1.bf16.msra.mxu0 %v303
    %367 = vmatprep.subr.bf16.mxu0 0
    %368 = vmatpush2.bf16.msra.mxu0 %v318
    %369 = vmatprep.subr.bf16.mxu0 0
    %370 = vmatpush2.bf16.msra.mxu0 %v317
    %371 = vmatprep.subr.bf16.mxu0 0
    %372 = vmatpush2.bf16.msra.mxu0 %v316
    %373 = vmatprep.subr.bf16.mxu0 0
    %374 = vmatpush2.bf16.msra.mxu0 %v315
    %375 = vmatprep.subr.bf16.mxu0 0
    %376 = vmatpush2.bf16.msra.mxu0 %v314
    %377 = vmatprep.subr.bf16.mxu0 0
    %378 = vmatpush2.bf16.msra.mxu0 %v313
    %379 = vmatprep.subr.bf16.mxu0 0
    %380 = vmatpush2.bf16.msra.mxu0 %v312
    %381 = vmatprep.subr.bf16.mxu0 0
    %382 = vmatpush2.bf16.msra.mxu0 %v311
    %383 = vmatprep.mubr.bf16.mxu0 %v184
    %384 = vmatmul.mubr.bf16.gmra.mxu0 %v183
    %v385 = vpop.f32.mrf.mxu0
    %v386 = vadd.f32 %v141, %v385
    %v387 = vpop.f32.mrf.mxu0
    %v388 = vpop.f32.mrf.mxu0
    %v389 = vadd.f32 %v141, %v388
    %v390 = vpop.f32.mrf.mxu0
    %391 = vmatprep.mubr.bf16.mxu0 %v187
    %392 = vmatmul.mubr.bf16.gmra.mxu0 %v186
    %v393 = vpop.f32.mrf.mxu0
    %v394 = vadd.f32 %v141, %v393
    %v395 = vpop.f32.mrf.mxu0
    %v396 = vpop.f32.mrf.mxu0
    %v397 = vadd.f32 %v141, %v396
    %v398 = vpop.f32.mrf.mxu0
    %399 = vmatprep.mubr.bf16.mxu0 %v190
    %400 = vmatmul.mubr.bf16.gmra.mxu0 %v189
    %v401 = vpop.f32.mrf.mxu0
    %v402 = vadd.f32 %v141, %v401
    %v403 = vpop.f32.mrf.mxu0
    %v404 = vpop.f32.mrf.mxu0
    %v405 = vadd.f32 %v141, %v404
    %v406 = vpop.f32.mrf.mxu0
    %407 = vmatprep.mubr.bf16.mxu0 %v193
    %408 = vmatmul.mubr.bf16.gmra.mxu0 %v192
    %v409 = vpop.f32.mrf.mxu0
    %v410 = vadd.f32 %v141, %v409
    %v411 = vpop.f32.mrf.mxu0
    %v412 = vpop.f32.mrf.mxu0
    %v413 = vadd.f32 %v141, %v412
    %v414 = vpop.f32.mrf.mxu0
    %415 = vdwg.mxu0
    %416 = vmatprep.subr.bf16.mxu0 0
    %417 = vmatpush1.bf16.msra.mxu0 %v326
    %418 = vmatprep.subr.bf16.mxu0 0
    %419 = vmatpush1.bf16.msra.mxu0 %v325
    %420 = vmatprep.subr.bf16.mxu0 0
    %421 = vmatpush1.bf16.msra.mxu0 %v324
    %422 = vmatprep.subr.bf16.mxu0 0
    %423 = vmatpush1.bf16.msra.mxu0 %v323
    %424 = vmatprep.subr.bf16.mxu0 0
    %425 = vmatpush1.bf16.msra.mxu0 %v322
    %426 = vmatprep.subr.bf16.mxu0 0
    %427 = vmatpush1.bf16.msra.mxu0 %v321
    %428 = vmatprep.subr.bf16.mxu0 0
    %429 = vmatpush1.bf16.msra.mxu0 %v320
    %430 = vmatprep.subr.bf16.mxu0 0
    %431 = vmatpush1.bf16.msra.mxu0 %v319
    %432 = vmatprep.subr.bf16.mxu0 0
    %433 = vmatpush2.bf16.msra.mxu0 0
    %434 = vmatprep.subr.bf16.mxu0 0
    %435 = vmatpush2.bf16.msra.mxu0 0
    %436 = vmatprep.subr.bf16.mxu0 0
    %437 = vmatpush2.bf16.msra.mxu0 0
    %438 = vmatprep.subr.bf16.mxu0 0
    %439 = vmatpush2.bf16.msra.mxu0 0
    %440 = vmatprep.subr.bf16.mxu0 0
    %441 = vmatpush2.bf16.msra.mxu0 0
    %442 = vmatprep.subr.bf16.mxu0 0
    %443 = vmatpush2.bf16.msra.mxu0 0
    %444 = vmatprep.subr.bf16.mxu0 0
    %445 = vmatpush2.bf16.msra.mxu0 0
    %446 = vmatprep.subr.bf16.mxu0 0
    %447 = vmatpush2.bf16.msra.mxu0 0
    %448 = vmatprep.mubr.bf16.mxu0 0
    %449 = vmatmul.mubr.bf16.gmra.mxu0 %v185
    %v450 = vpop.f32.mrf.mxu0
    %v451 = vadd.f32 %v386, %v450
    %v452 = vpop.f32.mrf.mxu0
    %v453 = vpop.f32.mrf.mxu0
    %v454 = vadd.f32 %v389, %v453
    %v455 = vpop.f32.mrf.mxu0
    %456 = vmatprep.mubr.bf16.mxu0 0
    %457 = vmatmul.mubr.bf16.gmra.mxu0 %v188
    %v458 = vpop.f32.mrf.mxu0
    %v459 = vadd.f32 %v394, %v458
    %v460 = vpop.f32.mrf.mxu0
    %v461 = vpop.f32.mrf.mxu0
    %v462 = vadd.f32 %v397, %v461
    %v463 = vpop.f32.mrf.mxu0
    %464 = vmatprep.mubr.bf16.mxu0 0
    %465 = vmatmul.mubr.bf16.gmra.mxu0 %v191
    %v466 = vpop.f32.mrf.mxu0
    %v467 = vadd.f32 %v402, %v466
    %v468 = vpop.f32.mrf.mxu0
    %v469 = vpop.f32.mrf.mxu0
    %v470 = vadd.f32 %v405, %v469
    %v471 = vpop.f32.mrf.mxu0
    %472 = vmatprep.mubr.bf16.mxu0 0
    %473 = vmatmul.mubr.bf16.gmra.mxu0 %v194
    %v474 = vpop.f32.mrf.mxu0
    %v475 = vadd.f32 %v410, %v474
    %v476 = vpop.f32.mrf.mxu0
    %v477 = vpop.f32.mrf.mxu0
    %v478 = vadd.f32 %v413, %v477
    %v479 = vpop.f32.mrf.mxu0
    %480 = vdwg.mxu0
    %vm481 = vcmask 785408
    %482 = vst.msk [vmem:[#allocation2] sm:$0xff] %vm481, %v451
    %483 = vst.msk [vmem:[#allocation2 + $0x8] sm:$0xff] %vm481, %v454
    %484 = vst.msk [vmem:[#allocation2 + $0x10] sm:$0xff] %vm481, %v459
    %485 = vst.msk [vmem:[#allocation2 + $0x18] sm:$0xff] %vm481, %v462
    %486 = vst.msk [vmem:[#allocation2 + $0x20] sm:$0xff] %vm481, %v467
    %487 = vst.msk [vmem:[#allocation2 + $0x28] sm:$0xff] %vm481, %v470
    %488 = vst.msk [vmem:[#allocation2 + $0x30] sm:$0xff] %vm481, %v475
    %489 = vst.msk [vmem:[#allocation2 + $0x38] sm:$0xff] %vm481, %v478
    %v490 = vld [vmem:[%s5] sm:$0xf]
    %v491 = vld [vmem:[%s5 + $0x4] sm:$0xf]
    %v492 = vld [vmem:[%s5 + $0x8] sm:$0xf]
    %v493 = vld [vmem:[%s5 + $0xc] sm:$0xf]
    %v494 = vld [vmem:[%s7] sm:$0x1]
    %v495 = vld [vmem:[#allocation2] sm:$0xff]
    %v497 = vlaneseq
    %v498 = vshrl.u32 %v497, 7
    %v499 = vsub.s32 0, %v498
    %v500 = vrot.slane %v494, %v499
    %v506 = vunpack.c.l.b16 %v490
    %v507 = vunpack.c.l.b16 %v491
    %v508 = vunpack.c.l.b16 %v492
    %v509 = vunpack.c.l.b16 %v493
    %v510 = vpack.c.b16 %v507, %v506
    %v511 = vpack.c.b16 %v509, %v508
    %vm514 = vcmask 261120
    %v516 = vsel %vm514, 0, 0
    %518 = vmatprep.subr.bf16.mxu0 0
    %519 = vmatpush1.bf16.msra.mxu0 0
    %520 = vmatprep.subr.bf16.mxu0 0
    %521 = vmatpush1.bf16.msra.mxu0 0
    %522 = vmatprep.subr.bf16.mxu0 0
    %523 = vmatpush1.bf16.msra.mxu0 0
    %524 = vmatprep.subr.bf16.mxu0 0
    %525 = vmatpush1.bf16.msra.mxu0 0
    %526 = vmatprep.subr.bf16.mxu0 0
    %527 = vmatpush1.bf16.msra.mxu0 0
    %528 = vmatprep.subr.bf16.mxu0 0
    %529 = vmatpush1.bf16.msra.mxu0 0
    %530 = vmatprep.subr.bf16.mxu0 0
    %531 = vmatpush1.bf16.msra.mxu0 %v511
    %532 = vmatprep.subr.bf16.mxu0 0
    %533 = vmatpush1.bf16.msra.mxu0 %v510
    %534 = vmatprep.subr.bf16.mxu0 0
    %535 = vmatpush2.bf16.msra.mxu0 0
    %536 = vmatprep.subr.bf16.mxu0 0
    %537 = vmatpush2.bf16.msra.mxu0 0
    %538 = vmatprep.subr.bf16.mxu0 0
    %539 = vmatpush2.bf16.msra.mxu0 0
    %540 = vmatprep.subr.bf16.mxu0 0
    %541 = vmatpush2.bf16.msra.mxu0 0
    %542 = vmatprep.subr.bf16.mxu0 0
    %543 = vmatpush2.bf16.msra.mxu0 0
    %544 = vmatprep.subr.bf16.mxu0 0
    %545 = vmatpush2.bf16.msra.mxu0 0
    %546 = vmatprep.subr.bf16.mxu0 0
    %547 = vmatpush2.bf16.msra.mxu0 0
    %548 = vmatprep.subr.bf16.mxu0 0
    %549 = vmatpush2.bf16.msra.mxu0 0
    %550 = vmatprep.mubr.bf16.mxu0 0
    %551 = vmatmul.mubr.bf16.gmra.mxu0 %v516
    %v552 = vpop.f32.mrf.mxu0
    %v553 = vadd.f32 %v500, %v552
    %v554 = vpop.f32.mrf.mxu0
    %v555 = vpop.f32.mrf.mxu0
    %v556 = vpop.f32.mrf.mxu0
    %557 = vdwg.mxu0
    %v558 = vadd.f32 %v495, %v553
    %v559 = vxor.u32 %v558, 2147483648
    %v560 = vmul.f32 %v559, 1.442695
    %v561 = vpow.pop %v560
    %v562 = vadd.f32 %v561, 1.0
    %v563 = vrcp.pop %v562
    %v564 = vmul.f32 1.0, %v563
    %566 = vrot.lane.b32.xlu0 %v553, 64
    %v567 = vpop.permute.xlu0 %566
    %v569 = vmul.f32 %v564, %v567
    %571 = vrot.lane.b32.xlu0 %v569, 64
    %v572 = vpop.permute.xlu0 %571
    %v574 = vadd.f32 %v495, %v572
    %v575 = vtanh.pop %v574
    %v576 = vsub.f32 1.0, %v564
    %578 = vrot.lane.b32.xlu0 %v575, 96
    %v579 = vpop.permute.xlu0 %578
    %v581 = vmul.f32 %v576, %v579
    %v582 = vmul.f32 %v564, 0.0
    %v583 = vadd.f32 %v581, %v582
    %s584 = scalar_lea.vmem [#allocation2], 8
    %v585 = vld [vmem:[%s584] sm:$0xff]
    %v586 = vpack.c.bf16 %v583, %v583
    %588 = vrot.lane.b32.xlu0 %v586, 96
    %v589 = vpop.permute.xlu0 %588
    %v591 = vsel %vm514, %v589, 0
    %593 = vmatprep.subr.bf16.mxu0 0
    %594 = vmatpush1.bf16.msra.mxu0 0
    %595 = vmatprep.subr.bf16.mxu0 0
    %596 = vmatpush1.bf16.msra.mxu0 0
    %597 = vmatprep.subr.bf16.mxu0 0
    %598 = vmatpush1.bf16.msra.mxu0 0
    %599 = vmatprep.subr.bf16.mxu0 0
    %600 = vmatpush1.bf16.msra.mxu0 0
    %601 = vmatprep.subr.bf16.mxu0 0
    %602 = vmatpush1.bf16.msra.mxu0 0
    %603 = vmatprep.subr.bf16.mxu0 0
    %604 = vmatpush1.bf16.msra.mxu0 0
    %605 = vmatprep.subr.bf16.mxu0 0
    %606 = vmatpush1.bf16.msra.mxu0 %v511
    %607 = vmatprep.subr.bf16.mxu0 0
    %608 = vmatpush1.bf16.msra.mxu0 %v510
    %609 = vmatprep.subr.bf16.mxu0 0
    %610 = vmatpush2.bf16.msra.mxu0 0
    %611 = vmatprep.subr.bf16.mxu0 0
    %612 = vmatpush2.bf16.msra.mxu0 0
    %613 = vmatprep.subr.bf16.mxu0 0
    %614 = vmatpush2.bf16.msra.mxu0 0
    %615 = vmatprep.subr.bf16.mxu0 0
    %616 = vmatpush2.bf16.msra.mxu0 0
    %617 = vmatprep.subr.bf16.mxu0 0
    %618 = vmatpush2.bf16.msra.mxu0 0
    %619 = vmatprep.subr.bf16.mxu0 0
    %620 = vmatpush2.bf16.msra.mxu0 0
    %621 = vmatprep.subr.bf16.mxu0 0
    %622 = vmatpush2.bf16.msra.mxu0 0
    %623 = vmatprep.subr.bf16.mxu0 0
    %624 = vmatpush2.bf16.msra.mxu0 0
    %625 = vmatprep.mubr.bf16.mxu0 0
    %626 = vmatmul.mubr.bf16.gmra.mxu0 %v591
    %v627 = vpop.f32.mrf.mxu0
    %v628 = vadd.f32 %v500, %v627
    %v629 = vpop.f32.mrf.mxu0
    %v630 = vpop.f32.mrf.mxu0
    %v631 = vpop.f32.mrf.mxu0
    %632 = vdwg.mxu0
    %v633 = vadd.f32 %v585, %v628
    %v634 = vxor.u32 %v633, 2147483648
    %v635 = vmul.f32 %v634, 1.442695
    %v636 = vpow.pop %v635
    %v637 = vadd.f32 %v636, 1.0
    %v638 = vrcp.pop %v637
    %v639 = vmul.f32 1.0, %v638
    %641 = vrot.lane.b32.xlu0 %v628, 64
    %v642 = vpop.permute.xlu0 %641
    %v644 = vmul.f32 %v639, %v642
    %646 = vrot.lane.b32.xlu0 %v644, 64
    %v647 = vpop.permute.xlu0 %646
    %v649 = vadd.f32 %v585, %v647
    %v650 = vtanh.pop %v649
    %v651 = vsub.f32 1.0, %v639
    %653 = vrot.lane.b32.xlu0 %v650, 96
    %v654 = vpop.permute.xlu0 %653
    %v656 = vmul.f32 %v651, %v654
    %v657 = vmul.f32 %v639, %v583
    %v658 = vadd.f32 %v656, %v657
    %s659 = scalar_lea.vmem [#allocation2], 16
    %v660 = vld [vmem:[%s659] sm:$0xff]
    %v661 = vpack.c.bf16 %v658, %v658
    %663 = vrot.lane.b32.xlu0 %v661, 96
    %v664 = vpop.permute.xlu0 %663
    %v666 = vsel %vm514, %v664, 0
    %668 = vmatprep.subr.bf16.mxu0 0
    %669 = vmatpush1.bf16.msra.mxu0 0
    %670 = vmatprep.subr.bf16.mxu0 0
    %671 = vmatpush1.bf16.msra.mxu0 0
    %672 = vmatprep.subr.bf16.mxu0 0
    %673 = vmatpush1.bf16.msra.mxu0 0
    %674 = vmatprep.subr.bf16.mxu0 0
    %675 = vmatpush1.bf16.msra.mxu0 0
    %676 = vmatprep.subr.bf16.mxu0 0
    %677 = vmatpush1.bf16.msra.mxu0 0
    %678 = vmatprep.subr.bf16.mxu0 0
    %679 = vmatpush1.bf16.msra.mxu0 0
    %680 = vmatprep.subr.bf16.mxu0 0
    %681 = vmatpush1.bf16.msra.mxu0 %v511
    %682 = vmatprep.subr.bf16.mxu0 0
    %683 = vmatpush1.bf16.msra.mxu0 %v510
    %684 = vmatprep.subr.bf16.mxu0 0
    %685 = vmatpush2.bf16.msra.mxu0 0
    %686 = vmatprep.subr.bf16.mxu0 0
    %687 = vmatpush2.bf16.msra.mxu0 0
    %688 = vmatprep.subr.bf16.mxu0 0
    %689 = vmatpush2.bf16.msra.mxu0 0
    %690 = vmatprep.subr.bf16.mxu0 0
    %691 = vmatpush2.bf16.msra.mxu0 0
    %692 = vmatprep.subr.bf16.mxu0 0
    %693 = vmatpush2.bf16.msra.mxu0 0
    %694 = vmatprep.subr.bf16.mxu0 0
    %695 = vmatpush2.bf16.msra.mxu0 0
    %696 = vmatprep.subr.bf16.mxu0 0
    %697 = vmatpush2.bf16.msra.mxu0 0
    %698 = vmatprep.subr.bf16.mxu0 0
    %699 = vmatpush2.bf16.msra.mxu0 0
    %700 = vmatprep.mubr.bf16.mxu0 0
    %701 = vmatmul.mubr.bf16.gmra.mxu0 %v666
    %v702 = vpop.f32.mrf.mxu0
    %v703 = vadd.f32 %v500, %v702
    %v704 = vpop.f32.mrf.mxu0
    %v705 = vpop.f32.mrf.mxu0
    %v706 = vpop.f32.mrf.mxu0
    %707 = vdwg.mxu0
    %v708 = vadd.f32 %v660, %v703
    %v709 = vxor.u32 %v708, 2147483648
    %v710 = vmul.f32 %v709, 1.442695
    %v711 = vpow.pop %v710
    %v712 = vadd.f32 %v711, 1.0
    %v713 = vrcp.pop %v712
    %v714 = vmul.f32 1.0, %v713
    %716 = vrot.lane.b32.xlu0 %v703, 64
    %v717 = vpop.permute.xlu0 %716
    %v719 = vmul.f32 %v714, %v717
    %721 = vrot.lane.b32.xlu0 %v719, 64
    %v722 = vpop.permute.xlu0 %721
    %v724 = vadd.f32 %v660, %v722
    %v725 = vtanh.pop %v724
    %v726 = vsub.f32 1.0, %v714
    %728 = vrot.lane.b32.xlu0 %v725, 96
    %v729 = vpop.permute.xlu0 %728
    %v731 = vmul.f32 %v726, %v729
    %v732 = vmul.f32 %v714, %v658
    %v733 = vadd.f32 %v731, %v732
    %s734 = scalar_lea.vmem [#allocation2], 24
    %v735 = vld [vmem:[%s734] sm:$0xff]
    %v736 = vpack.c.bf16 %v733, %v733
    %738 = vrot.lane.b32.xlu0 %v736, 96
    %v739 = vpop.permute.xlu0 %738
    %v741 = vsel %vm514, %v739, 0
    %743 = vmatprep.subr.bf16.mxu0 0
    %744 = vmatpush1.bf16.msra.mxu0 0
    %745 = vmatprep.subr.bf16.mxu0 0
    %746 = vmatpush1.bf16.msra.mxu0 0
    %747 = vmatprep.subr.bf16.mxu0 0
    %748 = vmatpush1.bf16.msra.mxu0 0
    %749 = vmatprep.subr.bf16.mxu0 0
    %750 = vmatpush1.bf16.msra.mxu0 0
    %751 = vmatprep.subr.bf16.mxu0 0
    %752 = vmatpush1.bf16.msra.mxu0 0
    %753 = vmatprep.subr.bf16.mxu0 0
    %754 = vmatpush1.bf16.msra.mxu0 0
    %755 = vmatprep.subr.bf16.mxu0 0
    %756 = vmatpush1.bf16.msra.mxu0 %v511
    %757 = vmatprep.subr.bf16.mxu0 0
    %758 = vmatpush1.bf16.msra.mxu0 %v510
    %759 = vmatprep.subr.bf16.mxu0 0
    %760 = vmatpush2.bf16.msra.mxu0 0
    %761 = vmatprep.subr.bf16.mxu0 0
    %762 = vmatpush2.bf16.msra.mxu0 0
    %763 = vmatprep.subr.bf16.mxu0 0
    %764 = vmatpush2.bf16.msra.mxu0 0
    %765 = vmatprep.subr.bf16.mxu0 0
    %766 = vmatpush2.bf16.msra.mxu0 0
    %767 = vmatprep.subr.bf16.mxu0 0
    %768 = vmatpush2.bf16.msra.mxu0 0
    %769 = vmatprep.subr.bf16.mxu0 0
    %770 = vmatpush2.bf16.msra.mxu0 0
    %771 = vmatprep.subr.bf16.mxu0 0
    %772 = vmatpush2.bf16.msra.mxu0 0
    %773 = vmatprep.subr.bf16.mxu0 0
    %774 = vmatpush2.bf16.msra.mxu0 0
    %775 = vmatprep.mubr.bf16.mxu0 0
    %776 = vmatmul.mubr.bf16.gmra.mxu0 %v741
    %v777 = vpop.f32.mrf.mxu0
    %v778 = vadd.f32 %v500, %v777
    %v779 = vpop.f32.mrf.mxu0
    %v780 = vpop.f32.mrf.mxu0
    %v781 = vpop.f32.mrf.mxu0
    %782 = vdwg.mxu0
    %v783 = vadd.f32 %v735, %v778
    %v784 = vxor.u32 %v783, 2147483648
    %v785 = vmul.f32 %v784, 1.442695
    %v786 = vpow.pop %v785
    %v787 = vadd.f32 %v786, 1.0
    %v788 = vrcp.pop %v787
    %v789 = vmul.f32 1.0, %v788
    %791 = vrot.lane.b32.xlu0 %v778, 64
    %v792 = vpop.permute.xlu0 %791
    %v794 = vmul.f32 %v789, %v792
    %796 = vrot.lane.b32.xlu0 %v794, 64
    %v797 = vpop.permute.xlu0 %796
    %v799 = vadd.f32 %v735, %v797
    %v800 = vtanh.pop %v799
    %v801 = vsub.f32 1.0, %v789
    %803 = vrot.lane.b32.xlu0 %v800, 96
    %v804 = vpop.permute.xlu0 %803
    %v806 = vmul.f32 %v801, %v804
    %v807 = vmul.f32 %v789, %v733
    %v808 = vadd.f32 %v806, %v807
    %s809 = scalar_lea.vmem [#allocation2], 32
    %v810 = vld [vmem:[%s809] sm:$0xff]
    %v811 = vpack.c.bf16 %v808, %v808
    %813 = vrot.lane.b32.xlu0 %v811, 96
    %v814 = vpop.permute.xlu0 %813
    %v816 = vsel %vm514, %v814, 0
    %818 = vmatprep.subr.bf16.mxu0 0
    %819 = vmatpush1.bf16.msra.mxu0 0
    %820 = vmatprep.subr.bf16.mxu0 0
    %821 = vmatpush1.bf16.msra.mxu0 0
    %822 = vmatprep.subr.bf16.mxu0 0
    %823 = vmatpush1.bf16.msra.mxu0 0
    %824 = vmatprep.subr.bf16.mxu0 0
    %825 = vmatpush1.bf16.msra.mxu0 0
    %826 = vmatprep.subr.bf16.mxu0 0
    %827 = vmatpush1.bf16.msra.mxu0 0
    %828 = vmatprep.subr.bf16.mxu0 0
    %829 = vmatpush1.bf16.msra.mxu0 0
    %830 = vmatprep.subr.bf16.mxu0 0
    %831 = vmatpush1.bf16.msra.mxu0 %v511
    %832 = vmatprep.subr.bf16.mxu0 0
    %833 = vmatpush1.bf16.msra.mxu0 %v510
    %834 = vmatprep.subr.bf16.mxu0 0
    %835 = vmatpush2.bf16.msra.mxu0 0
    %836 = vmatprep.subr.bf16.mxu0 0
    %837 = vmatpush2.bf16.msra.mxu0 0
    %838 = vmatprep.subr.bf16.mxu0 0
    %839 = vmatpush2.bf16.msra.mxu0 0
    %840 = vmatprep.subr.bf16.mxu0 0
    %841 = vmatpush2.bf16.msra.mxu0 0
    %842 = vmatprep.subr.bf16.mxu0 0
    %843 = vmatpush2.bf16.msra.mxu0 0
    %844 = vmatprep.subr.bf16.mxu0 0
    %845 = vmatpush2.bf16.msra.mxu0 0
    %846 = vmatprep.subr.bf16.mxu0 0
    %847 = vmatpush2.bf16.msra.mxu0 0
    %848 = vmatprep.subr.bf16.mxu0 0
    %849 = vmatpush2.bf16.msra.mxu0 0
    %850 = vmatprep.mubr.bf16.mxu0 0
    %851 = vmatmul.mubr.bf16.gmra.mxu0 %v816
    %v852 = vpop.f32.mrf.mxu0
    %v853 = vadd.f32 %v500, %v852
    %v854 = vpop.f32.mrf.mxu0
    %v855 = vpop.f32.mrf.mxu0
    %v856 = vpop.f32.mrf.mxu0
    %857 = vdwg.mxu0
    %v858 = vadd.f32 %v810, %v853
    %v859 = vxor.u32 %v858, 2147483648
    %v860 = vmul.f32 %v859, 1.442695
    %v861 = vpow.pop %v860
    %v862 = vadd.f32 %v861, 1.0
    %v863 = vrcp.pop %v862
    %v864 = vmul.f32 1.0, %v863
    %866 = vrot.lane.b32.xlu0 %v853, 64
    %v867 = vpop.permute.xlu0 %866
    %v869 = vmul.f32 %v864, %v867
    %871 = vrot.lane.b32.xlu0 %v869, 64
    %v872 = vpop.permute.xlu0 %871
    %v874 = vadd.f32 %v810, %v872
    %v875 = vtanh.pop %v874
    %v876 = vsub.f32 1.0, %v864
    %878 = vrot.lane.b32.xlu0 %v875, 96
    %v879 = vpop.permute.xlu0 %878
    %v881 = vmul.f32 %v876, %v879
    %v882 = vmul.f32 %v864, %v808
    %v883 = vadd.f32 %v881, %v882
    %s884 = scalar_lea.vmem [#allocation2], 40
    %v885 = vld [vmem:[%s884] sm:$0xff]
    %v886 = vpack.c.bf16 %v883, %v883
    %888 = vrot.lane.b32.xlu0 %v886, 96
    %v889 = vpop.permute.xlu0 %888
    %v891 = vsel %vm514, %v889, 0
    %893 = vmatprep.subr.bf16.mxu0 0
    %894 = vmatpush1.bf16.msra.mxu0 0
    %895 = vmatprep.subr.bf16.mxu0 0
    %896 = vmatpush1.bf16.msra.mxu0 0
    %897 = vmatprep.subr.bf16.mxu0 0
    %898 = vmatpush1.bf16.msra.mxu0 0
    %899 = vmatprep.subr.bf16.mxu0 0
    %900 = vmatpush1.bf16.msra.mxu0 0
    %901 = vmatprep.subr.bf16.mxu0 0
    %902 = vmatpush1.bf16.msra.mxu0 0
    %903 = vmatprep.subr.bf16.mxu0 0
    %904 = vmatpush1.bf16.msra.mxu0 0
    %905 = vmatprep.subr.bf16.mxu0 0
    %906 = vmatpush1.bf16.msra.mxu0 %v511
    %907 = vmatprep.subr.bf16.mxu0 0
    %908 = vmatpush1.bf16.msra.mxu0 %v510
    %909 = vmatprep.subr.bf16.mxu0 0
    %910 = vmatpush2.bf16.msra.mxu0 0
    %911 = vmatprep.subr.bf16.mxu0 0
    %912 = vmatpush2.bf16.msra.mxu0 0
    %913 = vmatprep.subr.bf16.mxu0 0
    %914 = vmatpush2.bf16.msra.mxu0 0
    %915 = vmatprep.subr.bf16.mxu0 0
    %916 = vmatpush2.bf16.msra.mxu0 0
    %917 = vmatprep.subr.bf16.mxu0 0
    %918 = vmatpush2.bf16.msra.mxu0 0
    %919 = vmatprep.subr.bf16.mxu0 0
    %920 = vmatpush2.bf16.msra.mxu0 0
    %921 = vmatprep.subr.bf16.mxu0 0
    %922 = vmatpush2.bf16.msra.mxu0 0
    %923 = vmatprep.subr.bf16.mxu0 0
    %924 = vmatpush2.bf16.msra.mxu0 0
    %925 = vmatprep.mubr.bf16.mxu0 0
    %926 = vmatmul.mubr.bf16.gmra.mxu0 %v891
    %v927 = vpop.f32.mrf.mxu0
    %v928 = vadd.f32 %v500, %v927
    %v929 = vpop.f32.mrf.mxu0
    %v930 = vpop.f32.mrf.mxu0
    %v931 = vpop.f32.mrf.mxu0
    %932 = vdwg.mxu0
    %v933 = vadd.f32 %v885, %v928
    %v934 = vxor.u32 %v933, 2147483648
    %v935 = vmul.f32 %v934, 1.442695
    %v936 = vpow.pop %v935
    %v937 = vadd.f32 %v936, 1.0
    %v938 = vrcp.pop %v937
    %v939 = vmul.f32 1.0, %v938
    %941 = vrot.lane.b32.xlu0 %v928, 64
    %v942 = vpop.permute.xlu0 %941
    %v944 = vmul.f32 %v939, %v942
    %946 = vrot.lane.b32.xlu0 %v944, 64
    %v947 = vpop.permute.xlu0 %946
    %v949 = vadd.f32 %v885, %v947
    %v950 = vtanh.pop %v949
    %v951 = vsub.f32 1.0, %v939
    %953 = vrot.lane.b32.xlu0 %v950, 96
    %v954 = vpop.permute.xlu0 %953
    %v956 = vmul.f32 %v951, %v954
    %v957 = vmul.f32 %v939, %v883
    %v958 = vadd.f32 %v956, %v957
    %s959 = scalar_lea.vmem [#allocation2], 48
    %v960 = vld [vmem:[%s959] sm:$0xff]
    %v961 = vpack.c.bf16 %v958, %v958
    %963 = vrot.lane.b32.xlu0 %v961, 96
    %v964 = vpop.permute.xlu0 %963
    %v966 = vsel %vm514, %v964, 0
    %968 = vmatprep.subr.bf16.mxu0 0
    %969 = vmatpush1.bf16.msra.mxu0 0
    %970 = vmatprep.subr.bf16.mxu0 0
    %971 = vmatpush1.bf16.msra.mxu0 0
    %972 = vmatprep.subr.bf16.mxu0 0
    %973 = vmatpush1.bf16.msra.mxu0 0
    %974 = vmatprep.subr.bf16.mxu0 0
    %975 = vmatpush1.bf16.msra.mxu0 0
    %976 = vmatprep.subr.bf16.mxu0 0
    %977 = vmatpush1.bf16.msra.mxu0 0
    %978 = vmatprep.subr.bf16.mxu0 0
    %979 = vmatpush1.bf16.msra.mxu0 0
    %980 = vmatprep.subr.bf16.mxu0 0
    %981 = vmatpush1.bf16.msra.mxu0 %v511
    %982 = vmatprep.subr.bf16.mxu0 0
    %983 = vmatpush1.bf16.msra.mxu0 %v510
    %984 = vmatprep.subr.bf16.mxu0 0
    %985 = vmatpush2.bf16.msra.mxu0 0
    %986 = vmatprep.subr.bf16.mxu0 0
    %987 = vmatpush2.bf16.msra.mxu0 0
    %988 = vmatprep.subr.bf16.mxu0 0
    %989 = vmatpush2.bf16.msra.mxu0 0
    %990 = vmatprep.subr.bf16.mxu0 0
    %991 = vmatpush2.bf16.msra.mxu0 0
    %992 = vmatprep.subr.bf16.mxu0 0
    %993 = vmatpush2.bf16.msra.mxu0 0
    %994 = vmatprep.subr.bf16.mxu0 0
    %995 = vmatpush2.bf16.msra.mxu0 0
    %996 = vmatprep.subr.bf16.mxu0 0
    %997 = vmatpush2.bf16.msra.mxu0 0
    %998 = vmatprep.subr.bf16.mxu0 0
    %999 = vmatpush2.bf16.msra.mxu0 0
    %1000 = vmatprep.mubr.bf16.mxu0 0
    %1001 = vmatmul.mubr.bf16.gmra.mxu0 %v966
    %v1002 = vpop.f32.mrf.mxu0
    %v1003 = vadd.f32 %v500, %v1002
    %v1004 = vpop.f32.mrf.mxu0
    %v1005 = vpop.f32.mrf.mxu0
    %v1006 = vpop.f32.mrf.mxu0
    %1007 = vdwg.mxu0
    %v1008 = vadd.f32 %v960, %v1003
    %v1009 = vxor.u32 %v1008, 2147483648
    %v1010 = vmul.f32 %v1009, 1.442695
    %v1011 = vpow.pop %v1010
    %v1012 = vadd.f32 %v1011, 1.0
    %v1013 = vrcp.pop %v1012
    %v1014 = vmul.f32 1.0, %v1013
    %1016 = vrot.lane.b32.xlu0 %v1003, 64
    %v1017 = vpop.permute.xlu0 %1016
    %v1019 = vmul.f32 %v1014, %v1017
    %1021 = vrot.lane.b32.xlu0 %v1019, 64
    %v1022 = vpop.permute.xlu0 %1021
    %v1024 = vadd.f32 %v960, %v1022
    %v1025 = vtanh.pop %v1024
    %v1026 = vsub.f32 1.0, %v1014
    %1028 = vrot.lane.b32.xlu0 %v1025, 96
    %v1029 = vpop.permute.xlu0 %1028
    %v1031 = vmul.f32 %v1026, %v1029
    %v1032 = vmul.f32 %v1014, %v958
    %v1033 = vadd.f32 %v1031, %v1032
    %s1034 = scalar_lea.vmem [#allocation2], 56
    %v1035 = vld [vmem:[%s1034] sm:$0xff]
    %v1036 = vpack.c.bf16 %v1033, %v1033
    %1038 = vrot.lane.b32.xlu0 %v1036, 96
    %v1039 = vpop.permute.xlu0 %1038
    %v1041 = vsel %vm514, %v1039, 0
    %1043 = vmatprep.subr.bf16.mxu0 0
    %1044 = vmatpush1.bf16.msra.mxu0 0
    %1045 = vmatprep.subr.bf16.mxu0 0
    %1046 = vmatpush1.bf16.msra.mxu0 0
    %1047 = vmatprep.subr.bf16.mxu0 0
    %1048 = vmatpush1.bf16.msra.mxu0 0
    %1049 = vmatprep.subr.bf16.mxu0 0
    %1050 = vmatpush1.bf16.msra.mxu0 0
    %1051 = vmatprep.subr.bf16.mxu0 0
    %1052 = vmatpush1.bf16.msra.mxu0 0
    %1053 = vmatprep.subr.bf16.mxu0 0
    %1054 = vmatpush1.bf16.msra.mxu0 0
    %1055 = vmatprep.subr.bf16.mxu0 0
    %1056 = vmatpush1.bf16.msra.mxu0 %v511
    %1057 = vmatprep.subr.bf16.mxu0 0
    %1058 = vmatpush1.bf16.msra.mxu0 %v510
    %1059 = vmatprep.subr.bf16.mxu0 0
    %1060 = vmatpush2.bf16.msra.mxu0 0
    %1061 = vmatprep.subr.bf16.mxu0 0
    %1062 = vmatpush2.bf16.msra.mxu0 0
    %1063 = vmatprep.subr.bf16.mxu0 0
    %1064 = vmatpush2.bf16.msra.mxu0 0
    %1065 = vmatprep.subr.bf16.mxu0 0
    %1066 = vmatpush2.bf16.msra.mxu0 0
    %1067 = vmatprep.subr.bf16.mxu0 0
    %1068 = vmatpush2.bf16.msra.mxu0 0
    %1069 = vmatprep.subr.bf16.mxu0 0
    %1070 = vmatpush2.bf16.msra.mxu0 0
    %1071 = vmatprep.subr.bf16.mxu0 0
    %1072 = vmatpush2.bf16.msra.mxu0 0
    %1073 = vmatprep.subr.bf16.mxu0 0
    %1074 = vmatpush2.bf16.msra.mxu0 0
    %1075 = vmatprep.mubr.bf16.mxu0 0
    %1076 = vmatmul.mubr.bf16.gmra.mxu0 %v1041
    %v1077 = vpop.f32.mrf.mxu0
    %v1078 = vadd.f32 %v500, %v1077
    %v1079 = vpop.f32.mrf.mxu0
    %v1080 = vpop.f32.mrf.mxu0
    %v1081 = vpop.f32.mrf.mxu0
    %1082 = vdwg.mxu0
    %v1083 = vadd.f32 %v1035, %v1078
    %v1084 = vxor.u32 %v1083, 2147483648
    %v1085 = vmul.f32 %v1084, 1.442695
    %v1086 = vpow.pop %v1085
    %v1087 = vadd.f32 %v1086, 1.0
    %v1088 = vrcp.pop %v1087
    %v1089 = vmul.f32 1.0, %v1088
    %1091 = vrot.lane.b32.xlu0 %v1078, 64
    %v1092 = vpop.permute.xlu0 %1091
    %v1094 = vmul.f32 %v1089, %v1092
    %1096 = vrot.lane.b32.xlu0 %v1094, 64
    %v1097 = vpop.permute.xlu0 %1096
    %v1099 = vadd.f32 %v1035, %v1097
    %v1100 = vtanh.pop %v1099
    %v1101 = vsub.f32 1.0, %v1089
    %1103 = vrot.lane.b32.xlu0 %v1100, 96
    %v1104 = vpop.permute.xlu0 %1103
    %v1106 = vmul.f32 %v1101, %v1104
    %v1107 = vmul.f32 %v1089, %v1033
    %v1108 = vadd.f32 %v1106, %v1107
    %v1109 = vld [vmem:[%s1] sm:$0xf]
    %v1110 = vld [vmem:[%s1 + $0x4] sm:$0xf]
    %v1111 = vld [vmem:[%s1 + $0x8] sm:$0xf]
    %v1112 = vld [vmem:[%s1 + $0xc] sm:$0xf]
    %v1113 = vld [vmem:[%s1 + $0x10] sm:$0xf]
    %v1114 = vld [vmem:[%s1 + $0x14] sm:$0xf]
    %v1115 = vld [vmem:[%s1 + $0x18] sm:$0xf]
    %v1116 = vld [vmem:[%s1 + $0x1c] sm:$0xf]
    %v1117 = vunpack.c.l.bf16 %v1109
    %v1118 = vunpack.c.l.bf16 %v1110
    %v1119 = vunpack.c.l.bf16 %v1111
    %v1120 = vunpack.c.l.bf16 %v1112
    %v1121 = vunpack.c.l.bf16 %v1113
    %v1122 = vunpack.c.l.bf16 %v1114
    %v1123 = vunpack.c.l.bf16 %v1115
    %v1124 = vunpack.c.l.bf16 %v1116
    %v1125 = vld [vmem:[%s8] sm:$0xf]
    %v1126 = vld [vmem:[%s8 + $0x4] sm:$0xf]
    %v1127 = vld [vmem:[%s8 + $0x8] sm:$0xf]
    %v1128 = vld [vmem:[%s8 + $0xc] sm:$0xf]
    %v1129 = vld [vmem:[%s9] sm:$0x1]
    %v1131 = vlaneseq
    %v1132 = vshrl.u32 %v1131, 7
    %v1133 = vsub.s32 0, %v1132
    %v1134 = vrot.slane %v1129, %v1133
    %v1144 = vunpack.c.l.b16 %v1109
    %v1145 = vunpack.c.l.b16 %v1110
    %v1146 = vunpack.c.l.b16 %v1111
    %v1147 = vunpack.c.l.b16 %v1112
    %v1148 = vunpack.c.l.b16 %v1113
    %v1149 = vunpack.c.l.b16 %v1114
    %v1150 = vunpack.c.l.b16 %v1115
    %v1151 = vunpack.c.l.b16 %v1116
    %v1152 = vpack.c.b16 %v1145, %v1144
    %v1153 = vpack.c.b16 %v1147, %v1146
    %v1154 = vpack.c.b16 %v1149, %v1148
    %v1155 = vpack.c.b16 %v1151, %v1150
    %v1160 = vunpack.c.l.b16 %v1125
    %v1161 = vunpack.c.l.b16 %v1126
    %v1162 = vunpack.c.l.b16 %v1127
    %v1163 = vunpack.c.l.b16 %v1128
    %v1164 = vpack.c.b16 %v1161, %v1160
    %v1165 = vpack.c.b16 %v1163, %v1162
    %v1169 = vsel %vm514, %v1152, 0
    %v1172 = vsel %vm514, %v1153, 0
    %v1175 = vsel %vm514, %v1154, 0
    %v1178 = vsel %vm514, %v1155, 0
    %1180 = vmatprep.subr.bf16.mxu0 0
    %1181 = vmatpush1.bf16.msra.mxu0 0
    %1182 = vmatprep.subr.bf16.mxu0 0
    %1183 = vmatpush1.bf16.msra.mxu0 0
    %1184 = vmatprep.subr.bf16.mxu0 0
    %1185 = vmatpush1.bf16.msra.mxu0 0
    %1186 = vmatprep.subr.bf16.mxu0 0
    %1187 = vmatpush1.bf16.msra.mxu0 0
    %1188 = vmatprep.subr.bf16.mxu0 0
    %1189 = vmatpush1.bf16.msra.mxu0 0
    %1190 = vmatprep.subr.bf16.mxu0 0
    %1191 = vmatpush1.bf16.msra.mxu0 0
    %1192 = vmatprep.subr.bf16.mxu0 0
    %1193 = vmatpush1.bf16.msra.mxu0 %v1165
    %1194 = vmatprep.subr.bf16.mxu0 0
    %1195 = vmatpush1.bf16.msra.mxu0 %v1164
    %1196 = vmatprep.subr.bf16.mxu0 0
    %1197 = vmatpush2.bf16.msra.mxu0 0
    %1198 = vmatprep.subr.bf16.mxu0 0
    %1199 = vmatpush2.bf16.msra.mxu0 0
    %1200 = vmatprep.subr.bf16.mxu0 0
    %1201 = vmatpush2.bf16.msra.mxu0 0
    %1202 = vmatprep.subr.bf16.mxu0 0
    %1203 = vmatpush2.bf16.msra.mxu0 0
    %1204 = vmatprep.subr.bf16.mxu0 0
    %1205 = vmatpush2.bf16.msra.mxu0 0
    %1206 = vmatprep.subr.bf16.mxu0 0
    %1207 = vmatpush2.bf16.msra.mxu0 0
    %1208 = vmatprep.subr.bf16.mxu0 0
    %1209 = vmatpush2.bf16.msra.mxu0 0
    %1210 = vmatprep.subr.bf16.mxu0 0
    %1211 = vmatpush2.bf16.msra.mxu0 0
    %1212 = vmatprep.mubr.bf16.mxu0 0
    %1213 = vmatmul.mubr.bf16.gmra.mxu0 %v1169
    %v1214 = vpop.f32.mrf.mxu0
    %v1215 = vadd.f32 %v1134, %v1214
    %v1216 = vpop.f32.mrf.mxu0
    %v1217 = vpop.f32.mrf.mxu0
    %v1218 = vadd.f32 %v1134, %v1217
    %v1219 = vpop.f32.mrf.mxu0
    %1220 = vmatprep.mubr.bf16.mxu0 0
    %1221 = vmatmul.mubr.bf16.gmra.mxu0 %v1172
    %v1222 = vpop.f32.mrf.mxu0
    %v1223 = vadd.f32 %v1134, %v1222
    %v1224 = vpop.f32.mrf.mxu0
    %v1225 = vpop.f32.mrf.mxu0
    %v1226 = vadd.f32 %v1134, %v1225
    %v1227 = vpop.f32.mrf.mxu0
    %1228 = vmatprep.mubr.bf16.mxu0 0
    %1229 = vmatmul.mubr.bf16.gmra.mxu0 %v1175
    %v1230 = vpop.f32.mrf.mxu0
    %v1231 = vadd.f32 %v1134, %v1230
    %v1232 = vpop.f32.mrf.mxu0
    %v1233 = vpop.f32.mrf.mxu0
    %v1234 = vadd.f32 %v1134, %v1233
    %v1235 = vpop.f32.mrf.mxu0
    %1236 = vmatprep.mubr.bf16.mxu0 0
    %1237 = vmatmul.mubr.bf16.gmra.mxu0 %v1178
    %v1238 = vpop.f32.mrf.mxu0
    %v1239 = vadd.f32 %v1134, %v1238
    %v1240 = vpop.f32.mrf.mxu0
    %v1241 = vpop.f32.mrf.mxu0
    %v1242 = vadd.f32 %v1134, %v1241
    %v1243 = vpop.f32.mrf.mxu0
    %1244 = vdwg.mxu0
    %v1245 = vmax.f32 %v1215, 0.0
    %v1246 = vmax.f32 %v1218, 0.0
    %v1247 = vmax.f32 %v1223, 0.0
    %v1248 = vmax.f32 %v1226, 0.0
    %v1249 = vmax.f32 %v1231, 0.0
    %v1250 = vmax.f32 %v1234, 0.0
    %v1251 = vmax.f32 %v1239, 0.0
    %v1252 = vmax.f32 %v1242, 0.0
    %v1253 = vpack.c.bf16 %v1108, %v1108
    %v1254 = vld [vmem:[%s10] sm:$0xf]
    %v1255 = vld [vmem:[%s10 + $0x4] sm:$0xf]
    %v1256 = vld [vmem:[%s10 + $0x8] sm:$0xf]
    %v1257 = vld [vmem:[%s10 + $0xc] sm:$0xf]
    %v1258 = vld [vmem:[%s11] sm:$0x1]
    %v1260 = vlaneseq
    %v1261 = vshrl.u32 %v1260, 7
    %v1262 = vsub.s32 0, %v1261
    %v1263 = vrot.slane %v1258, %v1262
    %1266 = vrot.lane.b32.xlu0 %v1253, 96
    %v1267 = vpop.permute.xlu0 %1266
    %v1272 = vunpack.c.l.b16 %v1254
    %v1273 = vunpack.c.l.b16 %v1255
    %v1274 = vunpack.c.l.b16 %v1256
    %v1275 = vunpack.c.l.b16 %v1257
    %v1276 = vpack.c.b16 %v1273, %v1272
    %v1277 = vpack.c.b16 %v1275, %v1274
    %v1281 = vsel %vm514, %v1267, 0
    %1283 = vmatprep.subr.bf16.mxu0 0
    %1284 = vmatpush1.bf16.msra.mxu0 0
    %1285 = vmatprep.subr.bf16.mxu0 0
    %1286 = vmatpush1.bf16.msra.mxu0 0
    %1287 = vmatprep.subr.bf16.mxu0 0
    %1288 = vmatpush1.bf16.msra.mxu0 0
    %1289 = vmatprep.subr.bf16.mxu0 0
    %1290 = vmatpush1.bf16.msra.mxu0 0
    %1291 = vmatprep.subr.bf16.mxu0 0
    %1292 = vmatpush1.bf16.msra.mxu0 0
    %1293 = vmatprep.subr.bf16.mxu0 0
    %1294 = vmatpush1.bf16.msra.mxu0 0
    %1295 = vmatprep.subr.bf16.mxu0 0
    %1296 = vmatpush1.bf16.msra.mxu0 %v1277
    %1297 = vmatprep.subr.bf16.mxu0 0
    %1298 = vmatpush1.bf16.msra.mxu0 %v1276
    %1299 = vmatprep.subr.bf16.mxu0 0
    %1300 = vmatpush2.bf16.msra.mxu0 0
    %1301 = vmatprep.subr.bf16.mxu0 0
    %1302 = vmatpush2.bf16.msra.mxu0 0
    %1303 = vmatprep.subr.bf16.mxu0 0
    %1304 = vmatpush2.bf16.msra.mxu0 0
    %1305 = vmatprep.subr.bf16.mxu0 0
    %1306 = vmatpush2.bf16.msra.mxu0 0
    %1307 = vmatprep.subr.bf16.mxu0 0
    %1308 = vmatpush2.bf16.msra.mxu0 0
    %1309 = vmatprep.subr.bf16.mxu0 0
    %1310 = vmatpush2.bf16.msra.mxu0 0
    %1311 = vmatprep.subr.bf16.mxu0 0
    %1312 = vmatpush2.bf16.msra.mxu0 0
    %1313 = vmatprep.subr.bf16.mxu0 0
    %1314 = vmatpush2.bf16.msra.mxu0 0
    %1315 = vmatprep.mubr.bf16.mxu0 0
    %1316 = vmatmul.mubr.bf16.gmra.mxu0 %v1281
    %v1317 = vpop.f32.mrf.mxu0
    %v1318 = vadd.f32 %v1263, %v1317
    %v1319 = vpop.f32.mrf.mxu0
    %v1320 = vpop.f32.mrf.mxu0
    %v1321 = vpop.f32.mrf.mxu0
    %1322 = vdwg.mxu0
    %v1323 = vmax.f32 %v1318, 0.0
    %v1325 = vcombine.high %v1323, %v1323
    %v1327 = vunpack.c.l.s4 1966171168
    %v1328 = vunpack.c.0.s8 %v1327
    %v1329 = vlaneseq
    %v1330 = vshrl.u32 %v1329, 7
    %v1331 = vsub.s32 %v1328, %v1330
    %v1332 = vrot.slane %v1323, %v1331
    %v1334 = vunpack.c.l.s4 1966171168
    %v1335 = vunpack.c.0.s8 %v1334
    %v1336 = vlaneseq
    %v1337 = vshrl.u32 %v1336, 7
    %v1338 = vsub.s32 %v1335, %v1337
    %v1339 = vrot.slane %v1325, %v1338
    %v1340 = vcombine.high %v1332, %v1332
    %v1341 = vcombine.high %v1339, %v1339
    %v1343 = vunpack.c.l.s4 1966171168
    %v1344 = vunpack.c.0.s8 %v1343
    %v1345 = vlaneseq
    %v1346 = vshrl.u32 %v1345, 7
    %v1347 = vsub.s32 %v1344, %v1346
    %v1348 = vrot.slane %v1332, %v1347
    %v1350 = vunpack.c.l.s4 1966171168
    %v1351 = vunpack.c.0.s8 %v1350
    %v1352 = vlaneseq
    %v1353 = vshrl.u32 %v1352, 7
    %v1354 = vsub.s32 %v1351, %v1353
    %v1355 = vrot.slane %v1339, %v1354
    %v1357 = vunpack.c.l.s4 1966171168
    %v1358 = vunpack.c.0.s8 %v1357
    %v1359 = vlaneseq
    %v1360 = vshrl.u32 %v1359, 7
    %v1361 = vsub.s32 %v1358, %v1360
    %v1362 = vrot.slane %v1340, %v1361
    %v1364 = vunpack.c.l.s4 1966171168
    %v1365 = vunpack.c.0.s8 %v1364
    %v1366 = vlaneseq
    %v1367 = vshrl.u32 %v1366, 7
    %v1368 = vsub.s32 %v1365, %v1367
    %v1369 = vrot.slane %v1341, %v1368
    %v1370 = vcombine.high %v1348, %v1348
    %v1371 = vcombine.high %v1355, %v1355
    %v1372 = vcombine.high %v1362, %v1362
    %v1373 = vcombine.high %v1369, %v1369
    %v1374 = vlaneseq
    %v1375 = vshrl.u32 %v1374, 7
    %v1376 = vsub.s32 0, %v1375
    %v1377 = vrot.slane %v1348, %v1376
    %v1378 = vlaneseq
    %v1379 = vshrl.u32 %v1378, 7
    %v1380 = vsub.s32 0, %v1379
    %v1381 = vrot.slane %v1362, %v1380
    %v1382 = vlaneseq
    %v1383 = vshrl.u32 %v1382, 7
    %v1384 = vsub.s32 0, %v1383
    %v1385 = vrot.slane %v1370, %v1384
    %v1386 = vlaneseq
    %v1387 = vshrl.u32 %v1386, 7
    %v1388 = vsub.s32 0, %v1387
    %v1389 = vrot.slane %v1372, %v1388
    %v1390 = vlaneseq
    %v1391 = vshrl.u32 %v1390, 7
    %v1392 = vsub.s32 0, %v1391
    %v1393 = vrot.slane %v1355, %v1392
    %v1394 = vlaneseq
    %v1395 = vshrl.u32 %v1394, 7
    %v1396 = vsub.s32 0, %v1395
    %v1397 = vrot.slane %v1369, %v1396
    %v1398 = vlaneseq
    %v1399 = vshrl.u32 %v1398, 7
    %v1400 = vsub.s32 0, %v1399
    %v1401 = vrot.slane %v1371, %v1400
    %v1402 = vlaneseq
    %v1403 = vshrl.u32 %v1402, 7
    %v1404 = vsub.s32 0, %v1403
    %v1405 = vrot.slane %v1373, %v1404
    %v1414 = vmul.f32 %v1245, %v1377
    %v1415 = vmul.f32 %v1246, %v1381
    %v1416 = vmul.f32 %v1247, %v1385
    %v1417 = vmul.f32 %v1248, %v1389
    %v1418 = vmul.f32 %v1249, %v1393
    %v1419 = vmul.f32 %v1250, %v1397
    %v1420 = vmul.f32 %v1251, %v1401
    %v1421 = vmul.f32 %v1252, %v1405
    %v1422 = vld [vmem:[%s12] sm:$0x1]
    %v1424 = vlaneseq
    %v1425 = vshrl.u32 %v1424, 7
    %v1426 = vsub.s32 0, %v1425
    %v1427 = vrot.slane %v1422, %v1426
    %v1429 = vmul.f32 %v1414, %v1427
    %v1430 = vmul.f32 %v1415, %v1427
    %v1431 = vmul.f32 %v1416, %v1427
    %v1432 = vmul.f32 %v1417, %v1427
    %v1433 = vmul.f32 %v1418, %v1427
    %v1434 = vmul.f32 %v1419, %v1427
    %v1435 = vmul.f32 %v1420, %v1427
    %v1436 = vmul.f32 %v1421, %v1427
    %v1437 = vsel %vm514, %v1429, 0.0
    %1438 = vadd.xlane.f32.xlu0 %v1437
    %v1439 = vpop.xlane.xlu0 %1438
    %v1440 = vsel %vm514, %v1430, 0.0
    %1441 = vadd.xlane.f32.xlu0 %v1440
    %v1442 = vpop.xlane.xlu0 %1441
    %v1443 = vsel %vm514, %v1431, 0.0
    %1444 = vadd.xlane.f32.xlu0 %v1443
    %v1445 = vpop.xlane.xlu0 %1444
    %v1446 = vsel %vm514, %v1432, 0.0
    %1447 = vadd.xlane.f32.xlu0 %v1446
    %v1448 = vpop.xlane.xlu0 %1447
    %v1449 = vsel %vm514, %v1433, 0.0
    %1450 = vadd.xlane.f32.xlu0 %v1449
    %v1451 = vpop.xlane.xlu0 %1450
    %v1452 = vsel %vm514, %v1434, 0.0
    %1453 = vadd.xlane.f32.xlu0 %v1452
    %v1454 = vpop.xlane.xlu0 %1453
    %v1455 = vsel %vm514, %v1435, 0.0
    %1456 = vadd.xlane.f32.xlu0 %v1455
    %v1457 = vpop.xlane.xlu0 %1456
    %v1458 = vsel %vm514, %v1436, 0.0
    %1459 = vadd.xlane.f32.xlu0 %v1458
    %v1460 = vpop.xlane.xlu0 %1459
    %v1461 = vld [vmem:[#allocation4] sm:$0x1]
    %v1463 = vlaneseq
    %v1464 = vshrl.u32 %v1463, 7
    %v1465 = vsub.s32 0, %v1464
    %v1466 = vrot.slane %v1461, %v1465
    %1467 = vset.pattern.permute.xlu0 0
    %1468 = vperm.xlu0 %1467, %v1466
    %v1469 = vpop.permute.xlu0 %1468
    %v1471 = vadd.f32 %v1439, %v1469
    %v1472 = vadd.f32 %v1442, %v1469
    %v1473 = vadd.f32 %v1445, %v1469
    %v1474 = vadd.f32 %v1448, %v1469
    %v1475 = vadd.f32 %v1451, %v1469
    %v1476 = vadd.f32 %v1454, %v1469
    %v1477 = vadd.f32 %v1457, %v1469
    %v1478 = vadd.f32 %v1460, %v1469
    %v1487 = vlaneseq
    %v1488 = vand.u32 %v1487, 127
    %v1489 = vlaneseq
    %v1490 = vshrl.u32 %v1489, 7
    %v1491 = vsub.s32 %v1488, %v1490
    %v1492 = vrot.slane %v1471, %v1491
    %v1493 = vlaneseq
    %v1494 = vshrl.u32 %v1493, 7
    %v1495 = vsub.s32 %v1488, %v1494
    %v1496 = vrot.slane %v1472, %v1495
    %v1497 = vlaneseq
    %v1498 = vshrl.u32 %v1497, 7
    %v1499 = vsub.s32 %v1488, %v1498
    %v1500 = vrot.slane %v1473, %v1499
    %v1501 = vlaneseq
    %v1502 = vshrl.u32 %v1501, 7
    %v1503 = vsub.s32 %v1488, %v1502
    %v1504 = vrot.slane %v1474, %v1503
    %v1505 = vlaneseq
    %v1506 = vshrl.u32 %v1505, 7
    %v1507 = vsub.s32 %v1488, %v1506
    %v1508 = vrot.slane %v1475, %v1507
    %v1509 = vlaneseq
    %v1510 = vshrl.u32 %v1509, 7
    %v1511 = vsub.s32 %v1488, %v1510
    %v1512 = vrot.slane %v1476, %v1511
    %v1513 = vlaneseq
    %v1514 = vshrl.u32 %v1513, 7
    %v1515 = vsub.s32 %v1488, %v1514
    %v1516 = vrot.slane %v1477, %v1515
    %v1517 = vlaneseq
    %v1518 = vshrl.u32 %v1517, 7
    %v1519 = vsub.s32 %v1488, %v1518
    %v1520 = vrot.slane %v1478, %v1519
    %vm1521 = vcmask 1041409
    %v1522 = vsel %vm1521, %v1496, %v1492
    %vm1523 = vcmask 1042434
    %v1524 = vsel %vm1523, %v1500, %v1522
    %vm1525 = vcmask 1043459
    %v1526 = vsel %vm1525, %v1504, %v1524
    %vm1527 = vcmask 1044484
    %v1528 = vsel %vm1527, %v1508, %v1526
    %vm1529 = vcmask 1045509
    %v1530 = vsel %vm1529, %v1512, %v1528
    %vm1531 = vcmask 1046534
    %v1532 = vsel %vm1531, %v1516, %v1530
    %vm1533 = vcmask 1047559
    %v1534 = vsel %vm1533, %v1520, %v1532
    %vm1536 = vcmask 64512
    %v1537 = vsel %vm1536, %v1534, -inf
    %1538 = vmax.xlane.f32.xlu0 %v1537
    %v1539 = vpop.xlane.xlu0 %1538
    %v1541 = vlaneseq
    %v1542 = vshrl.u32 %v1541, 7
    %v1543 = vsub.s32 0, %v1542
    %v1544 = vrot.slane %v1539, %v1543
    %v1545 = vlaneseq
    %v1546 = vshrl.u32 %v1545, 7
    %v1547 = vsub.s32 1, %v1546
    %v1548 = vrot.slane %v1539, %v1547
    %v1549 = vlaneseq
    %v1550 = vshrl.u32 %v1549, 7
    %v1551 = vsub.s32 2, %v1550
    %v1552 = vrot.slane %v1539, %v1551
    %v1553 = vlaneseq
    %v1554 = vshrl.u32 %v1553, 7
    %v1555 = vsub.s32 3, %v1554
    %v1556 = vrot.slane %v1539, %v1555
    %v1557 = vlaneseq
    %v1558 = vshrl.u32 %v1557, 7
    %v1559 = vsub.s32 4, %v1558
    %v1560 = vrot.slane %v1539, %v1559
    %v1561 = vlaneseq
    %v1562 = vshrl.u32 %v1561, 7
    %v1563 = vsub.s32 5, %v1562
    %v1564 = vrot.slane %v1539, %v1563
    %v1565 = vlaneseq
    %v1566 = vshrl.u32 %v1565, 7
    %v1567 = vsub.s32 6, %v1566
    %v1568 = vrot.slane %v1539, %v1567
    %v1569 = vlaneseq
    %v1570 = vshrl.u32 %v1569, 7
    %v1571 = vsub.s32 7, %v1570
    %v1572 = vrot.slane %v1539, %v1571
    %v1581 = vsub.f32 %v1471, %v1544
    %v1582 = vsub.f32 %v1472, %v1548
    %v1583 = vsub.f32 %v1473, %v1552
    %v1584 = vsub.f32 %v1474, %v1556
    %v1585 = vsub.f32 %v1475, %v1560
    %v1586 = vsub.f32 %v1476, %v1564
    %v1587 = vsub.f32 %v1477, %v1568
    %v1588 = vsub.f32 %v1478, %v1572
    %v1589 = vmul.f32 %v1581, 1.442695
    %v1590 = vpow.pop %v1589
    %v1591 = vmul.f32 %v1582, 1.442695
    %v1592 = vpow.pop %v1591
    %v1593 = vmul.f32 %v1583, 1.442695
    %v1594 = vpow.pop %v1593
    %v1595 = vmul.f32 %v1584, 1.442695
    %v1596 = vpow.pop %v1595
    %v1597 = vmul.f32 %v1585, 1.442695
    %v1598 = vpow.pop %v1597
    %v1599 = vmul.f32 %v1586, 1.442695
    %v1600 = vpow.pop %v1599
    %v1601 = vmul.f32 %v1587, 1.442695
    %v1602 = vpow.pop %v1601
    %v1603 = vmul.f32 %v1588, 1.442695
    %v1604 = vpow.pop %v1603
    %1613 = vset.pattern.permute.xlu0 0
    %1614 = vperm.xlu0 %1613, %v1590
    %v1615 = vpop.permute.xlu0 %1614
    %1616 = vset.pattern.permute.xlu0 0
    %1617 = vperm.xlu0 %1616, %v1592
    %v1618 = vpop.permute.xlu0 %1617
    %1619 = vset.pattern.permute.xlu0 0
    %1620 = vperm.xlu0 %1619, %v1594
    %v1621 = vpop.permute.xlu0 %1620
    %1622 = vset.pattern.permute.xlu0 0
    %1623 = vperm.xlu0 %1622, %v1596
    %v1624 = vpop.permute.xlu0 %1623
    %1625 = vset.pattern.permute.xlu0 0
    %1626 = vperm.xlu0 %1625, %v1598
    %v1627 = vpop.permute.xlu0 %1626
    %1628 = vset.pattern.permute.xlu0 0
    %1629 = vperm.xlu0 %1628, %v1600
    %v1630 = vpop.permute.xlu0 %1629
    %1631 = vset.pattern.permute.xlu0 0
    %1632 = vperm.xlu0 %1631, %v1602
    %v1633 = vpop.permute.xlu0 %1632
    %1634 = vset.pattern.permute.xlu0 0
    %1635 = vperm.xlu0 %1634, %v1604
    %v1636 = vpop.permute.xlu0 %1635
    %v1637 = vlaneseq
    %v1638 = vshrl.u32 %v1637, 7
    %v1639 = vsub.s32 %v1488, %v1638
    %v1640 = vrot.slane %v1615, %v1639
    %v1641 = vlaneseq
    %v1642 = vshrl.u32 %v1641, 7
    %v1643 = vsub.s32 %v1488, %v1642
    %v1644 = vrot.slane %v1618, %v1643
    %v1645 = vlaneseq
    %v1646 = vshrl.u32 %v1645, 7
    %v1647 = vsub.s32 %v1488, %v1646
    %v1648 = vrot.slane %v1621, %v1647
    %v1649 = vlaneseq
    %v1650 = vshrl.u32 %v1649, 7
    %v1651 = vsub.s32 %v1488, %v1650
    %v1652 = vrot.slane %v1624, %v1651
    %v1653 = vlaneseq
    %v1654 = vshrl.u32 %v1653, 7
    %v1655 = vsub.s32 %v1488, %v1654
    %v1656 = vrot.slane %v1627, %v1655
    %v1657 = vlaneseq
    %v1658 = vshrl.u32 %v1657, 7
    %v1659 = vsub.s32 %v1488, %v1658
    %v1660 = vrot.slane %v1630, %v1659
    %v1661 = vlaneseq
    %v1662 = vshrl.u32 %v1661, 7
    %v1663 = vsub.s32 %v1488, %v1662
    %v1664 = vrot.slane %v1633, %v1663
    %v1665 = vlaneseq
    %v1666 = vshrl.u32 %v1665, 7
    %v1667 = vsub.s32 %v1488, %v1666
    %v1668 = vrot.slane %v1636, %v1667
    %v1669 = vsel %vm1521, %v1644, %v1640
    %v1670 = vsel %vm1523, %v1648, %v1669
    %v1671 = vsel %vm1525, %v1652, %v1670
    %v1672 = vsel %vm1527, %v1656, %v1671
    %v1673 = vsel %vm1529, %v1660, %v1672
    %v1674 = vsel %vm1531, %v1664, %v1673
    %v1675 = vsel %vm1533, %v1668, %v1674
    %v1677 = vsel %vm1536, %v1675, 0.0
    %1678 = vadd.xlane.f32.xlu0 %v1677
    %v1679 = vpop.xlane.xlu0 %1678
    %v1680 = vrcp.pop %v1679
    %v1682 = vlaneseq
    %v1683 = vshrl.u32 %v1682, 7
    %v1684 = vsub.s32 0, %v1683
    %v1685 = vrot.slane %v1680, %v1684
    %v1686 = vlaneseq
    %v1687 = vshrl.u32 %v1686, 7
    %v1688 = vsub.s32 1, %v1687
    %v1689 = vrot.slane %v1680, %v1688
    %v1690 = vlaneseq
    %v1691 = vshrl.u32 %v1690, 7
    %v1692 = vsub.s32 2, %v1691
    %v1693 = vrot.slane %v1680, %v1692
    %v1694 = vlaneseq
    %v1695 = vshrl.u32 %v1694, 7
    %v1696 = vsub.s32 3, %v1695
    %v1697 = vrot.slane %v1680, %v1696
    %v1698 = vlaneseq
    %v1699 = vshrl.u32 %v1698, 7
    %v1700 = vsub.s32 4, %v1699
    %v1701 = vrot.slane %v1680, %v1700
    %v1702 = vlaneseq
    %v1703 = vshrl.u32 %v1702, 7
    %v1704 = vsub.s32 5, %v1703
    %v1705 = vrot.slane %v1680, %v1704
    %v1706 = vlaneseq
    %v1707 = vshrl.u32 %v1706, 7
    %v1708 = vsub.s32 6, %v1707
    %v1709 = vrot.slane %v1680, %v1708
    %v1710 = vlaneseq
    %v1711 = vshrl.u32 %v1710, 7
    %v1712 = vsub.s32 7, %v1711
    %v1713 = vrot.slane %v1680, %v1712
    %v1722 = vmul.f32 %v1590, %v1685
    %v1723 = vmul.f32 %v1592, %v1689
    %v1724 = vmul.f32 %v1594, %v1693
    %v1725 = vmul.f32 %v1596, %v1697
    %v1726 = vmul.f32 %v1598, %v1701
    %v1727 = vmul.f32 %v1600, %v1705
    %v1728 = vmul.f32 %v1602, %v1709
    %v1729 = vmul.f32 %v1604, %v1713
    %1731 = vset.pattern.permute.xlu0 0
    %1732 = vperm.xlu0 %1731, %v1722
    %v1733 = vpop.permute.xlu0 %1732
    %1736 = vset.pattern.permute.xlu0 0
    %1737 = vperm.xlu0 %1736, %v1723
    %v1738 = vpop.permute.xlu0 %1737
    %1741 = vset.pattern.permute.xlu0 0
    %1742 = vperm.xlu0 %1741, %v1724
    %v1743 = vpop.permute.xlu0 %1742
    %1746 = vset.pattern.permute.xlu0 0
    %1747 = vperm.xlu0 %1746, %v1725
    %v1748 = vpop.permute.xlu0 %1747
    %1751 = vset.pattern.permute.xlu0 0
    %1752 = vperm.xlu0 %1751, %v1726
    %v1753 = vpop.permute.xlu0 %1752
    %1756 = vset.pattern.permute.xlu0 0
    %1757 = vperm.xlu0 %1756, %v1727
    %v1758 = vpop.permute.xlu0 %1757
    %1761 = vset.pattern.permute.xlu0 0
    %1762 = vperm.xlu0 %1761, %v1728
    %v1763 = vpop.permute.xlu0 %1762
    %1766 = vset.pattern.permute.xlu0 0
    %1767 = vperm.xlu0 %1766, %v1729
    %v1768 = vpop.permute.xlu0 %1767
    %v1770 = vmul.f32 %v1733, %v1117
    %v1771 = vmul.f32 %v1738, %v1118
    %v1772 = vmul.f32 %v1743, %v1119
    %v1773 = vmul.f32 %v1748, %v1120
    %v1774 = vmul.f32 %v1753, %v1121
    %v1775 = vmul.f32 %v1758, %v1122
    %v1776 = vmul.f32 %v1763, %v1123
    %v1777 = vmul.f32 %v1768, %v1124
    %v1778 = vpack.c.bf16 %v1770, %v1770
    %v1779 = vpack.c.bf16 %v1771, %v1771
    %v1780 = vpack.c.bf16 %v1772, %v1772
    %v1781 = vpack.c.bf16 %v1773, %v1773
    %v1782 = vpack.c.bf16 %v1774, %v1774
    %v1783 = vpack.c.bf16 %v1775, %v1775
    %v1784 = vpack.c.bf16 %v1776, %v1776
    %v1785 = vpack.c.bf16 %v1777, %v1777
    %v1786 = vld [vmem:[%s14] sm:$0xf]
    %v1787 = vld [vmem:[%s14 + $0x4] sm:$0xf]
    %v1788 = vld [vmem:[%s14 + $0x8] sm:$0xf]
    %v1789 = vld [vmem:[%s14 + $0xc] sm:$0xf]
    %v1790 = vld [vmem:[%s15] sm:$0x1]
    %v1792 = vlaneseq
    %v1793 = vshrl.u32 %v1792, 7
    %v1794 = vsub.s32 0, %v1793
    %v1795 = vrot.slane %v1790, %v1794
    %v1805 = vunpack.c.l.b16 %v1778
    %v1806 = vunpack.c.l.b16 %v1779
    %v1807 = vunpack.c.l.b16 %v1780
    %v1808 = vunpack.c.l.b16 %v1781
    %v1809 = vunpack.c.l.b16 %v1782
    %v1810 = vunpack.c.l.b16 %v1783
    %v1811 = vunpack.c.l.b16 %v1784
    %v1812 = vunpack.c.l.b16 %v1785
    %v1813 = vpack.c.b16 %v1806, %v1805
    %v1814 = vpack.c.b16 %v1808, %v1807
    %v1815 = vpack.c.b16 %v1810, %v1809
    %v1816 = vpack.c.b16 %v1812, %v1811
    %v1821 = vunpack.c.l.b16 %v1786
    %v1822 = vunpack.c.l.b16 %v1787
    %v1823 = vunpack.c.l.b16 %v1788
    %v1824 = vunpack.c.l.b16 %v1789
    %v1825 = vpack.c.b16 %v1822, %v1821
    %v1826 = vpack.c.b16 %v1824, %v1823
    %v1830 = vsel %vm514, %v1813, 0
    %v1833 = vsel %vm514, %v1814, 0
    %v1836 = vsel %vm514, %v1815, 0
    %v1839 = vsel %vm514, %v1816, 0
    %1841 = vmatprep.subr.bf16.mxu0 0
    %1842 = vmatpush1.bf16.msra.mxu0 0
    %1843 = vmatprep.subr.bf16.mxu0 0
    %1844 = vmatpush1.bf16.msra.mxu0 0
    %1845 = vmatprep.subr.bf16.mxu0 0
    %1846 = vmatpush1.bf16.msra.mxu0 0
    %1847 = vmatprep.subr.bf16.mxu0 0
    %1848 = vmatpush1.bf16.msra.mxu0 0
    %1849 = vmatprep.subr.bf16.mxu0 0
    %1850 = vmatpush1.bf16.msra.mxu0 0
    %1851 = vmatprep.subr.bf16.mxu0 0
    %1852 = vmatpush1.bf16.msra.mxu0 0
    %1853 = vmatprep.subr.bf16.mxu0 0
    %1854 = vmatpush1.bf16.msra.mxu0 %v1826
    %1855 = vmatprep.subr.bf16.mxu0 0
    %1856 = vmatpush1.bf16.msra.mxu0 %v1825
    %1857 = vmatprep.subr.bf16.mxu0 0
    %1858 = vmatpush2.bf16.msra.mxu0 0
    %1859 = vmatprep.subr.bf16.mxu0 0
    %1860 = vmatpush2.bf16.msra.mxu0 0
    %1861 = vmatprep.subr.bf16.mxu0 0
    %1862 = vmatpush2.bf16.msra.mxu0 0
    %1863 = vmatprep.subr.bf16.mxu0 0
    %1864 = vmatpush2.bf16.msra.mxu0 0
    %1865 = vmatprep.subr.bf16.mxu0 0
    %1866 = vmatpush2.bf16.msra.mxu0 0
    %1867 = vmatprep.subr.bf16.mxu0 0
    %1868 = vmatpush2.bf16.msra.mxu0 0
    %1869 = vmatprep.subr.bf16.mxu0 0
    %1870 = vmatpush2.bf16.msra.mxu0 0
    %1871 = vmatprep.subr.bf16.mxu0 0
    %1872 = vmatpush2.bf16.msra.mxu0 0
    %1873 = vmatprep.mubr.bf16.mxu0 0
    %1874 = vmatmul.mubr.bf16.gmra.mxu0 %v1830
    %v1875 = vpop.f32.mrf.mxu0
    %v1876 = vadd.f32 %v1795, %v1875
    %v1877 = vpop.f32.mrf.mxu0
    %v1878 = vpop.f32.mrf.mxu0
    %v1879 = vadd.f32 %v1795, %v1878
    %v1880 = vpop.f32.mrf.mxu0
    %1881 = vmatprep.mubr.bf16.mxu0 0
    %1882 = vmatmul.mubr.bf16.gmra.mxu0 %v1833
    %v1883 = vpop.f32.mrf.mxu0
    %v1884 = vadd.f32 %v1795, %v1883
    %v1885 = vpop.f32.mrf.mxu0
    %v1886 = vpop.f32.mrf.mxu0
    %v1887 = vadd.f32 %v1795, %v1886
    %v1888 = vpop.f32.mrf.mxu0
    %1889 = vmatprep.mubr.bf16.mxu0 0
    %1890 = vmatmul.mubr.bf16.gmra.mxu0 %v1836
    %v1891 = vpop.f32.mrf.mxu0
    %v1892 = vadd.f32 %v1795, %v1891
    %v1893 = vpop.f32.mrf.mxu0
    %v1894 = vpop.f32.mrf.mxu0
    %v1895 = vadd.f32 %v1795, %v1894
    %v1896 = vpop.f32.mrf.mxu0
    %1897 = vmatprep.mubr.bf16.mxu0 0
    %1898 = vmatmul.mubr.bf16.gmra.mxu0 %v1839
    %v1899 = vpop.f32.mrf.mxu0
    %v1900 = vadd.f32 %v1795, %v1899
    %v1901 = vpop.f32.mrf.mxu0
    %v1902 = vpop.f32.mrf.mxu0
    %v1903 = vadd.f32 %v1795, %v1902
    %v1904 = vpop.f32.mrf.mxu0
    %1905 = vdwg.mxu0
    %v1906 = vmax.f32 %v1876, 0.0
    %v1907 = vmax.f32 %v1879, 0.0
    %v1908 = vmax.f32 %v1884, 0.0
    %v1909 = vmax.f32 %v1887, 0.0
    %v1910 = vmax.f32 %v1892, 0.0
    %v1911 = vmax.f32 %v1895, 0.0
    %v1912 = vmax.f32 %v1900, 0.0
    %v1913 = vmax.f32 %v1903, 0.0
    %v1914 = vld [vmem:[%s16] sm:$0xf]
    %v1915 = vld [vmem:[%s16 + $0x4] sm:$0xf]
    %v1916 = vld [vmem:[%s16 + $0x8] sm:$0xf]
    %v1917 = vld [vmem:[%s16 + $0xc] sm:$0xf]
    %v1918 = vld [vmem:[%s17] sm:$0x1]
    %v1920 = vlaneseq
    %v1921 = vshrl.u32 %v1920, 7
    %v1922 = vsub.s32 0, %v1921
    %v1923 = vrot.slane %v1918, %v1922
    %v1929 = vunpack.c.l.b16 %v1914
    %v1930 = vunpack.c.l.b16 %v1915
    %v1931 = vunpack.c.l.b16 %v1916
    %v1932 = vunpack.c.l.b16 %v1917
    %v1933 = vpack.c.b16 %v1930, %v1929
    %v1934 = vpack.c.b16 %v1932, %v1931
    %1937 = vmatprep.subr.bf16.mxu0 0
    %1938 = vmatpush1.bf16.msra.mxu0 0
    %1939 = vmatprep.subr.bf16.mxu0 0
    %1940 = vmatpush1.bf16.msra.mxu0 0
    %1941 = vmatprep.subr.bf16.mxu0 0
    %1942 = vmatpush1.bf16.msra.mxu0 0
    %1943 = vmatprep.subr.bf16.mxu0 0
    %1944 = vmatpush1.bf16.msra.mxu0 0
    %1945 = vmatprep.subr.bf16.mxu0 0
    %1946 = vmatpush1.bf16.msra.mxu0 0
    %1947 = vmatprep.subr.bf16.mxu0 0
    %1948 = vmatpush1.bf16.msra.mxu0 0
    %1949 = vmatprep.subr.bf16.mxu0 0
    %1950 = vmatpush1.bf16.msra.mxu0 %v1934
    %1951 = vmatprep.subr.bf16.mxu0 0
    %1952 = vmatpush1.bf16.msra.mxu0 %v1933
    %1953 = vmatprep.subr.bf16.mxu0 0
    %1954 = vmatpush2.bf16.msra.mxu0 0
    %1955 = vmatprep.subr.bf16.mxu0 0
    %1956 = vmatpush2.bf16.msra.mxu0 0
    %1957 = vmatprep.subr.bf16.mxu0 0
    %1958 = vmatpush2.bf16.msra.mxu0 0
    %1959 = vmatprep.subr.bf16.mxu0 0
    %1960 = vmatpush2.bf16.msra.mxu0 0
    %1961 = vmatprep.subr.bf16.mxu0 0
    %1962 = vmatpush2.bf16.msra.mxu0 0
    %1963 = vmatprep.subr.bf16.mxu0 0
    %1964 = vmatpush2.bf16.msra.mxu0 0
    %1965 = vmatprep.subr.bf16.mxu0 0
    %1966 = vmatpush2.bf16.msra.mxu0 0
    %1967 = vmatprep.subr.bf16.mxu0 0
    %1968 = vmatpush2.bf16.msra.mxu0 0
    %1969 = vmatprep.mubr.bf16.mxu0 0
    %1970 = vmatmul.mubr.bf16.gmra.mxu0 %v1830
    %v1971 = vpop.f32.mrf.mxu0
    %v1972 = vadd.f32 %v1923, %v1971
    %v1973 = vpop.f32.mrf.mxu0
    %v1974 = vpop.f32.mrf.mxu0
    %v1975 = vadd.f32 %v1923, %v1974
    %v1976 = vpop.f32.mrf.mxu0
    %1977 = vmatprep.mubr.bf16.mxu0 0
    %1978 = vmatmul.mubr.bf16.gmra.mxu0 %v1833
    %v1979 = vpop.f32.mrf.mxu0
    %v1980 = vadd.f32 %v1923, %v1979
    %v1981 = vpop.f32.mrf.mxu0
    %v1982 = vpop.f32.mrf.mxu0
    %v1983 = vadd.f32 %v1923, %v1982
    %v1984 = vpop.f32.mrf.mxu0
    %1985 = vmatprep.mubr.bf16.mxu0 0
    %1986 = vmatmul.mubr.bf16.gmra.mxu0 %v1836
    %v1987 = vpop.f32.mrf.mxu0
    %v1988 = vadd.f32 %v1923, %v1987
    %v1989 = vpop.f32.mrf.mxu0
    %v1990 = vpop.f32.mrf.mxu0
    %v1991 = vadd.f32 %v1923, %v1990
    %v1992 = vpop.f32.mrf.mxu0
    %1993 = vmatprep.mubr.bf16.mxu0 0
    %1994 = vmatmul.mubr.bf16.gmra.mxu0 %v1839
    %v1995 = vpop.f32.mrf.mxu0
    %v1996 = vadd.f32 %v1923, %v1995
    %v1997 = vpop.f32.mrf.mxu0
    %v1998 = vpop.f32.mrf.mxu0
    %v1999 = vadd.f32 %v1923, %v1998
    %v2000 = vpop.f32.mrf.mxu0
    %2001 = vdwg.mxu0
    %v2002 = vmax.f32 %v1972, 0.0
    %v2003 = vmax.f32 %v1975, 0.0
    %v2004 = vmax.f32 %v1980, 0.0
    %v2005 = vmax.f32 %v1983, 0.0
    %v2006 = vmax.f32 %v1988, 0.0
    %v2007 = vmax.f32 %v1991, 0.0
    %v2008 = vmax.f32 %v1996, 0.0
    %v2009 = vmax.f32 %v1999, 0.0
    %v2010 = vld [vmem:[%s2] sm:$0xff]
    %v2011 = vld [vmem:[%s2 + $0x8] sm:$0xff]
    %v2012 = vld [vmem:[%s2 + $0x10] sm:$0xff]
    %v2013 = vld [vmem:[%s2 + $0x18] sm:$0xff]
    %v2014 = vld [vmem:[%s2 + $0x20] sm:$0xff]
    %v2015 = vld [vmem:[%s2 + $0x28] sm:$0xff]
    %v2016 = vld [vmem:[%s2 + $0x30] sm:$0xff]
    %v2017 = vld [vmem:[%s2 + $0x38] sm:$0xff]
    %v2018 = vld [vmem:[%s18] sm:$0x1]
    %v2020 = vlaneseq
    %v2021 = vshrl.u32 %v2020, 7
    %v2022 = vsub.s32 0, %v2021
    %v2023 = vrot.slane %v2018, %v2022
    %v2025 = vmul.f32 %v2010, %v2023
    %v2026 = vmul.f32 %v2011, %v2023
    %v2027 = vmul.f32 %v2012, %v2023
    %v2028 = vmul.f32 %v2013, %v2023
    %v2029 = vmul.f32 %v2014, %v2023
    %v2030 = vmul.f32 %v2015, %v2023
    %v2031 = vmul.f32 %v2016, %v2023
    %v2032 = vmul.f32 %v2017, %v2023
    %v2033 = vpack.c.bf16 %v2025, %v2025
    %v2034 = vpack.c.bf16 %v2026, %v2026
    %v2035 = vpack.c.bf16 %v2027, %v2027
    %v2036 = vpack.c.bf16 %v2028, %v2028
    %v2037 = vpack.c.bf16 %v2029, %v2029
    %v2038 = vpack.c.bf16 %v2030, %v2030
    %v2039 = vpack.c.bf16 %v2031, %v2031
    %v2040 = vpack.c.bf16 %v2032, %v2032
    %v2041 = vpack.c.bf16 %v2002, %v2002
    %v2042 = vpack.c.bf16 %v2003, %v2003
    %v2043 = vpack.c.bf16 %v2004, %v2004
    %v2044 = vpack.c.bf16 %v2005, %v2005
    %v2045 = vpack.c.bf16 %v2006, %v2006
    %v2046 = vpack.c.bf16 %v2007, %v2007
    %v2047 = vpack.c.bf16 %v2008, %v2008
    %v2048 = vpack.c.bf16 %v2009, %v2009
    %v2050 = vsel %vm1536, %v2033, 0
    %vm2052 = vcmask 1043456
    %v2054 = vsel %vm2052, %v2041, 0
    %2056 = vmatprep.subr.bf16.mxu0 0
    %2057 = vmatpush1.bf16.msra.mxu0 0
    %2058 = vmatprep.subr.bf16.mxu0 0
    %2059 = vmatpush1.bf16.msra.mxu0 0
    %2060 = vmatprep.subr.bf16.mxu0 0
    %2061 = vmatpush1.bf16.msra.mxu0 0
    %2062 = vmatprep.subr.bf16.mxu0 0
    %2063 = vmatpush1.bf16.msra.mxu0 0
    %2064 = vmatprep.subr.bf16.mxu0 0
    %2065 = vmatpush1.bf16.msra.mxu0 0
    %2066 = vmatprep.subr.bf16.mxu0 0
    %2067 = vmatpush1.bf16.msra.mxu0 0
    %2068 = vmatprep.subr.bf16.mxu0 0
    %2069 = vmatpush1.bf16.msra.mxu0 0
    %2070 = vmatprep.subr.bf16.mxu0 0
    %2071 = vmatpush1.bf16.msra.mxu0 %v2054
    %2072 = vmatprep.subr.bf16.mxu0 0
    %2073 = vmatpush2.bf16.msra.mxu0 0
    %2074 = vmatprep.subr.bf16.mxu0 0
    %2075 = vmatpush2.bf16.msra.mxu0 0
    %2076 = vmatprep.subr.bf16.mxu0 0
    %2077 = vmatpush2.bf16.msra.mxu0 0
    %2078 = vmatprep.subr.bf16.mxu0 0
    %2079 = vmatpush2.bf16.msra.mxu0 0
    %2080 = vmatprep.subr.bf16.mxu0 0
    %2081 = vmatpush2.bf16.msra.mxu0 0
    %2082 = vmatprep.subr.bf16.mxu0 0
    %2083 = vmatpush2.bf16.msra.mxu0 0
    %2084 = vmatprep.subr.bf16.mxu0 0
    %2085 = vmatpush2.bf16.msra.mxu0 0
    %2086 = vmatprep.subr.bf16.mxu0 0
    %2087 = vmatpush2.bf16.msra.mxu0 0
    %2088 = vmatprep.mubr.bf16.mxu0 0
    %2089 = vmatmul.mubr.bf16.gmra.mxu0 %v2050
    %v2090 = vpop.f32.mrf.mxu0
    %v2091 = vadd.f32 0.0, %v2090
    %v2092 = vpop.f32.mrf.mxu0
    %v2093 = vpop.f32.mrf.mxu0
    %v2094 = vpop.f32.mrf.mxu0
    %2095 = vdwg.mxu0
    %v2097 = vsel %vm1536, %v2034, 0
    %v2100 = vsel %vm2052, %v2042, 0
    %2102 = vmatprep.subr.bf16.mxu0 0
    %2103 = vmatpush1.bf16.msra.mxu0 0
    %2104 = vmatprep.subr.bf16.mxu0 0
    %2105 = vmatpush1.bf16.msra.mxu0 0
    %2106 = vmatprep.subr.bf16.mxu0 0
    %2107 = vmatpush1.bf16.msra.mxu0 0
    %2108 = vmatprep.subr.bf16.mxu0 0
    %2109 = vmatpush1.bf16.msra.mxu0 0
    %2110 = vmatprep.subr.bf16.mxu0 0
    %2111 = vmatpush1.bf16.msra.mxu0 0
    %2112 = vmatprep.subr.bf16.mxu0 0
    %2113 = vmatpush1.bf16.msra.mxu0 0
    %2114 = vmatprep.subr.bf16.mxu0 0
    %2115 = vmatpush1.bf16.msra.mxu0 0
    %2116 = vmatprep.subr.bf16.mxu0 0
    %2117 = vmatpush1.bf16.msra.mxu0 %v2100
    %2118 = vmatprep.subr.bf16.mxu0 0
    %2119 = vmatpush2.bf16.msra.mxu0 0
    %2120 = vmatprep.subr.bf16.mxu0 0
    %2121 = vmatpush2.bf16.msra.mxu0 0
    %2122 = vmatprep.subr.bf16.mxu0 0
    %2123 = vmatpush2.bf16.msra.mxu0 0
    %2124 = vmatprep.subr.bf16.mxu0 0
    %2125 = vmatpush2.bf16.msra.mxu0 0
    %2126 = vmatprep.subr.bf16.mxu0 0
    %2127 = vmatpush2.bf16.msra.mxu0 0
    %2128 = vmatprep.subr.bf16.mxu0 0
    %2129 = vmatpush2.bf16.msra.mxu0 0
    %2130 = vmatprep.subr.bf16.mxu0 0
    %2131 = vmatpush2.bf16.msra.mxu0 0
    %2132 = vmatprep.subr.bf16.mxu0 0
    %2133 = vmatpush2.bf16.msra.mxu0 0
    %2134 = vmatprep.mubr.bf16.mxu0 0
    %2135 = vmatmul.mubr.bf16.gmra.mxu0 %v2097
    %v2136 = vpop.f32.mrf.mxu0
    %v2137 = vadd.f32 0.0, %v2136
    %v2138 = vpop.f32.mrf.mxu0
    %v2139 = vpop.f32.mrf.mxu0
    %v2140 = vpop.f32.mrf.mxu0
    %2141 = vdwg.mxu0
    %v2143 = vsel %vm1536, %v2035, 0
    %v2146 = vsel %vm2052, %v2043, 0
    %2148 = vmatprep.subr.bf16.mxu0 0
    %2149 = vmatpush1.bf16.msra.mxu0 0
    %2150 = vmatprep.subr.bf16.mxu0 0
    %2151 = vmatpush1.bf16.msra.mxu0 0
    %2152 = vmatprep.subr.bf16.mxu0 0
    %2153 = vmatpush1.bf16.msra.mxu0 0
    %2154 = vmatprep.subr.bf16.mxu0 0
    %2155 = vmatpush1.bf16.msra.mxu0 0
    %2156 = vmatprep.subr.bf16.mxu0 0
    %2157 = vmatpush1.bf16.msra.mxu0 0
    %2158 = vmatprep.subr.bf16.mxu0 0
    %2159 = vmatpush1.bf16.msra.mxu0 0
    %2160 = vmatprep.subr.bf16.mxu0 0
    %2161 = vmatpush1.bf16.msra.mxu0 0
    %2162 = vmatprep.subr.bf16.mxu0 0
    %2163 = vmatpush1.bf16.msra.mxu0 %v2146
    %2164 = vmatprep.subr.bf16.mxu0 0
    %2165 = vmatpush2.bf16.msra.mxu0 0
    %2166 = vmatprep.subr.bf16.mxu0 0
    %2167 = vmatpush2.bf16.msra.mxu0 0
    %2168 = vmatprep.subr.bf16.mxu0 0
    %2169 = vmatpush2.bf16.msra.mxu0 0
    %2170 = vmatprep.subr.bf16.mxu0 0
    %2171 = vmatpush2.bf16.msra.mxu0 0
    %2172 = vmatprep.subr.bf16.mxu0 0
    %2173 = vmatpush2.bf16.msra.mxu0 0
    %2174 = vmatprep.subr.bf16.mxu0 0
    %2175 = vmatpush2.bf16.msra.mxu0 0
    %2176 = vmatprep.subr.bf16.mxu0 0
    %2177 = vmatpush2.bf16.msra.mxu0 0
    %2178 = vmatprep.subr.bf16.mxu0 0
    %2179 = vmatpush2.bf16.msra.mxu0 0
    %2180 = vmatprep.mubr.bf16.mxu0 0
    %2181 = vmatmul.mubr.bf16.gmra.mxu0 %v2143
    %v2182 = vpop.f32.mrf.mxu0
    %v2183 = vadd.f32 0.0, %v2182
    %v2184 = vpop.f32.mrf.mxu0
    %v2185 = vpop.f32.mrf.mxu0
    %v2186 = vpop.f32.mrf.mxu0
    %2187 = vdwg.mxu0
    %v2189 = vsel %vm1536, %v2036, 0
    %v2192 = vsel %vm2052, %v2044, 0
    %2194 = vmatprep.subr.bf16.mxu0 0
    %2195 = vmatpush1.bf16.msra.mxu0 0
    %2196 = vmatprep.subr.bf16.mxu0 0
    %2197 = vmatpush1.bf16.msra.mxu0 0
    %2198 = vmatprep.subr.bf16.mxu0 0
    %2199 = vmatpush1.bf16.msra.mxu0 0
    %2200 = vmatprep.subr.bf16.mxu0 0
    %2201 = vmatpush1.bf16.msra.mxu0 0
    %2202 = vmatprep.subr.bf16.mxu0 0
    %2203 = vmatpush1.bf16.msra.mxu0 0
    %2204 = vmatprep.subr.bf16.mxu0 0
    %2205 = vmatpush1.bf16.msra.mxu0 0
    %2206 = vmatprep.subr.bf16.mxu0 0
    %2207 = vmatpush1.bf16.msra.mxu0 0
    %2208 = vmatprep.subr.bf16.mxu0 0
    %2209 = vmatpush1.bf16.msra.mxu0 %v2192
    %2210 = vmatprep.subr.bf16.mxu0 0
    %2211 = vmatpush2.bf16.msra.mxu0 0
    %2212 = vmatprep.subr.bf16.mxu0 0
    %2213 = vmatpush2.bf16.msra.mxu0 0
    %2214 = vmatprep.subr.bf16.mxu0 0
    %2215 = vmatpush2.bf16.msra.mxu0 0
    %2216 = vmatprep.subr.bf16.mxu0 0
    %2217 = vmatpush2.bf16.msra.mxu0 0
    %2218 = vmatprep.subr.bf16.mxu0 0
    %2219 = vmatpush2.bf16.msra.mxu0 0
    %2220 = vmatprep.subr.bf16.mxu0 0
    %2221 = vmatpush2.bf16.msra.mxu0 0
    %2222 = vmatprep.subr.bf16.mxu0 0
    %2223 = vmatpush2.bf16.msra.mxu0 0
    %2224 = vmatprep.subr.bf16.mxu0 0
    %2225 = vmatpush2.bf16.msra.mxu0 0
    %2226 = vmatprep.mubr.bf16.mxu0 0
    %2227 = vmatmul.mubr.bf16.gmra.mxu0 %v2189
    %v2228 = vpop.f32.mrf.mxu0
    %v2229 = vadd.f32 0.0, %v2228
    %v2230 = vpop.f32.mrf.mxu0
    %v2231 = vpop.f32.mrf.mxu0
    %v2232 = vpop.f32.mrf.mxu0
    %2233 = vdwg.mxu0
    %v2235 = vsel %vm1536, %v2037, 0
    %v2238 = vsel %vm2052, %v2045, 0
    %2240 = vmatprep.subr.bf16.mxu0 0
    %2241 = vmatpush1.bf16.msra.mxu0 0
    %2242 = vmatprep.subr.bf16.mxu0 0
    %2243 = vmatpush1.bf16.msra.mxu0 0
    %2244 = vmatprep.subr.bf16.mxu0 0
    %2245 = vmatpush1.bf16.msra.mxu0 0
    %2246 = vmatprep.subr.bf16.mxu0 0
    %2247 = vmatpush1.bf16.msra.mxu0 0
    %2248 = vmatprep.subr.bf16.mxu0 0
    %2249 = vmatpush1.bf16.msra.mxu0 0
    %2250 = vmatprep.subr.bf16.mxu0 0
    %2251 = vmatpush1.bf16.msra.mxu0 0
    %2252 = vmatprep.subr.bf16.mxu0 0
    %2253 = vmatpush1.bf16.msra.mxu0 0
    %2254 = vmatprep.subr.bf16.mxu0 0
    %2255 = vmatpush1.bf16.msra.mxu0 %v2238
    %2256 = vmatprep.subr.bf16.mxu0 0
    %2257 = vmatpush2.bf16.msra.mxu0 0
    %2258 = vmatprep.subr.bf16.mxu0 0
    %2259 = vmatpush2.bf16.msra.mxu0 0
    %2260 = vmatprep.subr.bf16.mxu0 0
    %2261 = vmatpush2.bf16.msra.mxu0 0
    %2262 = vmatprep.subr.bf16.mxu0 0
    %2263 = vmatpush2.bf16.msra.mxu0 0
    %2264 = vmatprep.subr.bf16.mxu0 0
    %2265 = vmatpush2.bf16.msra.mxu0 0
    %2266 = vmatprep.subr.bf16.mxu0 0
    %2267 = vmatpush2.bf16.msra.mxu0 0
    %2268 = vmatprep.subr.bf16.mxu0 0
    %2269 = vmatpush2.bf16.msra.mxu0 0
    %2270 = vmatprep.subr.bf16.mxu0 0
    %2271 = vmatpush2.bf16.msra.mxu0 0
    %2272 = vmatprep.mubr.bf16.mxu0 0
    %2273 = vmatmul.mubr.bf16.gmra.mxu0 %v2235
    %v2274 = vpop.f32.mrf.mxu0
    %v2275 = vadd.f32 0.0, %v2274
    %v2276 = vpop.f32.mrf.mxu0
    %v2277 = vpop.f32.mrf.mxu0
    %v2278 = vpop.f32.mrf.mxu0
    %2279 = vdwg.mxu0
    %v2281 = vsel %vm1536, %v2038, 0
    %v2284 = vsel %vm2052, %v2046, 0
    %2286 = vmatprep.subr.bf16.mxu0 0
    %2287 = vmatpush1.bf16.msra.mxu0 0
    %2288 = vmatprep.subr.bf16.mxu0 0
    %2289 = vmatpush1.bf16.msra.mxu0 0
    %2290 = vmatprep.subr.bf16.mxu0 0
    %2291 = vmatpush1.bf16.msra.mxu0 0
    %2292 = vmatprep.subr.bf16.mxu0 0
    %2293 = vmatpush1.bf16.msra.mxu0 0
    %2294 = vmatprep.subr.bf16.mxu0 0
    %2295 = vmatpush1.bf16.msra.mxu0 0
    %2296 = vmatprep.subr.bf16.mxu0 0
    %2297 = vmatpush1.bf16.msra.mxu0 0
    %2298 = vmatprep.subr.bf16.mxu0 0
    %2299 = vmatpush1.bf16.msra.mxu0 0
    %2300 = vmatprep.subr.bf16.mxu0 0
    %2301 = vmatpush1.bf16.msra.mxu0 %v2284
    %2302 = vmatprep.subr.bf16.mxu0 0
    %2303 = vmatpush2.bf16.msra.mxu0 0
    %2304 = vmatprep.subr.bf16.mxu0 0
    %2305 = vmatpush2.bf16.msra.mxu0 0
    %2306 = vmatprep.subr.bf16.mxu0 0
    %2307 = vmatpush2.bf16.msra.mxu0 0
    %2308 = vmatprep.subr.bf16.mxu0 0
    %2309 = vmatpush2.bf16.msra.mxu0 0
    %2310 = vmatprep.subr.bf16.mxu0 0
    %2311 = vmatpush2.bf16.msra.mxu0 0
    %2312 = vmatprep.subr.bf16.mxu0 0
    %2313 = vmatpush2.bf16.msra.mxu0 0
    %2314 = vmatprep.subr.bf16.mxu0 0
    %2315 = vmatpush2.bf16.msra.mxu0 0
    %2316 = vmatprep.subr.bf16.mxu0 0
    %2317 = vmatpush2.bf16.msra.mxu0 0
    %2318 = vmatprep.mubr.bf16.mxu0 0
    %2319 = vmatmul.mubr.bf16.gmra.mxu0 %v2281
    %v2320 = vpop.f32.mrf.mxu0
    %v2321 = vadd.f32 0.0, %v2320
    %v2322 = vpop.f32.mrf.mxu0
    %v2323 = vpop.f32.mrf.mxu0
    %v2324 = vpop.f32.mrf.mxu0
    %2325 = vdwg.mxu0
    %v2327 = vsel %vm1536, %v2039, 0
    %v2330 = vsel %vm2052, %v2047, 0
    %2332 = vmatprep.subr.bf16.mxu0 0
    %2333 = vmatpush1.bf16.msra.mxu0 0
    %2334 = vmatprep.subr.bf16.mxu0 0
    %2335 = vmatpush1.bf16.msra.mxu0 0
    %2336 = vmatprep.subr.bf16.mxu0 0
    %2337 = vmatpush1.bf16.msra.mxu0 0
    %2338 = vmatprep.subr.bf16.mxu0 0
    %2339 = vmatpush1.bf16.msra.mxu0 0
    %2340 = vmatprep.subr.bf16.mxu0 0
    %2341 = vmatpush1.bf16.msra.mxu0 0
    %2342 = vmatprep.subr.bf16.mxu0 0
    %2343 = vmatpush1.bf16.msra.mxu0 0
    %2344 = vmatprep.subr.bf16.mxu0 0
    %2345 = vmatpush1.bf16.msra.mxu0 0
    %2346 = vmatprep.subr.bf16.mxu0 0
    %2347 = vmatpush1.bf16.msra.mxu0 %v2330
    %2348 = vmatprep.subr.bf16.mxu0 0
    %2349 = vmatpush2.bf16.msra.mxu0 0
    %2350 = vmatprep.subr.bf16.mxu0 0
    %2351 = vmatpush2.bf16.msra.mxu0 0
    %2352 = vmatprep.subr.bf16.mxu0 0
    %2353 = vmatpush2.bf16.msra.mxu0 0
    %2354 = vmatprep.subr.bf16.mxu0 0
    %2355 = vmatpush2.bf16.msra.mxu0 0
    %2356 = vmatprep.subr.bf16.mxu0 0
    %2357 = vmatpush2.bf16.msra.mxu0 0
    %2358 = vmatprep.subr.bf16.mxu0 0
    %2359 = vmatpush2.bf16.msra.mxu0 0
    %2360 = vmatprep.subr.bf16.mxu0 0
    %2361 = vmatpush2.bf16.msra.mxu0 0
    %2362 = vmatprep.subr.bf16.mxu0 0
    %2363 = vmatpush2.bf16.msra.mxu0 0
    %2364 = vmatprep.mubr.bf16.mxu0 0
    %2365 = vmatmul.mubr.bf16.gmra.mxu0 %v2327
    %v2366 = vpop.f32.mrf.mxu0
    %v2367 = vadd.f32 0.0, %v2366
    %v2368 = vpop.f32.mrf.mxu0
    %v2369 = vpop.f32.mrf.mxu0
    %v2370 = vpop.f32.mrf.mxu0
    %2371 = vdwg.mxu0
    %v2373 = vsel %vm1536, %v2040, 0
    %v2376 = vsel %vm2052, %v2048, 0
    %2378 = vmatprep.subr.bf16.mxu0 0
    %2379 = vmatpush1.bf16.msra.mxu0 0
    %2380 = vmatprep.subr.bf16.mxu0 0
    %2381 = vmatpush1.bf16.msra.mxu0 0
    %2382 = vmatprep.subr.bf16.mxu0 0
    %2383 = vmatpush1.bf16.msra.mxu0 0
    %2384 = vmatprep.subr.bf16.mxu0 0
    %2385 = vmatpush1.bf16.msra.mxu0 0
    %2386 = vmatprep.subr.bf16.mxu0 0
    %2387 = vmatpush1.bf16.msra.mxu0 0
    %2388 = vmatprep.subr.bf16.mxu0 0
    %2389 = vmatpush1.bf16.msra.mxu0 0
    %2390 = vmatprep.subr.bf16.mxu0 0
    %2391 = vmatpush1.bf16.msra.mxu0 0
    %2392 = vmatprep.subr.bf16.mxu0 0
    %2393 = vmatpush1.bf16.msra.mxu0 %v2376
    %2394 = vmatprep.subr.bf16.mxu0 0
    %2395 = vmatpush2.bf16.msra.mxu0 0
    %2396 = vmatprep.subr.bf16.mxu0 0
    %2397 = vmatpush2.bf16.msra.mxu0 0
    %2398 = vmatprep.subr.bf16.mxu0 0
    %2399 = vmatpush2.bf16.msra.mxu0 0
    %2400 = vmatprep.subr.bf16.mxu0 0
    %2401 = vmatpush2.bf16.msra.mxu0 0
    %2402 = vmatprep.subr.bf16.mxu0 0
    %2403 = vmatpush2.bf16.msra.mxu0 0
    %2404 = vmatprep.subr.bf16.mxu0 0
    %2405 = vmatpush2.bf16.msra.mxu0 0
    %2406 = vmatprep.subr.bf16.mxu0 0
    %2407 = vmatpush2.bf16.msra.mxu0 0
    %2408 = vmatprep.subr.bf16.mxu0 0
    %2409 = vmatpush2.bf16.msra.mxu0 0
    %2410 = vmatprep.mubr.bf16.mxu0 0
    %2411 = vmatmul.mubr.bf16.gmra.mxu0 %v2373
    %v2412 = vpop.f32.mrf.mxu0
    %v2413 = vadd.f32 0.0, %v2412
    %v2414 = vpop.f32.mrf.mxu0
    %v2415 = vpop.f32.mrf.mxu0
    %v2416 = vpop.f32.mrf.mxu0
    %2417 = vdwg.mxu0
    %v2418 = vmul.f32 %v1906, %v2091
    %v2419 = vmul.f32 %v1907, %v2137
    %v2420 = vmul.f32 %v1908, %v2183
    %v2421 = vmul.f32 %v1909, %v2229
    %v2422 = vmul.f32 %v1910, %v2275
    %v2423 = vmul.f32 %v1911, %v2321
    %v2424 = vmul.f32 %v1912, %v2367
    %v2425 = vmul.f32 %v1913, %v2413
    %v2426 = vsel %vm514, %v2418, 0.0
    %2427 = vadd.xlane.f32.xlu0 %v2426
    %v2428 = vpop.xlane.xlu0 %2427
    %v2429 = vsel %vm514, %v2419, 0.0
    %2430 = vadd.xlane.f32.xlu0 %v2429
    %v2431 = vpop.xlane.xlu0 %2430
    %v2432 = vsel %vm514, %v2420, 0.0
    %2433 = vadd.xlane.f32.xlu0 %v2432
    %v2434 = vpop.xlane.xlu0 %2433
    %v2435 = vsel %vm514, %v2421, 0.0
    %2436 = vadd.xlane.f32.xlu0 %v2435
    %v2437 = vpop.xlane.xlu0 %2436
    %v2438 = vsel %vm514, %v2422, 0.0
    %2439 = vadd.xlane.f32.xlu0 %v2438
    %v2440 = vpop.xlane.xlu0 %2439
    %v2441 = vsel %vm514, %v2423, 0.0
    %2442 = vadd.xlane.f32.xlu0 %v2441
    %v2443 = vpop.xlane.xlu0 %2442
    %v2444 = vsel %vm514, %v2424, 0.0
    %2445 = vadd.xlane.f32.xlu0 %v2444
    %v2446 = vpop.xlane.xlu0 %2445
    %v2447 = vsel %vm514, %v2425, 0.0
    %2448 = vadd.xlane.f32.xlu0 %v2447
    %v2449 = vpop.xlane.xlu0 %2448
    %v2450 = vmul.f32 %v2428, 0.17677669
    %v2451 = vmul.f32 %v2431, 0.17677669
    %v2452 = vmul.f32 %v2434, 0.17677669
    %v2453 = vmul.f32 %v2437, 0.17677669
    %v2454 = vmul.f32 %v2440, 0.17677669
    %v2455 = vmul.f32 %v2443, 0.17677669
    %v2456 = vmul.f32 %v2446, 0.17677669
    %v2457 = vmul.f32 %v2449, 0.17677669
    %v2458 = vld [vmem:[#allocation5] sm:$0x1]
    %v2460 = vlaneseq
    %v2461 = vshrl.u32 %v2460, 7
    %v2462 = vsub.s32 0, %v2461
    %v2463 = vrot.slane %v2458, %v2462
    %2464 = vset.pattern.permute.xlu0 0
    %2465 = vperm.xlu0 %2464, %v2463
    %v2466 = vpop.permute.xlu0 %2465
    %v2468 = vadd.f32 %v2450, %v2466
    %v2469 = vadd.f32 %v2451, %v2466
    %v2470 = vadd.f32 %v2452, %v2466
    %v2471 = vadd.f32 %v2453, %v2466
    %v2472 = vadd.f32 %v2454, %v2466
    %v2473 = vadd.f32 %v2455, %v2466
    %v2474 = vadd.f32 %v2456, %v2466
    %v2475 = vadd.f32 %v2457, %v2466
    %v2476 = vxor.u32 %v2468, 2147483648
    %v2477 = vxor.u32 %v2469, 2147483648
    %v2478 = vxor.u32 %v2470, 2147483648
    %v2479 = vxor.u32 %v2471, 2147483648
    %v2480 = vxor.u32 %v2472, 2147483648
    %v2481 = vxor.u32 %v2473, 2147483648
    %v2482 = vxor.u32 %v2474, 2147483648
    %v2483 = vxor.u32 %v2475, 2147483648
    %v2484 = vmul.f32 %v2476, 1.442695
    %v2485 = vpow.pop %v2484
    %v2486 = vmul.f32 %v2477, 1.442695
    %v2487 = vpow.pop %v2486
    %v2488 = vmul.f32 %v2478, 1.442695
    %v2489 = vpow.pop %v2488
    %v2490 = vmul.f32 %v2479, 1.442695
    %v2491 = vpow.pop %v2490
    %v2492 = vmul.f32 %v2480, 1.442695
    %v2493 = vpow.pop %v2492
    %v2494 = vmul.f32 %v2481, 1.442695
    %v2495 = vpow.pop %v2494
    %v2496 = vmul.f32 %v2482, 1.442695
    %v2497 = vpow.pop %v2496
    %v2498 = vmul.f32 %v2483, 1.442695
    %v2499 = vpow.pop %v2498
    %v2500 = vadd.f32 %v2485, 1.0
    %v2501 = vadd.f32 %v2487, 1.0
    %v2502 = vadd.f32 %v2489, 1.0
    %v2503 = vadd.f32 %v2491, 1.0
    %v2504 = vadd.f32 %v2493, 1.0
    %v2505 = vadd.f32 %v2495, 1.0
    %v2506 = vadd.f32 %v2497, 1.0
    %v2507 = vadd.f32 %v2499, 1.0
    %v2508 = vrcp.pop %v2500
    %v2509 = vmul.f32 1.0, %v2508
    %v2510 = vrcp.pop %v2501
    %v2511 = vmul.f32 1.0, %v2510
    %v2512 = vrcp.pop %v2502
    %v2513 = vmul.f32 1.0, %v2512
    %v2514 = vrcp.pop %v2503
    %v2515 = vmul.f32 1.0, %v2514
    %v2516 = vrcp.pop %v2504
    %v2517 = vmul.f32 1.0, %v2516
    %v2518 = vrcp.pop %v2505
    %v2519 = vmul.f32 1.0, %v2518
    %v2520 = vrcp.pop %v2506
    %v2521 = vmul.f32 1.0, %v2520
    %v2522 = vrcp.pop %v2507
    %v2523 = vmul.f32 1.0, %v2522
    %s2524 = sld [smem:[#allocation3]]
    %v2525 = vstv %s2524
    %vm2526 = vcmp.gt.f32.partialorder %v2509, %v2525
    %vm2527 = vcmp.gt.f32.partialorder %v2511, %v2525
    %vm2528 = vcmp.gt.f32.partialorder %v2513, %v2525
    %vm2529 = vcmp.gt.f32.partialorder %v2515, %v2525
    %vm2530 = vcmp.gt.f32.partialorder %v2517, %v2525
    %vm2531 = vcmp.gt.f32.partialorder %v2519, %v2525
    %vm2532 = vcmp.gt.f32.partialorder %v2521, %v2525
    %vm2533 = vcmp.gt.f32.partialorder %v2523, %v2525
    %v2534 = vsel %vm2526, %v2509, 0.0
    %v2535 = vsel %vm2527, %v2511, 0.0
    %v2536 = vsel %vm2528, %v2513, 0.0
    %v2537 = vsel %vm2529, %v2515, 0.0
    %v2538 = vsel %vm2530, %v2517, 0.0
    %v2539 = vsel %vm2531, %v2519, 0.0
    %v2540 = vsel %vm2532, %v2521, 0.0
    %v2541 = vsel %vm2533, %v2523, 0.0
    %v2550 = vlaneseq
    %v2551 = vshrl.u32 %v2550, 7
    %v2552 = vsub.s32 %v1488, %v2551
    %v2553 = vrot.slane %v2534, %v2552
    %v2554 = vlaneseq
    %v2555 = vshrl.u32 %v2554, 7
    %v2556 = vsub.s32 %v1488, %v2555
    %v2557 = vrot.slane %v2535, %v2556
    %v2558 = vlaneseq
    %v2559 = vshrl.u32 %v2558, 7
    %v2560 = vsub.s32 %v1488, %v2559
    %v2561 = vrot.slane %v2536, %v2560
    %v2562 = vlaneseq
    %v2563 = vshrl.u32 %v2562, 7
    %v2564 = vsub.s32 %v1488, %v2563
    %v2565 = vrot.slane %v2537, %v2564
    %v2566 = vlaneseq
    %v2567 = vshrl.u32 %v2566, 7
    %v2568 = vsub.s32 %v1488, %v2567
    %v2569 = vrot.slane %v2538, %v2568
    %v2570 = vlaneseq
    %v2571 = vshrl.u32 %v2570, 7
    %v2572 = vsub.s32 %v1488, %v2571
    %v2573 = vrot.slane %v2539, %v2572
    %v2574 = vlaneseq
    %v2575 = vshrl.u32 %v2574, 7
    %v2576 = vsub.s32 %v1488, %v2575
    %v2577 = vrot.slane %v2540, %v2576
    %v2578 = vlaneseq
    %v2579 = vshrl.u32 %v2578, 7
    %v2580 = vsub.s32 %v1488, %v2579
    %v2581 = vrot.slane %v2541, %v2580
    %v2582 = vsel %vm1521, %v2557, %v2553
    %v2583 = vsel %vm1523, %v2561, %v2582
    %v2584 = vsel %vm1525, %v2565, %v2583
    %v2585 = vsel %vm1527, %v2569, %v2584
    %v2586 = vsel %vm1529, %v2573, %v2585
    %v2587 = vsel %vm1531, %v2577, %v2586
    %v2588 = vsel %vm1533, %v2581, %v2587
    %v2590 = vsel %vm1536, %v2588, 0.0
    %2591 = vadd.xlane.f32.xlu0 %v2590
    %v2592 = vpop.xlane.xlu0 %2591
    %2593 = vxpose.xlu0.b32.start [1/16] %v2592, 128
    %2594 = vxpose.xlu0.b32.cont [2/16] 0.0, 128
    %2595 = vxpose.xlu0.b32.cont [3/16] 0.0, 128
    %2596 = vxpose.xlu0.b32.cont [4/16] 0.0, 128
    %2597 = vxpose.xlu0.b32.cont [5/16] 0.0, 128
    %2598 = vxpose.xlu0.b32.cont [6/16] 0.0, 128
    %2599 = vxpose.xlu0.b32.cont [7/16] 0.0, 128
    %2600 = vxpose.xlu0.b32.cont [8/16] 0.0, 128
    %2601 = vxpose.xlu0.b32.cont [9/16] 0.0, 128
    %2602 = vxpose.xlu0.b32.cont [10/16] 0.0, 128
    %2603 = vxpose.xlu0.b32.cont [11/16] 0.0, 128
    %2604 = vxpose.xlu0.b32.cont [12/16] 0.0, 128
    %2605 = vxpose.xlu0.b32.cont [13/16] 0.0, 128
    %2606 = vxpose.xlu0.b32.cont [14/16] 0.0, 128
    %2607 = vxpose.xlu0.b32.cont [15/16] 0.0, 128
    %2608 = vxpose.xlu0.b32.end [16/16] 0.0, 128
    %v2609 = vpop.trf.xlu0
    %v2610 = vpop.trf.xlu0
    %v2611 = vpop.trf.xlu0
    %v2612 = vpop.trf.xlu0
    %v2613 = vpop.trf.xlu0
    %v2614 = vpop.trf.xlu0
    %v2615 = vpop.trf.xlu0
    %v2616 = vpop.trf.xlu0
    %v2617 = vpop.trf.xlu0
    %v2618 = vpop.trf.xlu0
    %v2619 = vpop.trf.xlu0
    %v2620 = vpop.trf.xlu0
    %v2621 = vpop.trf.xlu0
    %v2622 = vpop.trf.xlu0
    %v2623 = vpop.trf.xlu0
    %v2624 = vpop.trf.xlu0
    %vm2625 = vcmask 57344
    %2626 = vst.msk [vmem:[#allocation6] sm:$0x1] %vm2625, %v2609
    // Predicated region
    $region82: #{tpu_custom_call.1} parent=1 // pred_check
      _
    $region83: #{tpu_custom_call.1} parent=1 // pred_check_branch
      %2628 = sbr.rel (0) target = $region85
    $region84: #{tpu_custom_call.1} parent=1 // pred_region
      %s2630 = ssub.s32 16, 16
      %2631 = vsyncadd [#allocation7], %s2630
      %s2633 = sshll.u32 [#allocation6], 4
      %s2634 = int_to_ptr.vmem [resolvable:$true] %s2633
      %2636 = dma.vmem_to_hbm [thread:$0]  %s2634, 16, %s20, [#allocation7]
    $region85: #{tpu_custom_call.1} parent=1 // pred_fallthru
      _
    // Predicated region
    $region86: #{tpu_custom_call.1} parent=1 // pred_check
      _
    $region87: #{tpu_custom_call.1} parent=1 // pred_check_branch
      %2638 = sbr.rel (0) target = $region89
    $region88: #{tpu_custom_call.1} parent=1 // pred_region
      %2639 = dma.done [#allocation7], 16
    $region89: #{tpu_custom_call.1} parent=1 // pred_fallthru
      _
    %2640 = vsyncpa [#allocation7], 1

</llo_original>
